<compile_context>
chip_gen: v6e
topology: v6e:2x2x1
jax: 0.10.0
libtpu: 0.0.40
codegen_flags: <defaults>
</compile_context>

<pallas_src>
import functools

import numpy as np

import jax
import jax.numpy as jnp
from jax import lax
from jax.experimental import pallas as pl
from jax.experimental.pallas import tpu as pltpu

THRESHOLD = 1.0   # snn.Leaky default threshold
BETA = 0.95       # unused: one zero-init Leaky step => mem = beta*0 + cur = cur
NUM_CLASSES = 11
F32 = jnp.float32

H_IN = 128        # input spatial size forced by fc1 = Linear(4*32*32, 128)
W_LANE = 128      # every in-kernel 2-D array is kept 128 lanes wide
H_MID = 64        # spatial size after pool1


# --------------------------------------------------------------------------
# Host-built structural constants (0/1 selectors), passed as resident VMEM
# inputs so they are never rebuilt inside the kernel.
# --------------------------------------------------------------------------
def _build_conv_constants():
    # channel deinterleave: desel[ci][k, w] = 1 iff k == 2*w + ci
    k = np.arange(2 * H_IN)[:, None]
    w = np.arange(H_IN)[None, :]
    desel = np.stack([(k == 2 * w + ci) for ci in range(2)]).astype(np.float32)
    # pool1 row-pair selectors (64,128): pick rows 2r / 2r+1
    r = np.arange(H_IN // 2)[:, None]
    kk = np.arange(H_IN)[None, :]
    re1 = (kk == 2 * r).astype(np.float32)
    ro1 = (kk == 2 * r + 1).astype(np.float32)
    # pool1 even-column compaction (128,128): out col c<64 <- col 2c, rest 0
    kc = np.arange(W_LANE)[:, None]
    cc = np.arange(W_LANE)[None, :]
    csel1 = ((kc == 2 * cc) & (cc < H_MID)).astype(np.float32)
    # pool2 row-pair selectors (32,64)
    r2 = np.arange(H_MID // 2)[:, None]
    kk2 = np.arange(H_MID)[None, :]
    re2 = (kk2 == 2 * r2).astype(np.float32)
    ro2 = (kk2 == 2 * r2 + 1).astype(np.float32)
    # pool2 column compaction fused with channel placement, channels stacked
    # along K: place[co*128 + k, co*32 + x] = 1 iff k == 2*x  (x < 32)
    kp = np.arange(4 * W_LANE)[:, None]
    jj = np.arange(W_LANE)[None, :]
    place = ((kp // W_LANE == jj // 32)
             & (kp % W_LANE == 2 * (jj % 32))).astype(np.float32)
    return desel, re1, ro1, csel1, re2, ro2, place


_DESEL, _RE1, _RO1, _CSEL1, _RE2, _RO2, _PLACE = _build_conv_constants()


# --------------------------------------------------------------------------
# Fused conv1 -> pool1 -> conv2 -> pool2 kernel
# --------------------------------------------------------------------------
def _conv3x3(load_ci, w, b, *, cin, cout, n_rows, row_keep, col_keep):
    """3x3 stride-1 pad-1 cross-correlation (PyTorch Conv2d semantics).

    load_ci(ci) -> (n_rows, 128) input channel map.
    Row/column shifts via pltpu.roll (XLU) with narrow boundary masks; taps
    are produced one at a time and folded straight into the per-output-channel
    accumulators (low vreg pressure).  Returns cout (n_rows, 128) membranes
    (membrane == conv output because the initial Leaky membrane is zero).
    """
    accs = [jnp.zeros((n_rows, W_LANE), F32) + b[co] for co in range(cout)]
    for ci in range(cin):
        xin = load_ci(ci)
        for kh in range(3):
            dh = kh - 1
            if dh == 0:
                rs = xin
            else:
                rs = pltpu.roll(xin, (-dh) % n_rows, 0) * row_keep[dh]
            for kw in range(3):
                dw = kw - 1
                if dw == 0:
                    tap = rs
                else:
                    tap = pltpu.roll(rs, (-dw) % W_LANE, 1)
                    if col_keep is not None:
                        tap = tap * col_keep[dw]
                for co in range(cout):
                    idx = ((co * cin + ci) * 3 + kh) * 3 + kw
                    accs[co] = accs[co] + w[idx] * tap
    return accs


def _pool_cols(m):
    # max over column pairs; result meaningful at even columns only
    return jnp.maximum(m, pltpu.roll(m, W_LANE - 1, 1))


def _fused_conv_kernel(x_ref, desel_ref, re1_ref, ro1_ref, csel1_ref,
                       re2_ref, ro2_ref, place_ref,
                       w1_ref, b1_ref, w2_ref, b2_ref, out_ref, *, tb):
    """Per grid step: conv1 -> mem -> pool1 -> conv2 -> mem -> pool2 for TB images.

    x_ref:   VMEM (TB, 128, 256), interleaved lanes: x[t, y, 2*w + c]
    out_ref: VMEM (TB, 32, 128);  out[t, y, co*32 + x] = pooled2[t, co, y, x]
    """
    # hoisted SMEM scalar reads (once per grid step, not per image)
    w1 = [w1_ref[i] for i in range(2 * 2 * 9)]
    b1 = [b1_ref[i] for i in range(2)]
    w2 = [w2_ref[i] for i in range(4 * 2 * 9)]
    b2 = [b2_ref[i] for i in range(4)]

    # narrow boundary masks for the rolled taps (cheap to build, ~2 vregs each)
    def keep_rows(n, dead):
        rr = lax.broadcasted_iota(jnp.int32, (n, 1), 0)
        return (rr != dead).astype(F32)

    def keep_cols(dead):
        cc = lax.broadcasted_iota(jnp.int32, (1, W_LANE), 1)
        return (cc != dead).astype(F32)

    rk1 = {1: keep_rows(H_IN, H_IN - 1), -1: keep_rows(H_IN, 0)}
    ck1 = {1: keep_cols(W_LANE - 1), -1: keep_cols(0)}
    rk2 = {1: keep_rows(H_MID, H_MID - 1), -1: keep_rows(H_MID, 0)}
    # conv2 needs no column masks: its inputs are exactly zero in cols [64,128)
    # and the lane wrap only feeds those dead columns / pulls zeros into col 0/63.

    @pl.loop(0, tb)
    def _per_image(t):
        # ---- stage 1: conv1 (2->2) on deinterleaved channels (MXU selector) ----
        mem1 = _conv3x3(
            lambda ci: jnp.dot(x_ref[t], desel_ref[ci],
                               preferred_element_type=F32),
            w1, b1, cin=2, cout=2, n_rows=H_IN, row_keep=rk1, col_keep=ck1)

        # ---- pool1: 2x2 max of the membrane, both channels batched in lanes ----
        cm1 = jnp.concatenate([_pool_cols(m) for m in mem1], axis=1)   # (128,256)
        rm1 = jnp.maximum(
            jnp.dot(re1_ref[...], cm1, preferred_element_type=F32),
            jnp.dot(ro1_ref[...], cm1, preferred_element_type=F32))    # (64,256)
        # per-channel even-column compaction -> (64,128) with live cols [0,64)
        mid = [jnp.dot(rm1[:, ci * W_LANE:(ci + 1) * W_LANE], csel1_ref[...],
                       preferred_element_type=F32) for ci in range(2)]

        # ---- stage 2: conv2 (2->4) on the pooled maps ----
        mem3 = _conv3x3(lambda ci: mid[ci], w2, b2, cin=2, cout=4,
                        n_rows=H_MID, row_keep=rk2, col_keep=None)

        # ---- pool2 + channel placement, batched into wide MXU matmuls ----
        cm2 = jnp.concatenate([_pool_cols(m) for m in mem3], axis=1)   # (64,512)
        rm2 = jnp.maximum(
            jnp.dot(re2_ref[...], cm2, preferred_element_type=F32),
            jnp.dot(ro2_ref[...], cm2, preferred_element_type=F32))    # (32,512)
        # packed[y, co*32 + x] = pooled2[co, y, x]  (lane-dense (32,128) block)
        out_ref[t] = jnp.dot(rm2, place_ref[...], preferred_element_type=F32)


def conv_stack(x_int, w1, b1, w2, b2, *, tb):
    n = x_int.shape[0]
    n_pad = pl.cdiv(n, tb) * tb
    if n_pad != n:
        x_int = jnp.pad(x_int, ((0, n_pad - n), (0, 0), (0, 0)))
    kernel = functools.partial(_fused_conv_kernel, tb=tb)
    packed = pl.pallas_call(
        kernel,
        out_shape=jax.ShapeDtypeStruct((n_pad, 32, W_LANE), F32),
        grid=(n_pad // tb,),
        in_specs=[
            pl.BlockSpec((tb, H_IN, 2 * H_IN), lambda i: (i, 0, 0)),
            pl.BlockSpec((2, 2 * H_IN, H_IN), lambda i: (0, 0, 0)),   # desel
            pl.BlockSpec((H_MID, W_LANE), lambda i: (0, 0)),          # re1
            pl.BlockSpec((H_MID, W_LANE), lambda i: (0, 0)),          # ro1
            pl.BlockSpec((W_LANE, W_LANE), lambda i: (0, 0)),         # csel1
            pl.BlockSpec((H_MID // 2, H_MID), lambda i: (0, 0)),      # re2
            pl.BlockSpec((H_MID // 2, H_MID), lambda i: (0, 0)),      # ro2
            pl.BlockSpec((4 * W_LANE, W_LANE), lambda i: (0, 0)),     # place
            pl.BlockSpec(memory_space=pltpu.MemorySpace.SMEM),        # conv1 w
            pl.BlockSpec(memory_space=pltpu.MemorySpace.SMEM),        # conv1 b
            pl.BlockSpec(memory_space=pltpu.MemorySpace.SMEM),        # conv2 w
            pl.BlockSpec(memory_space=pltpu.MemorySpace.SMEM),        # conv2 b
        ],
        out_specs=pl.BlockSpec((tb, 32, W_LANE), lambda i: (i, 0, 0)),
        compiler_params=pltpu.CompilerParams(
            dimension_semantics=("parallel",),
            vmem_limit_bytes=32 * 1024 * 1024),
    )(x_int, _DESEL, _RE1, _RO1, _CSEL1, _RE2, _RO2, _PLACE, w1, b1, w2, b2)
    return packed[:n]


# --------------------------------------------------------------------------
# fc1 -> Leaky spike -> fc2 head
# --------------------------------------------------------------------------
def _fc_head_kernel(x_ref, w1_ref, b1_ref, w2_ref, b2_ref, o_ref):
    cur = jnp.dot(x_ref[...], w1_ref[...],
                  preferred_element_type=F32) + b1_ref[...]
    # snntorch heaviside(mem - threshold) fires strictly above threshold
    spk = (cur > THRESHOLD).astype(F32)
    o_ref[...] = jnp.dot(spk, w2_ref[...],
                         preferred_element_type=F32) + b2_ref[...]


def fc_head(feat, w1, b1, w2p, b2p, *, tm):
    n, f = feat.shape
    hidden = w1.shape[1]
    ncls_pad = w2p.shape[1]
    n_pad = pl.cdiv(n, tm) * tm
    if n_pad != n:
        feat = jnp.pad(feat, ((0, n_pad - n), (0, 0)))
    out = pl.pallas_call(
        _fc_head_kernel,
        out_shape=jax.ShapeDtypeStruct((n_pad, ncls_pad), F32),
        grid=(n_pad // tm,),
        in_specs=[
            pl.BlockSpec((tm, f), lambda i: (i, 0)),
            pl.BlockSpec((f, hidden), lambda i: (0, 0)),
            pl.BlockSpec((1, hidden), lambda i: (0, 0)),
            pl.BlockSpec((hidden, ncls_pad), lambda i: (0, 0)),
            pl.BlockSpec((1, ncls_pad), lambda i: (0, 0)),
        ],
        out_specs=pl.BlockSpec((tm, ncls_pad), lambda i: (i, 0)),
        compiler_params=pltpu.CompilerParams(
            dimension_semantics=("parallel",),
            vmem_limit_bytes=32 * 1024 * 1024),
    )(feat, w1, b1, w2p, b2p)
    return out[:n]


# --------------------------------------------------------------------------
# Forward pass + parameter packing
# --------------------------------------------------------------------------
def snn_forward(x, params):
    """x: (B, num_bins, 128, 128, 2) float32 -> (B, 11) float32."""
    bsz, t, h, w, c = x.shape
    assert (h, w, c) == (H_IN, H_IN, 2), "fc1 = Linear(4*32*32,128) forces 128x128x2"
    n = bsz * t
    # pure view: channels stay interleaved along lanes; the kernel deinterleaves
    # them on the MXU, so no NHWC->NCHW HBM transpose pass is needed.
    x_int = x.reshape(n, h, w * c)

    tb = 8 if n >= 16 else max(1, n // 2)          # >=2 grid steps (megacore)
    packed = conv_stack(x_int, params["conv1_w"], params["conv1_b"],
                        params["conv2_w"], params["conv2_b"], tb=tb)  # (N,32,128)

    # fc1 weight rows were pre-permuted to the packed (y, co, x) order, so this
    # flatten is a pure view (no activation transpose / extra HBM pass).
    feat = packed.reshape(n, 32 * W_LANE)                             # (N, 4096)
    tm = 128 if n >= 128 else min(128, pl.cdiv(n, 8) * 8)
    logits = fc_head(feat, params["fc1_w"], params["fc1_b"],
                     params["fc2_w"], params["fc2_b"], tm=tm)         # (N, 128)

    out = logits[:, :NUM_CLASSES].reshape(bsz, t, NUM_CLASSES)
    return out.sum(axis=1)                                            # sum over bins


def _fc1_row_perm():
    # packed flat index p = y*128 + co*32 + x  ->  torch flat index co*1024 + y*32 + x
    p = np.arange(4 * 32 * 32)
    y, rem = p // 128, p % 128
    co, x = rem // 32, rem % 32
    return co * 1024 + y * 32 + x


def init_params(key):
    """PyTorch-layout parameters (same shapes as the nn.Module)."""
    ks = jax.random.split(key, 8)
    return {
        "conv1_w": jax.random.normal(ks[0], (2, 2, 3, 3), F32) * 0.25,
        "conv1_b": jax.random.normal(ks[1], (2,), F32) * 0.10,
        "conv2_w": jax.random.normal(ks[2], (4, 2, 3, 3), F32) * 0.25,
        "conv2_b": jax.random.normal(ks[3], (4,), F32) * 0.10,
        "fc1_w": jax.random.normal(ks[4], (128, 4 * 32 * 32), F32) * 0.05,
        "fc1_b": jax.random.normal(ks[5], (128,), F32) * 0.05,
        "fc2_w": jax.random.normal(ks[6], (NUM_CLASSES, 128), F32) * 0.10,
        "fc2_b": jax.random.normal(ks[7], (NUM_CLASSES,), F32) * 0.10,
    }


def pack_params(p):
    """One-time weight-side reshuffle so the kernels see lane-dense operands."""
    perm = _fc1_row_perm()
    fc1_wT = jnp.asarray(p["fc1_w"]).T                       # (4096, 128)
    return {
        # conv weights flattened (PyTorch (out,in,kh,kw) C-order) for SMEM reads
        "conv1_w": jnp.asarray(p["conv1_w"]).reshape(-1),
        "conv1_b": jnp.asarray(p["conv1_b"]),
        "conv2_w": jnp.asarray(p["conv2_w"]).reshape(-1),
        "conv2_b": jnp.asarray(p["conv2_b"]),
        # Linear: y = x @ W.T + b; fc1 rows permuted to the packed activation order
        "fc1_w": fc1_wT[perm, :],                            # (4096, 128)
        "fc1_b": jnp.asarray(p["fc1_b"]).reshape(1, -1),     # (1, 128)
        # lane-dense fc2: zero-pad the 11 classes to 128 output lanes
        "fc2_w": jnp.pad(jnp.asarray(p["fc2_w"]).T,
                         ((0, 0), (0, W_LANE - NUM_CLASSES))),   # (128, 128)
        "fc2_b": jnp.pad(jnp.asarray(p["fc2_b"]).reshape(1, -1),
                         ((0, 0), (0, W_LANE - NUM_CLASSES))),   # (1, 128)
    }


if __name__ == "__main__":
    # H=W=128 and C=2 are implied by fc1 = Linear(4*32*32, 128) after two 2x2 pools.
    B, T = 2, 4
    key = jax.random.PRNGKey(0)
    kx, kp = jax.random.split(key)
    x = jax.random.normal(kx, (B, T, H_IN, H_IN, 2), F32)
    params = pack_params(init_params(kp))

    out = jax.jit(snn_forward)(x, params)
    out = jax.block_until_ready(out)

    assert out.shape == (B, NUM_CLASSES), out.shape
    assert out.dtype == jnp.float32
    assert bool(jnp.all(jnp.isfinite(out)))
    print("KERNEL_OK")
</pallas_src>

<mosaic_0001>
module attributes {stable_mosaic.version = 11 : i64} {
  func.func @_fused_conv_kernel(%arg0: i32, %arg1: memref<4x128x256xf32, #tpu.memory_space<vmem>>, %arg2: memref<2x256x128xf32, #tpu.memory_space<vmem>>, %arg3: memref<64x128xf32, #tpu.memory_space<vmem>>, %arg4: memref<64x128xf32, #tpu.memory_space<vmem>>, %arg5: memref<128x128xf32, #tpu.memory_space<vmem>>, %arg6: memref<32x64xf32, #tpu.memory_space<vmem>>, %arg7: memref<32x64xf32, #tpu.memory_space<vmem>>, %arg8: memref<512x128xf32, #tpu.memory_space<vmem>>, %arg9: memref<36xf32, #tpu.memory_space<smem>>, %arg10: memref<2xf32, #tpu.memory_space<smem>>, %arg11: memref<72xf32, #tpu.memory_space<smem>>, %arg12: memref<4xf32, #tpu.memory_space<smem>>, %arg13: memref<4x32x128xf32, #tpu.memory_space<vmem>>) attributes {dimension_semantics = [#tpu.dimension_semantics<parallel>], iteration_bounds = array<i64: 2>, scalar_prefetch = 0 : i64, scratch_operands = 0 : i64, tpu.core_type = #tpu.core_type<tc>, window_params = [{transform_indices = @transform_0, window_bounds = array<i64: 4, 128, 256>}, {pipeline_mode = #tpu.pipeline_mode<synchronous>, transform_indices = @transform_1, window_bounds = array<i64: 2, 256, 128>}, {pipeline_mode = #tpu.pipeline_mode<synchronous>, transform_indices = @transform_2, window_bounds = array<i64: 64, 128>}, {pipeline_mode = #tpu.pipeline_mode<synchronous>, transform_indices = @transform_3, window_bounds = array<i64: 64, 128>}, {pipeline_mode = #tpu.pipeline_mode<synchronous>, transform_indices = @transform_4, window_bounds = array<i64: 128, 128>}, {pipeline_mode = #tpu.pipeline_mode<synchronous>, transform_indices = @transform_5, window_bounds = array<i64: 32, 64>}, {pipeline_mode = #tpu.pipeline_mode<synchronous>, transform_indices = @transform_6, window_bounds = array<i64: 32, 64>}, {pipeline_mode = #tpu.pipeline_mode<synchronous>, transform_indices = @transform_7, window_bounds = array<i64: 512, 128>}, {transform_indices = @transform_8, window_bounds = array<i64: 36>}, {transform_indices = @transform_9, window_bounds = array<i64: 2>}, {transform_indices = @transform_10, window_bounds = array<i64: 72>}, {transform_indices = @transform_11, window_bounds = array<i64: 4>}, {transform_indices = @transform_12, window_bounds = array<i64: 4, 32, 128>}]} {
    %c0 = arith.constant 0 : index
    %0 = memref.load %arg9[%c0] : memref<36xf32, #tpu.memory_space<smem>>
    %c1 = arith.constant 1 : index
    %1 = memref.load %arg9[%c1] : memref<36xf32, #tpu.memory_space<smem>>
    %c2 = arith.constant 2 : index
    %2 = memref.load %arg9[%c2] : memref<36xf32, #tpu.memory_space<smem>>
    %c3 = arith.constant 3 : index
    %3 = memref.load %arg9[%c3] : memref<36xf32, #tpu.memory_space<smem>>
    %c4 = arith.constant 4 : index
    %4 = memref.load %arg9[%c4] : memref<36xf32, #tpu.memory_space<smem>>
    %c5 = arith.constant 5 : index
    %5 = memref.load %arg9[%c5] : memref<36xf32, #tpu.memory_space<smem>>
    %c6 = arith.constant 6 : index
    %6 = memref.load %arg9[%c6] : memref<36xf32, #tpu.memory_space<smem>>
    %c7 = arith.constant 7 : index
    %7 = memref.load %arg9[%c7] : memref<36xf32, #tpu.memory_space<smem>>
    %c8 = arith.constant 8 : index
    %8 = memref.load %arg9[%c8] : memref<36xf32, #tpu.memory_space<smem>>
    %c9 = arith.constant 9 : index
    %9 = memref.load %arg9[%c9] : memref<36xf32, #tpu.memory_space<smem>>
    %c10 = arith.constant 10 : index
    %10 = memref.load %arg9[%c10] : memref<36xf32, #tpu.memory_space<smem>>
    %c11 = arith.constant 11 : index
    %11 = memref.load %arg9[%c11] : memref<36xf32, #tpu.memory_space<smem>>
    %c12 = arith.constant 12 : index
    %12 = memref.load %arg9[%c12] : memref<36xf32, #tpu.memory_space<smem>>
    %c13 = arith.constant 13 : index
    %13 = memref.load %arg9[%c13] : memref<36xf32, #tpu.memory_space<smem>>
    %c14 = arith.constant 14 : index
    %14 = memref.load %arg9[%c14] : memref<36xf32, #tpu.memory_space<smem>>
    %c15 = arith.constant 15 : index
    %15 = memref.load %arg9[%c15] : memref<36xf32, #tpu.memory_space<smem>>
    %c16 = arith.constant 16 : index
    %16 = memref.load %arg9[%c16] : memref<36xf32, #tpu.memory_space<smem>>
    %c17 = arith.constant 17 : index
    %17 = memref.load %arg9[%c17] : memref<36xf32, #tpu.memory_space<smem>>
    %c18 = arith.constant 18 : index
    %18 = memref.load %arg9[%c18] : memref<36xf32, #tpu.memory_space<smem>>
    %c19 = arith.constant 19 : index
    %19 = memref.load %arg9[%c19] : memref<36xf32, #tpu.memory_space<smem>>
    %c20 = arith.constant 20 : index
    %20 = memref.load %arg9[%c20] : memref<36xf32, #tpu.memory_space<smem>>
    %c21 = arith.constant 21 : index
    %21 = memref.load %arg9[%c21] : memref<36xf32, #tpu.memory_space<smem>>
    %c22 = arith.constant 22 : index
    %22 = memref.load %arg9[%c22] : memref<36xf32, #tpu.memory_space<smem>>
    %c23 = arith.constant 23 : index
    %23 = memref.load %arg9[%c23] : memref<36xf32, #tpu.memory_space<smem>>
    %c24 = arith.constant 24 : index
    %24 = memref.load %arg9[%c24] : memref<36xf32, #tpu.memory_space<smem>>
    %c25 = arith.constant 25 : index
    %25 = memref.load %arg9[%c25] : memref<36xf32, #tpu.memory_space<smem>>
    %c26 = arith.constant 26 : index
    %26 = memref.load %arg9[%c26] : memref<36xf32, #tpu.memory_space<smem>>
    %c27 = arith.constant 27 : index
    %27 = memref.load %arg9[%c27] : memref<36xf32, #tpu.memory_space<smem>>
    %c28 = arith.constant 28 : index
    %28 = memref.load %arg9[%c28] : memref<36xf32, #tpu.memory_space<smem>>
    %c29 = arith.constant 29 : index
    %29 = memref.load %arg9[%c29] : memref<36xf32, #tpu.memory_space<smem>>
    %c30 = arith.constant 30 : index
    %30 = memref.load %arg9[%c30] : memref<36xf32, #tpu.memory_space<smem>>
    %c31 = arith.constant 31 : index
    %31 = memref.load %arg9[%c31] : memref<36xf32, #tpu.memory_space<smem>>
    %c32 = arith.constant 32 : index
    %32 = memref.load %arg9[%c32] : memref<36xf32, #tpu.memory_space<smem>>
    %c33 = arith.constant 33 : index
    %33 = memref.load %arg9[%c33] : memref<36xf32, #tpu.memory_space<smem>>
    %c34 = arith.constant 34 : index
    %34 = memref.load %arg9[%c34] : memref<36xf32, #tpu.memory_space<smem>>
    %c35 = arith.constant 35 : index
    %35 = memref.load %arg9[%c35] : memref<36xf32, #tpu.memory_space<smem>>
    %c0_0 = arith.constant 0 : index
    %36 = memref.load %arg10[%c0_0] : memref<2xf32, #tpu.memory_space<smem>>
    %c1_1 = arith.constant 1 : index
    %37 = memref.load %arg10[%c1_1] : memref<2xf32, #tpu.memory_space<smem>>
    %c0_2 = arith.constant 0 : index
    %38 = memref.load %arg11[%c0_2] : memref<72xf32, #tpu.memory_space<smem>>
    %c1_3 = arith.constant 1 : index
    %39 = memref.load %arg11[%c1_3] : memref<72xf32, #tpu.memory_space<smem>>
    %c2_4 = arith.constant 2 : index
    %40 = memref.load %arg11[%c2_4] : memref<72xf32, #tpu.memory_space<smem>>
    %c3_5 = arith.constant 3 : index
    %41 = memref.load %arg11[%c3_5] : memref<72xf32, #tpu.memory_space<smem>>
    %c4_6 = arith.constant 4 : index
    %42 = memref.load %arg11[%c4_6] : memref<72xf32, #tpu.memory_space<smem>>
    %c5_7 = arith.constant 5 : index
    %43 = memref.load %arg11[%c5_7] : memref<72xf32, #tpu.memory_space<smem>>
    %c6_8 = arith.constant 6 : index
    %44 = memref.load %arg11[%c6_8] : memref<72xf32, #tpu.memory_space<smem>>
    %c7_9 = arith.constant 7 : index
    %45 = memref.load %arg11[%c7_9] : memref<72xf32, #tpu.memory_space<smem>>
    %c8_10 = arith.constant 8 : index
    %46 = memref.load %arg11[%c8_10] : memref<72xf32, #tpu.memory_space<smem>>
    %c9_11 = arith.constant 9 : index
    %47 = memref.load %arg11[%c9_11] : memref<72xf32, #tpu.memory_space<smem>>
    %c10_12 = arith.constant 10 : index
    %48 = memref.load %arg11[%c10_12] : memref<72xf32, #tpu.memory_space<smem>>
    %c11_13 = arith.constant 11 : index
    %49 = memref.load %arg11[%c11_13] : memref<72xf32, #tpu.memory_space<smem>>
    %c12_14 = arith.constant 12 : index
    %50 = memref.load %arg11[%c12_14] : memref<72xf32, #tpu.memory_space<smem>>
    %c13_15 = arith.constant 13 : index
    %51 = memref.load %arg11[%c13_15] : memref<72xf32, #tpu.memory_space<smem>>
    %c14_16 = arith.constant 14 : index
    %52 = memref.load %arg11[%c14_16] : memref<72xf32, #tpu.memory_space<smem>>
    %c15_17 = arith.constant 15 : index
    %53 = memref.load %arg11[%c15_17] : memref<72xf32, #tpu.memory_space<smem>>
    %c16_18 = arith.constant 16 : index
    %54 = memref.load %arg11[%c16_18] : memref<72xf32, #tpu.memory_space<smem>>
    %c17_19 = arith.constant 17 : index
    %55 = memref.load %arg11[%c17_19] : memref<72xf32, #tpu.memory_space<smem>>
    %c18_20 = arith.constant 18 : index
    %56 = memref.load %arg11[%c18_20] : memref<72xf32, #tpu.memory_space<smem>>
    %c19_21 = arith.constant 19 : index
    %57 = memref.load %arg11[%c19_21] : memref<72xf32, #tpu.memory_space<smem>>
    %c20_22 = arith.constant 20 : index
    %58 = memref.load %arg11[%c20_22] : memref<72xf32, #tpu.memory_space<smem>>
    %c21_23 = arith.constant 21 : index
    %59 = memref.load %arg11[%c21_23] : memref<72xf32, #tpu.memory_space<smem>>
    %c22_24 = arith.constant 22 : index
    %60 = memref.load %arg11[%c22_24] : memref<72xf32, #tpu.memory_space<smem>>
    %c23_25 = arith.constant 23 : index
    %61 = memref.load %arg11[%c23_25] : memref<72xf32, #tpu.memory_space<smem>>
    %c24_26 = arith.constant 24 : index
    %62 = memref.load %arg11[%c24_26] : memref<72xf32, #tpu.memory_space<smem>>
    %c25_27 = arith.constant 25 : index
    %63 = memref.load %arg11[%c25_27] : memref<72xf32, #tpu.memory_space<smem>>
    %c26_28 = arith.constant 26 : index
    %64 = memref.load %arg11[%c26_28] : memref<72xf32, #tpu.memory_space<smem>>
    %c27_29 = arith.constant 27 : index
    %65 = memref.load %arg11[%c27_29] : memref<72xf32, #tpu.memory_space<smem>>
    %c28_30 = arith.constant 28 : index
    %66 = memref.load %arg11[%c28_30] : memref<72xf32, #tpu.memory_space<smem>>
    %c29_31 = arith.constant 29 : index
    %67 = memref.load %arg11[%c29_31] : memref<72xf32, #tpu.memory_space<smem>>
    %c30_32 = arith.constant 30 : index
    %68 = memref.load %arg11[%c30_32] : memref<72xf32, #tpu.memory_space<smem>>
    %c31_33 = arith.constant 31 : index
    %69 = memref.load %arg11[%c31_33] : memref<72xf32, #tpu.memory_space<smem>>
    %c32_34 = arith.constant 32 : index
    %70 = memref.load %arg11[%c32_34] : memref<72xf32, #tpu.memory_space<smem>>
    %c33_35 = arith.constant 33 : index
    %71 = memref.load %arg11[%c33_35] : memref<72xf32, #tpu.memory_space<smem>>
    %c34_36 = arith.constant 34 : index
    %72 = memref.load %arg11[%c34_36] : memref<72xf32, #tpu.memory_space<smem>>
    %c35_37 = arith.constant 35 : index
    %73 = memref.load %arg11[%c35_37] : memref<72xf32, #tpu.memory_space<smem>>
    %c36 = arith.constant 36 : index
    %74 = memref.load %arg11[%c36] : memref<72xf32, #tpu.memory_space<smem>>
    %c37 = arith.constant 37 : index
    %75 = memref.load %arg11[%c37] : memref<72xf32, #tpu.memory_space<smem>>
    %c38 = arith.constant 38 : index
    %76 = memref.load %arg11[%c38] : memref<72xf32, #tpu.memory_space<smem>>
    %c39 = arith.constant 39 : index
    %77 = memref.load %arg11[%c39] : memref<72xf32, #tpu.memory_space<smem>>
    %c40 = arith.constant 40 : index
    %78 = memref.load %arg11[%c40] : memref<72xf32, #tpu.memory_space<smem>>
    %c41 = arith.constant 41 : index
    %79 = memref.load %arg11[%c41] : memref<72xf32, #tpu.memory_space<smem>>
    %c42 = arith.constant 42 : index
    %80 = memref.load %arg11[%c42] : memref<72xf32, #tpu.memory_space<smem>>
    %c43 = arith.constant 43 : index
    %81 = memref.load %arg11[%c43] : memref<72xf32, #tpu.memory_space<smem>>
    %c44 = arith.constant 44 : index
    %82 = memref.load %arg11[%c44] : memref<72xf32, #tpu.memory_space<smem>>
    %c45 = arith.constant 45 : index
    %83 = memref.load %arg11[%c45] : memref<72xf32, #tpu.memory_space<smem>>
    %c46 = arith.constant 46 : index
    %84 = memref.load %arg11[%c46] : memref<72xf32, #tpu.memory_space<smem>>
    %c47 = arith.constant 47 : index
    %85 = memref.load %arg11[%c47] : memref<72xf32, #tpu.memory_space<smem>>
    %c48 = arith.constant 48 : index
    %86 = memref.load %arg11[%c48] : memref<72xf32, #tpu.memory_space<smem>>
    %c49 = arith.constant 49 : index
    %87 = memref.load %arg11[%c49] : memref<72xf32, #tpu.memory_space<smem>>
    %c50 = arith.constant 50 : index
    %88 = memref.load %arg11[%c50] : memref<72xf32, #tpu.memory_space<smem>>
    %c51 = arith.constant 51 : index
    %89 = memref.load %arg11[%c51] : memref<72xf32, #tpu.memory_space<smem>>
    %c52 = arith.constant 52 : index
    %90 = memref.load %arg11[%c52] : memref<72xf32, #tpu.memory_space<smem>>
    %c53 = arith.constant 53 : index
    %91 = memref.load %arg11[%c53] : memref<72xf32, #tpu.memory_space<smem>>
    %c54 = arith.constant 54 : index
    %92 = memref.load %arg11[%c54] : memref<72xf32, #tpu.memory_space<smem>>
    %c55 = arith.constant 55 : index
    %93 = memref.load %arg11[%c55] : memref<72xf32, #tpu.memory_space<smem>>
    %c56 = arith.constant 56 : index
    %94 = memref.load %arg11[%c56] : memref<72xf32, #tpu.memory_space<smem>>
    %c57 = arith.constant 57 : index
    %95 = memref.load %arg11[%c57] : memref<72xf32, #tpu.memory_space<smem>>
    %c58 = arith.constant 58 : index
    %96 = memref.load %arg11[%c58] : memref<72xf32, #tpu.memory_space<smem>>
    %c59 = arith.constant 59 : index
    %97 = memref.load %arg11[%c59] : memref<72xf32, #tpu.memory_space<smem>>
    %c60 = arith.constant 60 : index
    %98 = memref.load %arg11[%c60] : memref<72xf32, #tpu.memory_space<smem>>
    %c61 = arith.constant 61 : index
    %99 = memref.load %arg11[%c61] : memref<72xf32, #tpu.memory_space<smem>>
    %c62 = arith.constant 62 : index
    %100 = memref.load %arg11[%c62] : memref<72xf32, #tpu.memory_space<smem>>
    %c63 = arith.constant 63 : index
    %101 = memref.load %arg11[%c63] : memref<72xf32, #tpu.memory_space<smem>>
    %c64 = arith.constant 64 : index
    %102 = memref.load %arg11[%c64] : memref<72xf32, #tpu.memory_space<smem>>
    %c65 = arith.constant 65 : index
    %103 = memref.load %arg11[%c65] : memref<72xf32, #tpu.memory_space<smem>>
    %c66 = arith.constant 66 : index
    %104 = memref.load %arg11[%c66] : memref<72xf32, #tpu.memory_space<smem>>
    %c67 = arith.constant 67 : index
    %105 = memref.load %arg11[%c67] : memref<72xf32, #tpu.memory_space<smem>>
    %c68 = arith.constant 68 : index
    %106 = memref.load %arg11[%c68] : memref<72xf32, #tpu.memory_space<smem>>
    %c69 = arith.constant 69 : index
    %107 = memref.load %arg11[%c69] : memref<72xf32, #tpu.memory_space<smem>>
    %c70 = arith.constant 70 : index
    %108 = memref.load %arg11[%c70] : memref<72xf32, #tpu.memory_space<smem>>
    %c71 = arith.constant 71 : index
    %109 = memref.load %arg11[%c71] : memref<72xf32, #tpu.memory_space<smem>>
    %c0_38 = arith.constant 0 : index
    %110 = memref.load %arg12[%c0_38] : memref<4xf32, #tpu.memory_space<smem>>
    %c1_39 = arith.constant 1 : index
    %111 = memref.load %arg12[%c1_39] : memref<4xf32, #tpu.memory_space<smem>>
    %c2_40 = arith.constant 2 : index
    %112 = memref.load %arg12[%c2_40] : memref<4xf32, #tpu.memory_space<smem>>
    %c3_41 = arith.constant 3 : index
    %113 = memref.load %arg12[%c3_41] : memref<4xf32, #tpu.memory_space<smem>>
    %114 = tpu.iota {dimensions = array<i32: 0>} : vector<128x1xi32>
    %c127_i32 = arith.constant 127 : i32
    %115 = vector.broadcast %c127_i32 : i32 to vector<128x1xi32>
    %116 = arith.cmpi ne, %114, %115 : vector<128x1xi32>
    %117 = arith.extui %116 : vector<128x1xi1> to vector<128x1xi32>
    %118 = arith.sitofp %117 : vector<128x1xi32> to vector<128x1xf32>
    %119 = tpu.iota {dimensions = array<i32: 0>} : vector<128x1xi32>
    %c0_i32 = arith.constant 0 : i32
    %120 = vector.broadcast %c0_i32 : i32 to vector<128x1xi32>
    %121 = arith.cmpi ne, %119, %120 : vector<128x1xi32>
    %122 = arith.extui %121 : vector<128x1xi1> to vector<128x1xi32>
    %123 = arith.sitofp %122 : vector<128x1xi32> to vector<128x1xf32>
    %124 = tpu.iota {dimensions = array<i32: 1>} : vector<1x128xi32>
    %c127_i32_42 = arith.constant 127 : i32
    %125 = vector.broadcast %c127_i32_42 : i32 to vector<1x128xi32>
    %126 = arith.cmpi ne, %124, %125 : vector<1x128xi32>
    %127 = arith.extui %126 : vector<1x128xi1> to vector<1x128xi32>
    %128 = arith.sitofp %127 : vector<1x128xi32> to vector<1x128xf32>
    %129 = tpu.iota {dimensions = array<i32: 1>} : vector<1x128xi32>
    %c0_i32_43 = arith.constant 0 : i32
    %130 = vector.broadcast %c0_i32_43 : i32 to vector<1x128xi32>
    %131 = arith.cmpi ne, %129, %130 : vector<1x128xi32>
    %132 = arith.extui %131 : vector<1x128xi1> to vector<1x128xi32>
    %133 = arith.sitofp %132 : vector<1x128xi32> to vector<1x128xf32>
    %134 = tpu.iota {dimensions = array<i32: 0>} : vector<64x1xi32>
    %c63_i32 = arith.constant 63 : i32
    %135 = vector.broadcast %c63_i32 : i32 to vector<64x1xi32>
    %136 = arith.cmpi ne, %134, %135 : vector<64x1xi32>
    %137 = arith.extui %136 : vector<64x1xi1> to vector<64x1xi32>
    %138 = arith.sitofp %137 : vector<64x1xi32> to vector<64x1xf32>
    %139 = tpu.iota {dimensions = array<i32: 0>} : vector<64x1xi32>
    %c0_i32_44 = arith.constant 0 : i32
    %140 = vector.broadcast %c0_i32_44 : i32 to vector<64x1xi32>
    %141 = arith.cmpi ne, %139, %140 : vector<64x1xi32>
    %142 = arith.extui %141 : vector<64x1xi1> to vector<64x1xi32>
    %143 = arith.sitofp %142 : vector<64x1xi32> to vector<64x1xf32>
    %c0_i32_45 = arith.constant 0 : i32
    %c4_i32 = arith.constant 4 : i32
    %144 = arith.addi %c0_i32_45, %c4_i32 : i32
    %c1_i32 = arith.constant 1 : i32
    scf.for %arg14 = %c0_i32_45 to %144 step %c1_i32  : i32 {
      %c1_i32_47 = arith.constant 1 : i32
      %145 = arith.muli %arg14, %c1_i32_47 : i32
      %c0_i32_48 = arith.constant 0 : i32
      %146 = arith.addi %c0_i32_48, %145 : i32
      %cst = arith.constant 0.000000e+00 : f32
      %147 = vector.broadcast %cst : f32 to vector<128x128xf32>
      %148 = vector.broadcast %36 : f32 to vector<128x128xf32>
      %149 = arith.addf %147, %148 : vector<128x128xf32>
      %cst_49 = arith.constant 0.000000e+00 : f32
      %150 = vector.broadcast %cst_49 : f32 to vector<128x128xf32>
      %151 = vector.broadcast %37 : f32 to vector<128x128xf32>
      %152 = arith.addf %150, %151 : vector<128x128xf32>
      %153 = arith.index_cast %146 : i32 to index
      %c0_50 = arith.constant 0 : index
      %c0_51 = arith.constant 0 : index
      %154 = vector.load %arg1[%153, %c0_50, %c0_51] : memref<4x128x256xf32, #tpu.memory_space<vmem>>, vector<1x128x256xf32>
      %155 = vector.shape_cast %154 : vector<1x128x256xf32> to vector<128x256xf32>
      %c0_52 = arith.constant 0 : index
      %c0_53 = arith.constant 0 : index
      %c0_54 = arith.constant 0 : index
      %156 = vector.load %arg2[%c0_52, %c0_53, %c0_54] : memref<2x256x128xf32, #tpu.memory_space<vmem>>, vector<1x256x128xf32>
      %157 = vector.shape_cast %156 : vector<1x256x128xf32> to vector<256x128xf32>
      %cst_55 = arith.constant dense<0.000000e+00> : vector<128x128xf32>
      %158 = tpu.matmul %155, %157, %cst_55 {dimension_numbers = #tpu.dot_dimension_numbers<[1], [0], [0], [1], [0, 0, 1, 1], [], []>} : vector<128x256xf32>, vector<256x128xf32>, vector<128x128xf32> -> vector<128x128xf32>
      %c1_i32_56 = arith.constant 1 : i32
      %159 = tpu.dynamic_rotate %158 by %c1_i32_56 dim 0 : vector<128x128xf32>, i32 -> vector<128x128xf32>
      %160 = vector.broadcast %123 : vector<128x1xf32> to vector<128x128xf32>
      %161 = arith.mulf %159, %160 : vector<128x128xf32>
      %c1_i32_57 = arith.constant 1 : i32
      %162 = tpu.dynamic_rotate %161 by %c1_i32_57 dim 1 : vector<128x128xf32>, i32 -> vector<128x128xf32>
      %163 = vector.broadcast %133 : vector<1x128xf32> to vector<128x128xf32>
      %164 = arith.mulf %162, %163 : vector<128x128xf32>
      %165 = vector.broadcast %0 : f32 to vector<128x128xf32>
      %166 = arith.mulf %165, %164 : vector<128x128xf32>
      %167 = arith.addf %149, %166 : vector<128x128xf32>
      %168 = vector.broadcast %18 : f32 to vector<128x128xf32>
      %169 = arith.mulf %168, %164 : vector<128x128xf32>
      %170 = arith.addf %152, %169 : vector<128x128xf32>
      %171 = vector.broadcast %1 : f32 to vector<128x128xf32>
      %172 = arith.mulf %171, %161 : vector<128x128xf32>
      %173 = arith.addf %167, %172 : vector<128x128xf32>
      %174 = vector.broadcast %19 : f32 to vector<128x128xf32>
      %175 = arith.mulf %174, %161 : vector<128x128xf32>
      %176 = arith.addf %170, %175 : vector<128x128xf32>
      %c127_i32_58 = arith.constant 127 : i32
      %177 = tpu.dynamic_rotate %161 by %c127_i32_58 dim 1 : vector<128x128xf32>, i32 -> vector<128x128xf32>
      %178 = vector.broadcast %128 : vector<1x128xf32> to vector<128x128xf32>
      %179 = arith.mulf %177, %178 : vector<128x128xf32>
      %180 = vector.broadcast %2 : f32 to vector<128x128xf32>
      %181 = arith.mulf %180, %179 : vector<128x128xf32>
      %182 = arith.addf %173, %181 : vector<128x128xf32>
      %183 = vector.broadcast %20 : f32 to vector<128x128xf32>
      %184 = arith.mulf %183, %179 : vector<128x128xf32>
      %185 = arith.addf %176, %184 : vector<128x128xf32>
      %c1_i32_59 = arith.constant 1 : i32
      %186 = tpu.dynamic_rotate %158 by %c1_i32_59 dim 1 : vector<128x128xf32>, i32 -> vector<128x128xf32>
      %187 = vector.broadcast %133 : vector<1x128xf32> to vector<128x128xf32>
      %188 = arith.mulf %186, %187 : vector<128x128xf32>
      %189 = vector.broadcast %3 : f32 to vector<128x128xf32>
      %190 = arith.mulf %189, %188 : vector<128x128xf32>
      %191 = arith.addf %182, %190 : vector<128x128xf32>
      %192 = vector.broadcast %21 : f32 to vector<128x128xf32>
      %193 = arith.mulf %192, %188 : vector<128x128xf32>
      %194 = arith.addf %185, %193 : vector<128x128xf32>
      %195 = vector.broadcast %4 : f32 to vector<128x128xf32>
      %196 = arith.mulf %195, %158 : vector<128x128xf32>
      %197 = arith.addf %191, %196 : vector<128x128xf32>
      %198 = vector.broadcast %22 : f32 to vector<128x128xf32>
      %199 = arith.mulf %198, %158 : vector<128x128xf32>
      %200 = arith.addf %194, %199 : vector<128x128xf32>
      %c127_i32_60 = arith.constant 127 : i32
      %201 = tpu.dynamic_rotate %158 by %c127_i32_60 dim 1 : vector<128x128xf32>, i32 -> vector<128x128xf32>
      %202 = vector.broadcast %128 : vector<1x128xf32> to vector<128x128xf32>
      %203 = arith.mulf %201, %202 : vector<128x128xf32>
      %204 = vector.broadcast %5 : f32 to vector<128x128xf32>
      %205 = arith.mulf %204, %203 : vector<128x128xf32>
      %206 = arith.addf %197, %205 : vector<128x128xf32>
      %207 = vector.broadcast %23 : f32 to vector<128x128xf32>
      %208 = arith.mulf %207, %203 : vector<128x128xf32>
      %209 = arith.addf %200, %208 : vector<128x128xf32>
      %c127_i32_61 = arith.constant 127 : i32
      %210 = tpu.dynamic_rotate %158 by %c127_i32_61 dim 0 : vector<128x128xf32>, i32 -> vector<128x128xf32>
      %211 = vector.broadcast %118 : vector<128x1xf32> to vector<128x128xf32>
      %212 = arith.mulf %210, %211 : vector<128x128xf32>
      %c1_i32_62 = arith.constant 1 : i32
      %213 = tpu.dynamic_rotate %212 by %c1_i32_62 dim 1 : vector<128x128xf32>, i32 -> vector<128x128xf32>
      %214 = vector.broadcast %133 : vector<1x128xf32> to vector<128x128xf32>
      %215 = arith.mulf %213, %214 : vector<128x128xf32>
      %216 = vector.broadcast %6 : f32 to vector<128x128xf32>
      %217 = arith.mulf %216, %215 : vector<128x128xf32>
      %218 = arith.addf %206, %217 : vector<128x128xf32>
      %219 = vector.broadcast %24 : f32 to vector<128x128xf32>
      %220 = arith.mulf %219, %215 : vector<128x128xf32>
      %221 = arith.addf %209, %220 : vector<128x128xf32>
      %222 = vector.broadcast %7 : f32 to vector<128x128xf32>
      %223 = arith.mulf %222, %212 : vector<128x128xf32>
      %224 = arith.addf %218, %223 : vector<128x128xf32>
      %225 = vector.broadcast %25 : f32 to vector<128x128xf32>
      %226 = arith.mulf %225, %212 : vector<128x128xf32>
      %227 = arith.addf %221, %226 : vector<128x128xf32>
      %c127_i32_63 = arith.constant 127 : i32
      %228 = tpu.dynamic_rotate %212 by %c127_i32_63 dim 1 : vector<128x128xf32>, i32 -> vector<128x128xf32>
      %229 = vector.broadcast %128 : vector<1x128xf32> to vector<128x128xf32>
      %230 = arith.mulf %228, %229 : vector<128x128xf32>
      %231 = vector.broadcast %8 : f32 to vector<128x128xf32>
      %232 = arith.mulf %231, %230 : vector<128x128xf32>
      %233 = arith.addf %224, %232 : vector<128x128xf32>
      %234 = vector.broadcast %26 : f32 to vector<128x128xf32>
      %235 = arith.mulf %234, %230 : vector<128x128xf32>
      %236 = arith.addf %227, %235 : vector<128x128xf32>
      %237 = arith.index_cast %146 : i32 to index
      %c0_64 = arith.constant 0 : index
      %c0_65 = arith.constant 0 : index
      %238 = vector.load %arg1[%237, %c0_64, %c0_65] : memref<4x128x256xf32, #tpu.memory_space<vmem>>, vector<1x128x256xf32>
      %239 = vector.shape_cast %238 : vector<1x128x256xf32> to vector<128x256xf32>
      %c1_66 = arith.constant 1 : index
      %c0_67 = arith.constant 0 : index
      %c0_68 = arith.constant 0 : index
      %240 = vector.load %arg2[%c1_66, %c0_67, %c0_68] : memref<2x256x128xf32, #tpu.memory_space<vmem>>, vector<1x256x128xf32>
      %241 = vector.shape_cast %240 : vector<1x256x128xf32> to vector<256x128xf32>
      %cst_69 = arith.constant dense<0.000000e+00> : vector<128x128xf32>
      %242 = tpu.matmul %239, %241, %cst_69 {dimension_numbers = #tpu.dot_dimension_numbers<[1], [0], [0], [1], [0, 0, 1, 1], [], []>} : vector<128x256xf32>, vector<256x128xf32>, vector<128x128xf32> -> vector<128x128xf32>
      %c1_i32_70 = arith.constant 1 : i32
      %243 = tpu.dynamic_rotate %242 by %c1_i32_70 dim 0 : vector<128x128xf32>, i32 -> vector<128x128xf32>
      %244 = vector.broadcast %123 : vector<128x1xf32> to vector<128x128xf32>
      %245 = arith.mulf %243, %244 : vector<128x128xf32>
      %c1_i32_71 = arith.constant 1 : i32
      %246 = tpu.dynamic_rotate %245 by %c1_i32_71 dim 1 : vector<128x128xf32>, i32 -> vector<128x128xf32>
      %247 = vector.broadcast %133 : vector<1x128xf32> to vector<128x128xf32>
      %248 = arith.mulf %246, %247 : vector<128x128xf32>
      %249 = vector.broadcast %9 : f32 to vector<128x128xf32>
      %250 = arith.mulf %249, %248 : vector<128x128xf32>
      %251 = arith.addf %233, %250 : vector<128x128xf32>
      %252 = vector.broadcast %27 : f32 to vector<128x128xf32>
      %253 = arith.mulf %252, %248 : vector<128x128xf32>
      %254 = arith.addf %236, %253 : vector<128x128xf32>
      %255 = vector.broadcast %10 : f32 to vector<128x128xf32>
      %256 = arith.mulf %255, %245 : vector<128x128xf32>
      %257 = arith.addf %251, %256 : vector<128x128xf32>
      %258 = vector.broadcast %28 : f32 to vector<128x128xf32>
      %259 = arith.mulf %258, %245 : vector<128x128xf32>
      %260 = arith.addf %254, %259 : vector<128x128xf32>
      %c127_i32_72 = arith.constant 127 : i32
      %261 = tpu.dynamic_rotate %245 by %c127_i32_72 dim 1 : vector<128x128xf32>, i32 -> vector<128x128xf32>
      %262 = vector.broadcast %128 : vector<1x128xf32> to vector<128x128xf32>
      %263 = arith.mulf %261, %262 : vector<128x128xf32>
      %264 = vector.broadcast %11 : f32 to vector<128x128xf32>
      %265 = arith.mulf %264, %263 : vector<128x128xf32>
      %266 = arith.addf %257, %265 : vector<128x128xf32>
      %267 = vector.broadcast %29 : f32 to vector<128x128xf32>
      %268 = arith.mulf %267, %263 : vector<128x128xf32>
      %269 = arith.addf %260, %268 : vector<128x128xf32>
      %c1_i32_73 = arith.constant 1 : i32
      %270 = tpu.dynamic_rotate %242 by %c1_i32_73 dim 1 : vector<128x128xf32>, i32 -> vector<128x128xf32>
      %271 = vector.broadcast %133 : vector<1x128xf32> to vector<128x128xf32>
      %272 = arith.mulf %270, %271 : vector<128x128xf32>
      %273 = vector.broadcast %12 : f32 to vector<128x128xf32>
      %274 = arith.mulf %273, %272 : vector<128x128xf32>
      %275 = arith.addf %266, %274 : vector<128x128xf32>
      %276 = vector.broadcast %30 : f32 to vector<128x128xf32>
      %277 = arith.mulf %276, %272 : vector<128x128xf32>
      %278 = arith.addf %269, %277 : vector<128x128xf32>
      %279 = vector.broadcast %13 : f32 to vector<128x128xf32>
      %280 = arith.mulf %279, %242 : vector<128x128xf32>
      %281 = arith.addf %275, %280 : vector<128x128xf32>
      %282 = vector.broadcast %31 : f32 to vector<128x128xf32>
      %283 = arith.mulf %282, %242 : vector<128x128xf32>
      %284 = arith.addf %278, %283 : vector<128x128xf32>
      %c127_i32_74 = arith.constant 127 : i32
      %285 = tpu.dynamic_rotate %242 by %c127_i32_74 dim 1 : vector<128x128xf32>, i32 -> vector<128x128xf32>
      %286 = vector.broadcast %128 : vector<1x128xf32> to vector<128x128xf32>
      %287 = arith.mulf %285, %286 : vector<128x128xf32>
      %288 = vector.broadcast %14 : f32 to vector<128x128xf32>
      %289 = arith.mulf %288, %287 : vector<128x128xf32>
      %290 = arith.addf %281, %289 : vector<128x128xf32>
      %291 = vector.broadcast %32 : f32 to vector<128x128xf32>
      %292 = arith.mulf %291, %287 : vector<128x128xf32>
      %293 = arith.addf %284, %292 : vector<128x128xf32>
      %c127_i32_75 = arith.constant 127 : i32
      %294 = tpu.dynamic_rotate %242 by %c127_i32_75 dim 0 : vector<128x128xf32>, i32 -> vector<128x128xf32>
      %295 = vector.broadcast %118 : vector<128x1xf32> to vector<128x128xf32>
      %296 = arith.mulf %294, %295 : vector<128x128xf32>
      %c1_i32_76 = arith.constant 1 : i32
      %297 = tpu.dynamic_rotate %296 by %c1_i32_76 dim 1 : vector<128x128xf32>, i32 -> vector<128x128xf32>
      %298 = vector.broadcast %133 : vector<1x128xf32> to vector<128x128xf32>
      %299 = arith.mulf %297, %298 : vector<128x128xf32>
      %300 = vector.broadcast %15 : f32 to vector<128x128xf32>
      %301 = arith.mulf %300, %299 : vector<128x128xf32>
      %302 = arith.addf %290, %301 : vector<128x128xf32>
      %303 = vector.broadcast %33 : f32 to vector<128x128xf32>
      %304 = arith.mulf %303, %299 : vector<128x128xf32>
      %305 = arith.addf %293, %304 : vector<128x128xf32>
      %306 = vector.broadcast %16 : f32 to vector<128x128xf32>
      %307 = arith.mulf %306, %296 : vector<128x128xf32>
      %308 = arith.addf %302, %307 : vector<128x128xf32>
      %309 = vector.broadcast %34 : f32 to vector<128x128xf32>
      %310 = arith.mulf %309, %296 : vector<128x128xf32>
      %311 = arith.addf %305, %310 : vector<128x128xf32>
      %c127_i32_77 = arith.constant 127 : i32
      %312 = tpu.dynamic_rotate %296 by %c127_i32_77 dim 1 : vector<128x128xf32>, i32 -> vector<128x128xf32>
      %313 = vector.broadcast %128 : vector<1x128xf32> to vector<128x128xf32>
      %314 = arith.mulf %312, %313 : vector<128x128xf32>
      %315 = vector.broadcast %17 : f32 to vector<128x128xf32>
      %316 = arith.mulf %315, %314 : vector<128x128xf32>
      %317 = arith.addf %308, %316 : vector<128x128xf32>
      %318 = vector.broadcast %35 : f32 to vector<128x128xf32>
      %319 = arith.mulf %318, %314 : vector<128x128xf32>
      %320 = arith.addf %311, %319 : vector<128x128xf32>
      %c127_i32_78 = arith.constant 127 : i32
      %321 = tpu.dynamic_rotate %317 by %c127_i32_78 dim 1 : vector<128x128xf32>, i32 -> vector<128x128xf32>
      %322 = arith.maximumf %317, %321 : vector<128x128xf32>
      %c127_i32_79 = arith.constant 127 : i32
      %323 = tpu.dynamic_rotate %320 by %c127_i32_79 dim 1 : vector<128x128xf32>, i32 -> vector<128x128xf32>
      %324 = arith.maximumf %320, %323 : vector<128x128xf32>
      %325 = tpu.concatenate %322, %324 in 1 : vector<128x128xf32>, vector<128x128xf32> -> vector<128x256xf32>
      %c0_80 = arith.constant 0 : index
      %c0_81 = arith.constant 0 : index
      %326 = vector.load %arg3[%c0_80, %c0_81] : memref<64x128xf32, #tpu.memory_space<vmem>>, vector<64x128xf32>
      %cst_82 = arith.constant dense<0.000000e+00> : vector<64x256xf32>
      %327 = tpu.matmul %326, %325, %cst_82 {dimension_numbers = #tpu.dot_dimension_numbers<[1], [0], [0], [1], [0, 0, 1, 1], [], []>} : vector<64x128xf32>, vector<128x256xf32>, vector<64x256xf32> -> vector<64x256xf32>
      %c0_83 = arith.constant 0 : index
      %c0_84 = arith.constant 0 : index
      %328 = vector.load %arg4[%c0_83, %c0_84] : memref<64x128xf32, #tpu.memory_space<vmem>>, vector<64x128xf32>
      %cst_85 = arith.constant dense<0.000000e+00> : vector<64x256xf32>
      %329 = tpu.matmul %328, %325, %cst_85 {dimension_numbers = #tpu.dot_dimension_numbers<[1], [0], [0], [1], [0, 0, 1, 1], [], []>} : vector<64x128xf32>, vector<128x256xf32>, vector<64x256xf32> -> vector<64x256xf32>
      %330 = arith.maximumf %327, %329 : vector<64x256xf32>
      %331 = vector.extract_strided_slice %330 {offsets = [0, 0], sizes = [64, 128], strides = [1, 1]} : vector<64x256xf32> to vector<64x128xf32>
      %c0_86 = arith.constant 0 : index
      %c0_87 = arith.constant 0 : index
      %332 = vector.load %arg5[%c0_86, %c0_87] : memref<128x128xf32, #tpu.memory_space<vmem>>, vector<128x128xf32>
      %cst_88 = arith.constant dense<0.000000e+00> : vector<64x128xf32>
      %333 = tpu.matmul %331, %332, %cst_88 {dimension_numbers = #tpu.dot_dimension_numbers<[1], [0], [0], [1], [0, 0, 1, 1], [], []>} : vector<64x128xf32>, vector<128x128xf32>, vector<64x128xf32> -> vector<64x128xf32>
      %334 = vector.extract_strided_slice %330 {offsets = [0, 128], sizes = [64, 128], strides = [1, 1]} : vector<64x256xf32> to vector<64x128xf32>
      %c0_89 = arith.constant 0 : index
      %c0_90 = arith.constant 0 : index
      %335 = vector.load %arg5[%c0_89, %c0_90] : memref<128x128xf32, #tpu.memory_space<vmem>>, vector<128x128xf32>
      %cst_91 = arith.constant dense<0.000000e+00> : vector<64x128xf32>
      %336 = tpu.matmul %334, %335, %cst_91 {dimension_numbers = #tpu.dot_dimension_numbers<[1], [0], [0], [1], [0, 0, 1, 1], [], []>} : vector<64x128xf32>, vector<128x128xf32>, vector<64x128xf32> -> vector<64x128xf32>
      %cst_92 = arith.constant 0.000000e+00 : f32
      %337 = vector.broadcast %cst_92 : f32 to vector<64x128xf32>
      %338 = vector.broadcast %110 : f32 to vector<64x128xf32>
      %339 = arith.addf %337, %338 : vector<64x128xf32>
      %cst_93 = arith.constant 0.000000e+00 : f32
      %340 = vector.broadcast %cst_93 : f32 to vector<64x128xf32>
      %341 = vector.broadcast %111 : f32 to vector<64x128xf32>
      %342 = arith.addf %340, %341 : vector<64x128xf32>
      %cst_94 = arith.constant 0.000000e+00 : f32
      %343 = vector.broadcast %cst_94 : f32 to vector<64x128xf32>
      %344 = vector.broadcast %112 : f32 to vector<64x128xf32>
      %345 = arith.addf %343, %344 : vector<64x128xf32>
      %cst_95 = arith.constant 0.000000e+00 : f32
      %346 = vector.broadcast %cst_95 : f32 to vector<64x128xf32>
      %347 = vector.broadcast %113 : f32 to vector<64x128xf32>
      %348 = arith.addf %346, %347 : vector<64x128xf32>
      %c1_i32_96 = arith.constant 1 : i32
      %349 = tpu.dynamic_rotate %333 by %c1_i32_96 dim 0 : vector<64x128xf32>, i32 -> vector<64x128xf32>
      %350 = vector.broadcast %143 : vector<64x1xf32> to vector<64x128xf32>
      %351 = arith.mulf %349, %350 : vector<64x128xf32>
      %c1_i32_97 = arith.constant 1 : i32
      %352 = tpu.dynamic_rotate %351 by %c1_i32_97 dim 1 : vector<64x128xf32>, i32 -> vector<64x128xf32>
      %353 = vector.broadcast %38 : f32 to vector<64x128xf32>
      %354 = arith.mulf %353, %352 : vector<64x128xf32>
      %355 = arith.addf %339, %354 : vector<64x128xf32>
      %356 = vector.broadcast %56 : f32 to vector<64x128xf32>
      %357 = arith.mulf %356, %352 : vector<64x128xf32>
      %358 = arith.addf %342, %357 : vector<64x128xf32>
      %359 = vector.broadcast %74 : f32 to vector<64x128xf32>
      %360 = arith.mulf %359, %352 : vector<64x128xf32>
      %361 = arith.addf %345, %360 : vector<64x128xf32>
      %362 = vector.broadcast %92 : f32 to vector<64x128xf32>
      %363 = arith.mulf %362, %352 : vector<64x128xf32>
      %364 = arith.addf %348, %363 : vector<64x128xf32>
      %365 = vector.broadcast %39 : f32 to vector<64x128xf32>
      %366 = arith.mulf %365, %351 : vector<64x128xf32>
      %367 = arith.addf %355, %366 : vector<64x128xf32>
      %368 = vector.broadcast %57 : f32 to vector<64x128xf32>
      %369 = arith.mulf %368, %351 : vector<64x128xf32>
      %370 = arith.addf %358, %369 : vector<64x128xf32>
      %371 = vector.broadcast %75 : f32 to vector<64x128xf32>
      %372 = arith.mulf %371, %351 : vector<64x128xf32>
      %373 = arith.addf %361, %372 : vector<64x128xf32>
      %374 = vector.broadcast %93 : f32 to vector<64x128xf32>
      %375 = arith.mulf %374, %351 : vector<64x128xf32>
      %376 = arith.addf %364, %375 : vector<64x128xf32>
      %c127_i32_98 = arith.constant 127 : i32
      %377 = tpu.dynamic_rotate %351 by %c127_i32_98 dim 1 : vector<64x128xf32>, i32 -> vector<64x128xf32>
      %378 = vector.broadcast %40 : f32 to vector<64x128xf32>
      %379 = arith.mulf %378, %377 : vector<64x128xf32>
      %380 = arith.addf %367, %379 : vector<64x128xf32>
      %381 = vector.broadcast %58 : f32 to vector<64x128xf32>
      %382 = arith.mulf %381, %377 : vector<64x128xf32>
      %383 = arith.addf %370, %382 : vector<64x128xf32>
      %384 = vector.broadcast %76 : f32 to vector<64x128xf32>
      %385 = arith.mulf %384, %377 : vector<64x128xf32>
      %386 = arith.addf %373, %385 : vector<64x128xf32>
      %387 = vector.broadcast %94 : f32 to vector<64x128xf32>
      %388 = arith.mulf %387, %377 : vector<64x128xf32>
      %389 = arith.addf %376, %388 : vector<64x128xf32>
      %c1_i32_99 = arith.constant 1 : i32
      %390 = tpu.dynamic_rotate %333 by %c1_i32_99 dim 1 : vector<64x128xf32>, i32 -> vector<64x128xf32>
      %391 = vector.broadcast %41 : f32 to vector<64x128xf32>
      %392 = arith.mulf %391, %390 : vector<64x128xf32>
      %393 = arith.addf %380, %392 : vector<64x128xf32>
      %394 = vector.broadcast %59 : f32 to vector<64x128xf32>
      %395 = arith.mulf %394, %390 : vector<64x128xf32>
      %396 = arith.addf %383, %395 : vector<64x128xf32>
      %397 = vector.broadcast %77 : f32 to vector<64x128xf32>
      %398 = arith.mulf %397, %390 : vector<64x128xf32>
      %399 = arith.addf %386, %398 : vector<64x128xf32>
      %400 = vector.broadcast %95 : f32 to vector<64x128xf32>
      %401 = arith.mulf %400, %390 : vector<64x128xf32>
      %402 = arith.addf %389, %401 : vector<64x128xf32>
      %403 = vector.broadcast %42 : f32 to vector<64x128xf32>
      %404 = arith.mulf %403, %333 : vector<64x128xf32>
      %405 = arith.addf %393, %404 : vector<64x128xf32>
      %406 = vector.broadcast %60 : f32 to vector<64x128xf32>
      %407 = arith.mulf %406, %333 : vector<64x128xf32>
      %408 = arith.addf %396, %407 : vector<64x128xf32>
      %409 = vector.broadcast %78 : f32 to vector<64x128xf32>
      %410 = arith.mulf %409, %333 : vector<64x128xf32>
      %411 = arith.addf %399, %410 : vector<64x128xf32>
      %412 = vector.broadcast %96 : f32 to vector<64x128xf32>
      %413 = arith.mulf %412, %333 : vector<64x128xf32>
      %414 = arith.addf %402, %413 : vector<64x128xf32>
      %c127_i32_100 = arith.constant 127 : i32
      %415 = tpu.dynamic_rotate %333 by %c127_i32_100 dim 1 : vector<64x128xf32>, i32 -> vector<64x128xf32>
      %416 = vector.broadcast %43 : f32 to vector<64x128xf32>
      %417 = arith.mulf %416, %415 : vector<64x128xf32>
      %418 = arith.addf %405, %417 : vector<64x128xf32>
      %419 = vector.broadcast %61 : f32 to vector<64x128xf32>
      %420 = arith.mulf %419, %415 : vector<64x128xf32>
      %421 = arith.addf %408, %420 : vector<64x128xf32>
      %422 = vector.broadcast %79 : f32 to vector<64x128xf32>
      %423 = arith.mulf %422, %415 : vector<64x128xf32>
      %424 = arith.addf %411, %423 : vector<64x128xf32>
      %425 = vector.broadcast %97 : f32 to vector<64x128xf32>
      %426 = arith.mulf %425, %415 : vector<64x128xf32>
      %427 = arith.addf %414, %426 : vector<64x128xf32>
      %c63_i32_101 = arith.constant 63 : i32
      %428 = tpu.dynamic_rotate %333 by %c63_i32_101 dim 0 : vector<64x128xf32>, i32 -> vector<64x128xf32>
      %429 = vector.broadcast %138 : vector<64x1xf32> to vector<64x128xf32>
      %430 = arith.mulf %428, %429 : vector<64x128xf32>
      %c1_i32_102 = arith.constant 1 : i32
      %431 = tpu.dynamic_rotate %430 by %c1_i32_102 dim 1 : vector<64x128xf32>, i32 -> vector<64x128xf32>
      %432 = vector.broadcast %44 : f32 to vector<64x128xf32>
      %433 = arith.mulf %432, %431 : vector<64x128xf32>
      %434 = arith.addf %418, %433 : vector<64x128xf32>
      %435 = vector.broadcast %62 : f32 to vector<64x128xf32>
      %436 = arith.mulf %435, %431 : vector<64x128xf32>
      %437 = arith.addf %421, %436 : vector<64x128xf32>
      %438 = vector.broadcast %80 : f32 to vector<64x128xf32>
      %439 = arith.mulf %438, %431 : vector<64x128xf32>
      %440 = arith.addf %424, %439 : vector<64x128xf32>
      %441 = vector.broadcast %98 : f32 to vector<64x128xf32>
      %442 = arith.mulf %441, %431 : vector<64x128xf32>
      %443 = arith.addf %427, %442 : vector<64x128xf32>
      %444 = vector.broadcast %45 : f32 to vector<64x128xf32>
      %445 = arith.mulf %444, %430 : vector<64x128xf32>
      %446 = arith.addf %434, %445 : vector<64x128xf32>
      %447 = vector.broadcast %63 : f32 to vector<64x128xf32>
      %448 = arith.mulf %447, %430 : vector<64x128xf32>
      %449 = arith.addf %437, %448 : vector<64x128xf32>
      %450 = vector.broadcast %81 : f32 to vector<64x128xf32>
      %451 = arith.mulf %450, %430 : vector<64x128xf32>
      %452 = arith.addf %440, %451 : vector<64x128xf32>
      %453 = vector.broadcast %99 : f32 to vector<64x128xf32>
      %454 = arith.mulf %453, %430 : vector<64x128xf32>
      %455 = arith.addf %443, %454 : vector<64x128xf32>
      %c127_i32_103 = arith.constant 127 : i32
      %456 = tpu.dynamic_rotate %430 by %c127_i32_103 dim 1 : vector<64x128xf32>, i32 -> vector<64x128xf32>
      %457 = vector.broadcast %46 : f32 to vector<64x128xf32>
      %458 = arith.mulf %457, %456 : vector<64x128xf32>
      %459 = arith.addf %446, %458 : vector<64x128xf32>
      %460 = vector.broadcast %64 : f32 to vector<64x128xf32>
      %461 = arith.mulf %460, %456 : vector<64x128xf32>
      %462 = arith.addf %449, %461 : vector<64x128xf32>
      %463 = vector.broadcast %82 : f32 to vector<64x128xf32>
      %464 = arith.mulf %463, %456 : vector<64x128xf32>
      %465 = arith.addf %452, %464 : vector<64x128xf32>
      %466 = vector.broadcast %100 : f32 to vector<64x128xf32>
      %467 = arith.mulf %466, %456 : vector<64x128xf32>
      %468 = arith.addf %455, %467 : vector<64x128xf32>
      %c1_i32_104 = arith.constant 1 : i32
      %469 = tpu.dynamic_rotate %336 by %c1_i32_104 dim 0 : vector<64x128xf32>, i32 -> vector<64x128xf32>
      %470 = vector.broadcast %143 : vector<64x1xf32> to vector<64x128xf32>
      %471 = arith.mulf %469, %470 : vector<64x128xf32>
      %c1_i32_105 = arith.constant 1 : i32
      %472 = tpu.dynamic_rotate %471 by %c1_i32_105 dim 1 : vector<64x128xf32>, i32 -> vector<64x128xf32>
      %473 = vector.broadcast %47 : f32 to vector<64x128xf32>
      %474 = arith.mulf %473, %472 : vector<64x128xf32>
      %475 = arith.addf %459, %474 : vector<64x128xf32>
      %476 = vector.broadcast %65 : f32 to vector<64x128xf32>
      %477 = arith.mulf %476, %472 : vector<64x128xf32>
      %478 = arith.addf %462, %477 : vector<64x128xf32>
      %479 = vector.broadcast %83 : f32 to vector<64x128xf32>
      %480 = arith.mulf %479, %472 : vector<64x128xf32>
      %481 = arith.addf %465, %480 : vector<64x128xf32>
      %482 = vector.broadcast %101 : f32 to vector<64x128xf32>
      %483 = arith.mulf %482, %472 : vector<64x128xf32>
      %484 = arith.addf %468, %483 : vector<64x128xf32>
      %485 = vector.broadcast %48 : f32 to vector<64x128xf32>
      %486 = arith.mulf %485, %471 : vector<64x128xf32>
      %487 = arith.addf %475, %486 : vector<64x128xf32>
      %488 = vector.broadcast %66 : f32 to vector<64x128xf32>
      %489 = arith.mulf %488, %471 : vector<64x128xf32>
      %490 = arith.addf %478, %489 : vector<64x128xf32>
      %491 = vector.broadcast %84 : f32 to vector<64x128xf32>
      %492 = arith.mulf %491, %471 : vector<64x128xf32>
      %493 = arith.addf %481, %492 : vector<64x128xf32>
      %494 = vector.broadcast %102 : f32 to vector<64x128xf32>
      %495 = arith.mulf %494, %471 : vector<64x128xf32>
      %496 = arith.addf %484, %495 : vector<64x128xf32>
      %c127_i32_106 = arith.constant 127 : i32
      %497 = tpu.dynamic_rotate %471 by %c127_i32_106 dim 1 : vector<64x128xf32>, i32 -> vector<64x128xf32>
      %498 = vector.broadcast %49 : f32 to vector<64x128xf32>
      %499 = arith.mulf %498, %497 : vector<64x128xf32>
      %500 = arith.addf %487, %499 : vector<64x128xf32>
      %501 = vector.broadcast %67 : f32 to vector<64x128xf32>
      %502 = arith.mulf %501, %497 : vector<64x128xf32>
      %503 = arith.addf %490, %502 : vector<64x128xf32>
      %504 = vector.broadcast %85 : f32 to vector<64x128xf32>
      %505 = arith.mulf %504, %497 : vector<64x128xf32>
      %506 = arith.addf %493, %505 : vector<64x128xf32>
      %507 = vector.broadcast %103 : f32 to vector<64x128xf32>
      %508 = arith.mulf %507, %497 : vector<64x128xf32>
      %509 = arith.addf %496, %508 : vector<64x128xf32>
      %c1_i32_107 = arith.constant 1 : i32
      %510 = tpu.dynamic_rotate %336 by %c1_i32_107 dim 1 : vector<64x128xf32>, i32 -> vector<64x128xf32>
      %511 = vector.broadcast %50 : f32 to vector<64x128xf32>
      %512 = arith.mulf %511, %510 : vector<64x128xf32>
      %513 = arith.addf %500, %512 : vector<64x128xf32>
      %514 = vector.broadcast %68 : f32 to vector<64x128xf32>
      %515 = arith.mulf %514, %510 : vector<64x128xf32>
      %516 = arith.addf %503, %515 : vector<64x128xf32>
      %517 = vector.broadcast %86 : f32 to vector<64x128xf32>
      %518 = arith.mulf %517, %510 : vector<64x128xf32>
      %519 = arith.addf %506, %518 : vector<64x128xf32>
      %520 = vector.broadcast %104 : f32 to vector<64x128xf32>
      %521 = arith.mulf %520, %510 : vector<64x128xf32>
      %522 = arith.addf %509, %521 : vector<64x128xf32>
      %523 = vector.broadcast %51 : f32 to vector<64x128xf32>
      %524 = arith.mulf %523, %336 : vector<64x128xf32>
      %525 = arith.addf %513, %524 : vector<64x128xf32>
      %526 = vector.broadcast %69 : f32 to vector<64x128xf32>
      %527 = arith.mulf %526, %336 : vector<64x128xf32>
      %528 = arith.addf %516, %527 : vector<64x128xf32>
      %529 = vector.broadcast %87 : f32 to vector<64x128xf32>
      %530 = arith.mulf %529, %336 : vector<64x128xf32>
      %531 = arith.addf %519, %530 : vector<64x128xf32>
      %532 = vector.broadcast %105 : f32 to vector<64x128xf32>
      %533 = arith.mulf %532, %336 : vector<64x128xf32>
      %534 = arith.addf %522, %533 : vector<64x128xf32>
      %c127_i32_108 = arith.constant 127 : i32
      %535 = tpu.dynamic_rotate %336 by %c127_i32_108 dim 1 : vector<64x128xf32>, i32 -> vector<64x128xf32>
      %536 = vector.broadcast %52 : f32 to vector<64x128xf32>
      %537 = arith.mulf %536, %535 : vector<64x128xf32>
      %538 = arith.addf %525, %537 : vector<64x128xf32>
      %539 = vector.broadcast %70 : f32 to vector<64x128xf32>
      %540 = arith.mulf %539, %535 : vector<64x128xf32>
      %541 = arith.addf %528, %540 : vector<64x128xf32>
      %542 = vector.broadcast %88 : f32 to vector<64x128xf32>
      %543 = arith.mulf %542, %535 : vector<64x128xf32>
      %544 = arith.addf %531, %543 : vector<64x128xf32>
      %545 = vector.broadcast %106 : f32 to vector<64x128xf32>
      %546 = arith.mulf %545, %535 : vector<64x128xf32>
      %547 = arith.addf %534, %546 : vector<64x128xf32>
      %c63_i32_109 = arith.constant 63 : i32
      %548 = tpu.dynamic_rotate %336 by %c63_i32_109 dim 0 : vector<64x128xf32>, i32 -> vector<64x128xf32>
      %549 = vector.broadcast %138 : vector<64x1xf32> to vector<64x128xf32>
      %550 = arith.mulf %548, %549 : vector<64x128xf32>
      %c1_i32_110 = arith.constant 1 : i32
      %551 = tpu.dynamic_rotate %550 by %c1_i32_110 dim 1 : vector<64x128xf32>, i32 -> vector<64x128xf32>
      %552 = vector.broadcast %53 : f32 to vector<64x128xf32>
      %553 = arith.mulf %552, %551 : vector<64x128xf32>
      %554 = arith.addf %538, %553 : vector<64x128xf32>
      %555 = vector.broadcast %71 : f32 to vector<64x128xf32>
      %556 = arith.mulf %555, %551 : vector<64x128xf32>
      %557 = arith.addf %541, %556 : vector<64x128xf32>
      %558 = vector.broadcast %89 : f32 to vector<64x128xf32>
      %559 = arith.mulf %558, %551 : vector<64x128xf32>
      %560 = arith.addf %544, %559 : vector<64x128xf32>
      %561 = vector.broadcast %107 : f32 to vector<64x128xf32>
      %562 = arith.mulf %561, %551 : vector<64x128xf32>
      %563 = arith.addf %547, %562 : vector<64x128xf32>
      %564 = vector.broadcast %54 : f32 to vector<64x128xf32>
      %565 = arith.mulf %564, %550 : vector<64x128xf32>
      %566 = arith.addf %554, %565 : vector<64x128xf32>
      %567 = vector.broadcast %72 : f32 to vector<64x128xf32>
      %568 = arith.mulf %567, %550 : vector<64x128xf32>
      %569 = arith.addf %557, %568 : vector<64x128xf32>
      %570 = vector.broadcast %90 : f32 to vector<64x128xf32>
      %571 = arith.mulf %570, %550 : vector<64x128xf32>
      %572 = arith.addf %560, %571 : vector<64x128xf32>
      %573 = vector.broadcast %108 : f32 to vector<64x128xf32>
      %574 = arith.mulf %573, %550 : vector<64x128xf32>
      %575 = arith.addf %563, %574 : vector<64x128xf32>
      %c127_i32_111 = arith.constant 127 : i32
      %576 = tpu.dynamic_rotate %550 by %c127_i32_111 dim 1 : vector<64x128xf32>, i32 -> vector<64x128xf32>
      %577 = vector.broadcast %55 : f32 to vector<64x128xf32>
      %578 = arith.mulf %577, %576 : vector<64x128xf32>
      %579 = arith.addf %566, %578 : vector<64x128xf32>
      %580 = vector.broadcast %73 : f32 to vector<64x128xf32>
      %581 = arith.mulf %580, %576 : vector<64x128xf32>
      %582 = arith.addf %569, %581 : vector<64x128xf32>
      %583 = vector.broadcast %91 : f32 to vector<64x128xf32>
      %584 = arith.mulf %583, %576 : vector<64x128xf32>
      %585 = arith.addf %572, %584 : vector<64x128xf32>
      %586 = vector.broadcast %109 : f32 to vector<64x128xf32>
      %587 = arith.mulf %586, %576 : vector<64x128xf32>
      %588 = arith.addf %575, %587 : vector<64x128xf32>
      %c127_i32_112 = arith.constant 127 : i32
      %589 = tpu.dynamic_rotate %579 by %c127_i32_112 dim 1 : vector<64x128xf32>, i32 -> vector<64x128xf32>
      %590 = arith.maximumf %579, %589 : vector<64x128xf32>
      %c127_i32_113 = arith.constant 127 : i32
      %591 = tpu.dynamic_rotate %582 by %c127_i32_113 dim 1 : vector<64x128xf32>, i32 -> vector<64x128xf32>
      %592 = arith.maximumf %582, %591 : vector<64x128xf32>
      %c127_i32_114 = arith.constant 127 : i32
      %593 = tpu.dynamic_rotate %585 by %c127_i32_114 dim 1 : vector<64x128xf32>, i32 -> vector<64x128xf32>
      %594 = arith.maximumf %585, %593 : vector<64x128xf32>
      %c127_i32_115 = arith.constant 127 : i32
      %595 = tpu.dynamic_rotate %588 by %c127_i32_115 dim 1 : vector<64x128xf32>, i32 -> vector<64x128xf32>
      %596 = arith.maximumf %588, %595 : vector<64x128xf32>
      %597 = tpu.concatenate %590, %592, %594, %596 in 1 : vector<64x128xf32>, vector<64x128xf32>, vector<64x128xf32>, vector<64x128xf32> -> vector<64x512xf32>
      %c0_116 = arith.constant 0 : index
      %c0_117 = arith.constant 0 : index
      %598 = vector.load %arg6[%c0_116, %c0_117] : memref<32x64xf32, #tpu.memory_space<vmem>>, vector<32x64xf32>
      %cst_118 = arith.constant dense<0.000000e+00> : vector<32x512xf32>
      %599 = tpu.matmul %598, %597, %cst_118 {dimension_numbers = #tpu.dot_dimension_numbers<[1], [0], [0], [1], [0, 0, 1, 1], [], []>} : vector<32x64xf32>, vector<64x512xf32>, vector<32x512xf32> -> vector<32x512xf32>
      %c0_119 = arith.constant 0 : index
      %c0_120 = arith.constant 0 : index
      %600 = vector.load %arg7[%c0_119, %c0_120] : memref<32x64xf32, #tpu.memory_space<vmem>>, vector<32x64xf32>
      %cst_121 = arith.constant dense<0.000000e+00> : vector<32x512xf32>
      %601 = tpu.matmul %600, %597, %cst_121 {dimension_numbers = #tpu.dot_dimension_numbers<[1], [0], [0], [1], [0, 0, 1, 1], [], []>} : vector<32x64xf32>, vector<64x512xf32>, vector<32x512xf32> -> vector<32x512xf32>
      %602 = arith.maximumf %599, %601 : vector<32x512xf32>
      %c0_122 = arith.constant 0 : index
      %c0_123 = arith.constant 0 : index
      %603 = vector.load %arg8[%c0_122, %c0_123] : memref<512x128xf32, #tpu.memory_space<vmem>>, vector<512x128xf32>
      %cst_124 = arith.constant dense<0.000000e+00> : vector<32x128xf32>
      %604 = tpu.matmul %602, %603, %cst_124 {dimension_numbers = #tpu.dot_dimension_numbers<[1], [0], [0], [1], [0, 0, 1, 1], [], []>} : vector<32x512xf32>, vector<512x128xf32>, vector<32x128xf32> -> vector<32x128xf32>
      %605 = arith.index_cast %146 : i32 to index
      %c0_125 = arith.constant 0 : index
      %c0_126 = arith.constant 0 : index
      %606 = vector.load %arg13[%605, %c0_125, %c0_126] : memref<4x32x128xf32, #tpu.memory_space<vmem>>, vector<1x32x128xf32>
      %607 = vector.shape_cast %606 : vector<1x32x128xf32> to vector<32x128xf32>
      %608 = vector.shape_cast %604 : vector<32x128xf32> to vector<1x32x128xf32>
      tpu.vector_store %arg13[%605, %c0_125, %c0_126], %608 {strides = array<i32>} : memref<4x32x128xf32, #tpu.memory_space<vmem>>, vector<1x32x128xf32>,
    }
    %c4_i32_46 = arith.constant 4 : i32
    return
  }
  func.func @transform_0(%arg0: i32) -> (i32, i32, i32) {
    %c0_i32 = arith.constant 0 : i32
    %c0_i32_0 = arith.constant 0 : i32
    %c0_i32_1 = arith.constant 0 : i32
    return %arg0, %c0_i32, %c0_i32_0 : i32, i32, i32
  }
  func.func @transform_1(%arg0: i32) -> (i32, i32, i32) {
    %c0_i32 = arith.constant 0 : i32
    %c0_i32_0 = arith.constant 0 : i32
    %c0_i32_1 = arith.constant 0 : i32
    %c0_i32_2 = arith.constant 0 : i32
    return %c0_i32, %c0_i32_0, %c0_i32_1 : i32, i32, i32
  }
  func.func @transform_2(%arg0: i32) -> (i32, i32) {
    %c0_i32 = arith.constant 0 : i32
    %c0_i32_0 = arith.constant 0 : i32
    %c0_i32_1 = arith.constant 0 : i32
    return %c0_i32, %c0_i32_0 : i32, i32
  }
  func.func @transform_3(%arg0: i32) -> (i32, i32) {
    %c0_i32 = arith.constant 0 : i32
    %c0_i32_0 = arith.constant 0 : i32
    %c0_i32_1 = arith.constant 0 : i32
    return %c0_i32, %c0_i32_0 : i32, i32
  }
  func.func @transform_4(%arg0: i32) -> (i32, i32) {
    %c0_i32 = arith.constant 0 : i32
    %c0_i32_0 = arith.constant 0 : i32
    %c0_i32_1 = arith.constant 0 : i32
    return %c0_i32, %c0_i32_0 : i32, i32
  }
  func.func @transform_5(%arg0: i32) -> (i32, i32) {
    %c0_i32 = arith.constant 0 : i32
    %c0_i32_0 = arith.constant 0 : i32
    %c0_i32_1 = arith.constant 0 : i32
    return %c0_i32, %c0_i32_0 : i32, i32
  }
  func.func @transform_6(%arg0: i32) -> (i32, i32) {
    %c0_i32 = arith.constant 0 : i32
    %c0_i32_0 = arith.constant 0 : i32
    %c0_i32_1 = arith.constant 0 : i32
    return %c0_i32, %c0_i32_0 : i32, i32
  }
  func.func @transform_7(%arg0: i32) -> (i32, i32) {
    %c0_i32 = arith.constant 0 : i32
    %c0_i32_0 = arith.constant 0 : i32
    %c0_i32_1 = arith.constant 0 : i32
    return %c0_i32, %c0_i32_0 : i32, i32
  }
  func.func @transform_8(%arg0: i32) -> i32 {
    %c0_i32 = arith.constant 0 : i32
    %c0_i32_0 = arith.constant 0 : i32
    return %c0_i32 : i32
  }
  func.func @transform_9(%arg0: i32) -> i32 {
    %c0_i32 = arith.constant 0 : i32
    %c0_i32_0 = arith.constant 0 : i32
    return %c0_i32 : i32
  }
  func.func @transform_10(%arg0: i32) -> i32 {
    %c0_i32 = arith.constant 0 : i32
    %c0_i32_0 = arith.constant 0 : i32
    return %c0_i32 : i32
  }
  func.func @transform_11(%arg0: i32) -> i32 {
    %c0_i32 = arith.constant 0 : i32
    %c0_i32_0 = arith.constant 0 : i32
    return %c0_i32 : i32
  }
  func.func @transform_12(%arg0: i32) -> (i32, i32, i32) {
    %c0_i32 = arith.constant 0 : i32
    %c0_i32_0 = arith.constant 0 : i32
    %c0_i32_1 = arith.constant 0 : i32
    return %arg0, %c0_i32, %c0_i32_0 : i32, i32, i32
  }
}

module attributes {stable_mosaic.version = 11 : i64} {
  func.func @_fc_head_kernel(%arg0: i32, %arg1: memref<8x4096xf32, #tpu.memory_space<vmem>>, %arg2: memref<4096x128xf32, #tpu.memory_space<vmem>>, %arg3: memref<1x128xf32, #tpu.memory_space<vmem>>, %arg4: memref<128x128xf32, #tpu.memory_space<vmem>>, %arg5: memref<1x128xf32, #tpu.memory_space<vmem>>, %arg6: memref<8x128xf32, #tpu.memory_space<vmem>>) attributes {dimension_semantics = [#tpu.dimension_semantics<parallel>], iteration_bounds = array<i64: 1>, scalar_prefetch = 0 : i64, scratch_operands = 0 : i64, tpu.core_type = #tpu.core_type<tc>, window_params = [{transform_indices = @transform_0, window_bounds = array<i64: 8, 4096>}, {pipeline_mode = #tpu.pipeline_mode<synchronous>, transform_indices = @transform_1, window_bounds = array<i64: 4096, 128>}, {pipeline_mode = #tpu.pipeline_mode<synchronous>, transform_indices = @transform_2, window_bounds = array<i64: 1, 128>}, {pipeline_mode = #tpu.pipeline_mode<synchronous>, transform_indices = @transform_3, window_bounds = array<i64: 128, 128>}, {pipeline_mode = #tpu.pipeline_mode<synchronous>, transform_indices = @transform_4, window_bounds = array<i64: 1, 128>}, {transform_indices = @transform_5, window_bounds = array<i64: 8, 128>}]} {
    %c0 = arith.constant 0 : index
    %c0_0 = arith.constant 0 : index
    %0 = vector.load %arg1[%c0, %c0_0] : memref<8x4096xf32, #tpu.memory_space<vmem>>, vector<8x4096xf32>
    %c0_1 = arith.constant 0 : index
    %c0_2 = arith.constant 0 : index
    %1 = vector.load %arg2[%c0_1, %c0_2] : memref<4096x128xf32, #tpu.memory_space<vmem>>, vector<4096x128xf32>
    %cst = arith.constant dense<0.000000e+00> : vector<8x128xf32>
    %2 = tpu.matmul %0, %1, %cst {dimension_numbers = #tpu.dot_dimension_numbers<[1], [0], [0], [1], [0, 0, 1, 1], [], []>} : vector<8x4096xf32>, vector<4096x128xf32>, vector<8x128xf32> -> vector<8x128xf32>
    %c0_3 = arith.constant 0 : index
    %c0_4 = arith.constant 0 : index
    %3 = vector.load %arg3[%c0_3, %c0_4] : memref<1x128xf32, #tpu.memory_space<vmem>>, vector<1x128xf32>
    %4 = vector.broadcast %3 : vector<1x128xf32> to vector<8x128xf32>
    %5 = arith.addf %2, %4 : vector<8x128xf32>
    %cst_5 = arith.constant 1.000000e+00 : f32
    %6 = vector.broadcast %cst_5 : f32 to vector<8x128xf32>
    %7 = arith.cmpf ogt, %5, %6 : vector<8x128xf32>
    %8 = arith.extui %7 : vector<8x128xi1> to vector<8x128xi32>
    %9 = arith.sitofp %8 : vector<8x128xi32> to vector<8x128xf32>
    %c0_6 = arith.constant 0 : index
    %c0_7 = arith.constant 0 : index
    %10 = vector.load %arg4[%c0_6, %c0_7] : memref<128x128xf32, #tpu.memory_space<vmem>>, vector<128x128xf32>
    %cst_8 = arith.constant dense<0.000000e+00> : vector<8x128xf32>
    %11 = tpu.matmul %9, %10, %cst_8 {dimension_numbers = #tpu.dot_dimension_numbers<[1], [0], [0], [1], [0, 0, 1, 1], [], []>} : vector<8x128xf32>, vector<128x128xf32>, vector<8x128xf32> -> vector<8x128xf32>
    %c0_9 = arith.constant 0 : index
    %c0_10 = arith.constant 0 : index
    %12 = vector.load %arg5[%c0_9, %c0_10] : memref<1x128xf32, #tpu.memory_space<vmem>>, vector<1x128xf32>
    %13 = vector.broadcast %12 : vector<1x128xf32> to vector<8x128xf32>
    %14 = arith.addf %11, %13 : vector<8x128xf32>
    %c0_11 = arith.constant 0 : index
    %c0_12 = arith.constant 0 : index
    %15 = vector.load %arg6[%c0_11, %c0_12] : memref<8x128xf32, #tpu.memory_space<vmem>>, vector<8x128xf32>
    tpu.vector_store %arg6[%c0_11, %c0_12], %14 {strides = array<i32>} : memref<8x128xf32, #tpu.memory_space<vmem>>, vector<8x128xf32>,
    return
  }
  func.func @transform_0(%arg0: i32) -> (i32, i32) {
    %c0_i32 = arith.constant 0 : i32
    %c0_i32_0 = arith.constant 0 : i32
    return %arg0, %c0_i32 : i32, i32
  }
  func.func @transform_1(%arg0: i32) -> (i32, i32) {
    %c0_i32 = arith.constant 0 : i32
    %c0_i32_0 = arith.constant 0 : i32
    %c0_i32_1 = arith.constant 0 : i32
    return %c0_i32, %c0_i32_0 : i32, i32
  }
  func.func @transform_2(%arg0: i32) -> (i32, i32) {
    %c0_i32 = arith.constant 0 : i32
    %c0_i32_0 = arith.constant 0 : i32
    %c0_i32_1 = arith.constant 0 : i32
    return %c0_i32, %c0_i32_0 : i32, i32
  }
  func.func @transform_3(%arg0: i32) -> (i32, i32) {
    %c0_i32 = arith.constant 0 : i32
    %c0_i32_0 = arith.constant 0 : i32
    %c0_i32_1 = arith.constant 0 : i32
    return %c0_i32, %c0_i32_0 : i32, i32
  }
  func.func @transform_4(%arg0: i32) -> (i32, i32) {
    %c0_i32 = arith.constant 0 : i32
    %c0_i32_0 = arith.constant 0 : i32
    %c0_i32_1 = arith.constant 0 : i32
    return %c0_i32, %c0_i32_0 : i32, i32
  }
  func.func @transform_5(%arg0: i32) -> (i32, i32) {
    %c0_i32 = arith.constant 0 : i32
    %c0_i32_0 = arith.constant 0 : i32
    return %arg0, %c0_i32 : i32, i32
  }
}

</mosaic_0001>

<llo_original>
// kernel: snn_forward.3
$region0: #{snn_forward.3}
  #allocation0 [shape = 'u32[]', space=smem, size = 0x4, offset = 0x4, fixed_abs, tag = 'smem constant byte address 0x4 - core index']
  #allocation1 [shape = 'u32[144,128]{1,0:T(1,128)}', space=vmem, size = 0x12000, scoped, tag = 'internal scratch']
  %s0 = inlined_call_operand.vmem [shape: f32[8,4096], index: 0, kind: input, shape index: {}]
  %s1 = inlined_call_operand.vmem [shape: f32[4096,128], index: 1, kind: input, shape index: {}]
  %s2 = inlined_call_operand.vmem [shape: f32[1,128], index: 2, kind: input, shape index: {}]
  %s3 = inlined_call_operand.vmem [shape: f32[128,128], index: 3, kind: input, shape index: {}]
  %s4 = inlined_call_operand.vmem [shape: f32[1,128], index: 4, kind: input, shape index: {}]
  %s5 = inlined_call_operand.vmem [shape: f32[8,128], index: 5, kind: output, shape index: {}]
  %s6 = sld [smem:[#allocation0]]
  $region30: #{snn_forward.3} parent=0
    _
  %s8 = ssub.s32 1, %s6
  %s9 = scalar_select 0, %s8, %s6
  // Predicated region
  $region2: #{snn_forward.3} parent=0 // pred_check
    _
  $region3: #{snn_forward.3} parent=0 // pred_check_branch
    %11 = sbr.rel (0) target = $region5
  $region4: #{snn_forward.3} parent=0 // pred_region
    _
  $region5: #{snn_forward.3} parent=0 // pred_fallthru
    _
  // Predicated region
  $region6: #{snn_forward.3} parent=0 // pred_check
    _
  $region7: #{snn_forward.3} parent=0 // pred_check_branch
    %13 = sbr.rel (0) target = $region9
  $region8: #{snn_forward.3} parent=0 // pred_region
    _
  $region9: #{snn_forward.3} parent=0 // pred_fallthru
    _
  // Predicated region
  $region10: #{snn_forward.3} parent=0 // pred_check
    _
  $region11: #{snn_forward.3} parent=0 // pred_check_branch
    %15 = sbr.rel (0) target = $region13
  $region12: #{snn_forward.3} parent=0 // pred_region
    _
  $region13: #{snn_forward.3} parent=0 // pred_fallthru
    _
  // Predicated region
  $region14: #{snn_forward.3} parent=0 // pred_check
    _
  $region15: #{snn_forward.3} parent=0 // pred_check_branch
    %17 = sbr.rel (0) target = $region17
  $region16: #{snn_forward.3} parent=0 // pred_region
    _
  $region17: #{snn_forward.3} parent=0 // pred_fallthru
    _
  // Predicated region
  $region18: #{snn_forward.3} parent=0 // pred_check
    _
  $region19: #{snn_forward.3} parent=0 // pred_check_branch
    %19 = sbr.rel (0) target = $region21
  $region20: #{snn_forward.3} parent=0 // pred_region
    _
  $region21: #{snn_forward.3} parent=0 // pred_fallthru
    _
  %v20 = vld [vmem:[%s0] sm:$0xff]
  %v21 = vld [vmem:[%s0 + $0x8] sm:$0xff]
  %v22 = vld [vmem:[%s0 + $0x10] sm:$0xff]
  %v23 = vld [vmem:[%s0 + $0x18] sm:$0xff]
  %v24 = vld [vmem:[%s0 + $0x20] sm:$0xff]
  %v25 = vld [vmem:[%s0 + $0x28] sm:$0xff]
  %v26 = vld [vmem:[%s0 + $0x30] sm:$0xff]
  %v27 = vld [vmem:[%s0 + $0x38] sm:$0xff]
  %v28 = vld [vmem:[%s0 + $0x40] sm:$0xff]
  %v29 = vld [vmem:[%s0 + $0x48] sm:$0xff]
  %v30 = vld [vmem:[%s0 + $0x50] sm:$0xff]
  %v31 = vld [vmem:[%s0 + $0x58] sm:$0xff]
  %v32 = vld [vmem:[%s0 + $0x60] sm:$0xff]
  %v33 = vld [vmem:[%s0 + $0x68] sm:$0xff]
  %v34 = vld [vmem:[%s0 + $0x70] sm:$0xff]
  %v35 = vld [vmem:[%s0 + $0x78] sm:$0xff]
  %v36 = vld [vmem:[%s0 + $0x80] sm:$0xff]
  %v37 = vld [vmem:[%s0 + $0x88] sm:$0xff]
  %v38 = vld [vmem:[%s0 + $0x90] sm:$0xff]
  %v39 = vld [vmem:[%s0 + $0x98] sm:$0xff]
  %v40 = vld [vmem:[%s0 + $0xa0] sm:$0xff]
  %v41 = vld [vmem:[%s0 + $0xa8] sm:$0xff]
  %v42 = vld [vmem:[%s0 + $0xb0] sm:$0xff]
  %v43 = vld [vmem:[%s0 + $0xb8] sm:$0xff]
  %v44 = vld [vmem:[%s0 + $0xc0] sm:$0xff]
  %v45 = vld [vmem:[%s0 + $0xc8] sm:$0xff]
  %v46 = vld [vmem:[%s0 + $0xd0] sm:$0xff]
  %v47 = vld [vmem:[%s0 + $0xd8] sm:$0xff]
  %v48 = vld [vmem:[%s0 + $0xe0] sm:$0xff]
  %v49 = vld [vmem:[%s0 + $0xe8] sm:$0xff]
  %v50 = vld [vmem:[%s0 + $0xf0] sm:$0xff]
  %v51 = vld [vmem:[%s0 + $0xf8] sm:$0xff]
  %v52 = vld [vmem:[%s1] sm:$0xff]
  %v53 = vld [vmem:[%s1 + $0x8] sm:$0xff]
  %v54 = vld [vmem:[%s1 + $0x10] sm:$0xff]
  %v55 = vld [vmem:[%s1 + $0x18] sm:$0xff]
  %v56 = vld [vmem:[%s1 + $0x20] sm:$0xff]
  %v57 = vld [vmem:[%s1 + $0x28] sm:$0xff]
  %v58 = vld [vmem:[%s1 + $0x30] sm:$0xff]
  %v59 = vld [vmem:[%s1 + $0x38] sm:$0xff]
  %v60 = vld [vmem:[%s1 + $0x40] sm:$0xff]
  %v61 = vld [vmem:[%s1 + $0x48] sm:$0xff]
  %v62 = vld [vmem:[%s1 + $0x50] sm:$0xff]
  %v63 = vld [vmem:[%s1 + $0x58] sm:$0xff]
  %v64 = vld [vmem:[%s1 + $0x60] sm:$0xff]
  %v65 = vld [vmem:[%s1 + $0x68] sm:$0xff]
  %v66 = vld [vmem:[%s1 + $0x70] sm:$0xff]
  %v67 = vld [vmem:[%s1 + $0x78] sm:$0xff]
  %v68 = vld [vmem:[%s1 + $0x80] sm:$0xff]
  %v69 = vld [vmem:[%s1 + $0x88] sm:$0xff]
  %v70 = vld [vmem:[%s1 + $0x90] sm:$0xff]
  %v71 = vld [vmem:[%s1 + $0x98] sm:$0xff]
  %v72 = vld [vmem:[%s1 + $0xa0] sm:$0xff]
  %v73 = vld [vmem:[%s1 + $0xa8] sm:$0xff]
  %v74 = vld [vmem:[%s1 + $0xb0] sm:$0xff]
  %v75 = vld [vmem:[%s1 + $0xb8] sm:$0xff]
  %v76 = vld [vmem:[%s1 + $0xc0] sm:$0xff]
  %v77 = vld [vmem:[%s1 + $0xc8] sm:$0xff]
  %v78 = vld [vmem:[%s1 + $0xd0] sm:$0xff]
  %v79 = vld [vmem:[%s1 + $0xd8] sm:$0xff]
  %v80 = vld [vmem:[%s1 + $0xe0] sm:$0xff]
  %v81 = vld [vmem:[%s1 + $0xe8] sm:$0xff]
  %v82 = vld [vmem:[%s1 + $0xf0] sm:$0xff]
  %v83 = vld [vmem:[%s1 + $0xf8] sm:$0xff]
  %v84 = vld [vmem:[%s1 + $0x100] sm:$0xff]
  %v85 = vld [vmem:[%s1 + $0x108] sm:$0xff]
  %v86 = vld [vmem:[%s1 + $0x110] sm:$0xff]
  %v87 = vld [vmem:[%s1 + $0x118] sm:$0xff]
  %v88 = vld [vmem:[%s1 + $0x120] sm:$0xff]
  %v89 = vld [vmem:[%s1 + $0x128] sm:$0xff]
  %v90 = vld [vmem:[%s1 + $0x130] sm:$0xff]
  %v91 = vld [vmem:[%s1 + $0x138] sm:$0xff]
  %v92 = vld [vmem:[%s1 + $0x140] sm:$0xff]
  %v93 = vld [vmem:[%s1 + $0x148] sm:$0xff]
  %v94 = vld [vmem:[%s1 + $0x150] sm:$0xff]
  %v95 = vld [vmem:[%s1 + $0x158] sm:$0xff]
  %v96 = vld [vmem:[%s1 + $0x160] sm:$0xff]
  %v97 = vld [vmem:[%s1 + $0x168] sm:$0xff]
  %v98 = vld [vmem:[%s1 + $0x170] sm:$0xff]
  %v99 = vld [vmem:[%s1 + $0x178] sm:$0xff]
  %v100 = vld [vmem:[%s1 + $0x180] sm:$0xff]
  %v101 = vld [vmem:[%s1 + $0x188] sm:$0xff]
  %v102 = vld [vmem:[%s1 + $0x190] sm:$0xff]
  %v103 = vld [vmem:[%s1 + $0x198] sm:$0xff]
  %v104 = vld [vmem:[%s1 + $0x1a0] sm:$0xff]
  %v105 = vld [vmem:[%s1 + $0x1a8] sm:$0xff]
  %v106 = vld [vmem:[%s1 + $0x1b0] sm:$0xff]
  %v107 = vld [vmem:[%s1 + $0x1b8] sm:$0xff]
  %v108 = vld [vmem:[%s1 + $0x1c0] sm:$0xff]
  %v109 = vld [vmem:[%s1 + $0x1c8] sm:$0xff]
  %v110 = vld [vmem:[%s1 + $0x1d0] sm:$0xff]
  %v111 = vld [vmem:[%s1 + $0x1d8] sm:$0xff]
  %v112 = vld [vmem:[%s1 + $0x1e0] sm:$0xff]
  %v113 = vld [vmem:[%s1 + $0x1e8] sm:$0xff]
  %v114 = vld [vmem:[%s1 + $0x1f0] sm:$0xff]
  %v115 = vld [vmem:[%s1 + $0x1f8] sm:$0xff]
  %v116 = vld [vmem:[%s1 + $0x200] sm:$0xff]
  %v117 = vld [vmem:[%s1 + $0x208] sm:$0xff]
  %v118 = vld [vmem:[%s1 + $0x210] sm:$0xff]
  %v119 = vld [vmem:[%s1 + $0x218] sm:$0xff]
  %v120 = vld [vmem:[%s1 + $0x220] sm:$0xff]
  %v121 = vld [vmem:[%s1 + $0x228] sm:$0xff]
  %v122 = vld [vmem:[%s1 + $0x230] sm:$0xff]
  %v123 = vld [vmem:[%s1 + $0x238] sm:$0xff]
  %v124 = vld [vmem:[%s1 + $0x240] sm:$0xff]
  %v125 = vld [vmem:[%s1 + $0x248] sm:$0xff]
  %v126 = vld [vmem:[%s1 + $0x250] sm:$0xff]
  %v127 = vld [vmem:[%s1 + $0x258] sm:$0xff]
  %v128 = vld [vmem:[%s1 + $0x260] sm:$0xff]
  %v129 = vld [vmem:[%s1 + $0x268] sm:$0xff]
  %v130 = vld [vmem:[%s1 + $0x270] sm:$0xff]
  %v131 = vld [vmem:[%s1 + $0x278] sm:$0xff]
  %v132 = vld [vmem:[%s1 + $0x280] sm:$0xff]
  %v133 = vld [vmem:[%s1 + $0x288] sm:$0xff]
  %v134 = vld [vmem:[%s1 + $0x290] sm:$0xff]
  %v135 = vld [vmem:[%s1 + $0x298] sm:$0xff]
  %v136 = vld [vmem:[%s1 + $0x2a0] sm:$0xff]
  %v137 = vld [vmem:[%s1 + $0x2a8] sm:$0xff]
  %v138 = vld [vmem:[%s1 + $0x2b0] sm:$0xff]
  %v139 = vld [vmem:[%s1 + $0x2b8] sm:$0xff]
  %v140 = vld [vmem:[%s1 + $0x2c0] sm:$0xff]
  %v141 = vld [vmem:[%s1 + $0x2c8] sm:$0xff]
  %v142 = vld [vmem:[%s1 + $0x2d0] sm:$0xff]
  %v143 = vld [vmem:[%s1 + $0x2d8] sm:$0xff]
  %v144 = vld [vmem:[%s1 + $0x2e0] sm:$0xff]
  %v145 = vld [vmem:[%s1 + $0x2e8] sm:$0xff]
  %v146 = vld [vmem:[%s1 + $0x2f0] sm:$0xff]
  %v147 = vld [vmem:[%s1 + $0x2f8] sm:$0xff]
  %v148 = vld [vmem:[%s1 + $0x300] sm:$0xff]
  %v149 = vld [vmem:[%s1 + $0x308] sm:$0xff]
  %v150 = vld [vmem:[%s1 + $0x310] sm:$0xff]
  %v151 = vld [vmem:[%s1 + $0x318] sm:$0xff]
  %v152 = vld [vmem:[%s1 + $0x320] sm:$0xff]
  %v153 = vld [vmem:[%s1 + $0x328] sm:$0xff]
  %v154 = vld [vmem:[%s1 + $0x330] sm:$0xff]
  %v155 = vld [vmem:[%s1 + $0x338] sm:$0xff]
  %v156 = vld [vmem:[%s1 + $0x340] sm:$0xff]
  %v157 = vld [vmem:[%s1 + $0x348] sm:$0xff]
  %v158 = vld [vmem:[%s1 + $0x350] sm:$0xff]
  %v159 = vld [vmem:[%s1 + $0x358] sm:$0xff]
  %v160 = vld [vmem:[%s1 + $0x360] sm:$0xff]
  %v161 = vld [vmem:[%s1 + $0x368] sm:$0xff]
  %v162 = vld [vmem:[%s1 + $0x370] sm:$0xff]
  %v163 = vld [vmem:[%s1 + $0x378] sm:$0xff]
  %v164 = vld [vmem:[%s1 + $0x380] sm:$0xff]
  %v165 = vld [vmem:[%s1 + $0x388] sm:$0xff]
  %v166 = vld [vmem:[%s1 + $0x390] sm:$0xff]
  %v167 = vld [vmem:[%s1 + $0x398] sm:$0xff]
  %v168 = vld [vmem:[%s1 + $0x3a0] sm:$0xff]
  %v169 = vld [vmem:[%s1 + $0x3a8] sm:$0xff]
  %v170 = vld [vmem:[%s1 + $0x3b0] sm:$0xff]
  %v171 = vld [vmem:[%s1 + $0x3b8] sm:$0xff]
  %v172 = vld [vmem:[%s1 + $0x3c0] sm:$0xff]
  %v173 = vld [vmem:[%s1 + $0x3c8] sm:$0xff]
  %v174 = vld [vmem:[%s1 + $0x3d0] sm:$0xff]
  %v175 = vld [vmem:[%s1 + $0x3d8] sm:$0xff]
  %v176 = vld [vmem:[%s1 + $0x3e0] sm:$0xff]
  %v177 = vld [vmem:[%s1 + $0x3e8] sm:$0xff]
  %v178 = vld [vmem:[%s1 + $0x3f0] sm:$0xff]
  %v179 = vld [vmem:[%s1 + $0x3f8] sm:$0xff]
  %v180 = vld [vmem:[%s1 + $0x400] sm:$0xff]
  %v181 = vld [vmem:[%s1 + $0x408] sm:$0xff]
  %v182 = vld [vmem:[%s1 + $0x410] sm:$0xff]
  %v183 = vld [vmem:[%s1 + $0x418] sm:$0xff]
  %v184 = vld [vmem:[%s1 + $0x420] sm:$0xff]
  %v185 = vld [vmem:[%s1 + $0x428] sm:$0xff]
  %v186 = vld [vmem:[%s1 + $0x430] sm:$0xff]
  %v187 = vld [vmem:[%s1 + $0x438] sm:$0xff]
  %v188 = vld [vmem:[%s1 + $0x440] sm:$0xff]
  %v189 = vld [vmem:[%s1 + $0x448] sm:$0xff]
  %v190 = vld [vmem:[%s1 + $0x450] sm:$0xff]
  %v191 = vld [vmem:[%s1 + $0x458] sm:$0xff]
  %v192 = vld [vmem:[%s1 + $0x460] sm:$0xff]
  %v193 = vld [vmem:[%s1 + $0x468] sm:$0xff]
  %v194 = vld [vmem:[%s1 + $0x470] sm:$0xff]
  %v195 = vld [vmem:[%s1 + $0x478] sm:$0xff]
  %v196 = vld [vmem:[%s1 + $0x480] sm:$0xff]
  %v197 = vld [vmem:[%s1 + $0x488] sm:$0xff]
  %v198 = vld [vmem:[%s1 + $0x490] sm:$0xff]
  %v199 = vld [vmem:[%s1 + $0x498] sm:$0xff]
  %v200 = vld [vmem:[%s1 + $0x4a0] sm:$0xff]
  %v201 = vld [vmem:[%s1 + $0x4a8] sm:$0xff]
  %v202 = vld [vmem:[%s1 + $0x4b0] sm:$0xff]
  %v203 = vld [vmem:[%s1 + $0x4b8] sm:$0xff]
  %v204 = vld [vmem:[%s1 + $0x4c0] sm:$0xff]
  %v205 = vld [vmem:[%s1 + $0x4c8] sm:$0xff]
  %v206 = vld [vmem:[%s1 + $0x4d0] sm:$0xff]
  %v207 = vld [vmem:[%s1 + $0x4d8] sm:$0xff]
  %v208 = vld [vmem:[%s1 + $0x4e0] sm:$0xff]
  %v209 = vld [vmem:[%s1 + $0x4e8] sm:$0xff]
  %v210 = vld [vmem:[%s1 + $0x4f0] sm:$0xff]
  %v211 = vld [vmem:[%s1 + $0x4f8] sm:$0xff]
  %v212 = vld [vmem:[%s1 + $0x500] sm:$0xff]
  %v213 = vld [vmem:[%s1 + $0x508] sm:$0xff]
  %v214 = vld [vmem:[%s1 + $0x510] sm:$0xff]
  %v215 = vld [vmem:[%s1 + $0x518] sm:$0xff]
  %v216 = vld [vmem:[%s1 + $0x520] sm:$0xff]
  %v217 = vld [vmem:[%s1 + $0x528] sm:$0xff]
  %v218 = vld [vmem:[%s1 + $0x530] sm:$0xff]
  %v219 = vld [vmem:[%s1 + $0x538] sm:$0xff]
  %v220 = vld [vmem:[%s1 + $0x540] sm:$0xff]
  %v221 = vld [vmem:[%s1 + $0x548] sm:$0xff]
  %v222 = vld [vmem:[%s1 + $0x550] sm:$0xff]
  %v223 = vld [vmem:[%s1 + $0x558] sm:$0xff]
  %v224 = vld [vmem:[%s1 + $0x560] sm:$0xff]
  %v225 = vld [vmem:[%s1 + $0x568] sm:$0xff]
  %v226 = vld [vmem:[%s1 + $0x570] sm:$0xff]
  %v227 = vld [vmem:[%s1 + $0x578] sm:$0xff]
  %v228 = vld [vmem:[%s1 + $0x580] sm:$0xff]
  %v229 = vld [vmem:[%s1 + $0x588] sm:$0xff]
  %v230 = vld [vmem:[%s1 + $0x590] sm:$0xff]
  %v231 = vld [vmem:[%s1 + $0x598] sm:$0xff]
  %v232 = vld [vmem:[%s1 + $0x5a0] sm:$0xff]
  %v233 = vld [vmem:[%s1 + $0x5a8] sm:$0xff]
  %v234 = vld [vmem:[%s1 + $0x5b0] sm:$0xff]
  %v235 = vld [vmem:[%s1 + $0x5b8] sm:$0xff]
  %v236 = vld [vmem:[%s1 + $0x5c0] sm:$0xff]
  %v237 = vld [vmem:[%s1 + $0x5c8] sm:$0xff]
  %v238 = vld [vmem:[%s1 + $0x5d0] sm:$0xff]
  %v239 = vld [vmem:[%s1 + $0x5d8] sm:$0xff]
  %v240 = vld [vmem:[%s1 + $0x5e0] sm:$0xff]
  %v241 = vld [vmem:[%s1 + $0x5e8] sm:$0xff]
  %v242 = vld [vmem:[%s1 + $0x5f0] sm:$0xff]
  %v243 = vld [vmem:[%s1 + $0x5f8] sm:$0xff]
  %v244 = vld [vmem:[%s1 + $0x600] sm:$0xff]
  %v245 = vld [vmem:[%s1 + $0x608] sm:$0xff]
  %v246 = vld [vmem:[%s1 + $0x610] sm:$0xff]
  %v247 = vld [vmem:[%s1 + $0x618] sm:$0xff]
  %v248 = vld [vmem:[%s1 + $0x620] sm:$0xff]
  %v249 = vld [vmem:[%s1 + $0x628] sm:$0xff]
  %v250 = vld [vmem:[%s1 + $0x630] sm:$0xff]
  %v251 = vld [vmem:[%s1 + $0x638] sm:$0xff]
  %v252 = vld [vmem:[%s1 + $0x640] sm:$0xff]
  %v253 = vld [vmem:[%s1 + $0x648] sm:$0xff]
  %v254 = vld [vmem:[%s1 + $0x650] sm:$0xff]
  %v255 = vld [vmem:[%s1 + $0x658] sm:$0xff]
  %v256 = vld [vmem:[%s1 + $0x660] sm:$0xff]
  %v257 = vld [vmem:[%s1 + $0x668] sm:$0xff]
  %v258 = vld [vmem:[%s1 + $0x670] sm:$0xff]
  %v259 = vld [vmem:[%s1 + $0x678] sm:$0xff]
  %v260 = vld [vmem:[%s1 + $0x680] sm:$0xff]
  %v261 = vld [vmem:[%s1 + $0x688] sm:$0xff]
  %v262 = vld [vmem:[%s1 + $0x690] sm:$0xff]
  %v263 = vld [vmem:[%s1 + $0x698] sm:$0xff]
  %v264 = vld [vmem:[%s1 + $0x6a0] sm:$0xff]
  %v265 = vld [vmem:[%s1 + $0x6a8] sm:$0xff]
  %v266 = vld [vmem:[%s1 + $0x6b0] sm:$0xff]
  %v267 = vld [vmem:[%s1 + $0x6b8] sm:$0xff]
  %v268 = vld [vmem:[%s1 + $0x6c0] sm:$0xff]
  %v269 = vld [vmem:[%s1 + $0x6c8] sm:$0xff]
  %v270 = vld [vmem:[%s1 + $0x6d0] sm:$0xff]
  %v271 = vld [vmem:[%s1 + $0x6d8] sm:$0xff]
  %v272 = vld [vmem:[%s1 + $0x6e0] sm:$0xff]
  %v273 = vld [vmem:[%s1 + $0x6e8] sm:$0xff]
  %v274 = vld [vmem:[%s1 + $0x6f0] sm:$0xff]
  %v275 = vld [vmem:[%s1 + $0x6f8] sm:$0xff]
  %v276 = vld [vmem:[%s1 + $0x700] sm:$0xff]
  %v277 = vld [vmem:[%s1 + $0x708] sm:$0xff]
  %v278 = vld [vmem:[%s1 + $0x710] sm:$0xff]
  %v279 = vld [vmem:[%s1 + $0x718] sm:$0xff]
  %v280 = vld [vmem:[%s1 + $0x720] sm:$0xff]
  %v281 = vld [vmem:[%s1 + $0x728] sm:$0xff]
  %v282 = vld [vmem:[%s1 + $0x730] sm:$0xff]
  %v283 = vld [vmem:[%s1 + $0x738] sm:$0xff]
  %v284 = vld [vmem:[%s1 + $0x740] sm:$0xff]
  %v285 = vld [vmem:[%s1 + $0x748] sm:$0xff]
  %v286 = vld [vmem:[%s1 + $0x750] sm:$0xff]
  %v287 = vld [vmem:[%s1 + $0x758] sm:$0xff]
  %v288 = vld [vmem:[%s1 + $0x760] sm:$0xff]
  %v289 = vld [vmem:[%s1 + $0x768] sm:$0xff]
  %v290 = vld [vmem:[%s1 + $0x770] sm:$0xff]
  %v291 = vld [vmem:[%s1 + $0x778] sm:$0xff]
  %v292 = vld [vmem:[%s1 + $0x780] sm:$0xff]
  %v293 = vld [vmem:[%s1 + $0x788] sm:$0xff]
  %v294 = vld [vmem:[%s1 + $0x790] sm:$0xff]
  %v295 = vld [vmem:[%s1 + $0x798] sm:$0xff]
  %v296 = vld [vmem:[%s1 + $0x7a0] sm:$0xff]
  %v297 = vld [vmem:[%s1 + $0x7a8] sm:$0xff]
  %v298 = vld [vmem:[%s1 + $0x7b0] sm:$0xff]
  %v299 = vld [vmem:[%s1 + $0x7b8] sm:$0xff]
  %v300 = vld [vmem:[%s1 + $0x7c0] sm:$0xff]
  %v301 = vld [vmem:[%s1 + $0x7c8] sm:$0xff]
  %v302 = vld [vmem:[%s1 + $0x7d0] sm:$0xff]
  %v303 = vld [vmem:[%s1 + $0x7d8] sm:$0xff]
  %v304 = vld [vmem:[%s1 + $0x7e0] sm:$0xff]
  %v305 = vld [vmem:[%s1 + $0x7e8] sm:$0xff]
  %v306 = vld [vmem:[%s1 + $0x7f0] sm:$0xff]
  %v307 = vld [vmem:[%s1 + $0x7f8] sm:$0xff]
  %v308 = vld [vmem:[%s1 + $0x800] sm:$0xff]
  %v309 = vld [vmem:[%s1 + $0x808] sm:$0xff]
  %v310 = vld [vmem:[%s1 + $0x810] sm:$0xff]
  %v311 = vld [vmem:[%s1 + $0x818] sm:$0xff]
  %v312 = vld [vmem:[%s1 + $0x820] sm:$0xff]
  %v313 = vld [vmem:[%s1 + $0x828] sm:$0xff]
  %v314 = vld [vmem:[%s1 + $0x830] sm:$0xff]
  %v315 = vld [vmem:[%s1 + $0x838] sm:$0xff]
  %v316 = vld [vmem:[%s1 + $0x840] sm:$0xff]
  %v317 = vld [vmem:[%s1 + $0x848] sm:$0xff]
  %v318 = vld [vmem:[%s1 + $0x850] sm:$0xff]
  %v319 = vld [vmem:[%s1 + $0x858] sm:$0xff]
  %v320 = vld [vmem:[%s1 + $0x860] sm:$0xff]
  %v321 = vld [vmem:[%s1 + $0x868] sm:$0xff]
  %v322 = vld [vmem:[%s1 + $0x870] sm:$0xff]
  %v323 = vld [vmem:[%s1 + $0x878] sm:$0xff]
  %v324 = vld [vmem:[%s1 + $0x880] sm:$0xff]
  %v325 = vld [vmem:[%s1 + $0x888] sm:$0xff]
  %v326 = vld [vmem:[%s1 + $0x890] sm:$0xff]
  %v327 = vld [vmem:[%s1 + $0x898] sm:$0xff]
  %v328 = vld [vmem:[%s1 + $0x8a0] sm:$0xff]
  %v329 = vld [vmem:[%s1 + $0x8a8] sm:$0xff]
  %v330 = vld [vmem:[%s1 + $0x8b0] sm:$0xff]
  %v331 = vld [vmem:[%s1 + $0x8b8] sm:$0xff]
  %v332 = vld [vmem:[%s1 + $0x8c0] sm:$0xff]
  %v333 = vld [vmem:[%s1 + $0x8c8] sm:$0xff]
  %v334 = vld [vmem:[%s1 + $0x8d0] sm:$0xff]
  %v335 = vld [vmem:[%s1 + $0x8d8] sm:$0xff]
  %v336 = vld [vmem:[%s1 + $0x8e0] sm:$0xff]
  %v337 = vld [vmem:[%s1 + $0x8e8] sm:$0xff]
  %v338 = vld [vmem:[%s1 + $0x8f0] sm:$0xff]
  %v339 = vld [vmem:[%s1 + $0x8f8] sm:$0xff]
  %v340 = vld [vmem:[%s1 + $0x900] sm:$0xff]
  %v341 = vld [vmem:[%s1 + $0x908] sm:$0xff]
  %v342 = vld [vmem:[%s1 + $0x910] sm:$0xff]
  %v343 = vld [vmem:[%s1 + $0x918] sm:$0xff]
  %v344 = vld [vmem:[%s1 + $0x920] sm:$0xff]
  %v345 = vld [vmem:[%s1 + $0x928] sm:$0xff]
  %v346 = vld [vmem:[%s1 + $0x930] sm:$0xff]
  %v347 = vld [vmem:[%s1 + $0x938] sm:$0xff]
  %v348 = vld [vmem:[%s1 + $0x940] sm:$0xff]
  %v349 = vld [vmem:[%s1 + $0x948] sm:$0xff]
  %v350 = vld [vmem:[%s1 + $0x950] sm:$0xff]
  %v351 = vld [vmem:[%s1 + $0x958] sm:$0xff]
  %v352 = vld [vmem:[%s1 + $0x960] sm:$0xff]
  %v353 = vld [vmem:[%s1 + $0x968] sm:$0xff]
  %v354 = vld [vmem:[%s1 + $0x970] sm:$0xff]
  %v355 = vld [vmem:[%s1 + $0x978] sm:$0xff]
  %v356 = vld [vmem:[%s1 + $0x980] sm:$0xff]
  %v357 = vld [vmem:[%s1 + $0x988] sm:$0xff]
  %v358 = vld [vmem:[%s1 + $0x990] sm:$0xff]
  %v359 = vld [vmem:[%s1 + $0x998] sm:$0xff]
  %v360 = vld [vmem:[%s1 + $0x9a0] sm:$0xff]
  %v361 = vld [vmem:[%s1 + $0x9a8] sm:$0xff]
  %v362 = vld [vmem:[%s1 + $0x9b0] sm:$0xff]
  %v363 = vld [vmem:[%s1 + $0x9b8] sm:$0xff]
  %v364 = vld [vmem:[%s1 + $0x9c0] sm:$0xff]
  %v365 = vld [vmem:[%s1 + $0x9c8] sm:$0xff]
  %v366 = vld [vmem:[%s1 + $0x9d0] sm:$0xff]
  %v367 = vld [vmem:[%s1 + $0x9d8] sm:$0xff]
  %v368 = vld [vmem:[%s1 + $0x9e0] sm:$0xff]
  %v369 = vld [vmem:[%s1 + $0x9e8] sm:$0xff]
  %v370 = vld [vmem:[%s1 + $0x9f0] sm:$0xff]
  %v371 = vld [vmem:[%s1 + $0x9f8] sm:$0xff]
  %v372 = vld [vmem:[%s1 + $0xa00] sm:$0xff]
  %v373 = vld [vmem:[%s1 + $0xa08] sm:$0xff]
  %v374 = vld [vmem:[%s1 + $0xa10] sm:$0xff]
  %v375 = vld [vmem:[%s1 + $0xa18] sm:$0xff]
  %v376 = vld [vmem:[%s1 + $0xa20] sm:$0xff]
  %v377 = vld [vmem:[%s1 + $0xa28] sm:$0xff]
  %v378 = vld [vmem:[%s1 + $0xa30] sm:$0xff]
  %v379 = vld [vmem:[%s1 + $0xa38] sm:$0xff]
  %v380 = vld [vmem:[%s1 + $0xa40] sm:$0xff]
  %v381 = vld [vmem:[%s1 + $0xa48] sm:$0xff]
  %v382 = vld [vmem:[%s1 + $0xa50] sm:$0xff]
  %v383 = vld [vmem:[%s1 + $0xa58] sm:$0xff]
  %v384 = vld [vmem:[%s1 + $0xa60] sm:$0xff]
  %v385 = vld [vmem:[%s1 + $0xa68] sm:$0xff]
  %v386 = vld [vmem:[%s1 + $0xa70] sm:$0xff]
  %v387 = vld [vmem:[%s1 + $0xa78] sm:$0xff]
  %v388 = vld [vmem:[%s1 + $0xa80] sm:$0xff]
  %v389 = vld [vmem:[%s1 + $0xa88] sm:$0xff]
  %v390 = vld [vmem:[%s1 + $0xa90] sm:$0xff]
  %v391 = vld [vmem:[%s1 + $0xa98] sm:$0xff]
  %v392 = vld [vmem:[%s1 + $0xaa0] sm:$0xff]
  %v393 = vld [vmem:[%s1 + $0xaa8] sm:$0xff]
  %v394 = vld [vmem:[%s1 + $0xab0] sm:$0xff]
  %v395 = vld [vmem:[%s1 + $0xab8] sm:$0xff]
  %v396 = vld [vmem:[%s1 + $0xac0] sm:$0xff]
  %v397 = vld [vmem:[%s1 + $0xac8] sm:$0xff]
  %v398 = vld [vmem:[%s1 + $0xad0] sm:$0xff]
  %v399 = vld [vmem:[%s1 + $0xad8] sm:$0xff]
  %v400 = vld [vmem:[%s1 + $0xae0] sm:$0xff]
  %v401 = vld [vmem:[%s1 + $0xae8] sm:$0xff]
  %v402 = vld [vmem:[%s1 + $0xaf0] sm:$0xff]
  %v403 = vld [vmem:[%s1 + $0xaf8] sm:$0xff]
  %v404 = vld [vmem:[%s1 + $0xb00] sm:$0xff]
  %v405 = vld [vmem:[%s1 + $0xb08] sm:$0xff]
  %v406 = vld [vmem:[%s1 + $0xb10] sm:$0xff]
  %v407 = vld [vmem:[%s1 + $0xb18] sm:$0xff]
  %v408 = vld [vmem:[%s1 + $0xb20] sm:$0xff]
  %v409 = vld [vmem:[%s1 + $0xb28] sm:$0xff]
  %v410 = vld [vmem:[%s1 + $0xb30] sm:$0xff]
  %v411 = vld [vmem:[%s1 + $0xb38] sm:$0xff]
  %v412 = vld [vmem:[%s1 + $0xb40] sm:$0xff]
  %v413 = vld [vmem:[%s1 + $0xb48] sm:$0xff]
  %v414 = vld [vmem:[%s1 + $0xb50] sm:$0xff]
  %v415 = vld [vmem:[%s1 + $0xb58] sm:$0xff]
  %v416 = vld [vmem:[%s1 + $0xb60] sm:$0xff]
  %v417 = vld [vmem:[%s1 + $0xb68] sm:$0xff]
  %v418 = vld [vmem:[%s1 + $0xb70] sm:$0xff]
  %v419 = vld [vmem:[%s1 + $0xb78] sm:$0xff]
  %v420 = vld [vmem:[%s1 + $0xb80] sm:$0xff]
  %v421 = vld [vmem:[%s1 + $0xb88] sm:$0xff]
  %v422 = vld [vmem:[%s1 + $0xb90] sm:$0xff]
  %v423 = vld [vmem:[%s1 + $0xb98] sm:$0xff]
  %v424 = vld [vmem:[%s1 + $0xba0] sm:$0xff]
  %v425 = vld [vmem:[%s1 + $0xba8] sm:$0xff]
  %v426 = vld [vmem:[%s1 + $0xbb0] sm:$0xff]
  %v427 = vld [vmem:[%s1 + $0xbb8] sm:$0xff]
  %v428 = vld [vmem:[%s1 + $0xbc0] sm:$0xff]
  %v429 = vld [vmem:[%s1 + $0xbc8] sm:$0xff]
  %v430 = vld [vmem:[%s1 + $0xbd0] sm:$0xff]
  %v431 = vld [vmem:[%s1 + $0xbd8] sm:$0xff]
  %v432 = vld [vmem:[%s1 + $0xbe0] sm:$0xff]
  %v433 = vld [vmem:[%s1 + $0xbe8] sm:$0xff]
  %v434 = vld [vmem:[%s1 + $0xbf0] sm:$0xff]
  %v435 = vld [vmem:[%s1 + $0xbf8] sm:$0xff]
  %v436 = vld [vmem:[%s1 + $0xc00] sm:$0xff]
  %v437 = vld [vmem:[%s1 + $0xc08] sm:$0xff]
  %v438 = vld [vmem:[%s1 + $0xc10] sm:$0xff]
  %v439 = vld [vmem:[%s1 + $0xc18] sm:$0xff]
  %v440 = vld [vmem:[%s1 + $0xc20] sm:$0xff]
  %v441 = vld [vmem:[%s1 + $0xc28] sm:$0xff]
  %v442 = vld [vmem:[%s1 + $0xc30] sm:$0xff]
  %v443 = vld [vmem:[%s1 + $0xc38] sm:$0xff]
  %v444 = vld [vmem:[%s1 + $0xc40] sm:$0xff]
  %v445 = vld [vmem:[%s1 + $0xc48] sm:$0xff]
  %v446 = vld [vmem:[%s1 + $0xc50] sm:$0xff]
  %v447 = vld [vmem:[%s1 + $0xc58] sm:$0xff]
  %v448 = vld [vmem:[%s1 + $0xc60] sm:$0xff]
  %v449 = vld [vmem:[%s1 + $0xc68] sm:$0xff]
  %v450 = vld [vmem:[%s1 + $0xc70] sm:$0xff]
  %v451 = vld [vmem:[%s1 + $0xc78] sm:$0xff]
  %v452 = vld [vmem:[%s1 + $0xc80] sm:$0xff]
  %v453 = vld [vmem:[%s1 + $0xc88] sm:$0xff]
  %v454 = vld [vmem:[%s1 + $0xc90] sm:$0xff]
  %v455 = vld [vmem:[%s1 + $0xc98] sm:$0xff]
  %v456 = vld [vmem:[%s1 + $0xca0] sm:$0xff]
  %v457 = vld [vmem:[%s1 + $0xca8] sm:$0xff]
  %v458 = vld [vmem:[%s1 + $0xcb0] sm:$0xff]
  %v459 = vld [vmem:[%s1 + $0xcb8] sm:$0xff]
  %v460 = vld [vmem:[%s1 + $0xcc0] sm:$0xff]
  %v461 = vld [vmem:[%s1 + $0xcc8] sm:$0xff]
  %v462 = vld [vmem:[%s1 + $0xcd0] sm:$0xff]
  %v463 = vld [vmem:[%s1 + $0xcd8] sm:$0xff]
  %v464 = vld [vmem:[%s1 + $0xce0] sm:$0xff]
  %v465 = vld [vmem:[%s1 + $0xce8] sm:$0xff]
  %v466 = vld [vmem:[%s1 + $0xcf0] sm:$0xff]
  %v467 = vld [vmem:[%s1 + $0xcf8] sm:$0xff]
  %v468 = vld [vmem:[%s1 + $0xd00] sm:$0xff]
  %v469 = vld [vmem:[%s1 + $0xd08] sm:$0xff]
  %v470 = vld [vmem:[%s1 + $0xd10] sm:$0xff]
  %v471 = vld [vmem:[%s1 + $0xd18] sm:$0xff]
  %v472 = vld [vmem:[%s1 + $0xd20] sm:$0xff]
  %v473 = vld [vmem:[%s1 + $0xd28] sm:$0xff]
  %v474 = vld [vmem:[%s1 + $0xd30] sm:$0xff]
  %v475 = vld [vmem:[%s1 + $0xd38] sm:$0xff]
  %v476 = vld [vmem:[%s1 + $0xd40] sm:$0xff]
  %v477 = vld [vmem:[%s1 + $0xd48] sm:$0xff]
  %v478 = vld [vmem:[%s1 + $0xd50] sm:$0xff]
  %v479 = vld [vmem:[%s1 + $0xd58] sm:$0xff]
  %v480 = vld [vmem:[%s1 + $0xd60] sm:$0xff]
  %v481 = vld [vmem:[%s1 + $0xd68] sm:$0xff]
  %v482 = vld [vmem:[%s1 + $0xd70] sm:$0xff]
  %v483 = vld [vmem:[%s1 + $0xd78] sm:$0xff]
  %v484 = vld [vmem:[%s1 + $0xd80] sm:$0xff]
  %v485 = vld [vmem:[%s1 + $0xd88] sm:$0xff]
  %v486 = vld [vmem:[%s1 + $0xd90] sm:$0xff]
  %v487 = vld [vmem:[%s1 + $0xd98] sm:$0xff]
  %v488 = vld [vmem:[%s1 + $0xda0] sm:$0xff]
  %v489 = vld [vmem:[%s1 + $0xda8] sm:$0xff]
  %v490 = vld [vmem:[%s1 + $0xdb0] sm:$0xff]
  %v491 = vld [vmem:[%s1 + $0xdb8] sm:$0xff]
  %v492 = vld [vmem:[%s1 + $0xdc0] sm:$0xff]
  %v493 = vld [vmem:[%s1 + $0xdc8] sm:$0xff]
  %v494 = vld [vmem:[%s1 + $0xdd0] sm:$0xff]
  %v495 = vld [vmem:[%s1 + $0xdd8] sm:$0xff]
  %v496 = vld [vmem:[%s1 + $0xde0] sm:$0xff]
  %v497 = vld [vmem:[%s1 + $0xde8] sm:$0xff]
  %v498 = vld [vmem:[%s1 + $0xdf0] sm:$0xff]
  %v499 = vld [vmem:[%s1 + $0xdf8] sm:$0xff]
  %v500 = vld [vmem:[%s1 + $0xe00] sm:$0xff]
  %v501 = vld [vmem:[%s1 + $0xe08] sm:$0xff]
  %v502 = vld [vmem:[%s1 + $0xe10] sm:$0xff]
  %v503 = vld [vmem:[%s1 + $0xe18] sm:$0xff]
  %v504 = vld [vmem:[%s1 + $0xe20] sm:$0xff]
  %v505 = vld [vmem:[%s1 + $0xe28] sm:$0xff]
  %v506 = vld [vmem:[%s1 + $0xe30] sm:$0xff]
  %v507 = vld [vmem:[%s1 + $0xe38] sm:$0xff]
  %v508 = vld [vmem:[%s1 + $0xe40] sm:$0xff]
  %v509 = vld [vmem:[%s1 + $0xe48] sm:$0xff]
  %v510 = vld [vmem:[%s1 + $0xe50] sm:$0xff]
  %v511 = vld [vmem:[%s1 + $0xe58] sm:$0xff]
  %v512 = vld [vmem:[%s1 + $0xe60] sm:$0xff]
  %v513 = vld [vmem:[%s1 + $0xe68] sm:$0xff]
  %v514 = vld [vmem:[%s1 + $0xe70] sm:$0xff]
  %v515 = vld [vmem:[%s1 + $0xe78] sm:$0xff]
  %v516 = vld [vmem:[%s1 + $0xe80] sm:$0xff]
  %v517 = vld [vmem:[%s1 + $0xe88] sm:$0xff]
  %v518 = vld [vmem:[%s1 + $0xe90] sm:$0xff]
  %v519 = vld [vmem:[%s1 + $0xe98] sm:$0xff]
  %v520 = vld [vmem:[%s1 + $0xea0] sm:$0xff]
  %v521 = vld [vmem:[%s1 + $0xea8] sm:$0xff]
  %v522 = vld [vmem:[%s1 + $0xeb0] sm:$0xff]
  %v523 = vld [vmem:[%s1 + $0xeb8] sm:$0xff]
  %v524 = vld [vmem:[%s1 + $0xec0] sm:$0xff]
  %v525 = vld [vmem:[%s1 + $0xec8] sm:$0xff]
  %v526 = vld [vmem:[%s1 + $0xed0] sm:$0xff]
  %v527 = vld [vmem:[%s1 + $0xed8] sm:$0xff]
  %v528 = vld [vmem:[%s1 + $0xee0] sm:$0xff]
  %v529 = vld [vmem:[%s1 + $0xee8] sm:$0xff]
  %v530 = vld [vmem:[%s1 + $0xef0] sm:$0xff]
  %v531 = vld [vmem:[%s1 + $0xef8] sm:$0xff]
  %v532 = vld [vmem:[%s1 + $0xf00] sm:$0xff]
  %v533 = vld [vmem:[%s1 + $0xf08] sm:$0xff]
  %v534 = vld [vmem:[%s1 + $0xf10] sm:$0xff]
  %v535 = vld [vmem:[%s1 + $0xf18] sm:$0xff]
  %v536 = vld [vmem:[%s1 + $0xf20] sm:$0xff]
  %v537 = vld [vmem:[%s1 + $0xf28] sm:$0xff]
  %v538 = vld [vmem:[%s1 + $0xf30] sm:$0xff]
  %v539 = vld [vmem:[%s1 + $0xf38] sm:$0xff]
  %v540 = vld [vmem:[%s1 + $0xf40] sm:$0xff]
  %v541 = vld [vmem:[%s1 + $0xf48] sm:$0xff]
  %v542 = vld [vmem:[%s1 + $0xf50] sm:$0xff]
  %v543 = vld [vmem:[%s1 + $0xf58] sm:$0xff]
  %v544 = vld [vmem:[%s1 + $0xf60] sm:$0xff]
  %v545 = vld [vmem:[%s1 + $0xf68] sm:$0xff]
  %v546 = vld [vmem:[%s1 + $0xf70] sm:$0xff]
  %v547 = vld [vmem:[%s1 + $0xf78] sm:$0xff]
  %v548 = vld [vmem:[%s1 + $0xf80] sm:$0xff]
  %v549 = vld [vmem:[%s1 + $0xf88] sm:$0xff]
  %v550 = vld [vmem:[%s1 + $0xf90] sm:$0xff]
  %v551 = vld [vmem:[%s1 + $0xf98] sm:$0xff]
  %v552 = vld [vmem:[%s1 + $0xfa0] sm:$0xff]
  %v553 = vld [vmem:[%s1 + $0xfa8] sm:$0xff]
  %v554 = vld [vmem:[%s1 + $0xfb0] sm:$0xff]
  %v555 = vld [vmem:[%s1 + $0xfb8] sm:$0xff]
  %v556 = vld [vmem:[%s1 + $0xfc0] sm:$0xff]
  %v557 = vld [vmem:[%s1 + $0xfc8] sm:$0xff]
  %v558 = vld [vmem:[%s1 + $0xfd0] sm:$0xff]
  %v559 = vld [vmem:[%s1 + $0xfd8] sm:$0xff]
  %v560 = vld [vmem:[%s1 + $0xfe0] sm:$0xff]
  %v561 = vld [vmem:[%s1 + $0xfe8] sm:$0xff]
  %v562 = vld [vmem:[%s1 + $0xff0] sm:$0xff]
  %v563 = vld [vmem:[%s1 + $0xff8] sm:$0xff]
  %v564 = vld [vmem:[%s2] sm:$0x1]
  %v566 = vlaneseq
  %v567 = vshrl.u32 %v566, 7
  %v568 = vsub.s32 0, %v567
  %v569 = vrot.slane %v564, %v568
  %571 = vmatprep.subr.mxu0 0.0
  %572 = vmatpush1.msra.mxu0 %v67
  %573 = vmatprep.subr.mxu0 0.0
  %574 = vmatpush1.msra.mxu0 %v66
  %575 = vmatprep.subr.mxu0 0.0
  %576 = vmatpush1.msra.mxu0 %v65
  %577 = vmatprep.subr.mxu0 0.0
  %578 = vmatpush1.msra.mxu0 %v64
  %579 = vmatprep.subr.mxu0 0.0
  %580 = vmatpush1.msra.mxu0 %v63
  %581 = vmatprep.subr.mxu0 0.0
  %582 = vmatpush1.msra.mxu0 %v62
  %583 = vmatprep.subr.mxu0 0.0
  %584 = vmatpush1.msra.mxu0 %v61
  %585 = vmatprep.subr.mxu0 0.0
  %586 = vmatpush1.msra.mxu0 %v60
  %587 = vmatprep.subr.mxu0 0.0
  %588 = vmatpush1.msra.mxu0 %v59
  %589 = vmatprep.subr.mxu0 0.0
  %590 = vmatpush1.msra.mxu0 %v58
  %591 = vmatprep.subr.mxu0 0.0
  %592 = vmatpush1.msra.mxu0 %v57
  %593 = vmatprep.subr.mxu0 0.0
  %594 = vmatpush1.msra.mxu0 %v56
  %595 = vmatprep.subr.mxu0 0.0
  %596 = vmatpush1.msra.mxu0 %v55
  %597 = vmatprep.subr.mxu0 0.0
  %598 = vmatpush1.msra.mxu0 %v54
  %599 = vmatprep.subr.mxu0 0.0
  %600 = vmatpush1.msra.mxu0 %v53
  %601 = vmatprep.subr.mxu0 0.0
  %602 = vmatpush1.msra.mxu0 %v52
  %603 = vmatprep.subr.mxu0 0.0
  %604 = vmatpush2.msra.mxu0 %v83
  %605 = vmatprep.subr.mxu0 0.0
  %606 = vmatpush2.msra.mxu0 %v82
  %607 = vmatprep.subr.mxu0 0.0
  %608 = vmatpush2.msra.mxu0 %v81
  %609 = vmatprep.subr.mxu0 0.0
  %610 = vmatpush2.msra.mxu0 %v80
  %611 = vmatprep.subr.mxu0 0.0
  %612 = vmatpush2.msra.mxu0 %v79
  %613 = vmatprep.subr.mxu0 0.0
  %614 = vmatpush2.msra.mxu0 %v78
  %615 = vmatprep.subr.mxu0 0.0
  %616 = vmatpush2.msra.mxu0 %v77
  %617 = vmatprep.subr.mxu0 0.0
  %618 = vmatpush2.msra.mxu0 %v76
  %619 = vmatprep.subr.mxu0 0.0
  %620 = vmatpush2.msra.mxu0 %v75
  %621 = vmatprep.subr.mxu0 0.0
  %622 = vmatpush2.msra.mxu0 %v74
  %623 = vmatprep.subr.mxu0 0.0
  %624 = vmatpush2.msra.mxu0 %v73
  %625 = vmatprep.subr.mxu0 0.0
  %626 = vmatpush2.msra.mxu0 %v72
  %627 = vmatprep.subr.mxu0 0.0
  %628 = vmatpush2.msra.mxu0 %v71
  %629 = vmatprep.subr.mxu0 0.0
  %630 = vmatpush2.msra.mxu0 %v70
  %631 = vmatprep.subr.mxu0 0.0
  %632 = vmatpush2.msra.mxu0 %v69
  %633 = vmatprep.subr.mxu0 0.0
  %634 = vmatpush2.msra.mxu0 %v68
  %635 = vmatprep.mubr.f32.mxu0 %v21
  %636 = vmatmul.mubr.f32.gmra.mxu0 %v20
  %v637 = vpop.f32.mrf.mxu0
  %v638 = vadd.f32 %v569, %v637
  %v639 = vpop.f32.mrf.mxu0
  %640 = vdwg.mxu0
  %641 = vmatprep.subr.mxu0 0.0
  %642 = vmatpush1.msra.mxu0 %v99
  %643 = vmatprep.subr.mxu0 0.0
  %644 = vmatpush1.msra.mxu0 %v98
  %645 = vmatprep.subr.mxu0 0.0
  %646 = vmatpush1.msra.mxu0 %v97
  %647 = vmatprep.subr.mxu0 0.0
  %648 = vmatpush1.msra.mxu0 %v96
  %649 = vmatprep.subr.mxu0 0.0
  %650 = vmatpush1.msra.mxu0 %v95
  %651 = vmatprep.subr.mxu0 0.0
  %652 = vmatpush1.msra.mxu0 %v94
  %653 = vmatprep.subr.mxu0 0.0
  %654 = vmatpush1.msra.mxu0 %v93
  %655 = vmatprep.subr.mxu0 0.0
  %656 = vmatpush1.msra.mxu0 %v92
  %657 = vmatprep.subr.mxu0 0.0
  %658 = vmatpush1.msra.mxu0 %v91
  %659 = vmatprep.subr.mxu0 0.0
  %660 = vmatpush1.msra.mxu0 %v90
  %661 = vmatprep.subr.mxu0 0.0
  %662 = vmatpush1.msra.mxu0 %v89
  %663 = vmatprep.subr.mxu0 0.0
  %664 = vmatpush1.msra.mxu0 %v88
  %665 = vmatprep.subr.mxu0 0.0
  %666 = vmatpush1.msra.mxu0 %v87
  %667 = vmatprep.subr.mxu0 0.0
  %668 = vmatpush1.msra.mxu0 %v86
  %669 = vmatprep.subr.mxu0 0.0
  %670 = vmatpush1.msra.mxu0 %v85
  %671 = vmatprep.subr.mxu0 0.0
  %672 = vmatpush1.msra.mxu0 %v84
  %673 = vmatprep.subr.mxu0 0.0
  %674 = vmatpush2.msra.mxu0 %v115
  %675 = vmatprep.subr.mxu0 0.0
  %676 = vmatpush2.msra.mxu0 %v114
  %677 = vmatprep.subr.mxu0 0.0
  %678 = vmatpush2.msra.mxu0 %v113
  %679 = vmatprep.subr.mxu0 0.0
  %680 = vmatpush2.msra.mxu0 %v112
  %681 = vmatprep.subr.mxu0 0.0
  %682 = vmatpush2.msra.mxu0 %v111
  %683 = vmatprep.subr.mxu0 0.0
  %684 = vmatpush2.msra.mxu0 %v110
  %685 = vmatprep.subr.mxu0 0.0
  %686 = vmatpush2.msra.mxu0 %v109
  %687 = vmatprep.subr.mxu0 0.0
  %688 = vmatpush2.msra.mxu0 %v108
  %689 = vmatprep.subr.mxu0 0.0
  %690 = vmatpush2.msra.mxu0 %v107
  %691 = vmatprep.subr.mxu0 0.0
  %692 = vmatpush2.msra.mxu0 %v106
  %693 = vmatprep.subr.mxu0 0.0
  %694 = vmatpush2.msra.mxu0 %v105
  %695 = vmatprep.subr.mxu0 0.0
  %696 = vmatpush2.msra.mxu0 %v104
  %697 = vmatprep.subr.mxu0 0.0
  %698 = vmatpush2.msra.mxu0 %v103
  %699 = vmatprep.subr.mxu0 0.0
  %700 = vmatpush2.msra.mxu0 %v102
  %701 = vmatprep.subr.mxu0 0.0
  %702 = vmatpush2.msra.mxu0 %v101
  %703 = vmatprep.subr.mxu0 0.0
  %704 = vmatpush2.msra.mxu0 %v100
  %705 = vmatprep.mubr.f32.mxu0 %v23
  %706 = vmatmul.mubr.f32.gmra.mxu0 %v22
  %v707 = vpop.f32.mrf.mxu0
  %v708 = vadd.f32 %v638, %v707
  %v709 = vpop.f32.mrf.mxu0
  %710 = vdwg.mxu0
  %711 = vmatprep.subr.mxu0 0.0
  %712 = vmatpush1.msra.mxu0 %v131
  %713 = vmatprep.subr.mxu0 0.0
  %714 = vmatpush1.msra.mxu0 %v130
  %715 = vmatprep.subr.mxu0 0.0
  %716 = vmatpush1.msra.mxu0 %v129
  %717 = vmatprep.subr.mxu0 0.0
  %718 = vmatpush1.msra.mxu0 %v128
  %719 = vmatprep.subr.mxu0 0.0
  %720 = vmatpush1.msra.mxu0 %v127
  %721 = vmatprep.subr.mxu0 0.0
  %722 = vmatpush1.msra.mxu0 %v126
  %723 = vmatprep.subr.mxu0 0.0
  %724 = vmatpush1.msra.mxu0 %v125
  %725 = vmatprep.subr.mxu0 0.0
  %726 = vmatpush1.msra.mxu0 %v124
  %727 = vmatprep.subr.mxu0 0.0
  %728 = vmatpush1.msra.mxu0 %v123
  %729 = vmatprep.subr.mxu0 0.0
  %730 = vmatpush1.msra.mxu0 %v122
  %731 = vmatprep.subr.mxu0 0.0
  %732 = vmatpush1.msra.mxu0 %v121
  %733 = vmatprep.subr.mxu0 0.0
  %734 = vmatpush1.msra.mxu0 %v120
  %735 = vmatprep.subr.mxu0 0.0
  %736 = vmatpush1.msra.mxu0 %v119
  %737 = vmatprep.subr.mxu0 0.0
  %738 = vmatpush1.msra.mxu0 %v118
  %739 = vmatprep.subr.mxu0 0.0
  %740 = vmatpush1.msra.mxu0 %v117
  %741 = vmatprep.subr.mxu0 0.0
  %742 = vmatpush1.msra.mxu0 %v116
  %743 = vmatprep.subr.mxu0 0.0
  %744 = vmatpush2.msra.mxu0 %v147
  %745 = vmatprep.subr.mxu0 0.0
  %746 = vmatpush2.msra.mxu0 %v146
  %747 = vmatprep.subr.mxu0 0.0
  %748 = vmatpush2.msra.mxu0 %v145
  %749 = vmatprep.subr.mxu0 0.0
  %750 = vmatpush2.msra.mxu0 %v144
  %751 = vmatprep.subr.mxu0 0.0
  %752 = vmatpush2.msra.mxu0 %v143
  %753 = vmatprep.subr.mxu0 0.0
  %754 = vmatpush2.msra.mxu0 %v142
  %755 = vmatprep.subr.mxu0 0.0
  %756 = vmatpush2.msra.mxu0 %v141
  %757 = vmatprep.subr.mxu0 0.0
  %758 = vmatpush2.msra.mxu0 %v140
  %759 = vmatprep.subr.mxu0 0.0
  %760 = vmatpush2.msra.mxu0 %v139
  %761 = vmatprep.subr.mxu0 0.0
  %762 = vmatpush2.msra.mxu0 %v138
  %763 = vmatprep.subr.mxu0 0.0
  %764 = vmatpush2.msra.mxu0 %v137
  %765 = vmatprep.subr.mxu0 0.0
  %766 = vmatpush2.msra.mxu0 %v136
  %767 = vmatprep.subr.mxu0 0.0
  %768 = vmatpush2.msra.mxu0 %v135
  %769 = vmatprep.subr.mxu0 0.0
  %770 = vmatpush2.msra.mxu0 %v134
  %771 = vmatprep.subr.mxu0 0.0
  %772 = vmatpush2.msra.mxu0 %v133
  %773 = vmatprep.subr.mxu0 0.0
  %774 = vmatpush2.msra.mxu0 %v132
  %775 = vmatprep.mubr.f32.mxu0 %v25
  %776 = vmatmul.mubr.f32.gmra.mxu0 %v24
  %v777 = vpop.f32.mrf.mxu0
  %v778 = vadd.f32 %v708, %v777
  %v779 = vpop.f32.mrf.mxu0
  %780 = vdwg.mxu0
  %781 = vmatprep.subr.mxu0 0.0
  %782 = vmatpush1.msra.mxu0 %v163
  %783 = vmatprep.subr.mxu0 0.0
  %784 = vmatpush1.msra.mxu0 %v162
  %785 = vmatprep.subr.mxu0 0.0
  %786 = vmatpush1.msra.mxu0 %v161
  %787 = vmatprep.subr.mxu0 0.0
  %788 = vmatpush1.msra.mxu0 %v160
  %789 = vmatprep.subr.mxu0 0.0
  %790 = vmatpush1.msra.mxu0 %v159
  %791 = vmatprep.subr.mxu0 0.0
  %792 = vmatpush1.msra.mxu0 %v158
  %793 = vmatprep.subr.mxu0 0.0
  %794 = vmatpush1.msra.mxu0 %v157
  %795 = vmatprep.subr.mxu0 0.0
  %796 = vmatpush1.msra.mxu0 %v156
  %797 = vmatprep.subr.mxu0 0.0
  %798 = vmatpush1.msra.mxu0 %v155
  %799 = vmatprep.subr.mxu0 0.0
  %800 = vmatpush1.msra.mxu0 %v154
  %801 = vmatprep.subr.mxu0 0.0
  %802 = vmatpush1.msra.mxu0 %v153
  %803 = vmatprep.subr.mxu0 0.0
  %804 = vmatpush1.msra.mxu0 %v152
  %805 = vmatprep.subr.mxu0 0.0
  %806 = vmatpush1.msra.mxu0 %v151
  %807 = vmatprep.subr.mxu0 0.0
  %808 = vmatpush1.msra.mxu0 %v150
  %809 = vmatprep.subr.mxu0 0.0
  %810 = vmatpush1.msra.mxu0 %v149
  %811 = vmatprep.subr.mxu0 0.0
  %812 = vmatpush1.msra.mxu0 %v148
  %813 = vmatprep.subr.mxu0 0.0
  %814 = vmatpush2.msra.mxu0 %v179
  %815 = vmatprep.subr.mxu0 0.0
  %816 = vmatpush2.msra.mxu0 %v178
  %817 = vmatprep.subr.mxu0 0.0
  %818 = vmatpush2.msra.mxu0 %v177
  %819 = vmatprep.subr.mxu0 0.0
  %820 = vmatpush2.msra.mxu0 %v176
  %821 = vmatprep.subr.mxu0 0.0
  %822 = vmatpush2.msra.mxu0 %v175
  %823 = vmatprep.subr.mxu0 0.0
  %824 = vmatpush2.msra.mxu0 %v174
  %825 = vmatprep.subr.mxu0 0.0
  %826 = vmatpush2.msra.mxu0 %v173
  %827 = vmatprep.subr.mxu0 0.0
  %828 = vmatpush2.msra.mxu0 %v172
  %829 = vmatprep.subr.mxu0 0.0
  %830 = vmatpush2.msra.mxu0 %v171
  %831 = vmatprep.subr.mxu0 0.0
  %832 = vmatpush2.msra.mxu0 %v170
  %833 = vmatprep.subr.mxu0 0.0
  %834 = vmatpush2.msra.mxu0 %v169
  %835 = vmatprep.subr.mxu0 0.0
  %836 = vmatpush2.msra.mxu0 %v168
  %837 = vmatprep.subr.mxu0 0.0
  %838 = vmatpush2.msra.mxu0 %v167
  %839 = vmatprep.subr.mxu0 0.0
  %840 = vmatpush2.msra.mxu0 %v166
  %841 = vmatprep.subr.mxu0 0.0
  %842 = vmatpush2.msra.mxu0 %v165
  %843 = vmatprep.subr.mxu0 0.0
  %844 = vmatpush2.msra.mxu0 %v164
  %845 = vmatprep.mubr.f32.mxu0 %v27
  %846 = vmatmul.mubr.f32.gmra.mxu0 %v26
  %v847 = vpop.f32.mrf.mxu0
  %v848 = vadd.f32 %v778, %v847
  %v849 = vpop.f32.mrf.mxu0
  %850 = vdwg.mxu0
  %851 = vmatprep.subr.mxu0 0.0
  %852 = vmatpush1.msra.mxu0 %v195
  %853 = vmatprep.subr.mxu0 0.0
  %854 = vmatpush1.msra.mxu0 %v194
  %855 = vmatprep.subr.mxu0 0.0
  %856 = vmatpush1.msra.mxu0 %v193
  %857 = vmatprep.subr.mxu0 0.0
  %858 = vmatpush1.msra.mxu0 %v192
  %859 = vmatprep.subr.mxu0 0.0
  %860 = vmatpush1.msra.mxu0 %v191
  %861 = vmatprep.subr.mxu0 0.0
  %862 = vmatpush1.msra.mxu0 %v190
  %863 = vmatprep.subr.mxu0 0.0
  %864 = vmatpush1.msra.mxu0 %v189
  %865 = vmatprep.subr.mxu0 0.0
  %866 = vmatpush1.msra.mxu0 %v188
  %867 = vmatprep.subr.mxu0 0.0
  %868 = vmatpush1.msra.mxu0 %v187
  %869 = vmatprep.subr.mxu0 0.0
  %870 = vmatpush1.msra.mxu0 %v186
  %871 = vmatprep.subr.mxu0 0.0
  %872 = vmatpush1.msra.mxu0 %v185
  %873 = vmatprep.subr.mxu0 0.0
  %874 = vmatpush1.msra.mxu0 %v184
  %875 = vmatprep.subr.mxu0 0.0
  %876 = vmatpush1.msra.mxu0 %v183
  %877 = vmatprep.subr.mxu0 0.0
  %878 = vmatpush1.msra.mxu0 %v182
  %879 = vmatprep.subr.mxu0 0.0
  %880 = vmatpush1.msra.mxu0 %v181
  %881 = vmatprep.subr.mxu0 0.0
  %882 = vmatpush1.msra.mxu0 %v180
  %883 = vmatprep.subr.mxu0 0.0
  %884 = vmatpush2.msra.mxu0 %v211
  %885 = vmatprep.subr.mxu0 0.0
  %886 = vmatpush2.msra.mxu0 %v210
  %887 = vmatprep.subr.mxu0 0.0
  %888 = vmatpush2.msra.mxu0 %v209
  %889 = vmatprep.subr.mxu0 0.0
  %890 = vmatpush2.msra.mxu0 %v208
  %891 = vmatprep.subr.mxu0 0.0
  %892 = vmatpush2.msra.mxu0 %v207
  %893 = vmatprep.subr.mxu0 0.0
  %894 = vmatpush2.msra.mxu0 %v206
  %895 = vmatprep.subr.mxu0 0.0
  %896 = vmatpush2.msra.mxu0 %v205
  %897 = vmatprep.subr.mxu0 0.0
  %898 = vmatpush2.msra.mxu0 %v204
  %899 = vmatprep.subr.mxu0 0.0
  %900 = vmatpush2.msra.mxu0 %v203
  %901 = vmatprep.subr.mxu0 0.0
  %902 = vmatpush2.msra.mxu0 %v202
  %903 = vmatprep.subr.mxu0 0.0
  %904 = vmatpush2.msra.mxu0 %v201
  %905 = vmatprep.subr.mxu0 0.0
  %906 = vmatpush2.msra.mxu0 %v200
  %907 = vmatprep.subr.mxu0 0.0
  %908 = vmatpush2.msra.mxu0 %v199
  %909 = vmatprep.subr.mxu0 0.0
  %910 = vmatpush2.msra.mxu0 %v198
  %911 = vmatprep.subr.mxu0 0.0
  %912 = vmatpush2.msra.mxu0 %v197
  %913 = vmatprep.subr.mxu0 0.0
  %914 = vmatpush2.msra.mxu0 %v196
  %915 = vmatprep.mubr.f32.mxu0 %v29
  %916 = vmatmul.mubr.f32.gmra.mxu0 %v28
  %v917 = vpop.f32.mrf.mxu0
  %v918 = vadd.f32 %v848, %v917
  %v919 = vpop.f32.mrf.mxu0
  %920 = vdwg.mxu0
  %921 = vmatprep.subr.mxu0 0.0
  %922 = vmatpush1.msra.mxu0 %v227
  %923 = vmatprep.subr.mxu0 0.0
  %924 = vmatpush1.msra.mxu0 %v226
  %925 = vmatprep.subr.mxu0 0.0
  %926 = vmatpush1.msra.mxu0 %v225
  %927 = vmatprep.subr.mxu0 0.0
  %928 = vmatpush1.msra.mxu0 %v224
  %929 = vmatprep.subr.mxu0 0.0
  %930 = vmatpush1.msra.mxu0 %v223
  %931 = vmatprep.subr.mxu0 0.0
  %932 = vmatpush1.msra.mxu0 %v222
  %933 = vmatprep.subr.mxu0 0.0
  %934 = vmatpush1.msra.mxu0 %v221
  %935 = vmatprep.subr.mxu0 0.0
  %936 = vmatpush1.msra.mxu0 %v220
  %937 = vmatprep.subr.mxu0 0.0
  %938 = vmatpush1.msra.mxu0 %v219
  %939 = vmatprep.subr.mxu0 0.0
  %940 = vmatpush1.msra.mxu0 %v218
  %941 = vmatprep.subr.mxu0 0.0
  %942 = vmatpush1.msra.mxu0 %v217
  %943 = vmatprep.subr.mxu0 0.0
  %944 = vmatpush1.msra.mxu0 %v216
  %945 = vmatprep.subr.mxu0 0.0
  %946 = vmatpush1.msra.mxu0 %v215
  %947 = vmatprep.subr.mxu0 0.0
  %948 = vmatpush1.msra.mxu0 %v214
  %949 = vmatprep.subr.mxu0 0.0
  %950 = vmatpush1.msra.mxu0 %v213
  %951 = vmatprep.subr.mxu0 0.0
  %952 = vmatpush1.msra.mxu0 %v212
  %953 = vmatprep.subr.mxu0 0.0
  %954 = vmatpush2.msra.mxu0 %v243
  %955 = vmatprep.subr.mxu0 0.0
  %956 = vmatpush2.msra.mxu0 %v242
  %957 = vmatprep.subr.mxu0 0.0
  %958 = vmatpush2.msra.mxu0 %v241
  %959 = vmatprep.subr.mxu0 0.0
  %960 = vmatpush2.msra.mxu0 %v240
  %961 = vmatprep.subr.mxu0 0.0
  %962 = vmatpush2.msra.mxu0 %v239
  %963 = vmatprep.subr.mxu0 0.0
  %964 = vmatpush2.msra.mxu0 %v238
  %965 = vmatprep.subr.mxu0 0.0
  %966 = vmatpush2.msra.mxu0 %v237
  %967 = vmatprep.subr.mxu0 0.0
  %968 = vmatpush2.msra.mxu0 %v236
  %969 = vmatprep.subr.mxu0 0.0
  %970 = vmatpush2.msra.mxu0 %v235
  %971 = vmatprep.subr.mxu0 0.0
  %972 = vmatpush2.msra.mxu0 %v234
  %973 = vmatprep.subr.mxu0 0.0
  %974 = vmatpush2.msra.mxu0 %v233
  %975 = vmatprep.subr.mxu0 0.0
  %976 = vmatpush2.msra.mxu0 %v232
  %977 = vmatprep.subr.mxu0 0.0
  %978 = vmatpush2.msra.mxu0 %v231
  %979 = vmatprep.subr.mxu0 0.0
  %980 = vmatpush2.msra.mxu0 %v230
  %981 = vmatprep.subr.mxu0 0.0
  %982 = vmatpush2.msra.mxu0 %v229
  %983 = vmatprep.subr.mxu0 0.0
  %984 = vmatpush2.msra.mxu0 %v228
  %985 = vmatprep.mubr.f32.mxu0 %v31
  %986 = vmatmul.mubr.f32.gmra.mxu0 %v30
  %v987 = vpop.f32.mrf.mxu0
  %v988 = vadd.f32 %v918, %v987
  %v989 = vpop.f32.mrf.mxu0
  %990 = vdwg.mxu0
  %991 = vmatprep.subr.mxu0 0.0
  %992 = vmatpush1.msra.mxu0 %v259
  %993 = vmatprep.subr.mxu0 0.0
  %994 = vmatpush1.msra.mxu0 %v258
  %995 = vmatprep.subr.mxu0 0.0
  %996 = vmatpush1.msra.mxu0 %v257
  %997 = vmatprep.subr.mxu0 0.0
  %998 = vmatpush1.msra.mxu0 %v256
  %999 = vmatprep.subr.mxu0 0.0
  %1000 = vmatpush1.msra.mxu0 %v255
  %1001 = vmatprep.subr.mxu0 0.0
  %1002 = vmatpush1.msra.mxu0 %v254
  %1003 = vmatprep.subr.mxu0 0.0
  %1004 = vmatpush1.msra.mxu0 %v253
  %1005 = vmatprep.subr.mxu0 0.0
  %1006 = vmatpush1.msra.mxu0 %v252
  %1007 = vmatprep.subr.mxu0 0.0
  %1008 = vmatpush1.msra.mxu0 %v251
  %1009 = vmatprep.subr.mxu0 0.0
  %1010 = vmatpush1.msra.mxu0 %v250
  %1011 = vmatprep.subr.mxu0 0.0
  %1012 = vmatpush1.msra.mxu0 %v249
  %1013 = vmatprep.subr.mxu0 0.0
  %1014 = vmatpush1.msra.mxu0 %v248
  %1015 = vmatprep.subr.mxu0 0.0
  %1016 = vmatpush1.msra.mxu0 %v247
  %1017 = vmatprep.subr.mxu0 0.0
  %1018 = vmatpush1.msra.mxu0 %v246
  %1019 = vmatprep.subr.mxu0 0.0
  %1020 = vmatpush1.msra.mxu0 %v245
  %1021 = vmatprep.subr.mxu0 0.0
  %1022 = vmatpush1.msra.mxu0 %v244
  %1023 = vmatprep.subr.mxu0 0.0
  %1024 = vmatpush2.msra.mxu0 %v275
  %1025 = vmatprep.subr.mxu0 0.0
  %1026 = vmatpush2.msra.mxu0 %v274
  %1027 = vmatprep.subr.mxu0 0.0
  %1028 = vmatpush2.msra.mxu0 %v273
  %1029 = vmatprep.subr.mxu0 0.0
  %1030 = vmatpush2.msra.mxu0 %v272
  %1031 = vmatprep.subr.mxu0 0.0
  %1032 = vmatpush2.msra.mxu0 %v271
  %1033 = vmatprep.subr.mxu0 0.0
  %1034 = vmatpush2.msra.mxu0 %v270
  %1035 = vmatprep.subr.mxu0 0.0
  %1036 = vmatpush2.msra.mxu0 %v269
  %1037 = vmatprep.subr.mxu0 0.0
  %1038 = vmatpush2.msra.mxu0 %v268
  %1039 = vmatprep.subr.mxu0 0.0
  %1040 = vmatpush2.msra.mxu0 %v267
  %1041 = vmatprep.subr.mxu0 0.0
  %1042 = vmatpush2.msra.mxu0 %v266
  %1043 = vmatprep.subr.mxu0 0.0
  %1044 = vmatpush2.msra.mxu0 %v265
  %1045 = vmatprep.subr.mxu0 0.0
  %1046 = vmatpush2.msra.mxu0 %v264
  %1047 = vmatprep.subr.mxu0 0.0
  %1048 = vmatpush2.msra.mxu0 %v263
  %1049 = vmatprep.subr.mxu0 0.0
  %1050 = vmatpush2.msra.mxu0 %v262
  %1051 = vmatprep.subr.mxu0 0.0
  %1052 = vmatpush2.msra.mxu0 %v261
  %1053 = vmatprep.subr.mxu0 0.0
  %1054 = vmatpush2.msra.mxu0 %v260
  %1055 = vmatprep.mubr.f32.mxu0 %v33
  %1056 = vmatmul.mubr.f32.gmra.mxu0 %v32
  %v1057 = vpop.f32.mrf.mxu0
  %v1058 = vadd.f32 %v988, %v1057
  %v1059 = vpop.f32.mrf.mxu0
  %1060 = vdwg.mxu0
  %1061 = vmatprep.subr.mxu0 0.0
  %1062 = vmatpush1.msra.mxu0 %v291
  %1063 = vmatprep.subr.mxu0 0.0
  %1064 = vmatpush1.msra.mxu0 %v290
  %1065 = vmatprep.subr.mxu0 0.0
  %1066 = vmatpush1.msra.mxu0 %v289
  %1067 = vmatprep.subr.mxu0 0.0
  %1068 = vmatpush1.msra.mxu0 %v288
  %1069 = vmatprep.subr.mxu0 0.0
  %1070 = vmatpush1.msra.mxu0 %v287
  %1071 = vmatprep.subr.mxu0 0.0
  %1072 = vmatpush1.msra.mxu0 %v286
  %1073 = vmatprep.subr.mxu0 0.0
  %1074 = vmatpush1.msra.mxu0 %v285
  %1075 = vmatprep.subr.mxu0 0.0
  %1076 = vmatpush1.msra.mxu0 %v284
  %1077 = vmatprep.subr.mxu0 0.0
  %1078 = vmatpush1.msra.mxu0 %v283
  %1079 = vmatprep.subr.mxu0 0.0
  %1080 = vmatpush1.msra.mxu0 %v282
  %1081 = vmatprep.subr.mxu0 0.0
  %1082 = vmatpush1.msra.mxu0 %v281
  %1083 = vmatprep.subr.mxu0 0.0
  %1084 = vmatpush1.msra.mxu0 %v280
  %1085 = vmatprep.subr.mxu0 0.0
  %1086 = vmatpush1.msra.mxu0 %v279
  %1087 = vmatprep.subr.mxu0 0.0
  %1088 = vmatpush1.msra.mxu0 %v278
  %1089 = vmatprep.subr.mxu0 0.0
  %1090 = vmatpush1.msra.mxu0 %v277
  %1091 = vmatprep.subr.mxu0 0.0
  %1092 = vmatpush1.msra.mxu0 %v276
  %1093 = vmatprep.subr.mxu0 0.0
  %1094 = vmatpush2.msra.mxu0 %v307
  %1095 = vmatprep.subr.mxu0 0.0
  %1096 = vmatpush2.msra.mxu0 %v306
  %1097 = vmatprep.subr.mxu0 0.0
  %1098 = vmatpush2.msra.mxu0 %v305
  %1099 = vmatprep.subr.mxu0 0.0
  %1100 = vmatpush2.msra.mxu0 %v304
  %1101 = vmatprep.subr.mxu0 0.0
  %1102 = vmatpush2.msra.mxu0 %v303
  %1103 = vmatprep.subr.mxu0 0.0
  %1104 = vmatpush2.msra.mxu0 %v302
  %1105 = vmatprep.subr.mxu0 0.0
  %1106 = vmatpush2.msra.mxu0 %v301
  %1107 = vmatprep.subr.mxu0 0.0
  %1108 = vmatpush2.msra.mxu0 %v300
  %1109 = vmatprep.subr.mxu0 0.0
  %1110 = vmatpush2.msra.mxu0 %v299
  %1111 = vmatprep.subr.mxu0 0.0
  %1112 = vmatpush2.msra.mxu0 %v298
  %1113 = vmatprep.subr.mxu0 0.0
  %1114 = vmatpush2.msra.mxu0 %v297
  %1115 = vmatprep.subr.mxu0 0.0
  %1116 = vmatpush2.msra.mxu0 %v296
  %1117 = vmatprep.subr.mxu0 0.0
  %1118 = vmatpush2.msra.mxu0 %v295
  %1119 = vmatprep.subr.mxu0 0.0
  %1120 = vmatpush2.msra.mxu0 %v294
  %1121 = vmatprep.subr.mxu0 0.0
  %1122 = vmatpush2.msra.mxu0 %v293
  %1123 = vmatprep.subr.mxu0 0.0
  %1124 = vmatpush2.msra.mxu0 %v292
  %1125 = vmatprep.mubr.f32.mxu0 %v35
  %1126 = vmatmul.mubr.f32.gmra.mxu0 %v34
  %v1127 = vpop.f32.mrf.mxu0
  %v1128 = vadd.f32 %v1058, %v1127
  %v1129 = vpop.f32.mrf.mxu0
  %1130 = vdwg.mxu0
  %1131 = vmatprep.subr.mxu0 0.0
  %1132 = vmatpush1.msra.mxu0 %v323
  %1133 = vmatprep.subr.mxu0 0.0
  %1134 = vmatpush1.msra.mxu0 %v322
  %1135 = vmatprep.subr.mxu0 0.0
  %1136 = vmatpush1.msra.mxu0 %v321
  %1137 = vmatprep.subr.mxu0 0.0
  %1138 = vmatpush1.msra.mxu0 %v320
  %1139 = vmatprep.subr.mxu0 0.0
  %1140 = vmatpush1.msra.mxu0 %v319
  %1141 = vmatprep.subr.mxu0 0.0
  %1142 = vmatpush1.msra.mxu0 %v318
  %1143 = vmatprep.subr.mxu0 0.0
  %1144 = vmatpush1.msra.mxu0 %v317
  %1145 = vmatprep.subr.mxu0 0.0
  %1146 = vmatpush1.msra.mxu0 %v316
  %1147 = vmatprep.subr.mxu0 0.0
  %1148 = vmatpush1.msra.mxu0 %v315
  %1149 = vmatprep.subr.mxu0 0.0
  %1150 = vmatpush1.msra.mxu0 %v314
  %1151 = vmatprep.subr.mxu0 0.0
  %1152 = vmatpush1.msra.mxu0 %v313
  %1153 = vmatprep.subr.mxu0 0.0
  %1154 = vmatpush1.msra.mxu0 %v312
  %1155 = vmatprep.subr.mxu0 0.0
  %1156 = vmatpush1.msra.mxu0 %v311
  %1157 = vmatprep.subr.mxu0 0.0
  %1158 = vmatpush1.msra.mxu0 %v310
  %1159 = vmatprep.subr.mxu0 0.0
  %1160 = vmatpush1.msra.mxu0 %v309
  %1161 = vmatprep.subr.mxu0 0.0
  %1162 = vmatpush1.msra.mxu0 %v308
  %1163 = vmatprep.subr.mxu0 0.0
  %1164 = vmatpush2.msra.mxu0 %v339
  %1165 = vmatprep.subr.mxu0 0.0
  %1166 = vmatpush2.msra.mxu0 %v338
  %1167 = vmatprep.subr.mxu0 0.0
  %1168 = vmatpush2.msra.mxu0 %v337
  %1169 = vmatprep.subr.mxu0 0.0
  %1170 = vmatpush2.msra.mxu0 %v336
  %1171 = vmatprep.subr.mxu0 0.0
  %1172 = vmatpush2.msra.mxu0 %v335
  %1173 = vmatprep.subr.mxu0 0.0
  %1174 = vmatpush2.msra.mxu0 %v334
  %1175 = vmatprep.subr.mxu0 0.0
  %1176 = vmatpush2.msra.mxu0 %v333
  %1177 = vmatprep.subr.mxu0 0.0
  %1178 = vmatpush2.msra.mxu0 %v332
  %1179 = vmatprep.subr.mxu0 0.0
  %1180 = vmatpush2.msra.mxu0 %v331
  %1181 = vmatprep.subr.mxu0 0.0
  %1182 = vmatpush2.msra.mxu0 %v330
  %1183 = vmatprep.subr.mxu0 0.0
  %1184 = vmatpush2.msra.mxu0 %v329
  %1185 = vmatprep.subr.mxu0 0.0
  %1186 = vmatpush2.msra.mxu0 %v328
  %1187 = vmatprep.subr.mxu0 0.0
  %1188 = vmatpush2.msra.mxu0 %v327
  %1189 = vmatprep.subr.mxu0 0.0
  %1190 = vmatpush2.msra.mxu0 %v326
  %1191 = vmatprep.subr.mxu0 0.0
  %1192 = vmatpush2.msra.mxu0 %v325
  %1193 = vmatprep.subr.mxu0 0.0
  %1194 = vmatpush2.msra.mxu0 %v324
  %1195 = vmatprep.mubr.f32.mxu0 %v37
  %1196 = vmatmul.mubr.f32.gmra.mxu0 %v36
  %v1197 = vpop.f32.mrf.mxu0
  %v1198 = vadd.f32 %v1128, %v1197
  %v1199 = vpop.f32.mrf.mxu0
  %1200 = vdwg.mxu0
  %1201 = vmatprep.subr.mxu0 0.0
  %1202 = vmatpush1.msra.mxu0 %v355
  %1203 = vmatprep.subr.mxu0 0.0
  %1204 = vmatpush1.msra.mxu0 %v354
  %1205 = vmatprep.subr.mxu0 0.0
  %1206 = vmatpush1.msra.mxu0 %v353
  %1207 = vmatprep.subr.mxu0 0.0
  %1208 = vmatpush1.msra.mxu0 %v352
  %1209 = vmatprep.subr.mxu0 0.0
  %1210 = vmatpush1.msra.mxu0 %v351
  %1211 = vmatprep.subr.mxu0 0.0
  %1212 = vmatpush1.msra.mxu0 %v350
  %1213 = vmatprep.subr.mxu0 0.0
  %1214 = vmatpush1.msra.mxu0 %v349
  %1215 = vmatprep.subr.mxu0 0.0
  %1216 = vmatpush1.msra.mxu0 %v348
  %1217 = vmatprep.subr.mxu0 0.0
  %1218 = vmatpush1.msra.mxu0 %v347
  %1219 = vmatprep.subr.mxu0 0.0
  %1220 = vmatpush1.msra.mxu0 %v346
  %1221 = vmatprep.subr.mxu0 0.0
  %1222 = vmatpush1.msra.mxu0 %v345
  %1223 = vmatprep.subr.mxu0 0.0
  %1224 = vmatpush1.msra.mxu0 %v344
  %1225 = vmatprep.subr.mxu0 0.0
  %1226 = vmatpush1.msra.mxu0 %v343
  %1227 = vmatprep.subr.mxu0 0.0
  %1228 = vmatpush1.msra.mxu0 %v342
  %1229 = vmatprep.subr.mxu0 0.0
  %1230 = vmatpush1.msra.mxu0 %v341
  %1231 = vmatprep.subr.mxu0 0.0
  %1232 = vmatpush1.msra.mxu0 %v340
  %1233 = vmatprep.subr.mxu0 0.0
  %1234 = vmatpush2.msra.mxu0 %v371
  %1235 = vmatprep.subr.mxu0 0.0
  %1236 = vmatpush2.msra.mxu0 %v370
  %1237 = vmatprep.subr.mxu0 0.0
  %1238 = vmatpush2.msra.mxu0 %v369
  %1239 = vmatprep.subr.mxu0 0.0
  %1240 = vmatpush2.msra.mxu0 %v368
  %1241 = vmatprep.subr.mxu0 0.0
  %1242 = vmatpush2.msra.mxu0 %v367
  %1243 = vmatprep.subr.mxu0 0.0
  %1244 = vmatpush2.msra.mxu0 %v366
  %1245 = vmatprep.subr.mxu0 0.0
  %1246 = vmatpush2.msra.mxu0 %v365
  %1247 = vmatprep.subr.mxu0 0.0
  %1248 = vmatpush2.msra.mxu0 %v364
  %1249 = vmatprep.subr.mxu0 0.0
  %1250 = vmatpush2.msra.mxu0 %v363
  %1251 = vmatprep.subr.mxu0 0.0
  %1252 = vmatpush2.msra.mxu0 %v362
  %1253 = vmatprep.subr.mxu0 0.0
  %1254 = vmatpush2.msra.mxu0 %v361
  %1255 = vmatprep.subr.mxu0 0.0
  %1256 = vmatpush2.msra.mxu0 %v360
  %1257 = vmatprep.subr.mxu0 0.0
  %1258 = vmatpush2.msra.mxu0 %v359
  %1259 = vmatprep.subr.mxu0 0.0
  %1260 = vmatpush2.msra.mxu0 %v358
  %1261 = vmatprep.subr.mxu0 0.0
  %1262 = vmatpush2.msra.mxu0 %v357
  %1263 = vmatprep.subr.mxu0 0.0
  %1264 = vmatpush2.msra.mxu0 %v356
  %1265 = vmatprep.mubr.f32.mxu0 %v39
  %1266 = vmatmul.mubr.f32.gmra.mxu0 %v38
  %v1267 = vpop.f32.mrf.mxu0
  %v1268 = vadd.f32 %v1198, %v1267
  %v1269 = vpop.f32.mrf.mxu0
  %1270 = vdwg.mxu0
  %1271 = vmatprep.subr.mxu0 0.0
  %1272 = vmatpush1.msra.mxu0 %v387
  %1273 = vmatprep.subr.mxu0 0.0
  %1274 = vmatpush1.msra.mxu0 %v386
  %1275 = vmatprep.subr.mxu0 0.0
  %1276 = vmatpush1.msra.mxu0 %v385
  %1277 = vmatprep.subr.mxu0 0.0
  %1278 = vmatpush1.msra.mxu0 %v384
  %1279 = vmatprep.subr.mxu0 0.0
  %1280 = vmatpush1.msra.mxu0 %v383
  %1281 = vmatprep.subr.mxu0 0.0
  %1282 = vmatpush1.msra.mxu0 %v382
  %1283 = vmatprep.subr.mxu0 0.0
  %1284 = vmatpush1.msra.mxu0 %v381
  %1285 = vmatprep.subr.mxu0 0.0
  %1286 = vmatpush1.msra.mxu0 %v380
  %1287 = vmatprep.subr.mxu0 0.0
  %1288 = vmatpush1.msra.mxu0 %v379
  %1289 = vmatprep.subr.mxu0 0.0
  %1290 = vmatpush1.msra.mxu0 %v378
  %1291 = vmatprep.subr.mxu0 0.0
  %1292 = vmatpush1.msra.mxu0 %v377
  %1293 = vmatprep.subr.mxu0 0.0
  %1294 = vmatpush1.msra.mxu0 %v376
  %1295 = vmatprep.subr.mxu0 0.0
  %1296 = vmatpush1.msra.mxu0 %v375
  %1297 = vmatprep.subr.mxu0 0.0
  %1298 = vmatpush1.msra.mxu0 %v374
  %1299 = vmatprep.subr.mxu0 0.0
  %1300 = vmatpush1.msra.mxu0 %v373
  %1301 = vmatprep.subr.mxu0 0.0
  %1302 = vmatpush1.msra.mxu0 %v372
  %1303 = vmatprep.subr.mxu0 0.0
  %1304 = vmatpush2.msra.mxu0 %v403
  %1305 = vmatprep.subr.mxu0 0.0
  %1306 = vmatpush2.msra.mxu0 %v402
  %1307 = vmatprep.subr.mxu0 0.0
  %1308 = vmatpush2.msra.mxu0 %v401
  %1309 = vmatprep.subr.mxu0 0.0
  %1310 = vmatpush2.msra.mxu0 %v400
  %1311 = vmatprep.subr.mxu0 0.0
  %1312 = vmatpush2.msra.mxu0 %v399
  %1313 = vmatprep.subr.mxu0 0.0
  %1314 = vmatpush2.msra.mxu0 %v398
  %1315 = vmatprep.subr.mxu0 0.0
  %1316 = vmatpush2.msra.mxu0 %v397
  %1317 = vmatprep.subr.mxu0 0.0
  %1318 = vmatpush2.msra.mxu0 %v396
  %1319 = vmatprep.subr.mxu0 0.0
  %1320 = vmatpush2.msra.mxu0 %v395
  %1321 = vmatprep.subr.mxu0 0.0
  %1322 = vmatpush2.msra.mxu0 %v394
  %1323 = vmatprep.subr.mxu0 0.0
  %1324 = vmatpush2.msra.mxu0 %v393
  %1325 = vmatprep.subr.mxu0 0.0
  %1326 = vmatpush2.msra.mxu0 %v392
  %1327 = vmatprep.subr.mxu0 0.0
  %1328 = vmatpush2.msra.mxu0 %v391
  %1329 = vmatprep.subr.mxu0 0.0
  %1330 = vmatpush2.msra.mxu0 %v390
  %1331 = vmatprep.subr.mxu0 0.0
  %1332 = vmatpush2.msra.mxu0 %v389
  %1333 = vmatprep.subr.mxu0 0.0
  %1334 = vmatpush2.msra.mxu0 %v388
  %1335 = vmatprep.mubr.f32.mxu0 %v41
  %1336 = vmatmul.mubr.f32.gmra.mxu0 %v40
  %v1337 = vpop.f32.mrf.mxu0
  %v1338 = vadd.f32 %v1268, %v1337
  %v1339 = vpop.f32.mrf.mxu0
  %1340 = vdwg.mxu0
  %1341 = vmatprep.subr.mxu0 0.0
  %1342 = vmatpush1.msra.mxu0 %v419
  %1343 = vmatprep.subr.mxu0 0.0
  %1344 = vmatpush1.msra.mxu0 %v418
  %1345 = vmatprep.subr.mxu0 0.0
  %1346 = vmatpush1.msra.mxu0 %v417
  %1347 = vmatprep.subr.mxu0 0.0
  %1348 = vmatpush1.msra.mxu0 %v416
  %1349 = vmatprep.subr.mxu0 0.0
  %1350 = vmatpush1.msra.mxu0 %v415
  %1351 = vmatprep.subr.mxu0 0.0
  %1352 = vmatpush1.msra.mxu0 %v414
  %1353 = vmatprep.subr.mxu0 0.0
  %1354 = vmatpush1.msra.mxu0 %v413
  %1355 = vmatprep.subr.mxu0 0.0
  %1356 = vmatpush1.msra.mxu0 %v412
  %1357 = vmatprep.subr.mxu0 0.0
  %1358 = vmatpush1.msra.mxu0 %v411
  %1359 = vmatprep.subr.mxu0 0.0
  %1360 = vmatpush1.msra.mxu0 %v410
  %1361 = vmatprep.subr.mxu0 0.0
  %1362 = vmatpush1.msra.mxu0 %v409
  %1363 = vmatprep.subr.mxu0 0.0
  %1364 = vmatpush1.msra.mxu0 %v408
  %1365 = vmatprep.subr.mxu0 0.0
  %1366 = vmatpush1.msra.mxu0 %v407
  %1367 = vmatprep.subr.mxu0 0.0
  %1368 = vmatpush1.msra.mxu0 %v406
  %1369 = vmatprep.subr.mxu0 0.0
  %1370 = vmatpush1.msra.mxu0 %v405
  %1371 = vmatprep.subr.mxu0 0.0
  %1372 = vmatpush1.msra.mxu0 %v404
  %1373 = vmatprep.subr.mxu0 0.0
  %1374 = vmatpush2.msra.mxu0 %v435
  %1375 = vmatprep.subr.mxu0 0.0
  %1376 = vmatpush2.msra.mxu0 %v434
  %1377 = vmatprep.subr.mxu0 0.0
  %1378 = vmatpush2.msra.mxu0 %v433
  %1379 = vmatprep.subr.mxu0 0.0
  %1380 = vmatpush2.msra.mxu0 %v432
  %1381 = vmatprep.subr.mxu0 0.0
  %1382 = vmatpush2.msra.mxu0 %v431
  %1383 = vmatprep.subr.mxu0 0.0
  %1384 = vmatpush2.msra.mxu0 %v430
  %1385 = vmatprep.subr.mxu0 0.0
  %1386 = vmatpush2.msra.mxu0 %v429
  %1387 = vmatprep.subr.mxu0 0.0
  %1388 = vmatpush2.msra.mxu0 %v428
  %1389 = vmatprep.subr.mxu0 0.0
  %1390 = vmatpush2.msra.mxu0 %v427
  %1391 = vmatprep.subr.mxu0 0.0
  %1392 = vmatpush2.msra.mxu0 %v426
  %1393 = vmatprep.subr.mxu0 0.0
  %1394 = vmatpush2.msra.mxu0 %v425
  %1395 = vmatprep.subr.mxu0 0.0
  %1396 = vmatpush2.msra.mxu0 %v424
  %1397 = vmatprep.subr.mxu0 0.0
  %1398 = vmatpush2.msra.mxu0 %v423
  %1399 = vmatprep.subr.mxu0 0.0
  %1400 = vmatpush2.msra.mxu0 %v422
  %1401 = vmatprep.subr.mxu0 0.0
  %1402 = vmatpush2.msra.mxu0 %v421
  %1403 = vmatprep.subr.mxu0 0.0
  %1404 = vmatpush2.msra.mxu0 %v420
  %1405 = vmatprep.mubr.f32.mxu0 %v43
  %1406 = vmatmul.mubr.f32.gmra.mxu0 %v42
  %v1407 = vpop.f32.mrf.mxu0
  %v1408 = vadd.f32 %v1338, %v1407
  %v1409 = vpop.f32.mrf.mxu0
  %1410 = vdwg.mxu0
  %1411 = vmatprep.subr.mxu0 0.0
  %1412 = vmatpush1.msra.mxu0 %v451
  %1413 = vmatprep.subr.mxu0 0.0
  %1414 = vmatpush1.msra.mxu0 %v450
  %1415 = vmatprep.subr.mxu0 0.0
  %1416 = vmatpush1.msra.mxu0 %v449
  %1417 = vmatprep.subr.mxu0 0.0
  %1418 = vmatpush1.msra.mxu0 %v448
  %1419 = vmatprep.subr.mxu0 0.0
  %1420 = vmatpush1.msra.mxu0 %v447
  %1421 = vmatprep.subr.mxu0 0.0
  %1422 = vmatpush1.msra.mxu0 %v446
  %1423 = vmatprep.subr.mxu0 0.0
  %1424 = vmatpush1.msra.mxu0 %v445
  %1425 = vmatprep.subr.mxu0 0.0
  %1426 = vmatpush1.msra.mxu0 %v444
  %1427 = vmatprep.subr.mxu0 0.0
  %1428 = vmatpush1.msra.mxu0 %v443
  %1429 = vmatprep.subr.mxu0 0.0
  %1430 = vmatpush1.msra.mxu0 %v442
  %1431 = vmatprep.subr.mxu0 0.0
  %1432 = vmatpush1.msra.mxu0 %v441
  %1433 = vmatprep.subr.mxu0 0.0
  %1434 = vmatpush1.msra.mxu0 %v440
  %1435 = vmatprep.subr.mxu0 0.0
  %1436 = vmatpush1.msra.mxu0 %v439
  %1437 = vmatprep.subr.mxu0 0.0
  %1438 = vmatpush1.msra.mxu0 %v438
  %1439 = vmatprep.subr.mxu0 0.0
  %1440 = vmatpush1.msra.mxu0 %v437
  %1441 = vmatprep.subr.mxu0 0.0
  %1442 = vmatpush1.msra.mxu0 %v436
  %1443 = vmatprep.subr.mxu0 0.0
  %1444 = vmatpush2.msra.mxu0 %v467
  %1445 = vmatprep.subr.mxu0 0.0
  %1446 = vmatpush2.msra.mxu0 %v466
  %1447 = vmatprep.subr.mxu0 0.0
  %1448 = vmatpush2.msra.mxu0 %v465
  %1449 = vmatprep.subr.mxu0 0.0
  %1450 = vmatpush2.msra.mxu0 %v464
  %1451 = vmatprep.subr.mxu0 0.0
  %1452 = vmatpush2.msra.mxu0 %v463
  %1453 = vmatprep.subr.mxu0 0.0
  %1454 = vmatpush2.msra.mxu0 %v462
  %1455 = vmatprep.subr.mxu0 0.0
  %1456 = vmatpush2.msra.mxu0 %v461
  %1457 = vmatprep.subr.mxu0 0.0
  %1458 = vmatpush2.msra.mxu0 %v460
  %1459 = vmatprep.subr.mxu0 0.0
  %1460 = vmatpush2.msra.mxu0 %v459
  %1461 = vmatprep.subr.mxu0 0.0
  %1462 = vmatpush2.msra.mxu0 %v458
  %1463 = vmatprep.subr.mxu0 0.0
  %1464 = vmatpush2.msra.mxu0 %v457
  %1465 = vmatprep.subr.mxu0 0.0
  %1466 = vmatpush2.msra.mxu0 %v456
  %1467 = vmatprep.subr.mxu0 0.0
  %1468 = vmatpush2.msra.mxu0 %v455
  %1469 = vmatprep.subr.mxu0 0.0
  %1470 = vmatpush2.msra.mxu0 %v454
  %1471 = vmatprep.subr.mxu0 0.0
  %1472 = vmatpush2.msra.mxu0 %v453
  %1473 = vmatprep.subr.mxu0 0.0
  %1474 = vmatpush2.msra.mxu0 %v452
  %1475 = vmatprep.mubr.f32.mxu0 %v45
  %1476 = vmatmul.mubr.f32.gmra.mxu0 %v44
  %v1477 = vpop.f32.mrf.mxu0
  %v1478 = vadd.f32 %v1408, %v1477
  %v1479 = vpop.f32.mrf.mxu0
  %1480 = vdwg.mxu0
  %1481 = vmatprep.subr.mxu0 0.0
  %1482 = vmatpush1.msra.mxu0 %v483
  %1483 = vmatprep.subr.mxu0 0.0
  %1484 = vmatpush1.msra.mxu0 %v482
  %1485 = vmatprep.subr.mxu0 0.0
  %1486 = vmatpush1.msra.mxu0 %v481
  %1487 = vmatprep.subr.mxu0 0.0
  %1488 = vmatpush1.msra.mxu0 %v480
  %1489 = vmatprep.subr.mxu0 0.0
  %1490 = vmatpush1.msra.mxu0 %v479
  %1491 = vmatprep.subr.mxu0 0.0
  %1492 = vmatpush1.msra.mxu0 %v478
  %1493 = vmatprep.subr.mxu0 0.0
  %1494 = vmatpush1.msra.mxu0 %v477
  %1495 = vmatprep.subr.mxu0 0.0
  %1496 = vmatpush1.msra.mxu0 %v476
  %1497 = vmatprep.subr.mxu0 0.0
  %1498 = vmatpush1.msra.mxu0 %v475
  %1499 = vmatprep.subr.mxu0 0.0
  %1500 = vmatpush1.msra.mxu0 %v474
  %1501 = vmatprep.subr.mxu0 0.0
  %1502 = vmatpush1.msra.mxu0 %v473
  %1503 = vmatprep.subr.mxu0 0.0
  %1504 = vmatpush1.msra.mxu0 %v472
  %1505 = vmatprep.subr.mxu0 0.0
  %1506 = vmatpush1.msra.mxu0 %v471
  %1507 = vmatprep.subr.mxu0 0.0
  %1508 = vmatpush1.msra.mxu0 %v470
  %1509 = vmatprep.subr.mxu0 0.0
  %1510 = vmatpush1.msra.mxu0 %v469
  %1511 = vmatprep.subr.mxu0 0.0
  %1512 = vmatpush1.msra.mxu0 %v468
  %1513 = vmatprep.subr.mxu0 0.0
  %1514 = vmatpush2.msra.mxu0 %v499
  %1515 = vmatprep.subr.mxu0 0.0
  %1516 = vmatpush2.msra.mxu0 %v498
  %1517 = vmatprep.subr.mxu0 0.0
  %1518 = vmatpush2.msra.mxu0 %v497
  %1519 = vmatprep.subr.mxu0 0.0
  %1520 = vmatpush2.msra.mxu0 %v496
  %1521 = vmatprep.subr.mxu0 0.0
  %1522 = vmatpush2.msra.mxu0 %v495
  %1523 = vmatprep.subr.mxu0 0.0
  %1524 = vmatpush2.msra.mxu0 %v494
  %1525 = vmatprep.subr.mxu0 0.0
  %1526 = vmatpush2.msra.mxu0 %v493
  %1527 = vmatprep.subr.mxu0 0.0
  %1528 = vmatpush2.msra.mxu0 %v492
  %1529 = vmatprep.subr.mxu0 0.0
  %1530 = vmatpush2.msra.mxu0 %v491
  %1531 = vmatprep.subr.mxu0 0.0
  %1532 = vmatpush2.msra.mxu0 %v490
  %1533 = vmatprep.subr.mxu0 0.0
  %1534 = vmatpush2.msra.mxu0 %v489
  %1535 = vmatprep.subr.mxu0 0.0
  %1536 = vmatpush2.msra.mxu0 %v488
  %1537 = vmatprep.subr.mxu0 0.0
  %1538 = vmatpush2.msra.mxu0 %v487
  %1539 = vmatprep.subr.mxu0 0.0
  %1540 = vmatpush2.msra.mxu0 %v486
  %1541 = vmatprep.subr.mxu0 0.0
  %1542 = vmatpush2.msra.mxu0 %v485
  %1543 = vmatprep.subr.mxu0 0.0
  %1544 = vmatpush2.msra.mxu0 %v484
  %1545 = vmatprep.mubr.f32.mxu0 %v47
  %1546 = vmatmul.mubr.f32.gmra.mxu0 %v46
  %v1547 = vpop.f32.mrf.mxu0
  %v1548 = vadd.f32 %v1478, %v1547
  %v1549 = vpop.f32.mrf.mxu0
  %1550 = vdwg.mxu0
  %1551 = vmatprep.subr.mxu0 0.0
  %1552 = vmatpush1.msra.mxu0 %v515
  %1553 = vmatprep.subr.mxu0 0.0
  %1554 = vmatpush1.msra.mxu0 %v514
  %1555 = vmatprep.subr.mxu0 0.0
  %1556 = vmatpush1.msra.mxu0 %v513
  %1557 = vmatprep.subr.mxu0 0.0
  %1558 = vmatpush1.msra.mxu0 %v512
  %1559 = vmatprep.subr.mxu0 0.0
  %1560 = vmatpush1.msra.mxu0 %v511
  %1561 = vmatprep.subr.mxu0 0.0
  %1562 = vmatpush1.msra.mxu0 %v510
  %1563 = vmatprep.subr.mxu0 0.0
  %1564 = vmatpush1.msra.mxu0 %v509
  %1565 = vmatprep.subr.mxu0 0.0
  %1566 = vmatpush1.msra.mxu0 %v508
  %1567 = vmatprep.subr.mxu0 0.0
  %1568 = vmatpush1.msra.mxu0 %v507
  %1569 = vmatprep.subr.mxu0 0.0
  %1570 = vmatpush1.msra.mxu0 %v506
  %1571 = vmatprep.subr.mxu0 0.0
  %1572 = vmatpush1.msra.mxu0 %v505
  %1573 = vmatprep.subr.mxu0 0.0
  %1574 = vmatpush1.msra.mxu0 %v504
  %1575 = vmatprep.subr.mxu0 0.0
  %1576 = vmatpush1.msra.mxu0 %v503
  %1577 = vmatprep.subr.mxu0 0.0
  %1578 = vmatpush1.msra.mxu0 %v502
  %1579 = vmatprep.subr.mxu0 0.0
  %1580 = vmatpush1.msra.mxu0 %v501
  %1581 = vmatprep.subr.mxu0 0.0
  %1582 = vmatpush1.msra.mxu0 %v500
  %1583 = vmatprep.subr.mxu0 0.0
  %1584 = vmatpush2.msra.mxu0 %v531
  %1585 = vmatprep.subr.mxu0 0.0
  %1586 = vmatpush2.msra.mxu0 %v530
  %1587 = vmatprep.subr.mxu0 0.0
  %1588 = vmatpush2.msra.mxu0 %v529
  %1589 = vmatprep.subr.mxu0 0.0
  %1590 = vmatpush2.msra.mxu0 %v528
  %1591 = vmatprep.subr.mxu0 0.0
  %1592 = vmatpush2.msra.mxu0 %v527
  %1593 = vmatprep.subr.mxu0 0.0
  %1594 = vmatpush2.msra.mxu0 %v526
  %1595 = vmatprep.subr.mxu0 0.0
  %1596 = vmatpush2.msra.mxu0 %v525
  %1597 = vmatprep.subr.mxu0 0.0
  %1598 = vmatpush2.msra.mxu0 %v524
  %1599 = vmatprep.subr.mxu0 0.0
  %1600 = vmatpush2.msra.mxu0 %v523
  %1601 = vmatprep.subr.mxu0 0.0
  %1602 = vmatpush2.msra.mxu0 %v522
  %1603 = vmatprep.subr.mxu0 0.0
  %1604 = vmatpush2.msra.mxu0 %v521
  %1605 = vmatprep.subr.mxu0 0.0
  %1606 = vmatpush2.msra.mxu0 %v520
  %1607 = vmatprep.subr.mxu0 0.0
  %1608 = vmatpush2.msra.mxu0 %v519
  %1609 = vmatprep.subr.mxu0 0.0
  %1610 = vmatpush2.msra.mxu0 %v518
  %1611 = vmatprep.subr.mxu0 0.0
  %1612 = vmatpush2.msra.mxu0 %v517
  %1613 = vmatprep.subr.mxu0 0.0
  %1614 = vmatpush2.msra.mxu0 %v516
  %1615 = vmatprep.mubr.f32.mxu0 %v49
  %1616 = vmatmul.mubr.f32.gmra.mxu0 %v48
  %v1617 = vpop.f32.mrf.mxu0
  %v1618 = vadd.f32 %v1548, %v1617
  %v1619 = vpop.f32.mrf.mxu0
  %1620 = vdwg.mxu0
  %1621 = vmatprep.subr.mxu0 0.0
  %1622 = vmatpush1.msra.mxu0 %v547
  %1623 = vmatprep.subr.mxu0 0.0
  %1624 = vmatpush1.msra.mxu0 %v546
  %1625 = vmatprep.subr.mxu0 0.0
  %1626 = vmatpush1.msra.mxu0 %v545
  %1627 = vmatprep.subr.mxu0 0.0
  %1628 = vmatpush1.msra.mxu0 %v544
  %1629 = vmatprep.subr.mxu0 0.0
  %1630 = vmatpush1.msra.mxu0 %v543
  %1631 = vmatprep.subr.mxu0 0.0
  %1632 = vmatpush1.msra.mxu0 %v542
  %1633 = vmatprep.subr.mxu0 0.0
  %1634 = vmatpush1.msra.mxu0 %v541
  %1635 = vmatprep.subr.mxu0 0.0
  %1636 = vmatpush1.msra.mxu0 %v540
  %1637 = vmatprep.subr.mxu0 0.0
  %1638 = vmatpush1.msra.mxu0 %v539
  %1639 = vmatprep.subr.mxu0 0.0
  %1640 = vmatpush1.msra.mxu0 %v538
  %1641 = vmatprep.subr.mxu0 0.0
  %1642 = vmatpush1.msra.mxu0 %v537
  %1643 = vmatprep.subr.mxu0 0.0
  %1644 = vmatpush1.msra.mxu0 %v536
  %1645 = vmatprep.subr.mxu0 0.0
  %1646 = vmatpush1.msra.mxu0 %v535
  %1647 = vmatprep.subr.mxu0 0.0
  %1648 = vmatpush1.msra.mxu0 %v534
  %1649 = vmatprep.subr.mxu0 0.0
  %1650 = vmatpush1.msra.mxu0 %v533
  %1651 = vmatprep.subr.mxu0 0.0
  %1652 = vmatpush1.msra.mxu0 %v532
  %1653 = vmatprep.subr.mxu0 0.0
  %1654 = vmatpush2.msra.mxu0 %v563
  %1655 = vmatprep.subr.mxu0 0.0
  %1656 = vmatpush2.msra.mxu0 %v562
  %1657 = vmatprep.subr.mxu0 0.0
  %1658 = vmatpush2.msra.mxu0 %v561
  %1659 = vmatprep.subr.mxu0 0.0
  %1660 = vmatpush2.msra.mxu0 %v560
  %1661 = vmatprep.subr.mxu0 0.0
  %1662 = vmatpush2.msra.mxu0 %v559
  %1663 = vmatprep.subr.mxu0 0.0
  %1664 = vmatpush2.msra.mxu0 %v558
  %1665 = vmatprep.subr.mxu0 0.0
  %1666 = vmatpush2.msra.mxu0 %v557
  %1667 = vmatprep.subr.mxu0 0.0
  %1668 = vmatpush2.msra.mxu0 %v556
  %1669 = vmatprep.subr.mxu0 0.0
  %1670 = vmatpush2.msra.mxu0 %v555
  %1671 = vmatprep.subr.mxu0 0.0
  %1672 = vmatpush2.msra.mxu0 %v554
  %1673 = vmatprep.subr.mxu0 0.0
  %1674 = vmatpush2.msra.mxu0 %v553
  %1675 = vmatprep.subr.mxu0 0.0
  %1676 = vmatpush2.msra.mxu0 %v552
  %1677 = vmatprep.subr.mxu0 0.0
  %1678 = vmatpush2.msra.mxu0 %v551
  %1679 = vmatprep.subr.mxu0 0.0
  %1680 = vmatpush2.msra.mxu0 %v550
  %1681 = vmatprep.subr.mxu0 0.0
  %1682 = vmatpush2.msra.mxu0 %v549
  %1683 = vmatprep.subr.mxu0 0.0
  %1684 = vmatpush2.msra.mxu0 %v548
  %1685 = vmatprep.mubr.f32.mxu0 %v51
  %1686 = vmatmul.mubr.f32.gmra.mxu0 %v50
  %v1687 = vpop.f32.mrf.mxu0
  %v1688 = vadd.f32 %v1618, %v1687
  %v1689 = vpop.f32.mrf.mxu0
  %1690 = vdwg.mxu0
  %vm1691 = vcmp.gt.f32.partialorder %v1688, 1.0
  %v1692 = vsel %vm1691, 1, 0
  %v1693 = vcvt.s32.f32 %v1692
  %v1694 = vld [vmem:[%s3] sm:$0xff]
  %v1695 = vld [vmem:[%s3 + $0x8] sm:$0xff]
  %v1696 = vld [vmem:[%s3 + $0x10] sm:$0xff]
  %v1697 = vld [vmem:[%s3 + $0x18] sm:$0xff]
  %v1698 = vld [vmem:[%s3 + $0x20] sm:$0xff]
  %v1699 = vld [vmem:[%s3 + $0x28] sm:$0xff]
  %v1700 = vld [vmem:[%s3 + $0x30] sm:$0xff]
  %v1701 = vld [vmem:[%s3 + $0x38] sm:$0xff]
  %v1702 = vld [vmem:[%s3 + $0x40] sm:$0xff]
  %v1703 = vld [vmem:[%s3 + $0x48] sm:$0xff]
  %v1704 = vld [vmem:[%s3 + $0x50] sm:$0xff]
  %v1705 = vld [vmem:[%s3 + $0x58] sm:$0xff]
  %v1706 = vld [vmem:[%s3 + $0x60] sm:$0xff]
  %v1707 = vld [vmem:[%s3 + $0x68] sm:$0xff]
  %v1708 = vld [vmem:[%s3 + $0x70] sm:$0xff]
  %v1709 = vld [vmem:[%s3 + $0x78] sm:$0xff]
  %v1710 = vld [vmem:[%s4] sm:$0x1]
  %v1712 = vlaneseq
  %v1713 = vshrl.u32 %v1712, 7
  %v1714 = vsub.s32 0, %v1713
  %v1715 = vrot.slane %v1710, %v1714
  %1717 = vmatprep.subr.mxu0 0.0
  %1718 = vmatpush1.msra.mxu0 %v1709
  %1719 = vmatprep.subr.mxu0 0.0
  %1720 = vmatpush1.msra.mxu0 %v1708
  %1721 = vmatprep.subr.mxu0 0.0
  %1722 = vmatpush1.msra.mxu0 %v1707
  %1723 = vmatprep.subr.mxu0 0.0
  %1724 = vmatpush1.msra.mxu0 %v1706
  %1725 = vmatprep.subr.mxu0 0.0
  %1726 = vmatpush1.msra.mxu0 %v1705
  %1727 = vmatprep.subr.mxu0 0.0
  %1728 = vmatpush1.msra.mxu0 %v1704
  %1729 = vmatprep.subr.mxu0 0.0
  %1730 = vmatpush1.msra.mxu0 %v1703
  %1731 = vmatprep.subr.mxu0 0.0
  %1732 = vmatpush1.msra.mxu0 %v1702
  %1733 = vmatprep.subr.mxu0 0.0
  %1734 = vmatpush1.msra.mxu0 %v1701
  %1735 = vmatprep.subr.mxu0 0.0
  %1736 = vmatpush1.msra.mxu0 %v1700
  %1737 = vmatprep.subr.mxu0 0.0
  %1738 = vmatpush1.msra.mxu0 %v1699
  %1739 = vmatprep.subr.mxu0 0.0
  %1740 = vmatpush1.msra.mxu0 %v1698
  %1741 = vmatprep.subr.mxu0 0.0
  %1742 = vmatpush1.msra.mxu0 %v1697
  %1743 = vmatprep.subr.mxu0 0.0
  %1744 = vmatpush1.msra.mxu0 %v1696
  %1745 = vmatprep.subr.mxu0 0.0
  %1746 = vmatpush1.msra.mxu0 %v1695
  %1747 = vmatprep.subr.mxu0 0.0
  %1748 = vmatpush1.msra.mxu0 %v1694
  %1749 = vmatprep.subr.mxu0 0.0
  %1750 = vmatpush2.msra.mxu0 0.0
  %1751 = vmatprep.subr.mxu0 0.0
  %1752 = vmatpush2.msra.mxu0 0.0
  %1753 = vmatprep.subr.mxu0 0.0
  %1754 = vmatpush2.msra.mxu0 0.0
  %1755 = vmatprep.subr.mxu0 0.0
  %1756 = vmatpush2.msra.mxu0 0.0
  %1757 = vmatprep.subr.mxu0 0.0
  %1758 = vmatpush2.msra.mxu0 0.0
  %1759 = vmatprep.subr.mxu0 0.0
  %1760 = vmatpush2.msra.mxu0 0.0
  %1761 = vmatprep.subr.mxu0 0.0
  %1762 = vmatpush2.msra.mxu0 0.0
  %1763 = vmatprep.subr.mxu0 0.0
  %1764 = vmatpush2.msra.mxu0 0.0
  %1765 = vmatprep.subr.mxu0 0.0
  %1766 = vmatpush2.msra.mxu0 0.0
  %1767 = vmatprep.subr.mxu0 0.0
  %1768 = vmatpush2.msra.mxu0 0.0
  %1769 = vmatprep.subr.mxu0 0.0
  %1770 = vmatpush2.msra.mxu0 0.0
  %1771 = vmatprep.subr.mxu0 0.0
  %1772 = vmatpush2.msra.mxu0 0.0
  %1773 = vmatprep.subr.mxu0 0.0
  %1774 = vmatpush2.msra.mxu0 0.0
  %1775 = vmatprep.subr.mxu0 0.0
  %1776 = vmatpush2.msra.mxu0 0.0
  %1777 = vmatprep.subr.mxu0 0.0
  %1778 = vmatpush2.msra.mxu0 0.0
  %1779 = vmatprep.subr.mxu0 0.0
  %1780 = vmatpush2.msra.mxu0 0.0
  %1781 = vmatprep.mubr.f32.mxu0 0.0
  %1782 = vmatmul.mubr.f32.gmra.mxu0 %v1693
  %v1783 = vpop.f32.mrf.mxu0
  %v1784 = vadd.f32 %v1715, %v1783
  %v1785 = vpop.f32.mrf.mxu0
  %1786 = vdwg.mxu0
  %1787 = vst [vmem:[%s5] sm:$0xff] %v1784
  // Predicated region
  $region22: #{snn_forward.3} parent=0 // pred_check
    _
  $region23: #{snn_forward.3} parent=0 // pred_check_branch
    %1789 = sbr.rel (0) target = $region25
  $region24: #{snn_forward.3} parent=0 // pred_region
    _
  $region25: #{snn_forward.3} parent=0 // pred_fallthru
    _
  // Predicated region
  $region26: #{snn_forward.3} parent=0 // pred_check
    _
  $region27: #{snn_forward.3} parent=0 // pred_check_branch
    %1791 = sbr.rel (0) target = $region29
  $region28: #{snn_forward.3} parent=0 // pred_region
    _
  $region29: #{snn_forward.3} parent=0 // pred_fallthru
    _

// kernel: snn_forward.2
$region0: #{snn_forward.2}
  #allocation0 [shape = 'u32[]', space=smem, size = 0x4, offset = 0x4, fixed_abs, tag = 'smem constant byte address 0x4 - core index']
  #allocation1 [shape = 'u32[144,128]{1,0:T(1,128)}', space=vmem, size = 0x12000, scoped, tag = 'internal scratch']
  %s0 = inlined_call_operand.vmem [shape: f32[8,128,256], index: 0, kind: input, shape index: {}]
  %s1 = inlined_call_operand.vmem [shape: f32[2,256,128], index: 1, kind: input, shape index: {}]
  %s2 = inlined_call_operand.vmem [shape: f32[64,128], index: 2, kind: input, shape index: {}]
  %s3 = inlined_call_operand.vmem [shape: f32[64,128], index: 3, kind: input, shape index: {}]
  %s4 = inlined_call_operand.vmem [shape: f32[128,128], index: 4, kind: input, shape index: {}]
  %s5 = inlined_call_operand.vmem [shape: f32[32,64], index: 5, kind: input, shape index: {}]
  %s6 = inlined_call_operand.vmem [shape: f32[32,64], index: 6, kind: input, shape index: {}]
  %s7 = inlined_call_operand.vmem [shape: f32[512,128], index: 7, kind: input, shape index: {}]
  %s8 = inlined_call_operand.vmem [shape: f32[36], index: 8, kind: input, shape index: {}]
  %s9 = inlined_call_operand.vmem [shape: f32[2], index: 9, kind: input, shape index: {}]
  %s10 = inlined_call_operand.vmem [shape: f32[72], index: 10, kind: input, shape index: {}]
  %s11 = inlined_call_operand.vmem [shape: f32[4], index: 11, kind: input, shape index: {}]
  %s12 = inlined_call_operand.vmem [shape: f32[8,32,128], index: 12, kind: output, shape index: {}]
  %s13 = sld [smem:[#allocation0]]
  $region104: #{snn_forward.2} parent=0
    _
  %s15 = ssub.s32 1, %s13
  %s16 = scalar_select 0, %s15, %s13
  $region1: #{snn_forward.2} parent=0
    #allocation2 [shape = 'u8[512]{0}', space=smem, size = 0x200, scoped, tag = 'input window, operand 8, single buffered']
    #allocation3 [shape = 's32[2]{0}', space=sflag, size = 0x8, scoped, tag = 'scoped memory for snn_forward.2']
    #allocation4 [shape = 'u8[512]{0}', space=smem, size = 0x200, scoped, tag = 'input window, operand 9, single buffered']
    #allocation5 [shape = 's32[1]{0}', space=sflag, size = 0x4, scoped, tag = 'scoped memory for snn_forward.2']
    #allocation6 [shape = 'u8[512]{0}', space=smem, size = 0x200, scoped, tag = 'input window, operand 10, single buffered']
    #allocation7 [shape = 'u8[512]{0}', space=smem, size = 0x200, scoped, tag = 'input window, operand 11, single buffered']
    #allocation8 [shape = 's32[1]{0}', space=sflag, size = 0x4, scoped, tag = 'scoped memory for snn_forward.2']
    %17 = vsyncpa [#allocation3], 0
    %18 = vsyncpa [#allocation5], 0
    %19 = vsyncpa [#allocation8], 0
    loop: start=0, step=1, limit=4
    $region2: #{snn_forward.2} parent=1 // loop_pre_header
      _
    $region3: #{snn_forward.2} parent=1 // loop_header
      %s21 = sphi 0, %s25
      %p22 = scmp.ge.s32.totalorder %s21, 4
      %s31 = sphi 0, %s33
      %s34 = sphi 0, %s31
      %s35 = sphi 0, %s34
      %s51 = sphi 0, %s35
      %s55 = sphi 0, %s55
      %s57 = sphi 0, %s55
      %s58 = sphi 0, %s57
      %s72 = sphi 0, %s58
      %s76 = sphi 0, %s76
      %s78 = sphi 0, %s76
      %s79 = sphi 0, %s78
      %s93 = sphi 0, %s79
      %s97 = sphi 0, %s97
      %s99 = sphi 0, %s97
      %s100 = sphi 0, %s99
      %s114 = sphi 0, %s100
      %s118 = sphi 0, %s118
      %s120 = sphi 0, %s118
      %s121 = sphi 0, %s120
      %s135 = sphi 0, %s121
      %s139 = sphi 0, %s139
      %s141 = sphi 0, %s139
      %s142 = sphi 0, %s141
      %s156 = sphi 0, %s142
      %s160 = sphi 0, %s160
      %s162 = sphi 0, %s160
      %s163 = sphi 0, %s162
      %s177 = sphi 0, %s163
      %s181 = sphi 0, %s181
      %s183 = sphi 0, %s181
      %s184 = sphi 0, %s183
      %s198 = sphi 0, %s184
      %s202 = sphi 0, %s202
      %s204 = sphi 0, %s202
      %s205 = sphi 0, %s204
      %s219 = sphi 0, %s205
      %s223 = sphi 0, %s223
      %s225 = sphi 0, %s223
      %s226 = sphi 0, %s225
      %s240 = sphi 0, %s226
      %s244 = sphi 0, %s244
      %s246 = sphi 0, %s244
      %s247 = sphi 0, %s246
      %s261 = sphi 0, %s247
      %s265 = sphi 0, %s265
      %s267 = sphi 0, %s265
      %s268 = sphi 0, %s267
      %s282 = sphi 0, %s268
      %s288 = sphi 0, %s290
      %s291 = sphi 0, %s288
      %s292 = sphi 0, %s291
      %s308 = sphi 0, %s292
    $region4: #{snn_forward.2} parent=1 // loop_header_branch
      %24 = sbr.rel (%p22) target = $region8
    $region5: #{snn_forward.2} parent=1 // loop_body
      %s26 = ssub.s32 %s21, 1
      %s27 = ssub.s32 %s21, 2
      %s28 = sadd.s32 %s21, 1
      %s29 = ssub.s32 %s21, %s28
      %p30 = scmp.eq.s32.totalorder %s29, 0
      %s32 = sadd.s32 %s31, 1
      %s33 = scalar_select %p30, %s31, %s32
      %p36 = pneg %p30
      %p37 = scmp.eq.s32.totalorder %s21, 1
      %p38 = por %p36, %p37
      %p39 = scmp.ne.s32.totalorder %s31, %s34
      %p40 = scmp.eq.s32.totalorder %s21, 0
      %p41 = por %p39, %p40
      %p42 = scmp.ne.s32.totalorder %s31, %s34
      %p43 = scmp.eq.s32.totalorder %s26, 1
      %p44 = por %p42, %p43
      %p45 = scmp.ne.s32.totalorder %s34, %s35
      %p46 = scmp.eq.s32.totalorder %s26, 0
      %p47 = por %p45, %p46
      %p48 = scmp.ne.s32.totalorder %s34, %s35
      %p49 = scmp.eq.s32.totalorder %s27, 1
      %p50 = por %p48, %p49
      %p52 = scmp.ne.s32.totalorder %s35, %s51
      %p53 = scmp.eq.s32.totalorder %s27, 0
      %p54 = por %p52, %p53
      %s56 = sadd.s32 %s55, 1
      %p59 = scmp.eq.s32.totalorder %s21, 1
      %p60 = scmp.ne.s32.totalorder %s55, %s57
      %p61 = scmp.eq.s32.totalorder %s21, 0
      %p62 = por %p60, %p61
      %p63 = scmp.ne.s32.totalorder %s55, %s57
      %p64 = scmp.eq.s32.totalorder %s26, 1
      %p65 = por %p63, %p64
      %p66 = scmp.ne.s32.totalorder %s57, %s58
      %p67 = scmp.eq.s32.totalorder %s26, 0
      %p68 = por %p66, %p67
      %p69 = scmp.ne.s32.totalorder %s57, %s58
      %p70 = scmp.eq.s32.totalorder %s27, 1
      %p71 = por %p69, %p70
      %p73 = scmp.ne.s32.totalorder %s58, %s72
      %p74 = scmp.eq.s32.totalorder %s27, 0
      %p75 = por %p73, %p74
      %s77 = sadd.s32 %s76, 1
      %p80 = scmp.eq.s32.totalorder %s21, 1
      %p81 = scmp.ne.s32.totalorder %s76, %s78
      %p82 = scmp.eq.s32.totalorder %s21, 0
      %p83 = por %p81, %p82
      %p84 = scmp.ne.s32.totalorder %s76, %s78
      %p85 = scmp.eq.s32.totalorder %s26, 1
      %p86 = por %p84, %p85
      %p87 = scmp.ne.s32.totalorder %s78, %s79
      %p88 = scmp.eq.s32.totalorder %s26, 0
      %p89 = por %p87, %p88
      %p90 = scmp.ne.s32.totalorder %s78, %s79
      %p91 = scmp.eq.s32.totalorder %s27, 1
      %p92 = por %p90, %p91
      %p94 = scmp.ne.s32.totalorder %s79, %s93
      %p95 = scmp.eq.s32.totalorder %s27, 0
      %p96 = por %p94, %p95
      %s98 = sadd.s32 %s97, 1
      %p101 = scmp.eq.s32.totalorder %s21, 1
      %p102 = scmp.ne.s32.totalorder %s97, %s99
      %p103 = scmp.eq.s32.totalorder %s21, 0
      %p104 = por %p102, %p103
      %p105 = scmp.ne.s32.totalorder %s97, %s99
      %p106 = scmp.eq.s32.totalorder %s26, 1
      %p107 = por %p105, %p106
      %p108 = scmp.ne.s32.totalorder %s99, %s100
      %p109 = scmp.eq.s32.totalorder %s26, 0
      %p110 = por %p108, %p109
      %p111 = scmp.ne.s32.totalorder %s99, %s100
      %p112 = scmp.eq.s32.totalorder %s27, 1
      %p113 = por %p111, %p112
      %p115 = scmp.ne.s32.totalorder %s100, %s114
      %p116 = scmp.eq.s32.totalorder %s27, 0
      %p117 = por %p115, %p116
      %s119 = sadd.s32 %s118, 1
      %p122 = scmp.eq.s32.totalorder %s21, 1
      %p123 = scmp.ne.s32.totalorder %s118, %s120
      %p124 = scmp.eq.s32.totalorder %s21, 0
      %p125 = por %p123, %p124
      %p126 = scmp.ne.s32.totalorder %s118, %s120
      %p127 = scmp.eq.s32.totalorder %s26, 1
      %p128 = por %p126, %p127
      %p129 = scmp.ne.s32.totalorder %s120, %s121
      %p130 = scmp.eq.s32.totalorder %s26, 0
      %p131 = por %p129, %p130
      %p132 = scmp.ne.s32.totalorder %s120, %s121
      %p133 = scmp.eq.s32.totalorder %s27, 1
      %p134 = por %p132, %p133
      %p136 = scmp.ne.s32.totalorder %s121, %s135
      %p137 = scmp.eq.s32.totalorder %s27, 0
      %p138 = por %p136, %p137
      %s140 = sadd.s32 %s139, 1
      %p143 = scmp.eq.s32.totalorder %s21, 1
      %p144 = scmp.ne.s32.totalorder %s139, %s141
      %p145 = scmp.eq.s32.totalorder %s21, 0
      %p146 = por %p144, %p145
      %p147 = scmp.ne.s32.totalorder %s139, %s141
      %p148 = scmp.eq.s32.totalorder %s26, 1
      %p149 = por %p147, %p148
      %p150 = scmp.ne.s32.totalorder %s141, %s142
      %p151 = scmp.eq.s32.totalorder %s26, 0
      %p152 = por %p150, %p151
      %p153 = scmp.ne.s32.totalorder %s141, %s142
      %p154 = scmp.eq.s32.totalorder %s27, 1
      %p155 = por %p153, %p154
      %p157 = scmp.ne.s32.totalorder %s142, %s156
      %p158 = scmp.eq.s32.totalorder %s27, 0
      %p159 = por %p157, %p158
      %s161 = sadd.s32 %s160, 1
      %p164 = scmp.eq.s32.totalorder %s21, 1
      %p165 = scmp.ne.s32.totalorder %s160, %s162
      %p166 = scmp.eq.s32.totalorder %s21, 0
      %p167 = por %p165, %p166
      %p168 = scmp.ne.s32.totalorder %s160, %s162
      %p169 = scmp.eq.s32.totalorder %s26, 1
      %p170 = por %p168, %p169
      %p171 = scmp.ne.s32.totalorder %s162, %s163
      %p172 = scmp.eq.s32.totalorder %s26, 0
      %p173 = por %p171, %p172
      %p174 = scmp.ne.s32.totalorder %s162, %s163
      %p175 = scmp.eq.s32.totalorder %s27, 1
      %p176 = por %p174, %p175
      %p178 = scmp.ne.s32.totalorder %s163, %s177
      %p179 = scmp.eq.s32.totalorder %s27, 0
      %p180 = por %p178, %p179
      %s182 = sadd.s32 %s181, 1
      %p185 = scmp.eq.s32.totalorder %s21, 1
      %p186 = scmp.ne.s32.totalorder %s181, %s183
      %p187 = scmp.eq.s32.totalorder %s21, 0
      %p188 = por %p186, %p187
      %p189 = scmp.ne.s32.totalorder %s181, %s183
      %p190 = scmp.eq.s32.totalorder %s26, 1
      %p191 = por %p189, %p190
      %p192 = scmp.ne.s32.totalorder %s183, %s184
      %p193 = scmp.eq.s32.totalorder %s26, 0
      %p194 = por %p192, %p193
      %p195 = scmp.ne.s32.totalorder %s183, %s184
      %p196 = scmp.eq.s32.totalorder %s27, 1
      %p197 = por %p195, %p196
      %p199 = scmp.ne.s32.totalorder %s184, %s198
      %p200 = scmp.eq.s32.totalorder %s27, 0
      %p201 = por %p199, %p200
      %s203 = sadd.s32 %s202, 1
      %p206 = scmp.eq.s32.totalorder %s21, 1
      %p207 = scmp.ne.s32.totalorder %s202, %s204
      %p208 = scmp.eq.s32.totalorder %s21, 0
      %p209 = por %p207, %p208
      %p210 = scmp.ne.s32.totalorder %s202, %s204
      %p211 = scmp.eq.s32.totalorder %s26, 1
      %p212 = por %p210, %p211
      %p213 = scmp.ne.s32.totalorder %s204, %s205
      %p214 = scmp.eq.s32.totalorder %s26, 0
      %p215 = por %p213, %p214
      %p216 = scmp.ne.s32.totalorder %s204, %s205
      %p217 = scmp.eq.s32.totalorder %s27, 1
      %p218 = por %p216, %p217
      %p220 = scmp.ne.s32.totalorder %s205, %s219
      %p221 = scmp.eq.s32.totalorder %s27, 0
      %p222 = por %p220, %p221
      %s224 = sadd.s32 %s223, 1
      %p227 = scmp.eq.s32.totalorder %s21, 1
      %p228 = scmp.ne.s32.totalorder %s223, %s225
      %p229 = scmp.eq.s32.totalorder %s21, 0
      %p230 = por %p228, %p229
      %p231 = scmp.ne.s32.totalorder %s223, %s225
      %p232 = scmp.eq.s32.totalorder %s26, 1
      %p233 = por %p231, %p232
      %p234 = scmp.ne.s32.totalorder %s225, %s226
      %p235 = scmp.eq.s32.totalorder %s26, 0
      %p236 = por %p234, %p235
      %p237 = scmp.ne.s32.totalorder %s225, %s226
      %p238 = scmp.eq.s32.totalorder %s27, 1
      %p239 = por %p237, %p238
      %p241 = scmp.ne.s32.totalorder %s226, %s240
      %p242 = scmp.eq.s32.totalorder %s27, 0
      %p243 = por %p241, %p242
      %s245 = sadd.s32 %s244, 1
      %p248 = scmp.eq.s32.totalorder %s21, 1
      %p249 = scmp.ne.s32.totalorder %s244, %s246
      %p250 = scmp.eq.s32.totalorder %s21, 0
      %p251 = por %p249, %p250
      %p252 = scmp.ne.s32.totalorder %s244, %s246
      %p253 = scmp.eq.s32.totalorder %s26, 1
      %p254 = por %p252, %p253
      %p255 = scmp.ne.s32.totalorder %s246, %s247
      %p256 = scmp.eq.s32.totalorder %s26, 0
      %p257 = por %p255, %p256
      %p258 = scmp.ne.s32.totalorder %s246, %s247
      %p259 = scmp.eq.s32.totalorder %s27, 1
      %p260 = por %p258, %p259
      %p262 = scmp.ne.s32.totalorder %s247, %s261
      %p263 = scmp.eq.s32.totalorder %s27, 0
      %p264 = por %p262, %p263
      %s266 = sadd.s32 %s265, 1
      %p269 = scmp.eq.s32.totalorder %s21, 1
      %p270 = scmp.ne.s32.totalorder %s265, %s267
      %p271 = scmp.eq.s32.totalorder %s21, 0
      %p272 = por %p270, %p271
      %p273 = scmp.ne.s32.totalorder %s265, %s267
      %p274 = scmp.eq.s32.totalorder %s26, 1
      %p275 = por %p273, %p274
      %p276 = scmp.ne.s32.totalorder %s267, %s268
      %p277 = scmp.eq.s32.totalorder %s26, 0
      %p278 = por %p276, %p277
      %p279 = scmp.ne.s32.totalorder %s267, %s268
      %p280 = scmp.eq.s32.totalorder %s27, 1
      %p281 = por %p279, %p280
      %p283 = scmp.ne.s32.totalorder %s268, %s282
      %p284 = scmp.eq.s32.totalorder %s27, 0
      %p285 = por %p283, %p284
      %s286 = ssub.s32 %s21, %s28
      %p287 = scmp.eq.s32.totalorder %s286, 0
      %s289 = sadd.s32 %s288, 1
      %s290 = scalar_select %p287, %s288, %s289
      %p293 = pneg %p287
      %p294 = scmp.eq.s32.totalorder %s21, 1
      %p295 = por %p293, %p294
      %p296 = scmp.ne.s32.totalorder %s288, %s291
      %p297 = scmp.eq.s32.totalorder %s21, 0
      %p298 = por %p296, %p297
      %p299 = scmp.ne.s32.totalorder %s288, %s291
      %p300 = scmp.eq.s32.totalorder %s26, 1
      %p301 = por %p299, %p300
      %p302 = scmp.ne.s32.totalorder %s291, %s292
      %p303 = scmp.eq.s32.totalorder %s26, 0
      %p304 = por %p302, %p303
      %p305 = scmp.ne.s32.totalorder %s291, %s292
      %p306 = scmp.eq.s32.totalorder %s27, 1
      %p307 = por %p305, %p306
      %p309 = scmp.ne.s32.totalorder %s292, %s308
      %p310 = scmp.eq.s32.totalorder %s27, 0
      %p311 = por %p309, %p310
      %p312 = scmp.le.s32.totalorder 1, %s21
      %p313 = scmp.lt.s32.totalorder %s21, 3
      %p314 = pnand %p312, %p313
      %p315 = pneg %p314
      // Predicated region
      $region9: #{snn_forward.2} parent=5 // pred_check
        _
      $region10: #{snn_forward.2} parent=5 // pred_check_branch
        %317 = sbr.rel (%p314) target = $region12
      $region11: #{snn_forward.2} parent=5 // pred_region
        %s318 = ssub.s32 %s21, 1
        // Predicated region
        $region13: #{snn_forward.2} parent=11 // pred_check
          %p319 = pneg %p68
        $region14: #{snn_forward.2} parent=11 // pred_check_branch
          %321 = sbr.rel (%p319) target = $region16
        $region15: #{snn_forward.2} parent=11 // pred_region
          _
        $region16: #{snn_forward.2} parent=11 // pred_fallthru
          _
        // Predicated region
        $region17: #{snn_forward.2} parent=11 // pred_check
          %p322 = pneg %p89
        $region18: #{snn_forward.2} parent=11 // pred_check_branch
          %324 = sbr.rel (%p322) target = $region20
        $region19: #{snn_forward.2} parent=11 // pred_region
          _
        $region20: #{snn_forward.2} parent=11 // pred_fallthru
          _
        // Predicated region
        $region21: #{snn_forward.2} parent=11 // pred_check
          %p325 = pneg %p110
        $region22: #{snn_forward.2} parent=11 // pred_check_branch
          %327 = sbr.rel (%p325) target = $region24
        $region23: #{snn_forward.2} parent=11 // pred_region
          _
        $region24: #{snn_forward.2} parent=11 // pred_fallthru
          _
        // Predicated region
        $region25: #{snn_forward.2} parent=11 // pred_check
          %p328 = pneg %p131
        $region26: #{snn_forward.2} parent=11 // pred_check_branch
          %330 = sbr.rel (%p328) target = $region28
        $region27: #{snn_forward.2} parent=11 // pred_region
          _
        $region28: #{snn_forward.2} parent=11 // pred_fallthru
          _
        // Predicated region
        $region29: #{snn_forward.2} parent=11 // pred_check
          %p331 = pneg %p152
        $region30: #{snn_forward.2} parent=11 // pred_check_branch
          %333 = sbr.rel (%p331) target = $region32
        $region31: #{snn_forward.2} parent=11 // pred_region
          _
        $region32: #{snn_forward.2} parent=11 // pred_fallthru
          _
        // Predicated region
        $region33: #{snn_forward.2} parent=11 // pred_check
          %p334 = pneg %p173
        $region34: #{snn_forward.2} parent=11 // pred_check_branch
          %336 = sbr.rel (%p334) target = $region36
        $region35: #{snn_forward.2} parent=11 // pred_region
          _
        $region36: #{snn_forward.2} parent=11 // pred_fallthru
          _
        // Predicated region
        $region37: #{snn_forward.2} parent=11 // pred_check
          %p337 = pneg %p194
        $region38: #{snn_forward.2} parent=11 // pred_check_branch
          %339 = sbr.rel (%p337) target = $region40
        $region39: #{snn_forward.2} parent=11 // pred_region
          _
        $region40: #{snn_forward.2} parent=11 // pred_fallthru
          _
        // Predicated region
        $region41: #{snn_forward.2} parent=11 // pred_check
          %p340 = pneg %p215
        $region42: #{snn_forward.2} parent=11 // pred_check_branch
          %342 = sbr.rel (%p340) target = $region44
        $region43: #{snn_forward.2} parent=11 // pred_region
          %s344 = ssub.s32 16, 16
          %345 = vsyncadd [#allocation3], %s344
          %s347 = sshll.u32 %s8, 4
          %s348 = int_to_ptr.vmem [resolvable:$true] %s347
          %350 = dma.vmem_to_smem %s348, 16, [#allocation2], [#allocation3]
        $region44: #{snn_forward.2} parent=11 // pred_fallthru
          _
        // Predicated region
        $region45: #{snn_forward.2} parent=11 // pred_check
          %p351 = pneg %p236
        $region46: #{snn_forward.2} parent=11 // pred_check_branch
          %353 = sbr.rel (%p351) target = $region48
        $region47: #{snn_forward.2} parent=11 // pred_region
          %s355 = ssub.s32 16, 16
          %356 = vsyncadd [#allocation5], %s355
          %s358 = sshll.u32 %s9, 4
          %s359 = int_to_ptr.vmem [resolvable:$true] %s358
          %361 = dma.vmem_to_smem %s359, 16, [#allocation4], [#allocation5]
        $region48: #{snn_forward.2} parent=11 // pred_fallthru
          _
        // Predicated region
        $region49: #{snn_forward.2} parent=11 // pred_check
          %p362 = pneg %p257
        $region50: #{snn_forward.2} parent=11 // pred_check_branch
          %364 = sbr.rel (%p362) target = $region52
        $region51: #{snn_forward.2} parent=11 // pred_region
          %s366 = ssub.s32 16, 16
          %367 = vsyncadd [#allocation5], %s366
          %s369 = sshll.u32 %s10, 4
          %s370 = int_to_ptr.vmem [resolvable:$true] %s369
          %372 = dma.vmem_to_smem %s370, 16, [#allocation6], [#allocation5]
        $region52: #{snn_forward.2} parent=11 // pred_fallthru
          _
        // Predicated region
        $region53: #{snn_forward.2} parent=11 // pred_check
          %p373 = pneg %p278
        $region54: #{snn_forward.2} parent=11 // pred_check_branch
          %375 = sbr.rel (%p373) target = $region56
        $region55: #{snn_forward.2} parent=11 // pred_region
          %s377 = ssub.s32 16, 16
          %378 = vsyncadd [#allocation8], %s377
          %s380 = sshll.u32 %s11, 4
          %s381 = int_to_ptr.vmem [resolvable:$true] %s380
          %383 = dma.vmem_to_smem %s381, 16, [#allocation7], [#allocation8]
        $region56: #{snn_forward.2} parent=11 // pred_fallthru
          _
      $region12: #{snn_forward.2} parent=5 // pred_fallthru
        _
      %p384 = scmp.lt.s32.totalorder %s21, 2
      // Predicated region
      $region57: #{snn_forward.2} parent=5 // pred_check
        %p385 = pneg %p384
      $region58: #{snn_forward.2} parent=5 // pred_check_branch
        %387 = sbr.rel (%p385) target = $region60
      $region59: #{snn_forward.2} parent=5 // pred_region
        // Predicated region
        $region61: #{snn_forward.2} parent=59 // pred_check
          %p388 = pneg %p41
        $region62: #{snn_forward.2} parent=59 // pred_check_branch
          %390 = sbr.rel (%p388) target = $region64
        $region63: #{snn_forward.2} parent=59 // pred_region
          %s391 = smul.u32 4, %s21
          %p392 = scmp.lt.s32.totalorder %s391, 7
          %s393 = scalar_select %p392, %s391, 7
          %s394 = smul.addr %s393, 32
          %s395 = smul.addr %s394, 8
          %s396 = scalar_lea.vmem %s0, %s395
          %s397 = smul.u32 4, %s21
        $region64: #{snn_forward.2} parent=59 // pred_fallthru
          _
      $region60: #{snn_forward.2} parent=5 // pred_fallthru
        _
      %p398 = scmp.le.s32.totalorder 1, %s21
      %p399 = scmp.lt.s32.totalorder %s21, 3
      %p400 = pnand %p398, %p399
      %p401 = pneg %p400
      // Predicated region
      $region65: #{snn_forward.2} parent=5 // pred_check
        _
      $region66: #{snn_forward.2} parent=5 // pred_check_branch
        %403 = sbr.rel (%p400) target = $region68
      $region67: #{snn_forward.2} parent=5 // pred_region
        %s404 = ssub.s32 %s21, 1
        // Predicated region
        $region69: #{snn_forward.2} parent=67 // pred_check
          %p405 = pneg %p215
        $region70: #{snn_forward.2} parent=67 // pred_check_branch
          %407 = sbr.rel (%p405) target = $region72
        $region71: #{snn_forward.2} parent=67 // pred_region
          %408 = dma.done [#allocation3], 16
        $region72: #{snn_forward.2} parent=67 // pred_fallthru
          _
        // Predicated region
        $region73: #{snn_forward.2} parent=67 // pred_check
          %p409 = pneg %p236
        $region74: #{snn_forward.2} parent=67 // pred_check_branch
          %411 = sbr.rel (%p409) target = $region76
        $region75: #{snn_forward.2} parent=67 // pred_region
          %412 = dma.done [#allocation5], 16
        $region76: #{snn_forward.2} parent=67 // pred_fallthru
          _
        // Predicated region
        $region77: #{snn_forward.2} parent=67 // pred_check
          %p413 = pneg %p257
        $region78: #{snn_forward.2} parent=67 // pred_check_branch
          %415 = sbr.rel (%p413) target = $region80
        $region79: #{snn_forward.2} parent=67 // pred_region
          %416 = dma.done [#allocation5], 16
        $region80: #{snn_forward.2} parent=67 // pred_fallthru
          _
        // Predicated region
        $region81: #{snn_forward.2} parent=67 // pred_check
          %p417 = pneg %p278
        $region82: #{snn_forward.2} parent=67 // pred_check_branch
          %419 = sbr.rel (%p417) target = $region84
        $region83: #{snn_forward.2} parent=67 // pred_region
          %420 = dma.done [#allocation8], 16
        $region84: #{snn_forward.2} parent=67 // pred_fallthru
          _
        %421 = sfence
        %s422 = smul.u32 4, %s26
        %p423 = scmp.lt.s32.totalorder %s422, 7
        %s424 = scalar_select %p423, %s422, 7
        %s425 = smul.addr %s424, 32
        %s426 = smul.addr %s425, 8
        %s427 = scalar_lea.vmem %s0, %s426
        %p428 = pneg %p47
        %p429 = pneg %p44
        %p430 = pneg %p68
        %p431 = pneg %p65
        %p432 = pneg %p89
        %p433 = pneg %p86
        %p434 = pneg %p110
        %p435 = pneg %p107
        %p436 = pneg %p131
        %p437 = pneg %p128
        %p438 = pneg %p152
        %p439 = pneg %p149
        %p440 = pneg %p173
        %p441 = pneg %p170
        %p442 = pneg %p194
        %p443 = pneg %p191
        %p444 = pneg %p215
        %p445 = pneg %p212
        %p446 = pneg %p236
        %p447 = pneg %p233
        %p448 = pneg %p257
        %p449 = pneg %p254
        %p450 = pneg %p278
        %p451 = pneg %p275
        %p452 = pneg %p304
        %p453 = pneg %p301
        %s454 = smul.u32 4, %s26
        %p455 = scmp.lt.s32.totalorder %s454, 7
        %s456 = scalar_select %p455, %s454, 7
        %s457 = smul.addr %s456, 4
        %s458 = smul.addr %s457, 8
        %s459 = scalar_lea.vmem %s12, %s458
        %s460 = smul.u32 4, %s26
        %p461 = scmp.lt.s32.totalorder %s460, 7
        %s462 = scalar_select %p461, %s460, 7
        %s463 = smul.addr %s462, 32
        %s464 = smul.addr %s463, 8
        %s465 = scalar_lea.vmem %s0, %s464
        %s466 = smul.u32 4, %s26
        %s467 = smul.u32 4, %s26
        %p468 = scmp.lt.s32.totalorder %s467, 7
        %s469 = scalar_select %p468, %s467, 7
        %s470 = smul.addr %s469, 4
        %s471 = smul.addr %s470, 8
        %s472 = scalar_lea.vmem %s12, %s471
        %s473 = smul.u32 4, %s26
        %s474 = sld [smem:[#allocation2]]
        %s475 = sld [smem:[#allocation2 + $0x1]]
        %s476 = sld [smem:[#allocation2 + $0x2]]
        %s477 = sld [smem:[#allocation2 + $0x3]]
        %s478 = sld [smem:[#allocation2 + $0x4]]
        %s479 = sld [smem:[#allocation2 + $0x5]]
        %s480 = sld [smem:[#allocation2 + $0x6]]
        %s481 = sld [smem:[#allocation2 + $0x7]]
        %s482 = sld [smem:[#allocation2 + $0x8]]
        %s483 = sld [smem:[#allocation2 + $0x9]]
        %s484 = sld [smem:[#allocation2 + $0xa]]
        %s485 = sld [smem:[#allocation2 + $0xb]]
        %s486 = sld [smem:[#allocation2 + $0xc]]
        %s487 = sld [smem:[#allocation2 + $0xd]]
        %s488 = sld [smem:[#allocation2 + $0xe]]
        %s489 = sld [smem:[#allocation2 + $0xf]]
        %s490 = sld [smem:[#allocation2 + $0x10]]
        %s491 = sld [smem:[#allocation2 + $0x11]]
        %s492 = sld [smem:[#allocation2 + $0x12]]
        %s493 = sld [smem:[#allocation2 + $0x13]]
        %s494 = sld [smem:[#allocation2 + $0x14]]
        %s495 = sld [smem:[#allocation2 + $0x15]]
        %s496 = sld [smem:[#allocation2 + $0x16]]
        %s497 = sld [smem:[#allocation2 + $0x17]]
        %s498 = sld [smem:[#allocation2 + $0x18]]
        %s499 = sld [smem:[#allocation2 + $0x19]]
        %s500 = sld [smem:[#allocation2 + $0x1a]]
        %s501 = sld [smem:[#allocation2 + $0x1b]]
        %s502 = sld [smem:[#allocation2 + $0x1c]]
        %s503 = sld [smem:[#allocation2 + $0x1d]]
        %s504 = sld [smem:[#allocation2 + $0x1e]]
        %s505 = sld [smem:[#allocation2 + $0x1f]]
        %s506 = sld [smem:[#allocation2 + $0x20]]
        %s507 = sld [smem:[#allocation2 + $0x21]]
        %s508 = sld [smem:[#allocation2 + $0x22]]
        %s509 = sld [smem:[#allocation2 + $0x23]]
        %s510 = sld [smem:[#allocation4]]
        %s511 = sld [smem:[#allocation4 + $0x1]]
        %s512 = sld [smem:[#allocation6]]
        %s513 = sld [smem:[#allocation6 + $0x1]]
        %s514 = sld [smem:[#allocation6 + $0x2]]
        %s515 = sld [smem:[#allocation6 + $0x3]]
        %s516 = sld [smem:[#allocation6 + $0x4]]
        %s517 = sld [smem:[#allocation6 + $0x5]]
        %s518 = sld [smem:[#allocation6 + $0x6]]
        %s519 = sld [smem:[#allocation6 + $0x7]]
        %s520 = sld [smem:[#allocation6 + $0x8]]
        %s521 = sld [smem:[#allocation6 + $0x9]]
        %s522 = sld [smem:[#allocation6 + $0xa]]
        %s523 = sld [smem:[#allocation6 + $0xb]]
        %s524 = sld [smem:[#allocation6 + $0xc]]
        %s525 = sld [smem:[#allocation6 + $0xd]]
        %s526 = sld [smem:[#allocation6 + $0xe]]
        %s527 = sld [smem:[#allocation6 + $0xf]]
        %s528 = sld [smem:[#allocation6 + $0x10]]
        %s529 = sld [smem:[#allocation6 + $0x11]]
        %s530 = sld [smem:[#allocation6 + $0x12]]
        %s531 = sld [smem:[#allocation6 + $0x13]]
        %s532 = sld [smem:[#allocation6 + $0x14]]
        %s533 = sld [smem:[#allocation6 + $0x15]]
        %s534 = sld [smem:[#allocation6 + $0x16]]
        %s535 = sld [smem:[#allocation6 + $0x17]]
        %s536 = sld [smem:[#allocation6 + $0x18]]
        %s537 = sld [smem:[#allocation6 + $0x19]]
        %s538 = sld [smem:[#allocation6 + $0x1a]]
        %s539 = sld [smem:[#allocation6 + $0x1b]]
        %s540 = sld [smem:[#allocation6 + $0x1c]]
        %s541 = sld [smem:[#allocation6 + $0x1d]]
        %s542 = sld [smem:[#allocation6 + $0x1e]]
        %s543 = sld [smem:[#allocation6 + $0x1f]]
        %s544 = sld [smem:[#allocation6 + $0x20]]
        %s545 = sld [smem:[#allocation6 + $0x21]]
        %s546 = sld [smem:[#allocation6 + $0x22]]
        %s547 = sld [smem:[#allocation6 + $0x23]]
        %s548 = sld [smem:[#allocation6 + $0x24]]
        %s549 = sld [smem:[#allocation6 + $0x25]]
        %s550 = sld [smem:[#allocation6 + $0x26]]
        %s551 = sld [smem:[#allocation6 + $0x27]]
        %s552 = sld [smem:[#allocation6 + $0x28]]
        %s553 = sld [smem:[#allocation6 + $0x29]]
        %s554 = sld [smem:[#allocation6 + $0x2a]]
        %s555 = sld [smem:[#allocation6 + $0x2b]]
        %s556 = sld [smem:[#allocation6 + $0x2c]]
        %s557 = sld [smem:[#allocation6 + $0x2d]]
        %s558 = sld [smem:[#allocation6 + $0x2e]]
        %s559 = sld [smem:[#allocation6 + $0x2f]]
        %s560 = sld [smem:[#allocation6 + $0x30]]
        %s561 = sld [smem:[#allocation6 + $0x31]]
        %s562 = sld [smem:[#allocation6 + $0x32]]
        %s563 = sld [smem:[#allocation6 + $0x33]]
        %s564 = sld [smem:[#allocation6 + $0x34]]
        %s565 = sld [smem:[#allocation6 + $0x35]]
        %s566 = sld [smem:[#allocation6 + $0x36]]
        %s567 = sld [smem:[#allocation6 + $0x37]]
        %s568 = sld [smem:[#allocation6 + $0x38]]
        %s569 = sld [smem:[#allocation6 + $0x39]]
        %s570 = sld [smem:[#allocation6 + $0x3a]]
        %s571 = sld [smem:[#allocation6 + $0x3b]]
        %s572 = sld [smem:[#allocation6 + $0x3c]]
        %s573 = sld [smem:[#allocation6 + $0x3d]]
        %s574 = sld [smem:[#allocation6 + $0x3e]]
        %s575 = sld [smem:[#allocation6 + $0x3f]]
        %s576 = sld [smem:[#allocation6 + $0x40]]
        %s577 = sld [smem:[#allocation6 + $0x41]]
        %s578 = sld [smem:[#allocation6 + $0x42]]
        %s579 = sld [smem:[#allocation6 + $0x43]]
        %s580 = sld [smem:[#allocation6 + $0x44]]
        %s581 = sld [smem:[#allocation6 + $0x45]]
        %s582 = sld [smem:[#allocation6 + $0x46]]
        %s583 = sld [smem:[#allocation6 + $0x47]]
        %s584 = sld [smem:[#allocation7]]
        %s585 = sld [smem:[#allocation7 + $0x1]]
        %s586 = sld [smem:[#allocation7 + $0x2]]
        %s587 = sld [smem:[#allocation7 + $0x3]]
        %v588 = vlaneseq
        %v589 = vshrl.u32 %v588, 7
        %v590 = vadd.s32 %v589, 8
        %v591 = vadd.s32 %v589, 16
        %v592 = vadd.s32 %v589, 24
        %v593 = vadd.s32 %v589, 32
        %v594 = vadd.s32 %v589, 40
        %v595 = vadd.s32 %v589, 48
        %v596 = vadd.s32 %v589, 56
        %v597 = vadd.s32 %v589, 64
        %v598 = vadd.s32 %v589, 72
        %v599 = vadd.s32 %v589, 80
        %v600 = vadd.s32 %v589, 88
        %v601 = vadd.s32 %v589, 96
        %v602 = vadd.s32 %v589, 104
        %v603 = vadd.s32 %v589, 112
        %v604 = vadd.s32 %v589, 120
        %vm605 = vcmp.ne.s32.totalorder %v589, 127
        %vm606 = vcmp.ne.s32.totalorder %v590, 127
        %vm607 = vcmp.ne.s32.totalorder %v591, 127
        %vm608 = vcmp.ne.s32.totalorder %v592, 127
        %vm609 = vcmp.ne.s32.totalorder %v593, 127
        %vm610 = vcmp.ne.s32.totalorder %v594, 127
        %vm611 = vcmp.ne.s32.totalorder %v595, 127
        %vm612 = vcmp.ne.s32.totalorder %v596, 127
        %vm613 = vcmp.ne.s32.totalorder %v597, 127
        %vm614 = vcmp.ne.s32.totalorder %v598, 127
        %vm615 = vcmp.ne.s32.totalorder %v599, 127
        %vm616 = vcmp.ne.s32.totalorder %v600, 127
        %vm617 = vcmp.ne.s32.totalorder %v601, 127
        %vm618 = vcmp.ne.s32.totalorder %v602, 127
        %vm619 = vcmp.ne.s32.totalorder %v603, 127
        %vm620 = vcmp.ne.s32.totalorder %v604, 127
        %v621 = vsel %vm605, 1, 0
        %v622 = vsel %vm606, 1, 0
        %v623 = vsel %vm607, 1, 0
        %v624 = vsel %vm608, 1, 0
        %v625 = vsel %vm609, 1, 0
        %v626 = vsel %vm610, 1, 0
        %v627 = vsel %vm611, 1, 0
        %v628 = vsel %vm612, 1, 0
        %v629 = vsel %vm613, 1, 0
        %v630 = vsel %vm614, 1, 0
        %v631 = vsel %vm615, 1, 0
        %v632 = vsel %vm616, 1, 0
        %v633 = vsel %vm617, 1, 0
        %v634 = vsel %vm618, 1, 0
        %v635 = vsel %vm619, 1, 0
        %v636 = vsel %vm620, 1, 0
        %v637 = vcvt.s32.f32 %v621
        %v638 = vcvt.s32.f32 %v622
        %v639 = vcvt.s32.f32 %v623
        %v640 = vcvt.s32.f32 %v624
        %v641 = vcvt.s32.f32 %v625
        %v642 = vcvt.s32.f32 %v626
        %v643 = vcvt.s32.f32 %v627
        %v644 = vcvt.s32.f32 %v628
        %v645 = vcvt.s32.f32 %v629
        %v646 = vcvt.s32.f32 %v630
        %v647 = vcvt.s32.f32 %v631
        %v648 = vcvt.s32.f32 %v632
        %v649 = vcvt.s32.f32 %v633
        %v650 = vcvt.s32.f32 %v634
        %v651 = vcvt.s32.f32 %v635
        %v652 = vcvt.s32.f32 %v636
        %vm653 = vcmp.ne.s32.totalorder %v589, 0
        %vm654 = vcmp.ne.s32.totalorder %v590, 0
        %vm655 = vcmp.ne.s32.totalorder %v591, 0
        %vm656 = vcmp.ne.s32.totalorder %v592, 0
        %vm657 = vcmp.ne.s32.totalorder %v593, 0
        %vm658 = vcmp.ne.s32.totalorder %v594, 0
        %vm659 = vcmp.ne.s32.totalorder %v595, 0
        %vm660 = vcmp.ne.s32.totalorder %v596, 0
        %vm661 = vcmp.ne.s32.totalorder %v597, 0
        %vm662 = vcmp.ne.s32.totalorder %v598, 0
        %vm663 = vcmp.ne.s32.totalorder %v599, 0
        %vm664 = vcmp.ne.s32.totalorder %v600, 0
        %vm665 = vcmp.ne.s32.totalorder %v601, 0
        %vm666 = vcmp.ne.s32.totalorder %v602, 0
        %vm667 = vcmp.ne.s32.totalorder %v603, 0
        %vm668 = vcmp.ne.s32.totalorder %v604, 0
        %v669 = vsel %vm653, 1, 0
        %v670 = vsel %vm654, 1, 0
        %v671 = vsel %vm655, 1, 0
        %v672 = vsel %vm656, 1, 0
        %v673 = vsel %vm657, 1, 0
        %v674 = vsel %vm658, 1, 0
        %v675 = vsel %vm659, 1, 0
        %v676 = vsel %vm660, 1, 0
        %v677 = vsel %vm661, 1, 0
        %v678 = vsel %vm662, 1, 0
        %v679 = vsel %vm663, 1, 0
        %v680 = vsel %vm664, 1, 0
        %v681 = vsel %vm665, 1, 0
        %v682 = vsel %vm666, 1, 0
        %v683 = vsel %vm667, 1, 0
        %v684 = vsel %vm668, 1, 0
        %v685 = vcvt.s32.f32 %v669
        %v686 = vcvt.s32.f32 %v670
        %v687 = vcvt.s32.f32 %v671
        %v688 = vcvt.s32.f32 %v672
        %v689 = vcvt.s32.f32 %v673
        %v690 = vcvt.s32.f32 %v674
        %v691 = vcvt.s32.f32 %v675
        %v692 = vcvt.s32.f32 %v676
        %v693 = vcvt.s32.f32 %v677
        %v694 = vcvt.s32.f32 %v678
        %v695 = vcvt.s32.f32 %v679
        %v696 = vcvt.s32.f32 %v680
        %v697 = vcvt.s32.f32 %v681
        %v698 = vcvt.s32.f32 %v682
        %v699 = vcvt.s32.f32 %v683
        %v700 = vcvt.s32.f32 %v684
        %v701 = vlaneseq
        %v702 = vand.u32 %v701, 127
        %vm703 = vcmp.ne.s32.totalorder %v702, 127
        %v704 = vsel %vm703, 1, 0
        %v705 = vcvt.s32.f32 %v704
        %vm706 = vcmp.ne.s32.totalorder %v702, 0
        %v707 = vsel %vm706, 1, 0
        %v708 = vcvt.s32.f32 %v707
        %vm709 = vcmp.ne.s32.totalorder %v589, 63
        %vm710 = vcmp.ne.s32.totalorder %v590, 63
        %vm711 = vcmp.ne.s32.totalorder %v591, 63
        %vm712 = vcmp.ne.s32.totalorder %v592, 63
        %vm713 = vcmp.ne.s32.totalorder %v593, 63
        %vm714 = vcmp.ne.s32.totalorder %v594, 63
        %vm715 = vcmp.ne.s32.totalorder %v595, 63
        %vm716 = vcmp.ne.s32.totalorder %v596, 63
        %v717 = vsel %vm709, 1, 0
        %v718 = vsel %vm710, 1, 0
        %v719 = vsel %vm711, 1, 0
        %v720 = vsel %vm712, 1, 0
        %v721 = vsel %vm713, 1, 0
        %v722 = vsel %vm714, 1, 0
        %v723 = vsel %vm715, 1, 0
        %v724 = vsel %vm716, 1, 0
        %v725 = vcvt.s32.f32 %v717
        %v726 = vcvt.s32.f32 %v718
        %v727 = vcvt.s32.f32 %v719
        %v728 = vcvt.s32.f32 %v720
        %v729 = vcvt.s32.f32 %v721
        %v730 = vcvt.s32.f32 %v722
        %v731 = vcvt.s32.f32 %v723
        %v732 = vcvt.s32.f32 %v724
        loop: start=0, step=1, limit=4
        $region85: #{snn_forward.2} parent=67 // loop_pre_header
          _
        $region86: #{snn_forward.2} parent=67 // loop_header
          %s734 = sphi 0, %s738
          %p735 = scmp.ge.s32.totalorder %s734, 4
        $region87: #{snn_forward.2} parent=67 // loop_header_branch
          %737 = sbr.rel (%p735) target = $region91
        $region88: #{snn_forward.2} parent=67 // loop_body
          %v739 = vstv %s510
          %v740 = vadd.f32 %v739, 0.0
          %v741 = vstv %s511
          %v742 = vadd.f32 %v741, 0.0
          %s743 = smul.u32 %s734, 32
          %s744 = smul.addr %s743, 8
          %s745 = scalar_lea.vmem %s465, %s744
          %v746 = vld [vmem:[%s745] sm:$0xff]
          %v747 = vld [vmem:[%s745 + $0x8] sm:$0xff]
          %v748 = vld [vmem:[%s745 + $0x10] sm:$0xff]
          %v749 = vld [vmem:[%s745 + $0x18] sm:$0xff]
          %v750 = vld [vmem:[%s745 + $0x20] sm:$0xff]
          %v751 = vld [vmem:[%s745 + $0x28] sm:$0xff]
          %v752 = vld [vmem:[%s745 + $0x30] sm:$0xff]
          %v753 = vld [vmem:[%s745 + $0x38] sm:$0xff]
          %v754 = vld [vmem:[%s745 + $0x40] sm:$0xff]
          %v755 = vld [vmem:[%s745 + $0x48] sm:$0xff]
          %v756 = vld [vmem:[%s745 + $0x50] sm:$0xff]
          %v757 = vld [vmem:[%s745 + $0x58] sm:$0xff]
          %v758 = vld [vmem:[%s745 + $0x60] sm:$0xff]
          %v759 = vld [vmem:[%s745 + $0x68] sm:$0xff]
          %v760 = vld [vmem:[%s745 + $0x70] sm:$0xff]
          %v761 = vld [vmem:[%s745 + $0x78] sm:$0xff]
          %v762 = vld [vmem:[%s745 + $0x80] sm:$0xff]
          %v763 = vld [vmem:[%s745 + $0x88] sm:$0xff]
          %v764 = vld [vmem:[%s745 + $0x90] sm:$0xff]
          %v765 = vld [vmem:[%s745 + $0x98] sm:$0xff]
          %v766 = vld [vmem:[%s745 + $0xa0] sm:$0xff]
          %v767 = vld [vmem:[%s745 + $0xa8] sm:$0xff]
          %v768 = vld [vmem:[%s745 + $0xb0] sm:$0xff]
          %v769 = vld [vmem:[%s745 + $0xb8] sm:$0xff]
          %v770 = vld [vmem:[%s745 + $0xc0] sm:$0xff]
          %v771 = vld [vmem:[%s745 + $0xc8] sm:$0xff]
          %v772 = vld [vmem:[%s745 + $0xd0] sm:$0xff]
          %v773 = vld [vmem:[%s745 + $0xd8] sm:$0xff]
          %v774 = vld [vmem:[%s745 + $0xe0] sm:$0xff]
          %v775 = vld [vmem:[%s745 + $0xe8] sm:$0xff]
          %v776 = vld [vmem:[%s745 + $0xf0] sm:$0xff]
          %v777 = vld [vmem:[%s745 + $0xf8] sm:$0xff]
          %v778 = vld [vmem:[%s1] sm:$0xff]
          %v779 = vld [vmem:[%s1 + $0x8] sm:$0xff]
          %v780 = vld [vmem:[%s1 + $0x10] sm:$0xff]
          %v781 = vld [vmem:[%s1 + $0x18] sm:$0xff]
          %v782 = vld [vmem:[%s1 + $0x20] sm:$0xff]
          %v783 = vld [vmem:[%s1 + $0x28] sm:$0xff]
          %v784 = vld [vmem:[%s1 + $0x30] sm:$0xff]
          %v785 = vld [vmem:[%s1 + $0x38] sm:$0xff]
          %v786 = vld [vmem:[%s1 + $0x40] sm:$0xff]
          %v787 = vld [vmem:[%s1 + $0x48] sm:$0xff]
          %v788 = vld [vmem:[%s1 + $0x50] sm:$0xff]
          %v789 = vld [vmem:[%s1 + $0x58] sm:$0xff]
          %v790 = vld [vmem:[%s1 + $0x60] sm:$0xff]
          %v791 = vld [vmem:[%s1 + $0x68] sm:$0xff]
          %v792 = vld [vmem:[%s1 + $0x70] sm:$0xff]
          %v793 = vld [vmem:[%s1 + $0x78] sm:$0xff]
          %v794 = vld [vmem:[%s1 + $0x80] sm:$0xff]
          %v795 = vld [vmem:[%s1 + $0x88] sm:$0xff]
          %v796 = vld [vmem:[%s1 + $0x90] sm:$0xff]
          %v797 = vld [vmem:[%s1 + $0x98] sm:$0xff]
          %v798 = vld [vmem:[%s1 + $0xa0] sm:$0xff]
          %v799 = vld [vmem:[%s1 + $0xa8] sm:$0xff]
          %v800 = vld [vmem:[%s1 + $0xb0] sm:$0xff]
          %v801 = vld [vmem:[%s1 + $0xb8] sm:$0xff]
          %v802 = vld [vmem:[%s1 + $0xc0] sm:$0xff]
          %v803 = vld [vmem:[%s1 + $0xc8] sm:$0xff]
          %v804 = vld [vmem:[%s1 + $0xd0] sm:$0xff]
          %v805 = vld [vmem:[%s1 + $0xd8] sm:$0xff]
          %v806 = vld [vmem:[%s1 + $0xe0] sm:$0xff]
          %v807 = vld [vmem:[%s1 + $0xe8] sm:$0xff]
          %v808 = vld [vmem:[%s1 + $0xf0] sm:$0xff]
          %v809 = vld [vmem:[%s1 + $0xf8] sm:$0xff]
          %810 = vmatprep.subr.mxu0 0.0
          %811 = vmatpush1.msra.mxu0 %v793
          %812 = vmatprep.subr.mxu0 0.0
          %813 = vmatpush1.msra.mxu0 %v792
          %814 = vmatprep.subr.mxu0 0.0
          %815 = vmatpush1.msra.mxu0 %v791
          %816 = vmatprep.subr.mxu0 0.0
          %817 = vmatpush1.msra.mxu0 %v790
          %818 = vmatprep.subr.mxu0 0.0
          %819 = vmatpush1.msra.mxu0 %v789
          %820 = vmatprep.subr.mxu0 0.0
          %821 = vmatpush1.msra.mxu0 %v788
          %822 = vmatprep.subr.mxu0 0.0
          %823 = vmatpush1.msra.mxu0 %v787
          %824 = vmatprep.subr.mxu0 0.0
          %825 = vmatpush1.msra.mxu0 %v786
          %826 = vmatprep.subr.mxu0 0.0
          %827 = vmatpush1.msra.mxu0 %v785
          %828 = vmatprep.subr.mxu0 0.0
          %829 = vmatpush1.msra.mxu0 %v784
          %830 = vmatprep.subr.mxu0 0.0
          %831 = vmatpush1.msra.mxu0 %v783
          %832 = vmatprep.subr.mxu0 0.0
          %833 = vmatpush1.msra.mxu0 %v782
          %834 = vmatprep.subr.mxu0 0.0
          %835 = vmatpush1.msra.mxu0 %v781
          %836 = vmatprep.subr.mxu0 0.0
          %837 = vmatpush1.msra.mxu0 %v780
          %838 = vmatprep.subr.mxu0 0.0
          %839 = vmatpush1.msra.mxu0 %v779
          %840 = vmatprep.subr.mxu0 0.0
          %841 = vmatpush1.msra.mxu0 %v778
          %842 = vmatprep.subr.mxu0 0.0
          %843 = vmatpush2.msra.mxu0 %v809
          %844 = vmatprep.subr.mxu0 0.0
          %845 = vmatpush2.msra.mxu0 %v808
          %846 = vmatprep.subr.mxu0 0.0
          %847 = vmatpush2.msra.mxu0 %v807
          %848 = vmatprep.subr.mxu0 0.0
          %849 = vmatpush2.msra.mxu0 %v806
          %850 = vmatprep.subr.mxu0 0.0
          %851 = vmatpush2.msra.mxu0 %v805
          %852 = vmatprep.subr.mxu0 0.0
          %853 = vmatpush2.msra.mxu0 %v804
          %854 = vmatprep.subr.mxu0 0.0
          %855 = vmatpush2.msra.mxu0 %v803
          %856 = vmatprep.subr.mxu0 0.0
          %857 = vmatpush2.msra.mxu0 %v802
          %858 = vmatprep.subr.mxu0 0.0
          %859 = vmatpush2.msra.mxu0 %v801
          %860 = vmatprep.subr.mxu0 0.0
          %861 = vmatpush2.msra.mxu0 %v800
          %862 = vmatprep.subr.mxu0 0.0
          %863 = vmatpush2.msra.mxu0 %v799
          %864 = vmatprep.subr.mxu0 0.0
          %865 = vmatpush2.msra.mxu0 %v798
          %866 = vmatprep.subr.mxu0 0.0
          %867 = vmatpush2.msra.mxu0 %v797
          %868 = vmatprep.subr.mxu0 0.0
          %869 = vmatpush2.msra.mxu0 %v796
          %870 = vmatprep.subr.mxu0 0.0
          %871 = vmatpush2.msra.mxu0 %v795
          %872 = vmatprep.subr.mxu0 0.0
          %873 = vmatpush2.msra.mxu0 %v794
          %874 = vmatprep.mubr.f32.mxu0 %v747
          %875 = vmatmul.mubr.f32.gmra.mxu0 %v746
          %v876 = vpop.f32.mrf.mxu0
          %v877 = vadd.f32 0.0, %v876
          %v878 = vpop.f32.mrf.mxu0
          %879 = vmatprep.mubr.f32.mxu0 %v749
          %880 = vmatmul.mubr.f32.gmra.mxu0 %v748
          %v881 = vpop.f32.mrf.mxu0
          %v882 = vadd.f32 0.0, %v881
          %v883 = vpop.f32.mrf.mxu0
          %884 = vmatprep.mubr.f32.mxu0 %v751
          %885 = vmatmul.mubr.f32.gmra.mxu0 %v750
          %v886 = vpop.f32.mrf.mxu0
          %v887 = vadd.f32 0.0, %v886
          %v888 = vpop.f32.mrf.mxu0
          %889 = vmatprep.mubr.f32.mxu0 %v753
          %890 = vmatmul.mubr.f32.gmra.mxu0 %v752
          %v891 = vpop.f32.mrf.mxu0
          %v892 = vadd.f32 0.0, %v891
          %v893 = vpop.f32.mrf.mxu0
          %894 = vmatprep.mubr.f32.mxu0 %v755
          %895 = vmatmul.mubr.f32.gmra.mxu0 %v754
          %v896 = vpop.f32.mrf.mxu0
          %v897 = vadd.f32 0.0, %v896
          %v898 = vpop.f32.mrf.mxu0
          %899 = vmatprep.mubr.f32.mxu0 %v757
          %900 = vmatmul.mubr.f32.gmra.mxu0 %v756
          %v901 = vpop.f32.mrf.mxu0
          %v902 = vadd.f32 0.0, %v901
          %v903 = vpop.f32.mrf.mxu0
          %904 = vmatprep.mubr.f32.mxu0 %v759
          %905 = vmatmul.mubr.f32.gmra.mxu0 %v758
          %v906 = vpop.f32.mrf.mxu0
          %v907 = vadd.f32 0.0, %v906
          %v908 = vpop.f32.mrf.mxu0
          %909 = vmatprep.mubr.f32.mxu0 %v761
          %910 = vmatmul.mubr.f32.gmra.mxu0 %v760
          %v911 = vpop.f32.mrf.mxu0
          %v912 = vadd.f32 0.0, %v911
          %v913 = vpop.f32.mrf.mxu0
          %914 = vmatprep.mubr.f32.mxu0 %v763
          %915 = vmatmul.mubr.f32.gmra.mxu0 %v762
          %v916 = vpop.f32.mrf.mxu0
          %v917 = vadd.f32 0.0, %v916
          %v918 = vpop.f32.mrf.mxu0
          %919 = vmatprep.mubr.f32.mxu0 %v765
          %920 = vmatmul.mubr.f32.gmra.mxu0 %v764
          %v921 = vpop.f32.mrf.mxu0
          %v922 = vadd.f32 0.0, %v921
          %v923 = vpop.f32.mrf.mxu0
          %924 = vmatprep.mubr.f32.mxu0 %v767
          %925 = vmatmul.mubr.f32.gmra.mxu0 %v766
          %v926 = vpop.f32.mrf.mxu0
          %v927 = vadd.f32 0.0, %v926
          %v928 = vpop.f32.mrf.mxu0
          %929 = vmatprep.mubr.f32.mxu0 %v769
          %930 = vmatmul.mubr.f32.gmra.mxu0 %v768
          %v931 = vpop.f32.mrf.mxu0
          %v932 = vadd.f32 0.0, %v931
          %v933 = vpop.f32.mrf.mxu0
          %934 = vmatprep.mubr.f32.mxu0 %v771
          %935 = vmatmul.mubr.f32.gmra.mxu0 %v770
          %v936 = vpop.f32.mrf.mxu0
          %v937 = vadd.f32 0.0, %v936
          %v938 = vpop.f32.mrf.mxu0
          %939 = vmatprep.mubr.f32.mxu0 %v773
          %940 = vmatmul.mubr.f32.gmra.mxu0 %v772
          %v941 = vpop.f32.mrf.mxu0
          %v942 = vadd.f32 0.0, %v941
          %v943 = vpop.f32.mrf.mxu0
          %944 = vmatprep.mubr.f32.mxu0 %v775
          %945 = vmatmul.mubr.f32.gmra.mxu0 %v774
          %v946 = vpop.f32.mrf.mxu0
          %v947 = vadd.f32 0.0, %v946
          %v948 = vpop.f32.mrf.mxu0
          %949 = vmatprep.mubr.f32.mxu0 %v777
          %950 = vmatmul.mubr.f32.gmra.mxu0 %v776
          %v951 = vpop.f32.mrf.mxu0
          %v952 = vadd.f32 0.0, %v951
          %v953 = vpop.f32.mrf.mxu0
          %954 = vdwg.mxu0
          %v955 = vrot.slane %v877, 7
          %v956 = vrot.slane %v882, 7
          %v957 = vrot.slane %v887, 7
          %v958 = vrot.slane %v892, 7
          %v959 = vrot.slane %v897, 7
          %v960 = vrot.slane %v902, 7
          %v961 = vrot.slane %v907, 7
          %v962 = vrot.slane %v912, 7
          %v963 = vrot.slane %v917, 7
          %v964 = vrot.slane %v922, 7
          %v965 = vrot.slane %v927, 7
          %v966 = vrot.slane %v932, 7
          %v967 = vrot.slane %v937, 7
          %v968 = vrot.slane %v942, 7
          %v969 = vrot.slane %v947, 7
          %v970 = vrot.slane %v952, 7
          %vm971 = vcmp.lt.s32.totalorder %v589, 1
          %v972 = vsel %vm971, %v969, %v970
          %v973 = vsel %vm971, %v968, %v969
          %v974 = vsel %vm971, %v967, %v968
          %v975 = vsel %vm971, %v966, %v967
          %v976 = vsel %vm971, %v965, %v966
          %v977 = vsel %vm971, %v964, %v965
          %v978 = vsel %vm971, %v963, %v964
          %v979 = vsel %vm971, %v962, %v963
          %v980 = vsel %vm971, %v961, %v962
          %v981 = vsel %vm971, %v960, %v961
          %v982 = vsel %vm971, %v959, %v960
          %v983 = vsel %vm971, %v958, %v959
          %v984 = vsel %vm971, %v957, %v958
          %v985 = vsel %vm971, %v956, %v957
          %v986 = vsel %vm971, %v955, %v956
          %v987 = vsel %vm971, %v970, %v955
          %v988 = vmul.f32 %v987, %v685
          %v989 = vmul.f32 %v986, %v686
          %v990 = vmul.f32 %v985, %v687
          %v991 = vmul.f32 %v984, %v688
          %v992 = vmul.f32 %v983, %v689
          %v993 = vmul.f32 %v982, %v690
          %v994 = vmul.f32 %v981, %v691
          %v995 = vmul.f32 %v980, %v692
          %v996 = vmul.f32 %v979, %v693
          %v997 = vmul.f32 %v978, %v694
          %v998 = vmul.f32 %v977, %v695
          %v999 = vmul.f32 %v976, %v696
          %v1000 = vmul.f32 %v975, %v697
          %v1001 = vmul.f32 %v974, %v698
          %v1002 = vmul.f32 %v973, %v699
          %v1003 = vmul.f32 %v972, %v700
          %1004 = vrot.lane.b32.xlu0 %v988, 1
          %v1005 = vpop.permute.xlu0 %1004
          %1006 = vrot.lane.b32.xlu0 %v989, 1
          %v1007 = vpop.permute.xlu0 %1006
          %1008 = vrot.lane.b32.xlu0 %v990, 1
          %v1009 = vpop.permute.xlu0 %1008
          %1010 = vrot.lane.b32.xlu0 %v991, 1
          %v1011 = vpop.permute.xlu0 %1010
          %1012 = vrot.lane.b32.xlu0 %v992, 1
          %v1013 = vpop.permute.xlu0 %1012
          %1014 = vrot.lane.b32.xlu0 %v993, 1
          %v1015 = vpop.permute.xlu0 %1014
          %1016 = vrot.lane.b32.xlu0 %v994, 1
          %v1017 = vpop.permute.xlu0 %1016
          %1018 = vrot.lane.b32.xlu0 %v995, 1
          %v1019 = vpop.permute.xlu0 %1018
          %1020 = vrot.lane.b32.xlu0 %v996, 1
          %v1021 = vpop.permute.xlu0 %1020
          %1022 = vrot.lane.b32.xlu0 %v997, 1
          %v1023 = vpop.permute.xlu0 %1022
          %1024 = vrot.lane.b32.xlu0 %v998, 1
          %v1025 = vpop.permute.xlu0 %1024
          %1026 = vrot.lane.b32.xlu0 %v999, 1
          %v1027 = vpop.permute.xlu0 %1026
          %1028 = vrot.lane.b32.xlu0 %v1000, 1
          %v1029 = vpop.permute.xlu0 %1028
          %1030 = vrot.lane.b32.xlu0 %v1001, 1
          %v1031 = vpop.permute.xlu0 %1030
          %1032 = vrot.lane.b32.xlu0 %v1002, 1
          %v1033 = vpop.permute.xlu0 %1032
          %1034 = vrot.lane.b32.xlu0 %v1003, 1
          %v1035 = vpop.permute.xlu0 %1034
          %v1036 = vmul.f32 %v1005, %v708
          %v1037 = vmul.f32 %v1007, %v708
          %v1038 = vmul.f32 %v1009, %v708
          %v1039 = vmul.f32 %v1011, %v708
          %v1040 = vmul.f32 %v1013, %v708
          %v1041 = vmul.f32 %v1015, %v708
          %v1042 = vmul.f32 %v1017, %v708
          %v1043 = vmul.f32 %v1019, %v708
          %v1044 = vmul.f32 %v1021, %v708
          %v1045 = vmul.f32 %v1023, %v708
          %v1046 = vmul.f32 %v1025, %v708
          %v1047 = vmul.f32 %v1027, %v708
          %v1048 = vmul.f32 %v1029, %v708
          %v1049 = vmul.f32 %v1031, %v708
          %v1050 = vmul.f32 %v1033, %v708
          %v1051 = vmul.f32 %v1035, %v708
          %v1052 = vstv %s474
          %v1053 = vmul.f32 %v1052, %v1036
          %v1054 = vmul.f32 %v1052, %v1037
          %v1055 = vmul.f32 %v1052, %v1038
          %v1056 = vmul.f32 %v1052, %v1039
          %v1057 = vmul.f32 %v1052, %v1040
          %v1058 = vmul.f32 %v1052, %v1041
          %v1059 = vmul.f32 %v1052, %v1042
          %v1060 = vmul.f32 %v1052, %v1043
          %v1061 = vmul.f32 %v1052, %v1044
          %v1062 = vmul.f32 %v1052, %v1045
          %v1063 = vmul.f32 %v1052, %v1046
          %v1064 = vmul.f32 %v1052, %v1047
          %v1065 = vmul.f32 %v1052, %v1048
          %v1066 = vmul.f32 %v1052, %v1049
          %v1067 = vmul.f32 %v1052, %v1050
          %v1068 = vmul.f32 %v1052, %v1051
          %v1069 = vadd.f32 %v740, %v1053
          %v1070 = vadd.f32 %v740, %v1054
          %v1071 = vadd.f32 %v740, %v1055
          %v1072 = vadd.f32 %v740, %v1056
          %v1073 = vadd.f32 %v740, %v1057
          %v1074 = vadd.f32 %v740, %v1058
          %v1075 = vadd.f32 %v740, %v1059
          %v1076 = vadd.f32 %v740, %v1060
          %v1077 = vadd.f32 %v740, %v1061
          %v1078 = vadd.f32 %v740, %v1062
          %v1079 = vadd.f32 %v740, %v1063
          %v1080 = vadd.f32 %v740, %v1064
          %v1081 = vadd.f32 %v740, %v1065
          %v1082 = vadd.f32 %v740, %v1066
          %v1083 = vadd.f32 %v740, %v1067
          %v1084 = vadd.f32 %v740, %v1068
          %v1085 = vstv %s492
          %v1086 = vmul.f32 %v1085, %v1036
          %v1087 = vmul.f32 %v1085, %v1037
          %v1088 = vmul.f32 %v1085, %v1038
          %v1089 = vmul.f32 %v1085, %v1039
          %v1090 = vmul.f32 %v1085, %v1040
          %v1091 = vmul.f32 %v1085, %v1041
          %v1092 = vmul.f32 %v1085, %v1042
          %v1093 = vmul.f32 %v1085, %v1043
          %v1094 = vmul.f32 %v1085, %v1044
          %v1095 = vmul.f32 %v1085, %v1045
          %v1096 = vmul.f32 %v1085, %v1046
          %v1097 = vmul.f32 %v1085, %v1047
          %v1098 = vmul.f32 %v1085, %v1048
          %v1099 = vmul.f32 %v1085, %v1049
          %v1100 = vmul.f32 %v1085, %v1050
          %v1101 = vmul.f32 %v1085, %v1051
          %v1102 = vadd.f32 %v742, %v1086
          %v1103 = vadd.f32 %v742, %v1087
          %v1104 = vadd.f32 %v742, %v1088
          %v1105 = vadd.f32 %v742, %v1089
          %v1106 = vadd.f32 %v742, %v1090
          %v1107 = vadd.f32 %v742, %v1091
          %v1108 = vadd.f32 %v742, %v1092
          %v1109 = vadd.f32 %v742, %v1093
          %v1110 = vadd.f32 %v742, %v1094
          %v1111 = vadd.f32 %v742, %v1095
          %v1112 = vadd.f32 %v742, %v1096
          %v1113 = vadd.f32 %v742, %v1097
          %v1114 = vadd.f32 %v742, %v1098
          %v1115 = vadd.f32 %v742, %v1099
          %v1116 = vadd.f32 %v742, %v1100
          %v1117 = vadd.f32 %v742, %v1101
          %v1118 = vstv %s475
          %v1119 = vmul.f32 %v1118, %v988
          %v1120 = vmul.f32 %v1118, %v989
          %v1121 = vmul.f32 %v1118, %v990
          %v1122 = vmul.f32 %v1118, %v991
          %v1123 = vmul.f32 %v1118, %v992
          %v1124 = vmul.f32 %v1118, %v993
          %v1125 = vmul.f32 %v1118, %v994
          %v1126 = vmul.f32 %v1118, %v995
          %v1127 = vmul.f32 %v1118, %v996
          %v1128 = vmul.f32 %v1118, %v997
          %v1129 = vmul.f32 %v1118, %v998
          %v1130 = vmul.f32 %v1118, %v999
          %v1131 = vmul.f32 %v1118, %v1000
          %v1132 = vmul.f32 %v1118, %v1001
          %v1133 = vmul.f32 %v1118, %v1002
          %v1134 = vmul.f32 %v1118, %v1003
          %v1135 = vadd.f32 %v1069, %v1119
          %v1136 = vadd.f32 %v1070, %v1120
          %v1137 = vadd.f32 %v1071, %v1121
          %v1138 = vadd.f32 %v1072, %v1122
          %v1139 = vadd.f32 %v1073, %v1123
          %v1140 = vadd.f32 %v1074, %v1124
          %v1141 = vadd.f32 %v1075, %v1125
          %v1142 = vadd.f32 %v1076, %v1126
          %v1143 = vadd.f32 %v1077, %v1127
          %v1144 = vadd.f32 %v1078, %v1128
          %v1145 = vadd.f32 %v1079, %v1129
          %v1146 = vadd.f32 %v1080, %v1130
          %v1147 = vadd.f32 %v1081, %v1131
          %v1148 = vadd.f32 %v1082, %v1132
          %v1149 = vadd.f32 %v1083, %v1133
          %v1150 = vadd.f32 %v1084, %v1134
          %v1151 = vstv %s493
          %v1152 = vmul.f32 %v1151, %v988
          %v1153 = vmul.f32 %v1151, %v989
          %v1154 = vmul.f32 %v1151, %v990
          %v1155 = vmul.f32 %v1151, %v991
          %v1156 = vmul.f32 %v1151, %v992
          %v1157 = vmul.f32 %v1151, %v993
          %v1158 = vmul.f32 %v1151, %v994
          %v1159 = vmul.f32 %v1151, %v995
          %v1160 = vmul.f32 %v1151, %v996
          %v1161 = vmul.f32 %v1151, %v997
          %v1162 = vmul.f32 %v1151, %v998
          %v1163 = vmul.f32 %v1151, %v999
          %v1164 = vmul.f32 %v1151, %v1000
          %v1165 = vmul.f32 %v1151, %v1001
          %v1166 = vmul.f32 %v1151, %v1002
          %v1167 = vmul.f32 %v1151, %v1003
          %v1168 = vadd.f32 %v1102, %v1152
          %v1169 = vadd.f32 %v1103, %v1153
          %v1170 = vadd.f32 %v1104, %v1154
          %v1171 = vadd.f32 %v1105, %v1155
          %v1172 = vadd.f32 %v1106, %v1156
          %v1173 = vadd.f32 %v1107, %v1157
          %v1174 = vadd.f32 %v1108, %v1158
          %v1175 = vadd.f32 %v1109, %v1159
          %v1176 = vadd.f32 %v1110, %v1160
          %v1177 = vadd.f32 %v1111, %v1161
          %v1178 = vadd.f32 %v1112, %v1162
          %v1179 = vadd.f32 %v1113, %v1163
          %v1180 = vadd.f32 %v1114, %v1164
          %v1181 = vadd.f32 %v1115, %v1165
          %v1182 = vadd.f32 %v1116, %v1166
          %v1183 = vadd.f32 %v1117, %v1167
          %1184 = vrot.lane.b32.xlu0 %v988, 127
          %v1185 = vpop.permute.xlu0 %1184
          %1186 = vrot.lane.b32.xlu0 %v989, 127
          %v1187 = vpop.permute.xlu0 %1186
          %1188 = vrot.lane.b32.xlu0 %v990, 127
          %v1189 = vpop.permute.xlu0 %1188
          %1190 = vrot.lane.b32.xlu0 %v991, 127
          %v1191 = vpop.permute.xlu0 %1190
          %1192 = vrot.lane.b32.xlu0 %v992, 127
          %v1193 = vpop.permute.xlu0 %1192
          %1194 = vrot.lane.b32.xlu0 %v993, 127
          %v1195 = vpop.permute.xlu0 %1194
          %1196 = vrot.lane.b32.xlu0 %v994, 127
          %v1197 = vpop.permute.xlu0 %1196
          %1198 = vrot.lane.b32.xlu0 %v995, 127
          %v1199 = vpop.permute.xlu0 %1198
          %1200 = vrot.lane.b32.xlu0 %v996, 127
          %v1201 = vpop.permute.xlu0 %1200
          %1202 = vrot.lane.b32.xlu0 %v997, 127
          %v1203 = vpop.permute.xlu0 %1202
          %1204 = vrot.lane.b32.xlu0 %v998, 127
          %v1205 = vpop.permute.xlu0 %1204
          %1206 = vrot.lane.b32.xlu0 %v999, 127
          %v1207 = vpop.permute.xlu0 %1206
          %1208 = vrot.lane.b32.xlu0 %v1000, 127
          %v1209 = vpop.permute.xlu0 %1208
          %1210 = vrot.lane.b32.xlu0 %v1001, 127
          %v1211 = vpop.permute.xlu0 %1210
          %1212 = vrot.lane.b32.xlu0 %v1002, 127
          %v1213 = vpop.permute.xlu0 %1212
          %1214 = vrot.lane.b32.xlu0 %v1003, 127
          %v1215 = vpop.permute.xlu0 %1214
          %v1216 = vmul.f32 %v1185, %v705
          %v1217 = vmul.f32 %v1187, %v705
          %v1218 = vmul.f32 %v1189, %v705
          %v1219 = vmul.f32 %v1191, %v705
          %v1220 = vmul.f32 %v1193, %v705
          %v1221 = vmul.f32 %v1195, %v705
          %v1222 = vmul.f32 %v1197, %v705
          %v1223 = vmul.f32 %v1199, %v705
          %v1224 = vmul.f32 %v1201, %v705
          %v1225 = vmul.f32 %v1203, %v705
          %v1226 = vmul.f32 %v1205, %v705
          %v1227 = vmul.f32 %v1207, %v705
          %v1228 = vmul.f32 %v1209, %v705
          %v1229 = vmul.f32 %v1211, %v705
          %v1230 = vmul.f32 %v1213, %v705
          %v1231 = vmul.f32 %v1215, %v705
          %v1232 = vstv %s476
          %v1233 = vmul.f32 %v1232, %v1216
          %v1234 = vmul.f32 %v1232, %v1217
          %v1235 = vmul.f32 %v1232, %v1218
          %v1236 = vmul.f32 %v1232, %v1219
          %v1237 = vmul.f32 %v1232, %v1220
          %v1238 = vmul.f32 %v1232, %v1221
          %v1239 = vmul.f32 %v1232, %v1222
          %v1240 = vmul.f32 %v1232, %v1223
          %v1241 = vmul.f32 %v1232, %v1224
          %v1242 = vmul.f32 %v1232, %v1225
          %v1243 = vmul.f32 %v1232, %v1226
          %v1244 = vmul.f32 %v1232, %v1227
          %v1245 = vmul.f32 %v1232, %v1228
          %v1246 = vmul.f32 %v1232, %v1229
          %v1247 = vmul.f32 %v1232, %v1230
          %v1248 = vmul.f32 %v1232, %v1231
          %v1249 = vadd.f32 %v1135, %v1233
          %v1250 = vadd.f32 %v1136, %v1234
          %v1251 = vadd.f32 %v1137, %v1235
          %v1252 = vadd.f32 %v1138, %v1236
          %v1253 = vadd.f32 %v1139, %v1237
          %v1254 = vadd.f32 %v1140, %v1238
          %v1255 = vadd.f32 %v1141, %v1239
          %v1256 = vadd.f32 %v1142, %v1240
          %v1257 = vadd.f32 %v1143, %v1241
          %v1258 = vadd.f32 %v1144, %v1242
          %v1259 = vadd.f32 %v1145, %v1243
          %v1260 = vadd.f32 %v1146, %v1244
          %v1261 = vadd.f32 %v1147, %v1245
          %v1262 = vadd.f32 %v1148, %v1246
          %v1263 = vadd.f32 %v1149, %v1247
          %v1264 = vadd.f32 %v1150, %v1248
          %v1265 = vstv %s494
          %v1266 = vmul.f32 %v1265, %v1216
          %v1267 = vmul.f32 %v1265, %v1217
          %v1268 = vmul.f32 %v1265, %v1218
          %v1269 = vmul.f32 %v1265, %v1219
          %v1270 = vmul.f32 %v1265, %v1220
          %v1271 = vmul.f32 %v1265, %v1221
          %v1272 = vmul.f32 %v1265, %v1222
          %v1273 = vmul.f32 %v1265, %v1223
          %v1274 = vmul.f32 %v1265, %v1224
          %v1275 = vmul.f32 %v1265, %v1225
          %v1276 = vmul.f32 %v1265, %v1226
          %v1277 = vmul.f32 %v1265, %v1227
          %v1278 = vmul.f32 %v1265, %v1228
          %v1279 = vmul.f32 %v1265, %v1229
          %v1280 = vmul.f32 %v1265, %v1230
          %v1281 = vmul.f32 %v1265, %v1231
          %v1282 = vadd.f32 %v1168, %v1266
          %v1283 = vadd.f32 %v1169, %v1267
          %v1284 = vadd.f32 %v1170, %v1268
          %v1285 = vadd.f32 %v1171, %v1269
          %v1286 = vadd.f32 %v1172, %v1270
          %v1287 = vadd.f32 %v1173, %v1271
          %v1288 = vadd.f32 %v1174, %v1272
          %v1289 = vadd.f32 %v1175, %v1273
          %v1290 = vadd.f32 %v1176, %v1274
          %v1291 = vadd.f32 %v1177, %v1275
          %v1292 = vadd.f32 %v1178, %v1276
          %v1293 = vadd.f32 %v1179, %v1277
          %v1294 = vadd.f32 %v1180, %v1278
          %v1295 = vadd.f32 %v1181, %v1279
          %v1296 = vadd.f32 %v1182, %v1280
          %v1297 = vadd.f32 %v1183, %v1281
          %1298 = vrot.lane.b32.xlu0 %v877, 1
          %v1299 = vpop.permute.xlu0 %1298
          %1300 = vrot.lane.b32.xlu0 %v882, 1
          %v1301 = vpop.permute.xlu0 %1300
          %1302 = vrot.lane.b32.xlu0 %v887, 1
          %v1303 = vpop.permute.xlu0 %1302
          %1304 = vrot.lane.b32.xlu0 %v892, 1
          %v1305 = vpop.permute.xlu0 %1304
          %1306 = vrot.lane.b32.xlu0 %v897, 1
          %v1307 = vpop.permute.xlu0 %1306
          %1308 = vrot.lane.b32.xlu0 %v902, 1
          %v1309 = vpop.permute.xlu0 %1308
          %1310 = vrot.lane.b32.xlu0 %v907, 1
          %v1311 = vpop.permute.xlu0 %1310
          %1312 = vrot.lane.b32.xlu0 %v912, 1
          %v1313 = vpop.permute.xlu0 %1312
          %1314 = vrot.lane.b32.xlu0 %v917, 1
          %v1315 = vpop.permute.xlu0 %1314
          %1316 = vrot.lane.b32.xlu0 %v922, 1
          %v1317 = vpop.permute.xlu0 %1316
          %1318 = vrot.lane.b32.xlu0 %v927, 1
          %v1319 = vpop.permute.xlu0 %1318
          %1320 = vrot.lane.b32.xlu0 %v932, 1
          %v1321 = vpop.permute.xlu0 %1320
          %1322 = vrot.lane.b32.xlu0 %v937, 1
          %v1323 = vpop.permute.xlu0 %1322
          %1324 = vrot.lane.b32.xlu0 %v942, 1
          %v1325 = vpop.permute.xlu0 %1324
          %1326 = vrot.lane.b32.xlu0 %v947, 1
          %v1327 = vpop.permute.xlu0 %1326
          %1328 = vrot.lane.b32.xlu0 %v952, 1
          %v1329 = vpop.permute.xlu0 %1328
          %v1330 = vmul.f32 %v1299, %v708
          %v1331 = vmul.f32 %v1301, %v708
          %v1332 = vmul.f32 %v1303, %v708
          %v1333 = vmul.f32 %v1305, %v708
          %v1334 = vmul.f32 %v1307, %v708
          %v1335 = vmul.f32 %v1309, %v708
          %v1336 = vmul.f32 %v1311, %v708
          %v1337 = vmul.f32 %v1313, %v708
          %v1338 = vmul.f32 %v1315, %v708
          %v1339 = vmul.f32 %v1317, %v708
          %v1340 = vmul.f32 %v1319, %v708
          %v1341 = vmul.f32 %v1321, %v708
          %v1342 = vmul.f32 %v1323, %v708
          %v1343 = vmul.f32 %v1325, %v708
          %v1344 = vmul.f32 %v1327, %v708
          %v1345 = vmul.f32 %v1329, %v708
          %v1346 = vstv %s477
          %v1347 = vmul.f32 %v1346, %v1330
          %v1348 = vmul.f32 %v1346, %v1331
          %v1349 = vmul.f32 %v1346, %v1332
          %v1350 = vmul.f32 %v1346, %v1333
          %v1351 = vmul.f32 %v1346, %v1334
          %v1352 = vmul.f32 %v1346, %v1335
          %v1353 = vmul.f32 %v1346, %v1336
          %v1354 = vmul.f32 %v1346, %v1337
          %v1355 = vmul.f32 %v1346, %v1338
          %v1356 = vmul.f32 %v1346, %v1339
          %v1357 = vmul.f32 %v1346, %v1340
          %v1358 = vmul.f32 %v1346, %v1341
          %v1359 = vmul.f32 %v1346, %v1342
          %v1360 = vmul.f32 %v1346, %v1343
          %v1361 = vmul.f32 %v1346, %v1344
          %v1362 = vmul.f32 %v1346, %v1345
          %v1363 = vadd.f32 %v1249, %v1347
          %v1364 = vadd.f32 %v1250, %v1348
          %v1365 = vadd.f32 %v1251, %v1349
          %v1366 = vadd.f32 %v1252, %v1350
          %v1367 = vadd.f32 %v1253, %v1351
          %v1368 = vadd.f32 %v1254, %v1352
          %v1369 = vadd.f32 %v1255, %v1353
          %v1370 = vadd.f32 %v1256, %v1354
          %v1371 = vadd.f32 %v1257, %v1355
          %v1372 = vadd.f32 %v1258, %v1356
          %v1373 = vadd.f32 %v1259, %v1357
          %v1374 = vadd.f32 %v1260, %v1358
          %v1375 = vadd.f32 %v1261, %v1359
          %v1376 = vadd.f32 %v1262, %v1360
          %v1377 = vadd.f32 %v1263, %v1361
          %v1378 = vadd.f32 %v1264, %v1362
          %v1379 = vstv %s495
          %v1380 = vmul.f32 %v1379, %v1330
          %v1381 = vmul.f32 %v1379, %v1331
          %v1382 = vmul.f32 %v1379, %v1332
          %v1383 = vmul.f32 %v1379, %v1333
          %v1384 = vmul.f32 %v1379, %v1334
          %v1385 = vmul.f32 %v1379, %v1335
          %v1386 = vmul.f32 %v1379, %v1336
          %v1387 = vmul.f32 %v1379, %v1337
          %v1388 = vmul.f32 %v1379, %v1338
          %v1389 = vmul.f32 %v1379, %v1339
          %v1390 = vmul.f32 %v1379, %v1340
          %v1391 = vmul.f32 %v1379, %v1341
          %v1392 = vmul.f32 %v1379, %v1342
          %v1393 = vmul.f32 %v1379, %v1343
          %v1394 = vmul.f32 %v1379, %v1344
          %v1395 = vmul.f32 %v1379, %v1345
          %v1396 = vadd.f32 %v1282, %v1380
          %v1397 = vadd.f32 %v1283, %v1381
          %v1398 = vadd.f32 %v1284, %v1382
          %v1399 = vadd.f32 %v1285, %v1383
          %v1400 = vadd.f32 %v1286, %v1384
          %v1401 = vadd.f32 %v1287, %v1385
          %v1402 = vadd.f32 %v1288, %v1386
          %v1403 = vadd.f32 %v1289, %v1387
          %v1404 = vadd.f32 %v1290, %v1388
          %v1405 = vadd.f32 %v1291, %v1389
          %v1406 = vadd.f32 %v1292, %v1390
          %v1407 = vadd.f32 %v1293, %v1391
          %v1408 = vadd.f32 %v1294, %v1392
          %v1409 = vadd.f32 %v1295, %v1393
          %v1410 = vadd.f32 %v1296, %v1394
          %v1411 = vadd.f32 %v1297, %v1395
          %v1412 = vstv %s478
          %v1413 = vmul.f32 %v1412, %v877
          %v1414 = vmul.f32 %v1412, %v882
          %v1415 = vmul.f32 %v1412, %v887
          %v1416 = vmul.f32 %v1412, %v892
          %v1417 = vmul.f32 %v1412, %v897
          %v1418 = vmul.f32 %v1412, %v902
          %v1419 = vmul.f32 %v1412, %v907
          %v1420 = vmul.f32 %v1412, %v912
          %v1421 = vmul.f32 %v1412, %v917
          %v1422 = vmul.f32 %v1412, %v922
          %v1423 = vmul.f32 %v1412, %v927
          %v1424 = vmul.f32 %v1412, %v932
          %v1425 = vmul.f32 %v1412, %v937
          %v1426 = vmul.f32 %v1412, %v942
          %v1427 = vmul.f32 %v1412, %v947
          %v1428 = vmul.f32 %v1412, %v952
          %v1429 = vadd.f32 %v1363, %v1413
          %v1430 = vadd.f32 %v1364, %v1414
          %v1431 = vadd.f32 %v1365, %v1415
          %v1432 = vadd.f32 %v1366, %v1416
          %v1433 = vadd.f32 %v1367, %v1417
          %v1434 = vadd.f32 %v1368, %v1418
          %v1435 = vadd.f32 %v1369, %v1419
          %v1436 = vadd.f32 %v1370, %v1420
          %v1437 = vadd.f32 %v1371, %v1421
          %v1438 = vadd.f32 %v1372, %v1422
          %v1439 = vadd.f32 %v1373, %v1423
          %v1440 = vadd.f32 %v1374, %v1424
          %v1441 = vadd.f32 %v1375, %v1425
          %v1442 = vadd.f32 %v1376, %v1426
          %v1443 = vadd.f32 %v1377, %v1427
          %v1444 = vadd.f32 %v1378, %v1428
          %v1445 = vstv %s496
          %v1446 = vmul.f32 %v1445, %v877
          %v1447 = vmul.f32 %v1445, %v882
          %v1448 = vmul.f32 %v1445, %v887
          %v1449 = vmul.f32 %v1445, %v892
          %v1450 = vmul.f32 %v1445, %v897
          %v1451 = vmul.f32 %v1445, %v902
          %v1452 = vmul.f32 %v1445, %v907
          %v1453 = vmul.f32 %v1445, %v912
          %v1454 = vmul.f32 %v1445, %v917
          %v1455 = vmul.f32 %v1445, %v922
          %v1456 = vmul.f32 %v1445, %v927
          %v1457 = vmul.f32 %v1445, %v932
          %v1458 = vmul.f32 %v1445, %v937
          %v1459 = vmul.f32 %v1445, %v942
          %v1460 = vmul.f32 %v1445, %v947
          %v1461 = vmul.f32 %v1445, %v952
          %v1462 = vadd.f32 %v1396, %v1446
          %v1463 = vadd.f32 %v1397, %v1447
          %v1464 = vadd.f32 %v1398, %v1448
          %v1465 = vadd.f32 %v1399, %v1449
          %v1466 = vadd.f32 %v1400, %v1450
          %v1467 = vadd.f32 %v1401, %v1451
          %v1468 = vadd.f32 %v1402, %v1452
          %v1469 = vadd.f32 %v1403, %v1453
          %v1470 = vadd.f32 %v1404, %v1454
          %v1471 = vadd.f32 %v1405, %v1455
          %v1472 = vadd.f32 %v1406, %v1456
          %v1473 = vadd.f32 %v1407, %v1457
          %v1474 = vadd.f32 %v1408, %v1458
          %v1475 = vadd.f32 %v1409, %v1459
          %v1476 = vadd.f32 %v1410, %v1460
          %v1477 = vadd.f32 %v1411, %v1461
          %1478 = vrot.lane.b32.xlu0 %v877, 127
          %v1479 = vpop.permute.xlu0 %1478
          %1480 = vrot.lane.b32.xlu0 %v882, 127
          %v1481 = vpop.permute.xlu0 %1480
          %1482 = vrot.lane.b32.xlu0 %v887, 127
          %v1483 = vpop.permute.xlu0 %1482
          %1484 = vrot.lane.b32.xlu0 %v892, 127
          %v1485 = vpop.permute.xlu0 %1484
          %1486 = vrot.lane.b32.xlu0 %v897, 127
          %v1487 = vpop.permute.xlu0 %1486
          %1488 = vrot.lane.b32.xlu0 %v902, 127
          %v1489 = vpop.permute.xlu0 %1488
          %1490 = vrot.lane.b32.xlu0 %v907, 127
          %v1491 = vpop.permute.xlu0 %1490
          %1492 = vrot.lane.b32.xlu0 %v912, 127
          %v1493 = vpop.permute.xlu0 %1492
          %1494 = vrot.lane.b32.xlu0 %v917, 127
          %v1495 = vpop.permute.xlu0 %1494
          %1496 = vrot.lane.b32.xlu0 %v922, 127
          %v1497 = vpop.permute.xlu0 %1496
          %1498 = vrot.lane.b32.xlu0 %v927, 127
          %v1499 = vpop.permute.xlu0 %1498
          %1500 = vrot.lane.b32.xlu0 %v932, 127
          %v1501 = vpop.permute.xlu0 %1500
          %1502 = vrot.lane.b32.xlu0 %v937, 127
          %v1503 = vpop.permute.xlu0 %1502
          %1504 = vrot.lane.b32.xlu0 %v942, 127
          %v1505 = vpop.permute.xlu0 %1504
          %1506 = vrot.lane.b32.xlu0 %v947, 127
          %v1507 = vpop.permute.xlu0 %1506
          %1508 = vrot.lane.b32.xlu0 %v952, 127
          %v1509 = vpop.permute.xlu0 %1508
          %v1510 = vmul.f32 %v1479, %v705
          %v1511 = vmul.f32 %v1481, %v705
          %v1512 = vmul.f32 %v1483, %v705
          %v1513 = vmul.f32 %v1485, %v705
          %v1514 = vmul.f32 %v1487, %v705
          %v1515 = vmul.f32 %v1489, %v705
          %v1516 = vmul.f32 %v1491, %v705
          %v1517 = vmul.f32 %v1493, %v705
          %v1518 = vmul.f32 %v1495, %v705
          %v1519 = vmul.f32 %v1497, %v705
          %v1520 = vmul.f32 %v1499, %v705
          %v1521 = vmul.f32 %v1501, %v705
          %v1522 = vmul.f32 %v1503, %v705
          %v1523 = vmul.f32 %v1505, %v705
          %v1524 = vmul.f32 %v1507, %v705
          %v1525 = vmul.f32 %v1509, %v705
          %v1526 = vstv %s479
          %v1527 = vmul.f32 %v1526, %v1510
          %v1528 = vmul.f32 %v1526, %v1511
          %v1529 = vmul.f32 %v1526, %v1512
          %v1530 = vmul.f32 %v1526, %v1513
          %v1531 = vmul.f32 %v1526, %v1514
          %v1532 = vmul.f32 %v1526, %v1515
          %v1533 = vmul.f32 %v1526, %v1516
          %v1534 = vmul.f32 %v1526, %v1517
          %v1535 = vmul.f32 %v1526, %v1518
          %v1536 = vmul.f32 %v1526, %v1519
          %v1537 = vmul.f32 %v1526, %v1520
          %v1538 = vmul.f32 %v1526, %v1521
          %v1539 = vmul.f32 %v1526, %v1522
          %v1540 = vmul.f32 %v1526, %v1523
          %v1541 = vmul.f32 %v1526, %v1524
          %v1542 = vmul.f32 %v1526, %v1525
          %v1543 = vadd.f32 %v1429, %v1527
          %v1544 = vadd.f32 %v1430, %v1528
          %v1545 = vadd.f32 %v1431, %v1529
          %v1546 = vadd.f32 %v1432, %v1530
          %v1547 = vadd.f32 %v1433, %v1531
          %v1548 = vadd.f32 %v1434, %v1532
          %v1549 = vadd.f32 %v1435, %v1533
          %v1550 = vadd.f32 %v1436, %v1534
          %v1551 = vadd.f32 %v1437, %v1535
          %v1552 = vadd.f32 %v1438, %v1536
          %v1553 = vadd.f32 %v1439, %v1537
          %v1554 = vadd.f32 %v1440, %v1538
          %v1555 = vadd.f32 %v1441, %v1539
          %v1556 = vadd.f32 %v1442, %v1540
          %v1557 = vadd.f32 %v1443, %v1541
          %v1558 = vadd.f32 %v1444, %v1542
          %v1559 = vstv %s497
          %v1560 = vmul.f32 %v1559, %v1510
          %v1561 = vmul.f32 %v1559, %v1511
          %v1562 = vmul.f32 %v1559, %v1512
          %v1563 = vmul.f32 %v1559, %v1513
          %v1564 = vmul.f32 %v1559, %v1514
          %v1565 = vmul.f32 %v1559, %v1515
          %v1566 = vmul.f32 %v1559, %v1516
          %v1567 = vmul.f32 %v1559, %v1517
          %v1568 = vmul.f32 %v1559, %v1518
          %v1569 = vmul.f32 %v1559, %v1519
          %v1570 = vmul.f32 %v1559, %v1520
          %v1571 = vmul.f32 %v1559, %v1521
          %v1572 = vmul.f32 %v1559, %v1522
          %v1573 = vmul.f32 %v1559, %v1523
          %v1574 = vmul.f32 %v1559, %v1524
          %v1575 = vmul.f32 %v1559, %v1525
          %v1576 = vadd.f32 %v1462, %v1560
          %v1577 = vadd.f32 %v1463, %v1561
          %v1578 = vadd.f32 %v1464, %v1562
          %v1579 = vadd.f32 %v1465, %v1563
          %v1580 = vadd.f32 %v1466, %v1564
          %v1581 = vadd.f32 %v1467, %v1565
          %v1582 = vadd.f32 %v1468, %v1566
          %v1583 = vadd.f32 %v1469, %v1567
          %v1584 = vadd.f32 %v1470, %v1568
          %v1585 = vadd.f32 %v1471, %v1569
          %v1586 = vadd.f32 %v1472, %v1570
          %v1587 = vadd.f32 %v1473, %v1571
          %v1588 = vadd.f32 %v1474, %v1572
          %v1589 = vadd.f32 %v1475, %v1573
          %v1590 = vadd.f32 %v1476, %v1574
          %v1591 = vadd.f32 %v1477, %v1575
          %v1592 = vrot.slane %v877, 1
          %v1593 = vrot.slane %v882, 1
          %v1594 = vrot.slane %v887, 1
          %v1595 = vrot.slane %v892, 1
          %v1596 = vrot.slane %v897, 1
          %v1597 = vrot.slane %v902, 1
          %v1598 = vrot.slane %v907, 1
          %v1599 = vrot.slane %v912, 1
          %v1600 = vrot.slane %v917, 1
          %v1601 = vrot.slane %v922, 1
          %v1602 = vrot.slane %v927, 1
          %v1603 = vrot.slane %v932, 1
          %v1604 = vrot.slane %v937, 1
          %v1605 = vrot.slane %v942, 1
          %v1606 = vrot.slane %v947, 1
          %v1607 = vrot.slane %v952, 1
          %vm1608 = vcmp.lt.s32.totalorder %v589, 7
          %v1609 = vsel %vm1608, %v1606, %v1607
          %v1610 = vsel %vm1608, %v1605, %v1606
          %v1611 = vsel %vm1608, %v1604, %v1605
          %v1612 = vsel %vm1608, %v1603, %v1604
          %v1613 = vsel %vm1608, %v1602, %v1603
          %v1614 = vsel %vm1608, %v1601, %v1602
          %v1615 = vsel %vm1608, %v1600, %v1601
          %v1616 = vsel %vm1608, %v1599, %v1600
          %v1617 = vsel %vm1608, %v1598, %v1599
          %v1618 = vsel %vm1608, %v1597, %v1598
          %v1619 = vsel %vm1608, %v1596, %v1597
          %v1620 = vsel %vm1608, %v1595, %v1596
          %v1621 = vsel %vm1608, %v1594, %v1595
          %v1622 = vsel %vm1608, %v1593, %v1594
          %v1623 = vsel %vm1608, %v1592, %v1593
          %v1624 = vsel %vm1608, %v1607, %v1592
          %v1625 = vmul.f32 %v1623, %v637
          %v1626 = vmul.f32 %v1622, %v638
          %v1627 = vmul.f32 %v1621, %v639
          %v1628 = vmul.f32 %v1620, %v640
          %v1629 = vmul.f32 %v1619, %v641
          %v1630 = vmul.f32 %v1618, %v642
          %v1631 = vmul.f32 %v1617, %v643
          %v1632 = vmul.f32 %v1616, %v644
          %v1633 = vmul.f32 %v1615, %v645
          %v1634 = vmul.f32 %v1614, %v646
          %v1635 = vmul.f32 %v1613, %v647
          %v1636 = vmul.f32 %v1612, %v648
          %v1637 = vmul.f32 %v1611, %v649
          %v1638 = vmul.f32 %v1610, %v650
          %v1639 = vmul.f32 %v1609, %v651
          %v1640 = vmul.f32 %v1624, %v652
          %1641 = vrot.lane.b32.xlu0 %v1625, 1
          %v1642 = vpop.permute.xlu0 %1641
          %1643 = vrot.lane.b32.xlu0 %v1626, 1
          %v1644 = vpop.permute.xlu0 %1643
          %1645 = vrot.lane.b32.xlu0 %v1627, 1
          %v1646 = vpop.permute.xlu0 %1645
          %1647 = vrot.lane.b32.xlu0 %v1628, 1
          %v1648 = vpop.permute.xlu0 %1647
          %1649 = vrot.lane.b32.xlu0 %v1629, 1
          %v1650 = vpop.permute.xlu0 %1649
          %1651 = vrot.lane.b32.xlu0 %v1630, 1
          %v1652 = vpop.permute.xlu0 %1651
          %1653 = vrot.lane.b32.xlu0 %v1631, 1
          %v1654 = vpop.permute.xlu0 %1653
          %1655 = vrot.lane.b32.xlu0 %v1632, 1
          %v1656 = vpop.permute.xlu0 %1655
          %1657 = vrot.lane.b32.xlu0 %v1633, 1
          %v1658 = vpop.permute.xlu0 %1657
          %1659 = vrot.lane.b32.xlu0 %v1634, 1
          %v1660 = vpop.permute.xlu0 %1659
          %1661 = vrot.lane.b32.xlu0 %v1635, 1
          %v1662 = vpop.permute.xlu0 %1661
          %1663 = vrot.lane.b32.xlu0 %v1636, 1
          %v1664 = vpop.permute.xlu0 %1663
          %1665 = vrot.lane.b32.xlu0 %v1637, 1
          %v1666 = vpop.permute.xlu0 %1665
          %1667 = vrot.lane.b32.xlu0 %v1638, 1
          %v1668 = vpop.permute.xlu0 %1667
          %1669 = vrot.lane.b32.xlu0 %v1639, 1
          %v1670 = vpop.permute.xlu0 %1669
          %1671 = vrot.lane.b32.xlu0 %v1640, 1
          %v1672 = vpop.permute.xlu0 %1671
          %v1673 = vmul.f32 %v1642, %v708
          %v1674 = vmul.f32 %v1644, %v708
          %v1675 = vmul.f32 %v1646, %v708
          %v1676 = vmul.f32 %v1648, %v708
          %v1677 = vmul.f32 %v1650, %v708
          %v1678 = vmul.f32 %v1652, %v708
          %v1679 = vmul.f32 %v1654, %v708
          %v1680 = vmul.f32 %v1656, %v708
          %v1681 = vmul.f32 %v1658, %v708
          %v1682 = vmul.f32 %v1660, %v708
          %v1683 = vmul.f32 %v1662, %v708
          %v1684 = vmul.f32 %v1664, %v708
          %v1685 = vmul.f32 %v1666, %v708
          %v1686 = vmul.f32 %v1668, %v708
          %v1687 = vmul.f32 %v1670, %v708
          %v1688 = vmul.f32 %v1672, %v708
          %v1689 = vstv %s480
          %v1690 = vmul.f32 %v1689, %v1673
          %v1691 = vmul.f32 %v1689, %v1674
          %v1692 = vmul.f32 %v1689, %v1675
          %v1693 = vmul.f32 %v1689, %v1676
          %v1694 = vmul.f32 %v1689, %v1677
          %v1695 = vmul.f32 %v1689, %v1678
          %v1696 = vmul.f32 %v1689, %v1679
          %v1697 = vmul.f32 %v1689, %v1680
          %v1698 = vmul.f32 %v1689, %v1681
          %v1699 = vmul.f32 %v1689, %v1682
          %v1700 = vmul.f32 %v1689, %v1683
          %v1701 = vmul.f32 %v1689, %v1684
          %v1702 = vmul.f32 %v1689, %v1685
          %v1703 = vmul.f32 %v1689, %v1686
          %v1704 = vmul.f32 %v1689, %v1687
          %v1705 = vmul.f32 %v1689, %v1688
          %v1706 = vadd.f32 %v1543, %v1690
          %v1707 = vadd.f32 %v1544, %v1691
          %v1708 = vadd.f32 %v1545, %v1692
          %v1709 = vadd.f32 %v1546, %v1693
          %v1710 = vadd.f32 %v1547, %v1694
          %v1711 = vadd.f32 %v1548, %v1695
          %v1712 = vadd.f32 %v1549, %v1696
          %v1713 = vadd.f32 %v1550, %v1697
          %v1714 = vadd.f32 %v1551, %v1698
          %v1715 = vadd.f32 %v1552, %v1699
          %v1716 = vadd.f32 %v1553, %v1700
          %v1717 = vadd.f32 %v1554, %v1701
          %v1718 = vadd.f32 %v1555, %v1702
          %v1719 = vadd.f32 %v1556, %v1703
          %v1720 = vadd.f32 %v1557, %v1704
          %v1721 = vadd.f32 %v1558, %v1705
          %v1722 = vstv %s498
          %v1723 = vmul.f32 %v1722, %v1673
          %v1724 = vmul.f32 %v1722, %v1674
          %v1725 = vmul.f32 %v1722, %v1675
          %v1726 = vmul.f32 %v1722, %v1676
          %v1727 = vmul.f32 %v1722, %v1677
          %v1728 = vmul.f32 %v1722, %v1678
          %v1729 = vmul.f32 %v1722, %v1679
          %v1730 = vmul.f32 %v1722, %v1680
          %v1731 = vmul.f32 %v1722, %v1681
          %v1732 = vmul.f32 %v1722, %v1682
          %v1733 = vmul.f32 %v1722, %v1683
          %v1734 = vmul.f32 %v1722, %v1684
          %v1735 = vmul.f32 %v1722, %v1685
          %v1736 = vmul.f32 %v1722, %v1686
          %v1737 = vmul.f32 %v1722, %v1687
          %v1738 = vmul.f32 %v1722, %v1688
          %v1739 = vadd.f32 %v1576, %v1723
          %v1740 = vadd.f32 %v1577, %v1724
          %v1741 = vadd.f32 %v1578, %v1725
          %v1742 = vadd.f32 %v1579, %v1726
          %v1743 = vadd.f32 %v1580, %v1727
          %v1744 = vadd.f32 %v1581, %v1728
          %v1745 = vadd.f32 %v1582, %v1729
          %v1746 = vadd.f32 %v1583, %v1730
          %v1747 = vadd.f32 %v1584, %v1731
          %v1748 = vadd.f32 %v1585, %v1732
          %v1749 = vadd.f32 %v1586, %v1733
          %v1750 = vadd.f32 %v1587, %v1734
          %v1751 = vadd.f32 %v1588, %v1735
          %v1752 = vadd.f32 %v1589, %v1736
          %v1753 = vadd.f32 %v1590, %v1737
          %v1754 = vadd.f32 %v1591, %v1738
          %v1755 = vstv %s481
          %v1756 = vmul.f32 %v1755, %v1625
          %v1757 = vmul.f32 %v1755, %v1626
          %v1758 = vmul.f32 %v1755, %v1627
          %v1759 = vmul.f32 %v1755, %v1628
          %v1760 = vmul.f32 %v1755, %v1629
          %v1761 = vmul.f32 %v1755, %v1630
          %v1762 = vmul.f32 %v1755, %v1631
          %v1763 = vmul.f32 %v1755, %v1632
          %v1764 = vmul.f32 %v1755, %v1633
          %v1765 = vmul.f32 %v1755, %v1634
          %v1766 = vmul.f32 %v1755, %v1635
          %v1767 = vmul.f32 %v1755, %v1636
          %v1768 = vmul.f32 %v1755, %v1637
          %v1769 = vmul.f32 %v1755, %v1638
          %v1770 = vmul.f32 %v1755, %v1639
          %v1771 = vmul.f32 %v1755, %v1640
          %v1772 = vadd.f32 %v1706, %v1756
          %v1773 = vadd.f32 %v1707, %v1757
          %v1774 = vadd.f32 %v1708, %v1758
          %v1775 = vadd.f32 %v1709, %v1759
          %v1776 = vadd.f32 %v1710, %v1760
          %v1777 = vadd.f32 %v1711, %v1761
          %v1778 = vadd.f32 %v1712, %v1762
          %v1779 = vadd.f32 %v1713, %v1763
          %v1780 = vadd.f32 %v1714, %v1764
          %v1781 = vadd.f32 %v1715, %v1765
          %v1782 = vadd.f32 %v1716, %v1766
          %v1783 = vadd.f32 %v1717, %v1767
          %v1784 = vadd.f32 %v1718, %v1768
          %v1785 = vadd.f32 %v1719, %v1769
          %v1786 = vadd.f32 %v1720, %v1770
          %v1787 = vadd.f32 %v1721, %v1771
          %v1788 = vstv %s499
          %v1789 = vmul.f32 %v1788, %v1625
          %v1790 = vmul.f32 %v1788, %v1626
          %v1791 = vmul.f32 %v1788, %v1627
          %v1792 = vmul.f32 %v1788, %v1628
          %v1793 = vmul.f32 %v1788, %v1629
          %v1794 = vmul.f32 %v1788, %v1630
          %v1795 = vmul.f32 %v1788, %v1631
          %v1796 = vmul.f32 %v1788, %v1632
          %v1797 = vmul.f32 %v1788, %v1633
          %v1798 = vmul.f32 %v1788, %v1634
          %v1799 = vmul.f32 %v1788, %v1635
          %v1800 = vmul.f32 %v1788, %v1636
          %v1801 = vmul.f32 %v1788, %v1637
          %v1802 = vmul.f32 %v1788, %v1638
          %v1803 = vmul.f32 %v1788, %v1639
          %v1804 = vmul.f32 %v1788, %v1640
          %v1805 = vadd.f32 %v1739, %v1789
          %v1806 = vadd.f32 %v1740, %v1790
          %v1807 = vadd.f32 %v1741, %v1791
          %v1808 = vadd.f32 %v1742, %v1792
          %v1809 = vadd.f32 %v1743, %v1793
          %v1810 = vadd.f32 %v1744, %v1794
          %v1811 = vadd.f32 %v1745, %v1795
          %v1812 = vadd.f32 %v1746, %v1796
          %v1813 = vadd.f32 %v1747, %v1797
          %v1814 = vadd.f32 %v1748, %v1798
          %v1815 = vadd.f32 %v1749, %v1799
          %v1816 = vadd.f32 %v1750, %v1800
          %v1817 = vadd.f32 %v1751, %v1801
          %v1818 = vadd.f32 %v1752, %v1802
          %v1819 = vadd.f32 %v1753, %v1803
          %v1820 = vadd.f32 %v1754, %v1804
          %1821 = vrot.lane.b32.xlu0 %v1625, 127
          %v1822 = vpop.permute.xlu0 %1821
          %1823 = vrot.lane.b32.xlu0 %v1626, 127
          %v1824 = vpop.permute.xlu0 %1823
          %1825 = vrot.lane.b32.xlu0 %v1627, 127
          %v1826 = vpop.permute.xlu0 %1825
          %1827 = vrot.lane.b32.xlu0 %v1628, 127
          %v1828 = vpop.permute.xlu0 %1827
          %1829 = vrot.lane.b32.xlu0 %v1629, 127
          %v1830 = vpop.permute.xlu0 %1829
          %1831 = vrot.lane.b32.xlu0 %v1630, 127
          %v1832 = vpop.permute.xlu0 %1831
          %1833 = vrot.lane.b32.xlu0 %v1631, 127
          %v1834 = vpop.permute.xlu0 %1833
          %1835 = vrot.lane.b32.xlu0 %v1632, 127
          %v1836 = vpop.permute.xlu0 %1835
          %1837 = vrot.lane.b32.xlu0 %v1633, 127
          %v1838 = vpop.permute.xlu0 %1837
          %1839 = vrot.lane.b32.xlu0 %v1634, 127
          %v1840 = vpop.permute.xlu0 %1839
          %1841 = vrot.lane.b32.xlu0 %v1635, 127
          %v1842 = vpop.permute.xlu0 %1841
          %1843 = vrot.lane.b32.xlu0 %v1636, 127
          %v1844 = vpop.permute.xlu0 %1843
          %1845 = vrot.lane.b32.xlu0 %v1637, 127
          %v1846 = vpop.permute.xlu0 %1845
          %1847 = vrot.lane.b32.xlu0 %v1638, 127
          %v1848 = vpop.permute.xlu0 %1847
          %1849 = vrot.lane.b32.xlu0 %v1639, 127
          %v1850 = vpop.permute.xlu0 %1849
          %1851 = vrot.lane.b32.xlu0 %v1640, 127
          %v1852 = vpop.permute.xlu0 %1851
          %v1853 = vmul.f32 %v1822, %v705
          %v1854 = vmul.f32 %v1824, %v705
          %v1855 = vmul.f32 %v1826, %v705
          %v1856 = vmul.f32 %v1828, %v705
          %v1857 = vmul.f32 %v1830, %v705
          %v1858 = vmul.f32 %v1832, %v705
          %v1859 = vmul.f32 %v1834, %v705
          %v1860 = vmul.f32 %v1836, %v705
          %v1861 = vmul.f32 %v1838, %v705
          %v1862 = vmul.f32 %v1840, %v705
          %v1863 = vmul.f32 %v1842, %v705
          %v1864 = vmul.f32 %v1844, %v705
          %v1865 = vmul.f32 %v1846, %v705
          %v1866 = vmul.f32 %v1848, %v705
          %v1867 = vmul.f32 %v1850, %v705
          %v1868 = vmul.f32 %v1852, %v705
          %v1869 = vstv %s482
          %v1870 = vmul.f32 %v1869, %v1853
          %v1871 = vmul.f32 %v1869, %v1854
          %v1872 = vmul.f32 %v1869, %v1855
          %v1873 = vmul.f32 %v1869, %v1856
          %v1874 = vmul.f32 %v1869, %v1857
          %v1875 = vmul.f32 %v1869, %v1858
          %v1876 = vmul.f32 %v1869, %v1859
          %v1877 = vmul.f32 %v1869, %v1860
          %v1878 = vmul.f32 %v1869, %v1861
          %v1879 = vmul.f32 %v1869, %v1862
          %v1880 = vmul.f32 %v1869, %v1863
          %v1881 = vmul.f32 %v1869, %v1864
          %v1882 = vmul.f32 %v1869, %v1865
          %v1883 = vmul.f32 %v1869, %v1866
          %v1884 = vmul.f32 %v1869, %v1867
          %v1885 = vmul.f32 %v1869, %v1868
          %v1886 = vadd.f32 %v1772, %v1870
          %v1887 = vadd.f32 %v1773, %v1871
          %v1888 = vadd.f32 %v1774, %v1872
          %v1889 = vadd.f32 %v1775, %v1873
          %v1890 = vadd.f32 %v1776, %v1874
          %v1891 = vadd.f32 %v1777, %v1875
          %v1892 = vadd.f32 %v1778, %v1876
          %v1893 = vadd.f32 %v1779, %v1877
          %v1894 = vadd.f32 %v1780, %v1878
          %v1895 = vadd.f32 %v1781, %v1879
          %v1896 = vadd.f32 %v1782, %v1880
          %v1897 = vadd.f32 %v1783, %v1881
          %v1898 = vadd.f32 %v1784, %v1882
          %v1899 = vadd.f32 %v1785, %v1883
          %v1900 = vadd.f32 %v1786, %v1884
          %v1901 = vadd.f32 %v1787, %v1885
          %v1902 = vstv %s500
          %v1903 = vmul.f32 %v1902, %v1853
          %v1904 = vmul.f32 %v1902, %v1854
          %v1905 = vmul.f32 %v1902, %v1855
          %v1906 = vmul.f32 %v1902, %v1856
          %v1907 = vmul.f32 %v1902, %v1857
          %v1908 = vmul.f32 %v1902, %v1858
          %v1909 = vmul.f32 %v1902, %v1859
          %v1910 = vmul.f32 %v1902, %v1860
          %v1911 = vmul.f32 %v1902, %v1861
          %v1912 = vmul.f32 %v1902, %v1862
          %v1913 = vmul.f32 %v1902, %v1863
          %v1914 = vmul.f32 %v1902, %v1864
          %v1915 = vmul.f32 %v1902, %v1865
          %v1916 = vmul.f32 %v1902, %v1866
          %v1917 = vmul.f32 %v1902, %v1867
          %v1918 = vmul.f32 %v1902, %v1868
          %v1919 = vadd.f32 %v1805, %v1903
          %v1920 = vadd.f32 %v1806, %v1904
          %v1921 = vadd.f32 %v1807, %v1905
          %v1922 = vadd.f32 %v1808, %v1906
          %v1923 = vadd.f32 %v1809, %v1907
          %v1924 = vadd.f32 %v1810, %v1908
          %v1925 = vadd.f32 %v1811, %v1909
          %v1926 = vadd.f32 %v1812, %v1910
          %v1927 = vadd.f32 %v1813, %v1911
          %v1928 = vadd.f32 %v1814, %v1912
          %v1929 = vadd.f32 %v1815, %v1913
          %v1930 = vadd.f32 %v1816, %v1914
          %v1931 = vadd.f32 %v1817, %v1915
          %v1932 = vadd.f32 %v1818, %v1916
          %v1933 = vadd.f32 %v1819, %v1917
          %v1934 = vadd.f32 %v1820, %v1918
          %s1935 = scalar_lea.vmem %s1, 256
          %v1936 = vld [vmem:[%s1935] sm:$0xff]
          %v1937 = vld [vmem:[%s1935 + $0x8] sm:$0xff]
          %v1938 = vld [vmem:[%s1935 + $0x10] sm:$0xff]
          %v1939 = vld [vmem:[%s1935 + $0x18] sm:$0xff]
          %v1940 = vld [vmem:[%s1935 + $0x20] sm:$0xff]
          %v1941 = vld [vmem:[%s1935 + $0x28] sm:$0xff]
          %v1942 = vld [vmem:[%s1935 + $0x30] sm:$0xff]
          %v1943 = vld [vmem:[%s1935 + $0x38] sm:$0xff]
          %v1944 = vld [vmem:[%s1935 + $0x40] sm:$0xff]
          %v1945 = vld [vmem:[%s1935 + $0x48] sm:$0xff]
          %v1946 = vld [vmem:[%s1935 + $0x50] sm:$0xff]
          %v1947 = vld [vmem:[%s1935 + $0x58] sm:$0xff]
          %v1948 = vld [vmem:[%s1935 + $0x60] sm:$0xff]
          %v1949 = vld [vmem:[%s1935 + $0x68] sm:$0xff]
          %v1950 = vld [vmem:[%s1935 + $0x70] sm:$0xff]
          %v1951 = vld [vmem:[%s1935 + $0x78] sm:$0xff]
          %v1952 = vld [vmem:[%s1935 + $0x80] sm:$0xff]
          %v1953 = vld [vmem:[%s1935 + $0x88] sm:$0xff]
          %v1954 = vld [vmem:[%s1935 + $0x90] sm:$0xff]
          %v1955 = vld [vmem:[%s1935 + $0x98] sm:$0xff]
          %v1956 = vld [vmem:[%s1935 + $0xa0] sm:$0xff]
          %v1957 = vld [vmem:[%s1935 + $0xa8] sm:$0xff]
          %v1958 = vld [vmem:[%s1935 + $0xb0] sm:$0xff]
          %v1959 = vld [vmem:[%s1935 + $0xb8] sm:$0xff]
          %v1960 = vld [vmem:[%s1935 + $0xc0] sm:$0xff]
          %v1961 = vld [vmem:[%s1935 + $0xc8] sm:$0xff]
          %v1962 = vld [vmem:[%s1935 + $0xd0] sm:$0xff]
          %v1963 = vld [vmem:[%s1935 + $0xd8] sm:$0xff]
          %v1964 = vld [vmem:[%s1935 + $0xe0] sm:$0xff]
          %v1965 = vld [vmem:[%s1935 + $0xe8] sm:$0xff]
          %v1966 = vld [vmem:[%s1935 + $0xf0] sm:$0xff]
          %v1967 = vld [vmem:[%s1935 + $0xf8] sm:$0xff]
          %1968 = vmatprep.subr.mxu0 0.0
          %1969 = vmatpush1.msra.mxu0 %v1951
          %1970 = vmatprep.subr.mxu0 0.0
          %1971 = vmatpush1.msra.mxu0 %v1950
          %1972 = vmatprep.subr.mxu0 0.0
          %1973 = vmatpush1.msra.mxu0 %v1949
          %1974 = vmatprep.subr.mxu0 0.0
          %1975 = vmatpush1.msra.mxu0 %v1948
          %1976 = vmatprep.subr.mxu0 0.0
          %1977 = vmatpush1.msra.mxu0 %v1947
          %1978 = vmatprep.subr.mxu0 0.0
          %1979 = vmatpush1.msra.mxu0 %v1946
          %1980 = vmatprep.subr.mxu0 0.0
          %1981 = vmatpush1.msra.mxu0 %v1945
          %1982 = vmatprep.subr.mxu0 0.0
          %1983 = vmatpush1.msra.mxu0 %v1944
          %1984 = vmatprep.subr.mxu0 0.0
          %1985 = vmatpush1.msra.mxu0 %v1943
          %1986 = vmatprep.subr.mxu0 0.0
          %1987 = vmatpush1.msra.mxu0 %v1942
          %1988 = vmatprep.subr.mxu0 0.0
          %1989 = vmatpush1.msra.mxu0 %v1941
          %1990 = vmatprep.subr.mxu0 0.0
          %1991 = vmatpush1.msra.mxu0 %v1940
          %1992 = vmatprep.subr.mxu0 0.0
          %1993 = vmatpush1.msra.mxu0 %v1939
          %1994 = vmatprep.subr.mxu0 0.0
          %1995 = vmatpush1.msra.mxu0 %v1938
          %1996 = vmatprep.subr.mxu0 0.0
          %1997 = vmatpush1.msra.mxu0 %v1937
          %1998 = vmatprep.subr.mxu0 0.0
          %1999 = vmatpush1.msra.mxu0 %v1936
          %2000 = vmatprep.subr.mxu0 0.0
          %2001 = vmatpush2.msra.mxu0 %v1967
          %2002 = vmatprep.subr.mxu0 0.0
          %2003 = vmatpush2.msra.mxu0 %v1966
          %2004 = vmatprep.subr.mxu0 0.0
          %2005 = vmatpush2.msra.mxu0 %v1965
          %2006 = vmatprep.subr.mxu0 0.0
          %2007 = vmatpush2.msra.mxu0 %v1964
          %2008 = vmatprep.subr.mxu0 0.0
          %2009 = vmatpush2.msra.mxu0 %v1963
          %2010 = vmatprep.subr.mxu0 0.0
          %2011 = vmatpush2.msra.mxu0 %v1962
          %2012 = vmatprep.subr.mxu0 0.0
          %2013 = vmatpush2.msra.mxu0 %v1961
          %2014 = vmatprep.subr.mxu0 0.0
          %2015 = vmatpush2.msra.mxu0 %v1960
          %2016 = vmatprep.subr.mxu0 0.0
          %2017 = vmatpush2.msra.mxu0 %v1959
          %2018 = vmatprep.subr.mxu0 0.0
          %2019 = vmatpush2.msra.mxu0 %v1958
          %2020 = vmatprep.subr.mxu0 0.0
          %2021 = vmatpush2.msra.mxu0 %v1957
          %2022 = vmatprep.subr.mxu0 0.0
          %2023 = vmatpush2.msra.mxu0 %v1956
          %2024 = vmatprep.subr.mxu0 0.0
          %2025 = vmatpush2.msra.mxu0 %v1955
          %2026 = vmatprep.subr.mxu0 0.0
          %2027 = vmatpush2.msra.mxu0 %v1954
          %2028 = vmatprep.subr.mxu0 0.0
          %2029 = vmatpush2.msra.mxu0 %v1953
          %2030 = vmatprep.subr.mxu0 0.0
          %2031 = vmatpush2.msra.mxu0 %v1952
          %2032 = vmatprep.mubr.f32.mxu0 %v747
          %2033 = vmatmul.mubr.f32.gmra.mxu0 %v746
          %v2034 = vpop.f32.mrf.mxu0
          %v2035 = vadd.f32 0.0, %v2034
          %v2036 = vpop.f32.mrf.mxu0
          %2037 = vmatprep.mubr.f32.mxu0 %v749
          %2038 = vmatmul.mubr.f32.gmra.mxu0 %v748
          %v2039 = vpop.f32.mrf.mxu0
          %v2040 = vadd.f32 0.0, %v2039
          %v2041 = vpop.f32.mrf.mxu0
          %2042 = vmatprep.mubr.f32.mxu0 %v751
          %2043 = vmatmul.mubr.f32.gmra.mxu0 %v750
          %v2044 = vpop.f32.mrf.mxu0
          %v2045 = vadd.f32 0.0, %v2044
          %v2046 = vpop.f32.mrf.mxu0
          %2047 = vmatprep.mubr.f32.mxu0 %v753
          %2048 = vmatmul.mubr.f32.gmra.mxu0 %v752
          %v2049 = vpop.f32.mrf.mxu0
          %v2050 = vadd.f32 0.0, %v2049
          %v2051 = vpop.f32.mrf.mxu0
          %2052 = vmatprep.mubr.f32.mxu0 %v755
          %2053 = vmatmul.mubr.f32.gmra.mxu0 %v754
          %v2054 = vpop.f32.mrf.mxu0
          %v2055 = vadd.f32 0.0, %v2054
          %v2056 = vpop.f32.mrf.mxu0
          %2057 = vmatprep.mubr.f32.mxu0 %v757
          %2058 = vmatmul.mubr.f32.gmra.mxu0 %v756
          %v2059 = vpop.f32.mrf.mxu0
          %v2060 = vadd.f32 0.0, %v2059
          %v2061 = vpop.f32.mrf.mxu0
          %2062 = vmatprep.mubr.f32.mxu0 %v759
          %2063 = vmatmul.mubr.f32.gmra.mxu0 %v758
          %v2064 = vpop.f32.mrf.mxu0
          %v2065 = vadd.f32 0.0, %v2064
          %v2066 = vpop.f32.mrf.mxu0
          %2067 = vmatprep.mubr.f32.mxu0 %v761
          %2068 = vmatmul.mubr.f32.gmra.mxu0 %v760
          %v2069 = vpop.f32.mrf.mxu0
          %v2070 = vadd.f32 0.0, %v2069
          %v2071 = vpop.f32.mrf.mxu0
          %2072 = vmatprep.mubr.f32.mxu0 %v763
          %2073 = vmatmul.mubr.f32.gmra.mxu0 %v762
          %v2074 = vpop.f32.mrf.mxu0
          %v2075 = vadd.f32 0.0, %v2074
          %v2076 = vpop.f32.mrf.mxu0
          %2077 = vmatprep.mubr.f32.mxu0 %v765
          %2078 = vmatmul.mubr.f32.gmra.mxu0 %v764
          %v2079 = vpop.f32.mrf.mxu0
          %v2080 = vadd.f32 0.0, %v2079
          %v2081 = vpop.f32.mrf.mxu0
          %2082 = vmatprep.mubr.f32.mxu0 %v767
          %2083 = vmatmul.mubr.f32.gmra.mxu0 %v766
          %v2084 = vpop.f32.mrf.mxu0
          %v2085 = vadd.f32 0.0, %v2084
          %v2086 = vpop.f32.mrf.mxu0
          %2087 = vmatprep.mubr.f32.mxu0 %v769
          %2088 = vmatmul.mubr.f32.gmra.mxu0 %v768
          %v2089 = vpop.f32.mrf.mxu0
          %v2090 = vadd.f32 0.0, %v2089
          %v2091 = vpop.f32.mrf.mxu0
          %2092 = vmatprep.mubr.f32.mxu0 %v771
          %2093 = vmatmul.mubr.f32.gmra.mxu0 %v770
          %v2094 = vpop.f32.mrf.mxu0
          %v2095 = vadd.f32 0.0, %v2094
          %v2096 = vpop.f32.mrf.mxu0
          %2097 = vmatprep.mubr.f32.mxu0 %v773
          %2098 = vmatmul.mubr.f32.gmra.mxu0 %v772
          %v2099 = vpop.f32.mrf.mxu0
          %v2100 = vadd.f32 0.0, %v2099
          %v2101 = vpop.f32.mrf.mxu0
          %2102 = vmatprep.mubr.f32.mxu0 %v775
          %2103 = vmatmul.mubr.f32.gmra.mxu0 %v774
          %v2104 = vpop.f32.mrf.mxu0
          %v2105 = vadd.f32 0.0, %v2104
          %v2106 = vpop.f32.mrf.mxu0
          %2107 = vmatprep.mubr.f32.mxu0 %v777
          %2108 = vmatmul.mubr.f32.gmra.mxu0 %v776
          %v2109 = vpop.f32.mrf.mxu0
          %v2110 = vadd.f32 0.0, %v2109
          %v2111 = vpop.f32.mrf.mxu0
          %2112 = vdwg.mxu0
          %v2113 = vrot.slane %v2035, 7
          %v2114 = vrot.slane %v2040, 7
          %v2115 = vrot.slane %v2045, 7
          %v2116 = vrot.slane %v2050, 7
          %v2117 = vrot.slane %v2055, 7
          %v2118 = vrot.slane %v2060, 7
          %v2119 = vrot.slane %v2065, 7
          %v2120 = vrot.slane %v2070, 7
          %v2121 = vrot.slane %v2075, 7
          %v2122 = vrot.slane %v2080, 7
          %v2123 = vrot.slane %v2085, 7
          %v2124 = vrot.slane %v2090, 7
          %v2125 = vrot.slane %v2095, 7
          %v2126 = vrot.slane %v2100, 7
          %v2127 = vrot.slane %v2105, 7
          %v2128 = vrot.slane %v2110, 7
          %v2129 = vsel %vm971, %v2127, %v2128
          %v2130 = vsel %vm971, %v2126, %v2127
          %v2131 = vsel %vm971, %v2125, %v2126
          %v2132 = vsel %vm971, %v2124, %v2125
          %v2133 = vsel %vm971, %v2123, %v2124
          %v2134 = vsel %vm971, %v2122, %v2123
          %v2135 = vsel %vm971, %v2121, %v2122
          %v2136 = vsel %vm971, %v2120, %v2121
          %v2137 = vsel %vm971, %v2119, %v2120
          %v2138 = vsel %vm971, %v2118, %v2119
          %v2139 = vsel %vm971, %v2117, %v2118
          %v2140 = vsel %vm971, %v2116, %v2117
          %v2141 = vsel %vm971, %v2115, %v2116
          %v2142 = vsel %vm971, %v2114, %v2115
          %v2143 = vsel %vm971, %v2113, %v2114
          %v2144 = vsel %vm971, %v2128, %v2113
          %v2145 = vmul.f32 %v2144, %v685
          %v2146 = vmul.f32 %v2143, %v686
          %v2147 = vmul.f32 %v2142, %v687
          %v2148 = vmul.f32 %v2141, %v688
          %v2149 = vmul.f32 %v2140, %v689
          %v2150 = vmul.f32 %v2139, %v690
          %v2151 = vmul.f32 %v2138, %v691
          %v2152 = vmul.f32 %v2137, %v692
          %v2153 = vmul.f32 %v2136, %v693
          %v2154 = vmul.f32 %v2135, %v694
          %v2155 = vmul.f32 %v2134, %v695
          %v2156 = vmul.f32 %v2133, %v696
          %v2157 = vmul.f32 %v2132, %v697
          %v2158 = vmul.f32 %v2131, %v698
          %v2159 = vmul.f32 %v2130, %v699
          %v2160 = vmul.f32 %v2129, %v700
          %2161 = vrot.lane.b32.xlu0 %v2145, 1
          %v2162 = vpop.permute.xlu0 %2161
          %2163 = vrot.lane.b32.xlu0 %v2146, 1
          %v2164 = vpop.permute.xlu0 %2163
          %2165 = vrot.lane.b32.xlu0 %v2147, 1
          %v2166 = vpop.permute.xlu0 %2165
          %2167 = vrot.lane.b32.xlu0 %v2148, 1
          %v2168 = vpop.permute.xlu0 %2167
          %2169 = vrot.lane.b32.xlu0 %v2149, 1
          %v2170 = vpop.permute.xlu0 %2169
          %2171 = vrot.lane.b32.xlu0 %v2150, 1
          %v2172 = vpop.permute.xlu0 %2171
          %2173 = vrot.lane.b32.xlu0 %v2151, 1
          %v2174 = vpop.permute.xlu0 %2173
          %2175 = vrot.lane.b32.xlu0 %v2152, 1
          %v2176 = vpop.permute.xlu0 %2175
          %2177 = vrot.lane.b32.xlu0 %v2153, 1
          %v2178 = vpop.permute.xlu0 %2177
          %2179 = vrot.lane.b32.xlu0 %v2154, 1
          %v2180 = vpop.permute.xlu0 %2179
          %2181 = vrot.lane.b32.xlu0 %v2155, 1
          %v2182 = vpop.permute.xlu0 %2181
          %2183 = vrot.lane.b32.xlu0 %v2156, 1
          %v2184 = vpop.permute.xlu0 %2183
          %2185 = vrot.lane.b32.xlu0 %v2157, 1
          %v2186 = vpop.permute.xlu0 %2185
          %2187 = vrot.lane.b32.xlu0 %v2158, 1
          %v2188 = vpop.permute.xlu0 %2187
          %2189 = vrot.lane.b32.xlu0 %v2159, 1
          %v2190 = vpop.permute.xlu0 %2189
          %2191 = vrot.lane.b32.xlu0 %v2160, 1
          %v2192 = vpop.permute.xlu0 %2191
          %v2193 = vmul.f32 %v2162, %v708
          %v2194 = vmul.f32 %v2164, %v708
          %v2195 = vmul.f32 %v2166, %v708
          %v2196 = vmul.f32 %v2168, %v708
          %v2197 = vmul.f32 %v2170, %v708
          %v2198 = vmul.f32 %v2172, %v708
          %v2199 = vmul.f32 %v2174, %v708
          %v2200 = vmul.f32 %v2176, %v708
          %v2201 = vmul.f32 %v2178, %v708
          %v2202 = vmul.f32 %v2180, %v708
          %v2203 = vmul.f32 %v2182, %v708
          %v2204 = vmul.f32 %v2184, %v708
          %v2205 = vmul.f32 %v2186, %v708
          %v2206 = vmul.f32 %v2188, %v708
          %v2207 = vmul.f32 %v2190, %v708
          %v2208 = vmul.f32 %v2192, %v708
          %v2209 = vstv %s483
          %v2210 = vmul.f32 %v2209, %v2193
          %v2211 = vmul.f32 %v2209, %v2194
          %v2212 = vmul.f32 %v2209, %v2195
          %v2213 = vmul.f32 %v2209, %v2196
          %v2214 = vmul.f32 %v2209, %v2197
          %v2215 = vmul.f32 %v2209, %v2198
          %v2216 = vmul.f32 %v2209, %v2199
          %v2217 = vmul.f32 %v2209, %v2200
          %v2218 = vmul.f32 %v2209, %v2201
          %v2219 = vmul.f32 %v2209, %v2202
          %v2220 = vmul.f32 %v2209, %v2203
          %v2221 = vmul.f32 %v2209, %v2204
          %v2222 = vmul.f32 %v2209, %v2205
          %v2223 = vmul.f32 %v2209, %v2206
          %v2224 = vmul.f32 %v2209, %v2207
          %v2225 = vmul.f32 %v2209, %v2208
          %v2226 = vadd.f32 %v1886, %v2210
          %v2227 = vadd.f32 %v1887, %v2211
          %v2228 = vadd.f32 %v1888, %v2212
          %v2229 = vadd.f32 %v1889, %v2213
          %v2230 = vadd.f32 %v1890, %v2214
          %v2231 = vadd.f32 %v1891, %v2215
          %v2232 = vadd.f32 %v1892, %v2216
          %v2233 = vadd.f32 %v1893, %v2217
          %v2234 = vadd.f32 %v1894, %v2218
          %v2235 = vadd.f32 %v1895, %v2219
          %v2236 = vadd.f32 %v1896, %v2220
          %v2237 = vadd.f32 %v1897, %v2221
          %v2238 = vadd.f32 %v1898, %v2222
          %v2239 = vadd.f32 %v1899, %v2223
          %v2240 = vadd.f32 %v1900, %v2224
          %v2241 = vadd.f32 %v1901, %v2225
          %v2242 = vstv %s501
          %v2243 = vmul.f32 %v2242, %v2193
          %v2244 = vmul.f32 %v2242, %v2194
          %v2245 = vmul.f32 %v2242, %v2195
          %v2246 = vmul.f32 %v2242, %v2196
          %v2247 = vmul.f32 %v2242, %v2197
          %v2248 = vmul.f32 %v2242, %v2198
          %v2249 = vmul.f32 %v2242, %v2199
          %v2250 = vmul.f32 %v2242, %v2200
          %v2251 = vmul.f32 %v2242, %v2201
          %v2252 = vmul.f32 %v2242, %v2202
          %v2253 = vmul.f32 %v2242, %v2203
          %v2254 = vmul.f32 %v2242, %v2204
          %v2255 = vmul.f32 %v2242, %v2205
          %v2256 = vmul.f32 %v2242, %v2206
          %v2257 = vmul.f32 %v2242, %v2207
          %v2258 = vmul.f32 %v2242, %v2208
          %v2259 = vadd.f32 %v1919, %v2243
          %v2260 = vadd.f32 %v1920, %v2244
          %v2261 = vadd.f32 %v1921, %v2245
          %v2262 = vadd.f32 %v1922, %v2246
          %v2263 = vadd.f32 %v1923, %v2247
          %v2264 = vadd.f32 %v1924, %v2248
          %v2265 = vadd.f32 %v1925, %v2249
          %v2266 = vadd.f32 %v1926, %v2250
          %v2267 = vadd.f32 %v1927, %v2251
          %v2268 = vadd.f32 %v1928, %v2252
          %v2269 = vadd.f32 %v1929, %v2253
          %v2270 = vadd.f32 %v1930, %v2254
          %v2271 = vadd.f32 %v1931, %v2255
          %v2272 = vadd.f32 %v1932, %v2256
          %v2273 = vadd.f32 %v1933, %v2257
          %v2274 = vadd.f32 %v1934, %v2258
          %v2275 = vstv %s484
          %v2276 = vmul.f32 %v2275, %v2145
          %v2277 = vmul.f32 %v2275, %v2146
          %v2278 = vmul.f32 %v2275, %v2147
          %v2279 = vmul.f32 %v2275, %v2148
          %v2280 = vmul.f32 %v2275, %v2149
          %v2281 = vmul.f32 %v2275, %v2150
          %v2282 = vmul.f32 %v2275, %v2151
          %v2283 = vmul.f32 %v2275, %v2152
          %v2284 = vmul.f32 %v2275, %v2153
          %v2285 = vmul.f32 %v2275, %v2154
          %v2286 = vmul.f32 %v2275, %v2155
          %v2287 = vmul.f32 %v2275, %v2156
          %v2288 = vmul.f32 %v2275, %v2157
          %v2289 = vmul.f32 %v2275, %v2158
          %v2290 = vmul.f32 %v2275, %v2159
          %v2291 = vmul.f32 %v2275, %v2160
          %v2292 = vadd.f32 %v2226, %v2276
          %v2293 = vadd.f32 %v2227, %v2277
          %v2294 = vadd.f32 %v2228, %v2278
          %v2295 = vadd.f32 %v2229, %v2279
          %v2296 = vadd.f32 %v2230, %v2280
          %v2297 = vadd.f32 %v2231, %v2281
          %v2298 = vadd.f32 %v2232, %v2282
          %v2299 = vadd.f32 %v2233, %v2283
          %v2300 = vadd.f32 %v2234, %v2284
          %v2301 = vadd.f32 %v2235, %v2285
          %v2302 = vadd.f32 %v2236, %v2286
          %v2303 = vadd.f32 %v2237, %v2287
          %v2304 = vadd.f32 %v2238, %v2288
          %v2305 = vadd.f32 %v2239, %v2289
          %v2306 = vadd.f32 %v2240, %v2290
          %v2307 = vadd.f32 %v2241, %v2291
          %v2308 = vstv %s502
          %v2309 = vmul.f32 %v2308, %v2145
          %v2310 = vmul.f32 %v2308, %v2146
          %v2311 = vmul.f32 %v2308, %v2147
          %v2312 = vmul.f32 %v2308, %v2148
          %v2313 = vmul.f32 %v2308, %v2149
          %v2314 = vmul.f32 %v2308, %v2150
          %v2315 = vmul.f32 %v2308, %v2151
          %v2316 = vmul.f32 %v2308, %v2152
          %v2317 = vmul.f32 %v2308, %v2153
          %v2318 = vmul.f32 %v2308, %v2154
          %v2319 = vmul.f32 %v2308, %v2155
          %v2320 = vmul.f32 %v2308, %v2156
          %v2321 = vmul.f32 %v2308, %v2157
          %v2322 = vmul.f32 %v2308, %v2158
          %v2323 = vmul.f32 %v2308, %v2159
          %v2324 = vmul.f32 %v2308, %v2160
          %v2325 = vadd.f32 %v2259, %v2309
          %v2326 = vadd.f32 %v2260, %v2310
          %v2327 = vadd.f32 %v2261, %v2311
          %v2328 = vadd.f32 %v2262, %v2312
          %v2329 = vadd.f32 %v2263, %v2313
          %v2330 = vadd.f32 %v2264, %v2314
          %v2331 = vadd.f32 %v2265, %v2315
          %v2332 = vadd.f32 %v2266, %v2316
          %v2333 = vadd.f32 %v2267, %v2317
          %v2334 = vadd.f32 %v2268, %v2318
          %v2335 = vadd.f32 %v2269, %v2319
          %v2336 = vadd.f32 %v2270, %v2320
          %v2337 = vadd.f32 %v2271, %v2321
          %v2338 = vadd.f32 %v2272, %v2322
          %v2339 = vadd.f32 %v2273, %v2323
          %v2340 = vadd.f32 %v2274, %v2324
          %2341 = vrot.lane.b32.xlu0 %v2145, 127
          %v2342 = vpop.permute.xlu0 %2341
          %2343 = vrot.lane.b32.xlu0 %v2146, 127
          %v2344 = vpop.permute.xlu0 %2343
          %2345 = vrot.lane.b32.xlu0 %v2147, 127
          %v2346 = vpop.permute.xlu0 %2345
          %2347 = vrot.lane.b32.xlu0 %v2148, 127
          %v2348 = vpop.permute.xlu0 %2347
          %2349 = vrot.lane.b32.xlu0 %v2149, 127
          %v2350 = vpop.permute.xlu0 %2349
          %2351 = vrot.lane.b32.xlu0 %v2150, 127
          %v2352 = vpop.permute.xlu0 %2351
          %2353 = vrot.lane.b32.xlu0 %v2151, 127
          %v2354 = vpop.permute.xlu0 %2353
          %2355 = vrot.lane.b32.xlu0 %v2152, 127
          %v2356 = vpop.permute.xlu0 %2355
          %2357 = vrot.lane.b32.xlu0 %v2153, 127
          %v2358 = vpop.permute.xlu0 %2357
          %2359 = vrot.lane.b32.xlu0 %v2154, 127
          %v2360 = vpop.permute.xlu0 %2359
          %2361 = vrot.lane.b32.xlu0 %v2155, 127
          %v2362 = vpop.permute.xlu0 %2361
          %2363 = vrot.lane.b32.xlu0 %v2156, 127
          %v2364 = vpop.permute.xlu0 %2363
          %2365 = vrot.lane.b32.xlu0 %v2157, 127
          %v2366 = vpop.permute.xlu0 %2365
          %2367 = vrot.lane.b32.xlu0 %v2158, 127
          %v2368 = vpop.permute.xlu0 %2367
          %2369 = vrot.lane.b32.xlu0 %v2159, 127
          %v2370 = vpop.permute.xlu0 %2369
          %2371 = vrot.lane.b32.xlu0 %v2160, 127
          %v2372 = vpop.permute.xlu0 %2371
          %v2373 = vmul.f32 %v2342, %v705
          %v2374 = vmul.f32 %v2344, %v705
          %v2375 = vmul.f32 %v2346, %v705
          %v2376 = vmul.f32 %v2348, %v705
          %v2377 = vmul.f32 %v2350, %v705
          %v2378 = vmul.f32 %v2352, %v705
          %v2379 = vmul.f32 %v2354, %v705
          %v2380 = vmul.f32 %v2356, %v705
          %v2381 = vmul.f32 %v2358, %v705
          %v2382 = vmul.f32 %v2360, %v705
          %v2383 = vmul.f32 %v2362, %v705
          %v2384 = vmul.f32 %v2364, %v705
          %v2385 = vmul.f32 %v2366, %v705
          %v2386 = vmul.f32 %v2368, %v705
          %v2387 = vmul.f32 %v2370, %v705
          %v2388 = vmul.f32 %v2372, %v705
          %v2389 = vstv %s485
          %v2390 = vmul.f32 %v2389, %v2373
          %v2391 = vmul.f32 %v2389, %v2374
          %v2392 = vmul.f32 %v2389, %v2375
          %v2393 = vmul.f32 %v2389, %v2376
          %v2394 = vmul.f32 %v2389, %v2377
          %v2395 = vmul.f32 %v2389, %v2378
          %v2396 = vmul.f32 %v2389, %v2379
          %v2397 = vmul.f32 %v2389, %v2380
          %v2398 = vmul.f32 %v2389, %v2381
          %v2399 = vmul.f32 %v2389, %v2382
          %v2400 = vmul.f32 %v2389, %v2383
          %v2401 = vmul.f32 %v2389, %v2384
          %v2402 = vmul.f32 %v2389, %v2385
          %v2403 = vmul.f32 %v2389, %v2386
          %v2404 = vmul.f32 %v2389, %v2387
          %v2405 = vmul.f32 %v2389, %v2388
          %v2406 = vadd.f32 %v2292, %v2390
          %v2407 = vadd.f32 %v2293, %v2391
          %v2408 = vadd.f32 %v2294, %v2392
          %v2409 = vadd.f32 %v2295, %v2393
          %v2410 = vadd.f32 %v2296, %v2394
          %v2411 = vadd.f32 %v2297, %v2395
          %v2412 = vadd.f32 %v2298, %v2396
          %v2413 = vadd.f32 %v2299, %v2397
          %v2414 = vadd.f32 %v2300, %v2398
          %v2415 = vadd.f32 %v2301, %v2399
          %v2416 = vadd.f32 %v2302, %v2400
          %v2417 = vadd.f32 %v2303, %v2401
          %v2418 = vadd.f32 %v2304, %v2402
          %v2419 = vadd.f32 %v2305, %v2403
          %v2420 = vadd.f32 %v2306, %v2404
          %v2421 = vadd.f32 %v2307, %v2405
          %v2422 = vstv %s503
          %v2423 = vmul.f32 %v2422, %v2373
          %v2424 = vmul.f32 %v2422, %v2374
          %v2425 = vmul.f32 %v2422, %v2375
          %v2426 = vmul.f32 %v2422, %v2376
          %v2427 = vmul.f32 %v2422, %v2377
          %v2428 = vmul.f32 %v2422, %v2378
          %v2429 = vmul.f32 %v2422, %v2379
          %v2430 = vmul.f32 %v2422, %v2380
          %v2431 = vmul.f32 %v2422, %v2381
          %v2432 = vmul.f32 %v2422, %v2382
          %v2433 = vmul.f32 %v2422, %v2383
          %v2434 = vmul.f32 %v2422, %v2384
          %v2435 = vmul.f32 %v2422, %v2385
          %v2436 = vmul.f32 %v2422, %v2386
          %v2437 = vmul.f32 %v2422, %v2387
          %v2438 = vmul.f32 %v2422, %v2388
          %v2439 = vadd.f32 %v2325, %v2423
          %v2440 = vadd.f32 %v2326, %v2424
          %v2441 = vadd.f32 %v2327, %v2425
          %v2442 = vadd.f32 %v2328, %v2426
          %v2443 = vadd.f32 %v2329, %v2427
          %v2444 = vadd.f32 %v2330, %v2428
          %v2445 = vadd.f32 %v2331, %v2429
          %v2446 = vadd.f32 %v2332, %v2430
          %v2447 = vadd.f32 %v2333, %v2431
          %v2448 = vadd.f32 %v2334, %v2432
          %v2449 = vadd.f32 %v2335, %v2433
          %v2450 = vadd.f32 %v2336, %v2434
          %v2451 = vadd.f32 %v2337, %v2435
          %v2452 = vadd.f32 %v2338, %v2436
          %v2453 = vadd.f32 %v2339, %v2437
          %v2454 = vadd.f32 %v2340, %v2438
          %2455 = vrot.lane.b32.xlu0 %v2035, 1
          %v2456 = vpop.permute.xlu0 %2455
          %2457 = vrot.lane.b32.xlu0 %v2040, 1
          %v2458 = vpop.permute.xlu0 %2457
          %2459 = vrot.lane.b32.xlu0 %v2045, 1
          %v2460 = vpop.permute.xlu0 %2459
          %2461 = vrot.lane.b32.xlu0 %v2050, 1
          %v2462 = vpop.permute.xlu0 %2461
          %2463 = vrot.lane.b32.xlu0 %v2055, 1
          %v2464 = vpop.permute.xlu0 %2463
          %2465 = vrot.lane.b32.xlu0 %v2060, 1
          %v2466 = vpop.permute.xlu0 %2465
          %2467 = vrot.lane.b32.xlu0 %v2065, 1
          %v2468 = vpop.permute.xlu0 %2467
          %2469 = vrot.lane.b32.xlu0 %v2070, 1
          %v2470 = vpop.permute.xlu0 %2469
          %2471 = vrot.lane.b32.xlu0 %v2075, 1
          %v2472 = vpop.permute.xlu0 %2471
          %2473 = vrot.lane.b32.xlu0 %v2080, 1
          %v2474 = vpop.permute.xlu0 %2473
          %2475 = vrot.lane.b32.xlu0 %v2085, 1
          %v2476 = vpop.permute.xlu0 %2475
          %2477 = vrot.lane.b32.xlu0 %v2090, 1
          %v2478 = vpop.permute.xlu0 %2477
          %2479 = vrot.lane.b32.xlu0 %v2095, 1
          %v2480 = vpop.permute.xlu0 %2479
          %2481 = vrot.lane.b32.xlu0 %v2100, 1
          %v2482 = vpop.permute.xlu0 %2481
          %2483 = vrot.lane.b32.xlu0 %v2105, 1
          %v2484 = vpop.permute.xlu0 %2483
          %2485 = vrot.lane.b32.xlu0 %v2110, 1
          %v2486 = vpop.permute.xlu0 %2485
          %v2487 = vmul.f32 %v2456, %v708
          %v2488 = vmul.f32 %v2458, %v708
          %v2489 = vmul.f32 %v2460, %v708
          %v2490 = vmul.f32 %v2462, %v708
          %v2491 = vmul.f32 %v2464, %v708
          %v2492 = vmul.f32 %v2466, %v708
          %v2493 = vmul.f32 %v2468, %v708
          %v2494 = vmul.f32 %v2470, %v708
          %v2495 = vmul.f32 %v2472, %v708
          %v2496 = vmul.f32 %v2474, %v708
          %v2497 = vmul.f32 %v2476, %v708
          %v2498 = vmul.f32 %v2478, %v708
          %v2499 = vmul.f32 %v2480, %v708
          %v2500 = vmul.f32 %v2482, %v708
          %v2501 = vmul.f32 %v2484, %v708
          %v2502 = vmul.f32 %v2486, %v708
          %v2503 = vstv %s486
          %v2504 = vmul.f32 %v2503, %v2487
          %v2505 = vmul.f32 %v2503, %v2488
          %v2506 = vmul.f32 %v2503, %v2489
          %v2507 = vmul.f32 %v2503, %v2490
          %v2508 = vmul.f32 %v2503, %v2491
          %v2509 = vmul.f32 %v2503, %v2492
          %v2510 = vmul.f32 %v2503, %v2493
          %v2511 = vmul.f32 %v2503, %v2494
          %v2512 = vmul.f32 %v2503, %v2495
          %v2513 = vmul.f32 %v2503, %v2496
          %v2514 = vmul.f32 %v2503, %v2497
          %v2515 = vmul.f32 %v2503, %v2498
          %v2516 = vmul.f32 %v2503, %v2499
          %v2517 = vmul.f32 %v2503, %v2500
          %v2518 = vmul.f32 %v2503, %v2501
          %v2519 = vmul.f32 %v2503, %v2502
          %v2520 = vadd.f32 %v2406, %v2504
          %v2521 = vadd.f32 %v2407, %v2505
          %v2522 = vadd.f32 %v2408, %v2506
          %v2523 = vadd.f32 %v2409, %v2507
          %v2524 = vadd.f32 %v2410, %v2508
          %v2525 = vadd.f32 %v2411, %v2509
          %v2526 = vadd.f32 %v2412, %v2510
          %v2527 = vadd.f32 %v2413, %v2511
          %v2528 = vadd.f32 %v2414, %v2512
          %v2529 = vadd.f32 %v2415, %v2513
          %v2530 = vadd.f32 %v2416, %v2514
          %v2531 = vadd.f32 %v2417, %v2515
          %v2532 = vadd.f32 %v2418, %v2516
          %v2533 = vadd.f32 %v2419, %v2517
          %v2534 = vadd.f32 %v2420, %v2518
          %v2535 = vadd.f32 %v2421, %v2519
          %v2536 = vstv %s504
          %v2537 = vmul.f32 %v2536, %v2487
          %v2538 = vmul.f32 %v2536, %v2488
          %v2539 = vmul.f32 %v2536, %v2489
          %v2540 = vmul.f32 %v2536, %v2490
          %v2541 = vmul.f32 %v2536, %v2491
          %v2542 = vmul.f32 %v2536, %v2492
          %v2543 = vmul.f32 %v2536, %v2493
          %v2544 = vmul.f32 %v2536, %v2494
          %v2545 = vmul.f32 %v2536, %v2495
          %v2546 = vmul.f32 %v2536, %v2496
          %v2547 = vmul.f32 %v2536, %v2497
          %v2548 = vmul.f32 %v2536, %v2498
          %v2549 = vmul.f32 %v2536, %v2499
          %v2550 = vmul.f32 %v2536, %v2500
          %v2551 = vmul.f32 %v2536, %v2501
          %v2552 = vmul.f32 %v2536, %v2502
          %v2553 = vadd.f32 %v2439, %v2537
          %v2554 = vadd.f32 %v2440, %v2538
          %v2555 = vadd.f32 %v2441, %v2539
          %v2556 = vadd.f32 %v2442, %v2540
          %v2557 = vadd.f32 %v2443, %v2541
          %v2558 = vadd.f32 %v2444, %v2542
          %v2559 = vadd.f32 %v2445, %v2543
          %v2560 = vadd.f32 %v2446, %v2544
          %v2561 = vadd.f32 %v2447, %v2545
          %v2562 = vadd.f32 %v2448, %v2546
          %v2563 = vadd.f32 %v2449, %v2547
          %v2564 = vadd.f32 %v2450, %v2548
          %v2565 = vadd.f32 %v2451, %v2549
          %v2566 = vadd.f32 %v2452, %v2550
          %v2567 = vadd.f32 %v2453, %v2551
          %v2568 = vadd.f32 %v2454, %v2552
          %v2569 = vstv %s487
          %v2570 = vmul.f32 %v2569, %v2035
          %v2571 = vmul.f32 %v2569, %v2040
          %v2572 = vmul.f32 %v2569, %v2045
          %v2573 = vmul.f32 %v2569, %v2050
          %v2574 = vmul.f32 %v2569, %v2055
          %v2575 = vmul.f32 %v2569, %v2060
          %v2576 = vmul.f32 %v2569, %v2065
          %v2577 = vmul.f32 %v2569, %v2070
          %v2578 = vmul.f32 %v2569, %v2075
          %v2579 = vmul.f32 %v2569, %v2080
          %v2580 = vmul.f32 %v2569, %v2085
          %v2581 = vmul.f32 %v2569, %v2090
          %v2582 = vmul.f32 %v2569, %v2095
          %v2583 = vmul.f32 %v2569, %v2100
          %v2584 = vmul.f32 %v2569, %v2105
          %v2585 = vmul.f32 %v2569, %v2110
          %v2586 = vadd.f32 %v2520, %v2570
          %v2587 = vadd.f32 %v2521, %v2571
          %v2588 = vadd.f32 %v2522, %v2572
          %v2589 = vadd.f32 %v2523, %v2573
          %v2590 = vadd.f32 %v2524, %v2574
          %v2591 = vadd.f32 %v2525, %v2575
          %v2592 = vadd.f32 %v2526, %v2576
          %v2593 = vadd.f32 %v2527, %v2577
          %v2594 = vadd.f32 %v2528, %v2578
          %v2595 = vadd.f32 %v2529, %v2579
          %v2596 = vadd.f32 %v2530, %v2580
          %v2597 = vadd.f32 %v2531, %v2581
          %v2598 = vadd.f32 %v2532, %v2582
          %v2599 = vadd.f32 %v2533, %v2583
          %v2600 = vadd.f32 %v2534, %v2584
          %v2601 = vadd.f32 %v2535, %v2585
          %v2602 = vstv %s505
          %v2603 = vmul.f32 %v2602, %v2035
          %v2604 = vmul.f32 %v2602, %v2040
          %v2605 = vmul.f32 %v2602, %v2045
          %v2606 = vmul.f32 %v2602, %v2050
          %v2607 = vmul.f32 %v2602, %v2055
          %v2608 = vmul.f32 %v2602, %v2060
          %v2609 = vmul.f32 %v2602, %v2065
          %v2610 = vmul.f32 %v2602, %v2070
          %v2611 = vmul.f32 %v2602, %v2075
          %v2612 = vmul.f32 %v2602, %v2080
          %v2613 = vmul.f32 %v2602, %v2085
          %v2614 = vmul.f32 %v2602, %v2090
          %v2615 = vmul.f32 %v2602, %v2095
          %v2616 = vmul.f32 %v2602, %v2100
          %v2617 = vmul.f32 %v2602, %v2105
          %v2618 = vmul.f32 %v2602, %v2110
          %v2619 = vadd.f32 %v2553, %v2603
          %v2620 = vadd.f32 %v2554, %v2604
          %v2621 = vadd.f32 %v2555, %v2605
          %v2622 = vadd.f32 %v2556, %v2606
          %v2623 = vadd.f32 %v2557, %v2607
          %v2624 = vadd.f32 %v2558, %v2608
          %v2625 = vadd.f32 %v2559, %v2609
          %v2626 = vadd.f32 %v2560, %v2610
          %v2627 = vadd.f32 %v2561, %v2611
          %v2628 = vadd.f32 %v2562, %v2612
          %v2629 = vadd.f32 %v2563, %v2613
          %v2630 = vadd.f32 %v2564, %v2614
          %v2631 = vadd.f32 %v2565, %v2615
          %v2632 = vadd.f32 %v2566, %v2616
          %v2633 = vadd.f32 %v2567, %v2617
          %v2634 = vadd.f32 %v2568, %v2618
          %2635 = vrot.lane.b32.xlu0 %v2035, 127
          %v2636 = vpop.permute.xlu0 %2635
          %2637 = vrot.lane.b32.xlu0 %v2040, 127
          %v2638 = vpop.permute.xlu0 %2637
          %2639 = vrot.lane.b32.xlu0 %v2045, 127
          %v2640 = vpop.permute.xlu0 %2639
          %2641 = vrot.lane.b32.xlu0 %v2050, 127
          %v2642 = vpop.permute.xlu0 %2641
          %2643 = vrot.lane.b32.xlu0 %v2055, 127
          %v2644 = vpop.permute.xlu0 %2643
          %2645 = vrot.lane.b32.xlu0 %v2060, 127
          %v2646 = vpop.permute.xlu0 %2645
          %2647 = vrot.lane.b32.xlu0 %v2065, 127
          %v2648 = vpop.permute.xlu0 %2647
          %2649 = vrot.lane.b32.xlu0 %v2070, 127
          %v2650 = vpop.permute.xlu0 %2649
          %2651 = vrot.lane.b32.xlu0 %v2075, 127
          %v2652 = vpop.permute.xlu0 %2651
          %2653 = vrot.lane.b32.xlu0 %v2080, 127
          %v2654 = vpop.permute.xlu0 %2653
          %2655 = vrot.lane.b32.xlu0 %v2085, 127
          %v2656 = vpop.permute.xlu0 %2655
          %2657 = vrot.lane.b32.xlu0 %v2090, 127
          %v2658 = vpop.permute.xlu0 %2657
          %2659 = vrot.lane.b32.xlu0 %v2095, 127
          %v2660 = vpop.permute.xlu0 %2659
          %2661 = vrot.lane.b32.xlu0 %v2100, 127
          %v2662 = vpop.permute.xlu0 %2661
          %2663 = vrot.lane.b32.xlu0 %v2105, 127
          %v2664 = vpop.permute.xlu0 %2663
          %2665 = vrot.lane.b32.xlu0 %v2110, 127
          %v2666 = vpop.permute.xlu0 %2665
          %v2667 = vmul.f32 %v2636, %v705
          %v2668 = vmul.f32 %v2638, %v705
          %v2669 = vmul.f32 %v2640, %v705
          %v2670 = vmul.f32 %v2642, %v705
          %v2671 = vmul.f32 %v2644, %v705
          %v2672 = vmul.f32 %v2646, %v705
          %v2673 = vmul.f32 %v2648, %v705
          %v2674 = vmul.f32 %v2650, %v705
          %v2675 = vmul.f32 %v2652, %v705
          %v2676 = vmul.f32 %v2654, %v705
          %v2677 = vmul.f32 %v2656, %v705
          %v2678 = vmul.f32 %v2658, %v705
          %v2679 = vmul.f32 %v2660, %v705
          %v2680 = vmul.f32 %v2662, %v705
          %v2681 = vmul.f32 %v2664, %v705
          %v2682 = vmul.f32 %v2666, %v705
          %v2683 = vstv %s488
          %v2684 = vmul.f32 %v2683, %v2667
          %v2685 = vmul.f32 %v2683, %v2668
          %v2686 = vmul.f32 %v2683, %v2669
          %v2687 = vmul.f32 %v2683, %v2670
          %v2688 = vmul.f32 %v2683, %v2671
          %v2689 = vmul.f32 %v2683, %v2672
          %v2690 = vmul.f32 %v2683, %v2673
          %v2691 = vmul.f32 %v2683, %v2674
          %v2692 = vmul.f32 %v2683, %v2675
          %v2693 = vmul.f32 %v2683, %v2676
          %v2694 = vmul.f32 %v2683, %v2677
          %v2695 = vmul.f32 %v2683, %v2678
          %v2696 = vmul.f32 %v2683, %v2679
          %v2697 = vmul.f32 %v2683, %v2680
          %v2698 = vmul.f32 %v2683, %v2681
          %v2699 = vmul.f32 %v2683, %v2682
          %v2700 = vadd.f32 %v2586, %v2684
          %v2701 = vadd.f32 %v2587, %v2685
          %v2702 = vadd.f32 %v2588, %v2686
          %v2703 = vadd.f32 %v2589, %v2687
          %v2704 = vadd.f32 %v2590, %v2688
          %v2705 = vadd.f32 %v2591, %v2689
          %v2706 = vadd.f32 %v2592, %v2690
          %v2707 = vadd.f32 %v2593, %v2691
          %v2708 = vadd.f32 %v2594, %v2692
          %v2709 = vadd.f32 %v2595, %v2693
          %v2710 = vadd.f32 %v2596, %v2694
          %v2711 = vadd.f32 %v2597, %v2695
          %v2712 = vadd.f32 %v2598, %v2696
          %v2713 = vadd.f32 %v2599, %v2697
          %v2714 = vadd.f32 %v2600, %v2698
          %v2715 = vadd.f32 %v2601, %v2699
          %v2716 = vstv %s506
          %v2717 = vmul.f32 %v2716, %v2667
          %v2718 = vmul.f32 %v2716, %v2668
          %v2719 = vmul.f32 %v2716, %v2669
          %v2720 = vmul.f32 %v2716, %v2670
          %v2721 = vmul.f32 %v2716, %v2671
          %v2722 = vmul.f32 %v2716, %v2672
          %v2723 = vmul.f32 %v2716, %v2673
          %v2724 = vmul.f32 %v2716, %v2674
          %v2725 = vmul.f32 %v2716, %v2675
          %v2726 = vmul.f32 %v2716, %v2676
          %v2727 = vmul.f32 %v2716, %v2677
          %v2728 = vmul.f32 %v2716, %v2678
          %v2729 = vmul.f32 %v2716, %v2679
          %v2730 = vmul.f32 %v2716, %v2680
          %v2731 = vmul.f32 %v2716, %v2681
          %v2732 = vmul.f32 %v2716, %v2682
          %v2733 = vadd.f32 %v2619, %v2717
          %v2734 = vadd.f32 %v2620, %v2718
          %v2735 = vadd.f32 %v2621, %v2719
          %v2736 = vadd.f32 %v2622, %v2720
          %v2737 = vadd.f32 %v2623, %v2721
          %v2738 = vadd.f32 %v2624, %v2722
          %v2739 = vadd.f32 %v2625, %v2723
          %v2740 = vadd.f32 %v2626, %v2724
          %v2741 = vadd.f32 %v2627, %v2725
          %v2742 = vadd.f32 %v2628, %v2726
          %v2743 = vadd.f32 %v2629, %v2727
          %v2744 = vadd.f32 %v2630, %v2728
          %v2745 = vadd.f32 %v2631, %v2729
          %v2746 = vadd.f32 %v2632, %v2730
          %v2747 = vadd.f32 %v2633, %v2731
          %v2748 = vadd.f32 %v2634, %v2732
          %v2749 = vrot.slane %v2035, 1
          %v2750 = vrot.slane %v2040, 1
          %v2751 = vrot.slane %v2045, 1
          %v2752 = vrot.slane %v2050, 1
          %v2753 = vrot.slane %v2055, 1
          %v2754 = vrot.slane %v2060, 1
          %v2755 = vrot.slane %v2065, 1
          %v2756 = vrot.slane %v2070, 1
          %v2757 = vrot.slane %v2075, 1
          %v2758 = vrot.slane %v2080, 1
          %v2759 = vrot.slane %v2085, 1
          %v2760 = vrot.slane %v2090, 1
          %v2761 = vrot.slane %v2095, 1
          %v2762 = vrot.slane %v2100, 1
          %v2763 = vrot.slane %v2105, 1
          %v2764 = vrot.slane %v2110, 1
          %v2765 = vsel %vm1608, %v2763, %v2764
          %v2766 = vsel %vm1608, %v2762, %v2763
          %v2767 = vsel %vm1608, %v2761, %v2762
          %v2768 = vsel %vm1608, %v2760, %v2761
          %v2769 = vsel %vm1608, %v2759, %v2760
          %v2770 = vsel %vm1608, %v2758, %v2759
          %v2771 = vsel %vm1608, %v2757, %v2758
          %v2772 = vsel %vm1608, %v2756, %v2757
          %v2773 = vsel %vm1608, %v2755, %v2756
          %v2774 = vsel %vm1608, %v2754, %v2755
          %v2775 = vsel %vm1608, %v2753, %v2754
          %v2776 = vsel %vm1608, %v2752, %v2753
          %v2777 = vsel %vm1608, %v2751, %v2752
          %v2778 = vsel %vm1608, %v2750, %v2751
          %v2779 = vsel %vm1608, %v2749, %v2750
          %v2780 = vsel %vm1608, %v2764, %v2749
          %v2781 = vmul.f32 %v2779, %v637
          %v2782 = vmul.f32 %v2778, %v638
          %v2783 = vmul.f32 %v2777, %v639
          %v2784 = vmul.f32 %v2776, %v640
          %v2785 = vmul.f32 %v2775, %v641
          %v2786 = vmul.f32 %v2774, %v642
          %v2787 = vmul.f32 %v2773, %v643
          %v2788 = vmul.f32 %v2772, %v644
          %v2789 = vmul.f32 %v2771, %v645
          %v2790 = vmul.f32 %v2770, %v646
          %v2791 = vmul.f32 %v2769, %v647
          %v2792 = vmul.f32 %v2768, %v648
          %v2793 = vmul.f32 %v2767, %v649
          %v2794 = vmul.f32 %v2766, %v650
          %v2795 = vmul.f32 %v2765, %v651
          %v2796 = vmul.f32 %v2780, %v652
          %2797 = vrot.lane.b32.xlu0 %v2781, 1
          %v2798 = vpop.permute.xlu0 %2797
          %2799 = vrot.lane.b32.xlu0 %v2782, 1
          %v2800 = vpop.permute.xlu0 %2799
          %2801 = vrot.lane.b32.xlu0 %v2783, 1
          %v2802 = vpop.permute.xlu0 %2801
          %2803 = vrot.lane.b32.xlu0 %v2784, 1
          %v2804 = vpop.permute.xlu0 %2803
          %2805 = vrot.lane.b32.xlu0 %v2785, 1
          %v2806 = vpop.permute.xlu0 %2805
          %2807 = vrot.lane.b32.xlu0 %v2786, 1
          %v2808 = vpop.permute.xlu0 %2807
          %2809 = vrot.lane.b32.xlu0 %v2787, 1
          %v2810 = vpop.permute.xlu0 %2809
          %2811 = vrot.lane.b32.xlu0 %v2788, 1
          %v2812 = vpop.permute.xlu0 %2811
          %2813 = vrot.lane.b32.xlu0 %v2789, 1
          %v2814 = vpop.permute.xlu0 %2813
          %2815 = vrot.lane.b32.xlu0 %v2790, 1
          %v2816 = vpop.permute.xlu0 %2815
          %2817 = vrot.lane.b32.xlu0 %v2791, 1
          %v2818 = vpop.permute.xlu0 %2817
          %2819 = vrot.lane.b32.xlu0 %v2792, 1
          %v2820 = vpop.permute.xlu0 %2819
          %2821 = vrot.lane.b32.xlu0 %v2793, 1
          %v2822 = vpop.permute.xlu0 %2821
          %2823 = vrot.lane.b32.xlu0 %v2794, 1
          %v2824 = vpop.permute.xlu0 %2823
          %2825 = vrot.lane.b32.xlu0 %v2795, 1
          %v2826 = vpop.permute.xlu0 %2825
          %2827 = vrot.lane.b32.xlu0 %v2796, 1
          %v2828 = vpop.permute.xlu0 %2827
          %v2829 = vmul.f32 %v2798, %v708
          %v2830 = vmul.f32 %v2800, %v708
          %v2831 = vmul.f32 %v2802, %v708
          %v2832 = vmul.f32 %v2804, %v708
          %v2833 = vmul.f32 %v2806, %v708
          %v2834 = vmul.f32 %v2808, %v708
          %v2835 = vmul.f32 %v2810, %v708
          %v2836 = vmul.f32 %v2812, %v708
          %v2837 = vmul.f32 %v2814, %v708
          %v2838 = vmul.f32 %v2816, %v708
          %v2839 = vmul.f32 %v2818, %v708
          %v2840 = vmul.f32 %v2820, %v708
          %v2841 = vmul.f32 %v2822, %v708
          %v2842 = vmul.f32 %v2824, %v708
          %v2843 = vmul.f32 %v2826, %v708
          %v2844 = vmul.f32 %v2828, %v708
          %v2845 = vstv %s489
          %v2846 = vmul.f32 %v2845, %v2829
          %v2847 = vmul.f32 %v2845, %v2830
          %v2848 = vmul.f32 %v2845, %v2831
          %v2849 = vmul.f32 %v2845, %v2832
          %v2850 = vmul.f32 %v2845, %v2833
          %v2851 = vmul.f32 %v2845, %v2834
          %v2852 = vmul.f32 %v2845, %v2835
          %v2853 = vmul.f32 %v2845, %v2836
          %v2854 = vmul.f32 %v2845, %v2837
          %v2855 = vmul.f32 %v2845, %v2838
          %v2856 = vmul.f32 %v2845, %v2839
          %v2857 = vmul.f32 %v2845, %v2840
          %v2858 = vmul.f32 %v2845, %v2841
          %v2859 = vmul.f32 %v2845, %v2842
          %v2860 = vmul.f32 %v2845, %v2843
          %v2861 = vmul.f32 %v2845, %v2844
          %v2862 = vadd.f32 %v2700, %v2846
          %v2863 = vadd.f32 %v2701, %v2847
          %v2864 = vadd.f32 %v2702, %v2848
          %v2865 = vadd.f32 %v2703, %v2849
          %v2866 = vadd.f32 %v2704, %v2850
          %v2867 = vadd.f32 %v2705, %v2851
          %v2868 = vadd.f32 %v2706, %v2852
          %v2869 = vadd.f32 %v2707, %v2853
          %v2870 = vadd.f32 %v2708, %v2854
          %v2871 = vadd.f32 %v2709, %v2855
          %v2872 = vadd.f32 %v2710, %v2856
          %v2873 = vadd.f32 %v2711, %v2857
          %v2874 = vadd.f32 %v2712, %v2858
          %v2875 = vadd.f32 %v2713, %v2859
          %v2876 = vadd.f32 %v2714, %v2860
          %v2877 = vadd.f32 %v2715, %v2861
          %v2878 = vstv %s507
          %v2879 = vmul.f32 %v2878, %v2829
          %v2880 = vmul.f32 %v2878, %v2830
          %v2881 = vmul.f32 %v2878, %v2831
          %v2882 = vmul.f32 %v2878, %v2832
          %v2883 = vmul.f32 %v2878, %v2833
          %v2884 = vmul.f32 %v2878, %v2834
          %v2885 = vmul.f32 %v2878, %v2835
          %v2886 = vmul.f32 %v2878, %v2836
          %v2887 = vmul.f32 %v2878, %v2837
          %v2888 = vmul.f32 %v2878, %v2838
          %v2889 = vmul.f32 %v2878, %v2839
          %v2890 = vmul.f32 %v2878, %v2840
          %v2891 = vmul.f32 %v2878, %v2841
          %v2892 = vmul.f32 %v2878, %v2842
          %v2893 = vmul.f32 %v2878, %v2843
          %v2894 = vmul.f32 %v2878, %v2844
          %v2895 = vadd.f32 %v2733, %v2879
          %v2896 = vadd.f32 %v2734, %v2880
          %v2897 = vadd.f32 %v2735, %v2881
          %v2898 = vadd.f32 %v2736, %v2882
          %v2899 = vadd.f32 %v2737, %v2883
          %v2900 = vadd.f32 %v2738, %v2884
          %v2901 = vadd.f32 %v2739, %v2885
          %v2902 = vadd.f32 %v2740, %v2886
          %v2903 = vadd.f32 %v2741, %v2887
          %v2904 = vadd.f32 %v2742, %v2888
          %v2905 = vadd.f32 %v2743, %v2889
          %v2906 = vadd.f32 %v2744, %v2890
          %v2907 = vadd.f32 %v2745, %v2891
          %v2908 = vadd.f32 %v2746, %v2892
          %v2909 = vadd.f32 %v2747, %v2893
          %v2910 = vadd.f32 %v2748, %v2894
          %v2911 = vstv %s490
          %v2912 = vmul.f32 %v2911, %v2781
          %v2913 = vmul.f32 %v2911, %v2782
          %v2914 = vmul.f32 %v2911, %v2783
          %v2915 = vmul.f32 %v2911, %v2784
          %v2916 = vmul.f32 %v2911, %v2785
          %v2917 = vmul.f32 %v2911, %v2786
          %v2918 = vmul.f32 %v2911, %v2787
          %v2919 = vmul.f32 %v2911, %v2788
          %v2920 = vmul.f32 %v2911, %v2789
          %v2921 = vmul.f32 %v2911, %v2790
          %v2922 = vmul.f32 %v2911, %v2791
          %v2923 = vmul.f32 %v2911, %v2792
          %v2924 = vmul.f32 %v2911, %v2793
          %v2925 = vmul.f32 %v2911, %v2794
          %v2926 = vmul.f32 %v2911, %v2795
          %v2927 = vmul.f32 %v2911, %v2796
          %v2928 = vadd.f32 %v2862, %v2912
          %v2929 = vadd.f32 %v2863, %v2913
          %v2930 = vadd.f32 %v2864, %v2914
          %v2931 = vadd.f32 %v2865, %v2915
          %v2932 = vadd.f32 %v2866, %v2916
          %v2933 = vadd.f32 %v2867, %v2917
          %v2934 = vadd.f32 %v2868, %v2918
          %v2935 = vadd.f32 %v2869, %v2919
          %v2936 = vadd.f32 %v2870, %v2920
          %v2937 = vadd.f32 %v2871, %v2921
          %v2938 = vadd.f32 %v2872, %v2922
          %v2939 = vadd.f32 %v2873, %v2923
          %v2940 = vadd.f32 %v2874, %v2924
          %v2941 = vadd.f32 %v2875, %v2925
          %v2942 = vadd.f32 %v2876, %v2926
          %v2943 = vadd.f32 %v2877, %v2927
          %v2944 = vstv %s508
          %v2945 = vmul.f32 %v2944, %v2781
          %v2946 = vmul.f32 %v2944, %v2782
          %v2947 = vmul.f32 %v2944, %v2783
          %v2948 = vmul.f32 %v2944, %v2784
          %v2949 = vmul.f32 %v2944, %v2785
          %v2950 = vmul.f32 %v2944, %v2786
          %v2951 = vmul.f32 %v2944, %v2787
          %v2952 = vmul.f32 %v2944, %v2788
          %v2953 = vmul.f32 %v2944, %v2789
          %v2954 = vmul.f32 %v2944, %v2790
          %v2955 = vmul.f32 %v2944, %v2791
          %v2956 = vmul.f32 %v2944, %v2792
          %v2957 = vmul.f32 %v2944, %v2793
          %v2958 = vmul.f32 %v2944, %v2794
          %v2959 = vmul.f32 %v2944, %v2795
          %v2960 = vmul.f32 %v2944, %v2796
          %v2961 = vadd.f32 %v2895, %v2945
          %v2962 = vadd.f32 %v2896, %v2946
          %v2963 = vadd.f32 %v2897, %v2947
          %v2964 = vadd.f32 %v2898, %v2948
          %v2965 = vadd.f32 %v2899, %v2949
          %v2966 = vadd.f32 %v2900, %v2950
          %v2967 = vadd.f32 %v2901, %v2951
          %v2968 = vadd.f32 %v2902, %v2952
          %v2969 = vadd.f32 %v2903, %v2953
          %v2970 = vadd.f32 %v2904, %v2954
          %v2971 = vadd.f32 %v2905, %v2955
          %v2972 = vadd.f32 %v2906, %v2956
          %v2973 = vadd.f32 %v2907, %v2957
          %v2974 = vadd.f32 %v2908, %v2958
          %v2975 = vadd.f32 %v2909, %v2959
          %v2976 = vadd.f32 %v2910, %v2960
          %2977 = vrot.lane.b32.xlu0 %v2781, 127
          %v2978 = vpop.permute.xlu0 %2977
          %2979 = vrot.lane.b32.xlu0 %v2782, 127
          %v2980 = vpop.permute.xlu0 %2979
          %2981 = vrot.lane.b32.xlu0 %v2783, 127
          %v2982 = vpop.permute.xlu0 %2981
          %2983 = vrot.lane.b32.xlu0 %v2784, 127
          %v2984 = vpop.permute.xlu0 %2983
          %2985 = vrot.lane.b32.xlu0 %v2785, 127
          %v2986 = vpop.permute.xlu0 %2985
          %2987 = vrot.lane.b32.xlu0 %v2786, 127
          %v2988 = vpop.permute.xlu0 %2987
          %2989 = vrot.lane.b32.xlu0 %v2787, 127
          %v2990 = vpop.permute.xlu0 %2989
          %2991 = vrot.lane.b32.xlu0 %v2788, 127
          %v2992 = vpop.permute.xlu0 %2991
          %2993 = vrot.lane.b32.xlu0 %v2789, 127
          %v2994 = vpop.permute.xlu0 %2993
          %2995 = vrot.lane.b32.xlu0 %v2790, 127
          %v2996 = vpop.permute.xlu0 %2995
          %2997 = vrot.lane.b32.xlu0 %v2791, 127
          %v2998 = vpop.permute.xlu0 %2997
          %2999 = vrot.lane.b32.xlu0 %v2792, 127
          %v3000 = vpop.permute.xlu0 %2999
          %3001 = vrot.lane.b32.xlu0 %v2793, 127
          %v3002 = vpop.permute.xlu0 %3001
          %3003 = vrot.lane.b32.xlu0 %v2794, 127
          %v3004 = vpop.permute.xlu0 %3003
          %3005 = vrot.lane.b32.xlu0 %v2795, 127
          %v3006 = vpop.permute.xlu0 %3005
          %3007 = vrot.lane.b32.xlu0 %v2796, 127
          %v3008 = vpop.permute.xlu0 %3007
          %v3009 = vmul.f32 %v2978, %v705
          %v3010 = vmul.f32 %v2980, %v705
          %v3011 = vmul.f32 %v2982, %v705
          %v3012 = vmul.f32 %v2984, %v705
          %v3013 = vmul.f32 %v2986, %v705
          %v3014 = vmul.f32 %v2988, %v705
          %v3015 = vmul.f32 %v2990, %v705
          %v3016 = vmul.f32 %v2992, %v705
          %v3017 = vmul.f32 %v2994, %v705
          %v3018 = vmul.f32 %v2996, %v705
          %v3019 = vmul.f32 %v2998, %v705
          %v3020 = vmul.f32 %v3000, %v705
          %v3021 = vmul.f32 %v3002, %v705
          %v3022 = vmul.f32 %v3004, %v705
          %v3023 = vmul.f32 %v3006, %v705
          %v3024 = vmul.f32 %v3008, %v705
          %v3025 = vstv %s491
          %v3026 = vmul.f32 %v3025, %v3009
          %v3027 = vmul.f32 %v3025, %v3010
          %v3028 = vmul.f32 %v3025, %v3011
          %v3029 = vmul.f32 %v3025, %v3012
          %v3030 = vmul.f32 %v3025, %v3013
          %v3031 = vmul.f32 %v3025, %v3014
          %v3032 = vmul.f32 %v3025, %v3015
          %v3033 = vmul.f32 %v3025, %v3016
          %v3034 = vmul.f32 %v3025, %v3017
          %v3035 = vmul.f32 %v3025, %v3018
          %v3036 = vmul.f32 %v3025, %v3019
          %v3037 = vmul.f32 %v3025, %v3020
          %v3038 = vmul.f32 %v3025, %v3021
          %v3039 = vmul.f32 %v3025, %v3022
          %v3040 = vmul.f32 %v3025, %v3023
          %v3041 = vmul.f32 %v3025, %v3024
          %v3042 = vadd.f32 %v2928, %v3026
          %v3043 = vadd.f32 %v2929, %v3027
          %v3044 = vadd.f32 %v2930, %v3028
          %v3045 = vadd.f32 %v2931, %v3029
          %v3046 = vadd.f32 %v2932, %v3030
          %v3047 = vadd.f32 %v2933, %v3031
          %v3048 = vadd.f32 %v2934, %v3032
          %v3049 = vadd.f32 %v2935, %v3033
          %v3050 = vadd.f32 %v2936, %v3034
          %v3051 = vadd.f32 %v2937, %v3035
          %v3052 = vadd.f32 %v2938, %v3036
          %v3053 = vadd.f32 %v2939, %v3037
          %v3054 = vadd.f32 %v2940, %v3038
          %v3055 = vadd.f32 %v2941, %v3039
          %v3056 = vadd.f32 %v2942, %v3040
          %v3057 = vadd.f32 %v2943, %v3041
          %v3058 = vstv %s509
          %v3059 = vmul.f32 %v3058, %v3009
          %v3060 = vmul.f32 %v3058, %v3010
          %v3061 = vmul.f32 %v3058, %v3011
          %v3062 = vmul.f32 %v3058, %v3012
          %v3063 = vmul.f32 %v3058, %v3013
          %v3064 = vmul.f32 %v3058, %v3014
          %v3065 = vmul.f32 %v3058, %v3015
          %v3066 = vmul.f32 %v3058, %v3016
          %v3067 = vmul.f32 %v3058, %v3017
          %v3068 = vmul.f32 %v3058, %v3018
          %v3069 = vmul.f32 %v3058, %v3019
          %v3070 = vmul.f32 %v3058, %v3020
          %v3071 = vmul.f32 %v3058, %v3021
          %v3072 = vmul.f32 %v3058, %v3022
          %v3073 = vmul.f32 %v3058, %v3023
          %v3074 = vmul.f32 %v3058, %v3024
          %v3075 = vadd.f32 %v2961, %v3059
          %v3076 = vadd.f32 %v2962, %v3060
          %v3077 = vadd.f32 %v2963, %v3061
          %v3078 = vadd.f32 %v2964, %v3062
          %v3079 = vadd.f32 %v2965, %v3063
          %v3080 = vadd.f32 %v2966, %v3064
          %v3081 = vadd.f32 %v2967, %v3065
          %v3082 = vadd.f32 %v2968, %v3066
          %v3083 = vadd.f32 %v2969, %v3067
          %v3084 = vadd.f32 %v2970, %v3068
          %v3085 = vadd.f32 %v2971, %v3069
          %v3086 = vadd.f32 %v2972, %v3070
          %v3087 = vadd.f32 %v2973, %v3071
          %v3088 = vadd.f32 %v2974, %v3072
          %v3089 = vadd.f32 %v2975, %v3073
          %v3090 = vadd.f32 %v2976, %v3074
          %3091 = vrot.lane.b32.xlu0 %v3042, 127
          %v3092 = vpop.permute.xlu0 %3091
          %3093 = vrot.lane.b32.xlu0 %v3043, 127
          %v3094 = vpop.permute.xlu0 %3093
          %3095 = vrot.lane.b32.xlu0 %v3044, 127
          %v3096 = vpop.permute.xlu0 %3095
          %3097 = vrot.lane.b32.xlu0 %v3045, 127
          %v3098 = vpop.permute.xlu0 %3097
          %3099 = vrot.lane.b32.xlu0 %v3046, 127
          %v3100 = vpop.permute.xlu0 %3099
          %3101 = vrot.lane.b32.xlu0 %v3047, 127
          %v3102 = vpop.permute.xlu0 %3101
          %3103 = vrot.lane.b32.xlu0 %v3048, 127
          %v3104 = vpop.permute.xlu0 %3103
          %3105 = vrot.lane.b32.xlu0 %v3049, 127
          %v3106 = vpop.permute.xlu0 %3105
          %3107 = vrot.lane.b32.xlu0 %v3050, 127
          %v3108 = vpop.permute.xlu0 %3107
          %3109 = vrot.lane.b32.xlu0 %v3051, 127
          %v3110 = vpop.permute.xlu0 %3109
          %3111 = vrot.lane.b32.xlu0 %v3052, 127
          %v3112 = vpop.permute.xlu0 %3111
          %3113 = vrot.lane.b32.xlu0 %v3053, 127
          %v3114 = vpop.permute.xlu0 %3113
          %3115 = vrot.lane.b32.xlu0 %v3054, 127
          %v3116 = vpop.permute.xlu0 %3115
          %3117 = vrot.lane.b32.xlu0 %v3055, 127
          %v3118 = vpop.permute.xlu0 %3117
          %3119 = vrot.lane.b32.xlu0 %v3056, 127
          %v3120 = vpop.permute.xlu0 %3119
          %3121 = vrot.lane.b32.xlu0 %v3057, 127
          %v3122 = vpop.permute.xlu0 %3121
          %v3123 = vmax.f32 %v3042, %v3092
          %v3124 = vmax.f32 %v3043, %v3094
          %v3125 = vmax.f32 %v3044, %v3096
          %v3126 = vmax.f32 %v3045, %v3098
          %v3127 = vmax.f32 %v3046, %v3100
          %v3128 = vmax.f32 %v3047, %v3102
          %v3129 = vmax.f32 %v3048, %v3104
          %v3130 = vmax.f32 %v3049, %v3106
          %v3131 = vmax.f32 %v3050, %v3108
          %v3132 = vmax.f32 %v3051, %v3110
          %v3133 = vmax.f32 %v3052, %v3112
          %v3134 = vmax.f32 %v3053, %v3114
          %v3135 = vmax.f32 %v3054, %v3116
          %v3136 = vmax.f32 %v3055, %v3118
          %v3137 = vmax.f32 %v3056, %v3120
          %v3138 = vmax.f32 %v3057, %v3122
          %3139 = vrot.lane.b32.xlu0 %v3075, 127
          %v3140 = vpop.permute.xlu0 %3139
          %3141 = vrot.lane.b32.xlu0 %v3076, 127
          %v3142 = vpop.permute.xlu0 %3141
          %3143 = vrot.lane.b32.xlu0 %v3077, 127
          %v3144 = vpop.permute.xlu0 %3143
          %3145 = vrot.lane.b32.xlu0 %v3078, 127
          %v3146 = vpop.permute.xlu0 %3145
          %3147 = vrot.lane.b32.xlu0 %v3079, 127
          %v3148 = vpop.permute.xlu0 %3147
          %3149 = vrot.lane.b32.xlu0 %v3080, 127
          %v3150 = vpop.permute.xlu0 %3149
          %3151 = vrot.lane.b32.xlu0 %v3081, 127
          %v3152 = vpop.permute.xlu0 %3151
          %3153 = vrot.lane.b32.xlu0 %v3082, 127
          %v3154 = vpop.permute.xlu0 %3153
          %3155 = vrot.lane.b32.xlu0 %v3083, 127
          %v3156 = vpop.permute.xlu0 %3155
          %3157 = vrot.lane.b32.xlu0 %v3084, 127
          %v3158 = vpop.permute.xlu0 %3157
          %3159 = vrot.lane.b32.xlu0 %v3085, 127
          %v3160 = vpop.permute.xlu0 %3159
          %3161 = vrot.lane.b32.xlu0 %v3086, 127
          %v3162 = vpop.permute.xlu0 %3161
          %3163 = vrot.lane.b32.xlu0 %v3087, 127
          %v3164 = vpop.permute.xlu0 %3163
          %3165 = vrot.lane.b32.xlu0 %v3088, 127
          %v3166 = vpop.permute.xlu0 %3165
          %3167 = vrot.lane.b32.xlu0 %v3089, 127
          %v3168 = vpop.permute.xlu0 %3167
          %3169 = vrot.lane.b32.xlu0 %v3090, 127
          %v3170 = vpop.permute.xlu0 %3169
          %v3171 = vmax.f32 %v3075, %v3140
          %v3172 = vmax.f32 %v3076, %v3142
          %v3173 = vmax.f32 %v3077, %v3144
          %v3174 = vmax.f32 %v3078, %v3146
          %v3175 = vmax.f32 %v3079, %v3148
          %v3176 = vmax.f32 %v3080, %v3150
          %v3177 = vmax.f32 %v3081, %v3152
          %v3178 = vmax.f32 %v3082, %v3154
          %v3179 = vmax.f32 %v3083, %v3156
          %v3180 = vmax.f32 %v3084, %v3158
          %v3181 = vmax.f32 %v3085, %v3160
          %v3182 = vmax.f32 %v3086, %v3162
          %v3183 = vmax.f32 %v3087, %v3164
          %v3184 = vmax.f32 %v3088, %v3166
          %v3185 = vmax.f32 %v3089, %v3168
          %v3186 = vmax.f32 %v3090, %v3170
          %v3187 = vld [vmem:[%s2] sm:$0xff]
          %v3188 = vld [vmem:[%s2 + $0x8] sm:$0xff]
          %v3189 = vld [vmem:[%s2 + $0x10] sm:$0xff]
          %v3190 = vld [vmem:[%s2 + $0x18] sm:$0xff]
          %v3191 = vld [vmem:[%s2 + $0x20] sm:$0xff]
          %v3192 = vld [vmem:[%s2 + $0x28] sm:$0xff]
          %v3193 = vld [vmem:[%s2 + $0x30] sm:$0xff]
          %v3194 = vld [vmem:[%s2 + $0x38] sm:$0xff]
          %3195 = vmatprep.subr.mxu0 %v3186
          %3196 = vmatpush1.msra.mxu0 %v3138
          %3197 = vmatprep.subr.mxu0 %v3185
          %3198 = vmatpush1.msra.mxu0 %v3137
          %3199 = vmatprep.subr.mxu0 %v3184
          %3200 = vmatpush1.msra.mxu0 %v3136
          %3201 = vmatprep.subr.mxu0 %v3183
          %3202 = vmatpush1.msra.mxu0 %v3135
          %3203 = vmatprep.subr.mxu0 %v3182
          %3204 = vmatpush1.msra.mxu0 %v3134
          %3205 = vmatprep.subr.mxu0 %v3181
          %3206 = vmatpush1.msra.mxu0 %v3133
          %3207 = vmatprep.subr.mxu0 %v3180
          %3208 = vmatpush1.msra.mxu0 %v3132
          %3209 = vmatprep.subr.mxu0 %v3179
          %3210 = vmatpush1.msra.mxu0 %v3131
          %3211 = vmatprep.subr.mxu0 %v3178
          %3212 = vmatpush1.msra.mxu0 %v3130
          %3213 = vmatprep.subr.mxu0 %v3177
          %3214 = vmatpush1.msra.mxu0 %v3129
          %3215 = vmatprep.subr.mxu0 %v3176
          %3216 = vmatpush1.msra.mxu0 %v3128
          %3217 = vmatprep.subr.mxu0 %v3175
          %3218 = vmatpush1.msra.mxu0 %v3127
          %3219 = vmatprep.subr.mxu0 %v3174
          %3220 = vmatpush1.msra.mxu0 %v3126
          %3221 = vmatprep.subr.mxu0 %v3173
          %3222 = vmatpush1.msra.mxu0 %v3125
          %3223 = vmatprep.subr.mxu0 %v3172
          %3224 = vmatpush1.msra.mxu0 %v3124
          %3225 = vmatprep.subr.mxu0 %v3171
          %3226 = vmatpush1.msra.mxu0 %v3123
          %3227 = vmatprep.subr.mxu0 0.0
          %3228 = vmatpush2.msra.mxu0 0.0
          %3229 = vmatprep.subr.mxu0 0.0
          %3230 = vmatpush2.msra.mxu0 0.0
          %3231 = vmatprep.subr.mxu0 0.0
          %3232 = vmatpush2.msra.mxu0 0.0
          %3233 = vmatprep.subr.mxu0 0.0
          %3234 = vmatpush2.msra.mxu0 0.0
          %3235 = vmatprep.subr.mxu0 0.0
          %3236 = vmatpush2.msra.mxu0 0.0
          %3237 = vmatprep.subr.mxu0 0.0
          %3238 = vmatpush2.msra.mxu0 0.0
          %3239 = vmatprep.subr.mxu0 0.0
          %3240 = vmatpush2.msra.mxu0 0.0
          %3241 = vmatprep.subr.mxu0 0.0
          %3242 = vmatpush2.msra.mxu0 0.0
          %3243 = vmatprep.subr.mxu0 0.0
          %3244 = vmatpush2.msra.mxu0 0.0
          %3245 = vmatprep.subr.mxu0 0.0
          %3246 = vmatpush2.msra.mxu0 0.0
          %3247 = vmatprep.subr.mxu0 0.0
          %3248 = vmatpush2.msra.mxu0 0.0
          %3249 = vmatprep.subr.mxu0 0.0
          %3250 = vmatpush2.msra.mxu0 0.0
          %3251 = vmatprep.subr.mxu0 0.0
          %3252 = vmatpush2.msra.mxu0 0.0
          %3253 = vmatprep.subr.mxu0 0.0
          %3254 = vmatpush2.msra.mxu0 0.0
          %3255 = vmatprep.subr.mxu0 0.0
          %3256 = vmatpush2.msra.mxu0 0.0
          %3257 = vmatprep.subr.mxu0 0.0
          %3258 = vmatpush2.msra.mxu0 0.0
          %3259 = vmatprep.mubr.f32.mxu0 0.0
          %3260 = vmatmul.mubr.f32.gmra.mxu0 %v3187
          %v3261 = vpop.f32.mrf.mxu0
          %v3262 = vadd.f32 0.0, %v3261
          %v3263 = vpop.f32.mrf.mxu0
          %v3264 = vadd.f32 0.0, %v3263
          %3265 = vmatprep.mubr.f32.mxu0 0.0
          %3266 = vmatmul.mubr.f32.gmra.mxu0 %v3188
          %v3267 = vpop.f32.mrf.mxu0
          %v3268 = vadd.f32 0.0, %v3267
          %v3269 = vpop.f32.mrf.mxu0
          %v3270 = vadd.f32 0.0, %v3269
          %3271 = vmatprep.mubr.f32.mxu0 0.0
          %3272 = vmatmul.mubr.f32.gmra.mxu0 %v3189
          %v3273 = vpop.f32.mrf.mxu0
          %v3274 = vadd.f32 0.0, %v3273
          %v3275 = vpop.f32.mrf.mxu0
          %v3276 = vadd.f32 0.0, %v3275
          %3277 = vmatprep.mubr.f32.mxu0 0.0
          %3278 = vmatmul.mubr.f32.gmra.mxu0 %v3190
          %v3279 = vpop.f32.mrf.mxu0
          %v3280 = vadd.f32 0.0, %v3279
          %v3281 = vpop.f32.mrf.mxu0
          %v3282 = vadd.f32 0.0, %v3281
          %3283 = vmatprep.mubr.f32.mxu0 0.0
          %3284 = vmatmul.mubr.f32.gmra.mxu0 %v3191
          %v3285 = vpop.f32.mrf.mxu0
          %v3286 = vadd.f32 0.0, %v3285
          %v3287 = vpop.f32.mrf.mxu0
          %v3288 = vadd.f32 0.0, %v3287
          %3289 = vmatprep.mubr.f32.mxu0 0.0
          %3290 = vmatmul.mubr.f32.gmra.mxu0 %v3192
          %v3291 = vpop.f32.mrf.mxu0
          %v3292 = vadd.f32 0.0, %v3291
          %v3293 = vpop.f32.mrf.mxu0
          %v3294 = vadd.f32 0.0, %v3293
          %3295 = vmatprep.mubr.f32.mxu0 0.0
          %3296 = vmatmul.mubr.f32.gmra.mxu0 %v3193
          %v3297 = vpop.f32.mrf.mxu0
          %v3298 = vadd.f32 0.0, %v3297
          %v3299 = vpop.f32.mrf.mxu0
          %v3300 = vadd.f32 0.0, %v3299
          %3301 = vmatprep.mubr.f32.mxu0 0.0
          %3302 = vmatmul.mubr.f32.gmra.mxu0 %v3194
          %v3303 = vpop.f32.mrf.mxu0
          %v3304 = vadd.f32 0.0, %v3303
          %v3305 = vpop.f32.mrf.mxu0
          %v3306 = vadd.f32 0.0, %v3305
          %3307 = vdwg.mxu0
          %v3308 = vld [vmem:[%s3] sm:$0xff]
          %v3309 = vld [vmem:[%s3 + $0x8] sm:$0xff]
          %v3310 = vld [vmem:[%s3 + $0x10] sm:$0xff]
          %v3311 = vld [vmem:[%s3 + $0x18] sm:$0xff]
          %v3312 = vld [vmem:[%s3 + $0x20] sm:$0xff]
          %v3313 = vld [vmem:[%s3 + $0x28] sm:$0xff]
          %v3314 = vld [vmem:[%s3 + $0x30] sm:$0xff]
          %v3315 = vld [vmem:[%s3 + $0x38] sm:$0xff]
          %3316 = vmatprep.subr.mxu0 %v3186
          %3317 = vmatpush1.msra.mxu0 %v3138
          %3318 = vmatprep.subr.mxu0 %v3185
          %3319 = vmatpush1.msra.mxu0 %v3137
          %3320 = vmatprep.subr.mxu0 %v3184
          %3321 = vmatpush1.msra.mxu0 %v3136
          %3322 = vmatprep.subr.mxu0 %v3183
          %3323 = vmatpush1.msra.mxu0 %v3135
          %3324 = vmatprep.subr.mxu0 %v3182
          %3325 = vmatpush1.msra.mxu0 %v3134
          %3326 = vmatprep.subr.mxu0 %v3181
          %3327 = vmatpush1.msra.mxu0 %v3133
          %3328 = vmatprep.subr.mxu0 %v3180
          %3329 = vmatpush1.msra.mxu0 %v3132
          %3330 = vmatprep.subr.mxu0 %v3179
          %3331 = vmatpush1.msra.mxu0 %v3131
          %3332 = vmatprep.subr.mxu0 %v3178
          %3333 = vmatpush1.msra.mxu0 %v3130
          %3334 = vmatprep.subr.mxu0 %v3177
          %3335 = vmatpush1.msra.mxu0 %v3129
          %3336 = vmatprep.subr.mxu0 %v3176
          %3337 = vmatpush1.msra.mxu0 %v3128
          %3338 = vmatprep.subr.mxu0 %v3175
          %3339 = vmatpush1.msra.mxu0 %v3127
          %3340 = vmatprep.subr.mxu0 %v3174
          %3341 = vmatpush1.msra.mxu0 %v3126
          %3342 = vmatprep.subr.mxu0 %v3173
          %3343 = vmatpush1.msra.mxu0 %v3125
          %3344 = vmatprep.subr.mxu0 %v3172
          %3345 = vmatpush1.msra.mxu0 %v3124
          %3346 = vmatprep.subr.mxu0 %v3171
          %3347 = vmatpush1.msra.mxu0 %v3123
          %3348 = vmatprep.subr.mxu0 0.0
          %3349 = vmatpush2.msra.mxu0 0.0
          %3350 = vmatprep.subr.mxu0 0.0
          %3351 = vmatpush2.msra.mxu0 0.0
          %3352 = vmatprep.subr.mxu0 0.0
          %3353 = vmatpush2.msra.mxu0 0.0
          %3354 = vmatprep.subr.mxu0 0.0
          %3355 = vmatpush2.msra.mxu0 0.0
          %3356 = vmatprep.subr.mxu0 0.0
          %3357 = vmatpush2.msra.mxu0 0.0
          %3358 = vmatprep.subr.mxu0 0.0
          %3359 = vmatpush2.msra.mxu0 0.0
          %3360 = vmatprep.subr.mxu0 0.0
          %3361 = vmatpush2.msra.mxu0 0.0
          %3362 = vmatprep.subr.mxu0 0.0
          %3363 = vmatpush2.msra.mxu0 0.0
          %3364 = vmatprep.subr.mxu0 0.0
          %3365 = vmatpush2.msra.mxu0 0.0
          %3366 = vmatprep.subr.mxu0 0.0
          %3367 = vmatpush2.msra.mxu0 0.0
          %3368 = vmatprep.subr.mxu0 0.0
          %3369 = vmatpush2.msra.mxu0 0.0
          %3370 = vmatprep.subr.mxu0 0.0
          %3371 = vmatpush2.msra.mxu0 0.0
          %3372 = vmatprep.subr.mxu0 0.0
          %3373 = vmatpush2.msra.mxu0 0.0
          %3374 = vmatprep.subr.mxu0 0.0
          %3375 = vmatpush2.msra.mxu0 0.0
          %3376 = vmatprep.subr.mxu0 0.0
          %3377 = vmatpush2.msra.mxu0 0.0
          %3378 = vmatprep.subr.mxu0 0.0
          %3379 = vmatpush2.msra.mxu0 0.0
          %3380 = vmatprep.mubr.f32.mxu0 0.0
          %3381 = vmatmul.mubr.f32.gmra.mxu0 %v3308
          %v3382 = vpop.f32.mrf.mxu0
          %v3383 = vadd.f32 0.0, %v3382
          %v3384 = vpop.f32.mrf.mxu0
          %v3385 = vadd.f32 0.0, %v3384
          %3386 = vmatprep.mubr.f32.mxu0 0.0
          %3387 = vmatmul.mubr.f32.gmra.mxu0 %v3309
          %v3388 = vpop.f32.mrf.mxu0
          %v3389 = vadd.f32 0.0, %v3388
          %v3390 = vpop.f32.mrf.mxu0
          %v3391 = vadd.f32 0.0, %v3390
          %3392 = vmatprep.mubr.f32.mxu0 0.0
          %3393 = vmatmul.mubr.f32.gmra.mxu0 %v3310
          %v3394 = vpop.f32.mrf.mxu0
          %v3395 = vadd.f32 0.0, %v3394
          %v3396 = vpop.f32.mrf.mxu0
          %v3397 = vadd.f32 0.0, %v3396
          %3398 = vmatprep.mubr.f32.mxu0 0.0
          %3399 = vmatmul.mubr.f32.gmra.mxu0 %v3311
          %v3400 = vpop.f32.mrf.mxu0
          %v3401 = vadd.f32 0.0, %v3400
          %v3402 = vpop.f32.mrf.mxu0
          %v3403 = vadd.f32 0.0, %v3402
          %3404 = vmatprep.mubr.f32.mxu0 0.0
          %3405 = vmatmul.mubr.f32.gmra.mxu0 %v3312
          %v3406 = vpop.f32.mrf.mxu0
          %v3407 = vadd.f32 0.0, %v3406
          %v3408 = vpop.f32.mrf.mxu0
          %v3409 = vadd.f32 0.0, %v3408
          %3410 = vmatprep.mubr.f32.mxu0 0.0
          %3411 = vmatmul.mubr.f32.gmra.mxu0 %v3313
          %v3412 = vpop.f32.mrf.mxu0
          %v3413 = vadd.f32 0.0, %v3412
          %v3414 = vpop.f32.mrf.mxu0
          %v3415 = vadd.f32 0.0, %v3414
          %3416 = vmatprep.mubr.f32.mxu0 0.0
          %3417 = vmatmul.mubr.f32.gmra.mxu0 %v3314
          %v3418 = vpop.f32.mrf.mxu0
          %v3419 = vadd.f32 0.0, %v3418
          %v3420 = vpop.f32.mrf.mxu0
          %v3421 = vadd.f32 0.0, %v3420
          %3422 = vmatprep.mubr.f32.mxu0 0.0
          %3423 = vmatmul.mubr.f32.gmra.mxu0 %v3315
          %v3424 = vpop.f32.mrf.mxu0
          %v3425 = vadd.f32 0.0, %v3424
          %v3426 = vpop.f32.mrf.mxu0
          %v3427 = vadd.f32 0.0, %v3426
          %3428 = vdwg.mxu0
          %v3429 = vmax.f32 %v3262, %v3383
          %v3430 = vmax.f32 %v3264, %v3385
          %v3431 = vmax.f32 %v3268, %v3389
          %v3432 = vmax.f32 %v3270, %v3391
          %v3433 = vmax.f32 %v3274, %v3395
          %v3434 = vmax.f32 %v3276, %v3397
          %v3435 = vmax.f32 %v3280, %v3401
          %v3436 = vmax.f32 %v3282, %v3403
          %v3437 = vmax.f32 %v3286, %v3407
          %v3438 = vmax.f32 %v3288, %v3409
          %v3439 = vmax.f32 %v3292, %v3413
          %v3440 = vmax.f32 %v3294, %v3415
          %v3441 = vmax.f32 %v3298, %v3419
          %v3442 = vmax.f32 %v3300, %v3421
          %v3443 = vmax.f32 %v3304, %v3425
          %v3444 = vmax.f32 %v3306, %v3427
          %v3445 = vld [vmem:[%s4] sm:$0xff]
          %v3446 = vld [vmem:[%s4 + $0x8] sm:$0xff]
          %v3447 = vld [vmem:[%s4 + $0x10] sm:$0xff]
          %v3448 = vld [vmem:[%s4 + $0x18] sm:$0xff]
          %v3449 = vld [vmem:[%s4 + $0x20] sm:$0xff]
          %v3450 = vld [vmem:[%s4 + $0x28] sm:$0xff]
          %v3451 = vld [vmem:[%s4 + $0x30] sm:$0xff]
          %v3452 = vld [vmem:[%s4 + $0x38] sm:$0xff]
          %v3453 = vld [vmem:[%s4 + $0x40] sm:$0xff]
          %v3454 = vld [vmem:[%s4 + $0x48] sm:$0xff]
          %v3455 = vld [vmem:[%s4 + $0x50] sm:$0xff]
          %v3456 = vld [vmem:[%s4 + $0x58] sm:$0xff]
          %v3457 = vld [vmem:[%s4 + $0x60] sm:$0xff]
          %v3458 = vld [vmem:[%s4 + $0x68] sm:$0xff]
          %v3459 = vld [vmem:[%s4 + $0x70] sm:$0xff]
          %v3460 = vld [vmem:[%s4 + $0x78] sm:$0xff]
          %3461 = vmatprep.subr.mxu0 0.0
          %3462 = vmatpush1.msra.mxu0 %v3460
          %3463 = vmatprep.subr.mxu0 0.0
          %3464 = vmatpush1.msra.mxu0 %v3459
          %3465 = vmatprep.subr.mxu0 0.0
          %3466 = vmatpush1.msra.mxu0 %v3458
          %3467 = vmatprep.subr.mxu0 0.0
          %3468 = vmatpush1.msra.mxu0 %v3457
          %3469 = vmatprep.subr.mxu0 0.0
          %3470 = vmatpush1.msra.mxu0 %v3456
          %3471 = vmatprep.subr.mxu0 0.0
          %3472 = vmatpush1.msra.mxu0 %v3455
          %3473 = vmatprep.subr.mxu0 0.0
          %3474 = vmatpush1.msra.mxu0 %v3454
          %3475 = vmatprep.subr.mxu0 0.0
          %3476 = vmatpush1.msra.mxu0 %v3453
          %3477 = vmatprep.subr.mxu0 0.0
          %3478 = vmatpush1.msra.mxu0 %v3452
          %3479 = vmatprep.subr.mxu0 0.0
          %3480 = vmatpush1.msra.mxu0 %v3451
          %3481 = vmatprep.subr.mxu0 0.0
          %3482 = vmatpush1.msra.mxu0 %v3450
          %3483 = vmatprep.subr.mxu0 0.0
          %3484 = vmatpush1.msra.mxu0 %v3449
          %3485 = vmatprep.subr.mxu0 0.0
          %3486 = vmatpush1.msra.mxu0 %v3448
          %3487 = vmatprep.subr.mxu0 0.0
          %3488 = vmatpush1.msra.mxu0 %v3447
          %3489 = vmatprep.subr.mxu0 0.0
          %3490 = vmatpush1.msra.mxu0 %v3446
          %3491 = vmatprep.subr.mxu0 0.0
          %3492 = vmatpush1.msra.mxu0 %v3445
          %3493 = vmatprep.subr.mxu0 0.0
          %3494 = vmatpush2.msra.mxu0 0.0
          %3495 = vmatprep.subr.mxu0 0.0
          %3496 = vmatpush2.msra.mxu0 0.0
          %3497 = vmatprep.subr.mxu0 0.0
          %3498 = vmatpush2.msra.mxu0 0.0
          %3499 = vmatprep.subr.mxu0 0.0
          %3500 = vmatpush2.msra.mxu0 0.0
          %3501 = vmatprep.subr.mxu0 0.0
          %3502 = vmatpush2.msra.mxu0 0.0
          %3503 = vmatprep.subr.mxu0 0.0
          %3504 = vmatpush2.msra.mxu0 0.0
          %3505 = vmatprep.subr.mxu0 0.0
          %3506 = vmatpush2.msra.mxu0 0.0
          %3507 = vmatprep.subr.mxu0 0.0
          %3508 = vmatpush2.msra.mxu0 0.0
          %3509 = vmatprep.subr.mxu0 0.0
          %3510 = vmatpush2.msra.mxu0 0.0
          %3511 = vmatprep.subr.mxu0 0.0
          %3512 = vmatpush2.msra.mxu0 0.0
          %3513 = vmatprep.subr.mxu0 0.0
          %3514 = vmatpush2.msra.mxu0 0.0
          %3515 = vmatprep.subr.mxu0 0.0
          %3516 = vmatpush2.msra.mxu0 0.0
          %3517 = vmatprep.subr.mxu0 0.0
          %3518 = vmatpush2.msra.mxu0 0.0
          %3519 = vmatprep.subr.mxu0 0.0
          %3520 = vmatpush2.msra.mxu0 0.0
          %3521 = vmatprep.subr.mxu0 0.0
          %3522 = vmatpush2.msra.mxu0 0.0
          %3523 = vmatprep.subr.mxu0 0.0
          %3524 = vmatpush2.msra.mxu0 0.0
          %3525 = vmatprep.mubr.f32.mxu0 0.0
          %3526 = vmatmul.mubr.f32.gmra.mxu0 %v3429
          %v3527 = vpop.f32.mrf.mxu0
          %v3528 = vadd.f32 0.0, %v3527
          %v3529 = vpop.f32.mrf.mxu0
          %3530 = vmatprep.mubr.f32.mxu0 0.0
          %3531 = vmatmul.mubr.f32.gmra.mxu0 %v3431
          %v3532 = vpop.f32.mrf.mxu0
          %v3533 = vadd.f32 0.0, %v3532
          %v3534 = vpop.f32.mrf.mxu0
          %3535 = vmatprep.mubr.f32.mxu0 0.0
          %3536 = vmatmul.mubr.f32.gmra.mxu0 %v3433
          %v3537 = vpop.f32.mrf.mxu0
          %v3538 = vadd.f32 0.0, %v3537
          %v3539 = vpop.f32.mrf.mxu0
          %3540 = vmatprep.mubr.f32.mxu0 0.0
          %3541 = vmatmul.mubr.f32.gmra.mxu0 %v3435
          %v3542 = vpop.f32.mrf.mxu0
          %v3543 = vadd.f32 0.0, %v3542
          %v3544 = vpop.f32.mrf.mxu0
          %3545 = vmatprep.mubr.f32.mxu0 0.0
          %3546 = vmatmul.mubr.f32.gmra.mxu0 %v3437
          %v3547 = vpop.f32.mrf.mxu0
          %v3548 = vadd.f32 0.0, %v3547
          %v3549 = vpop.f32.mrf.mxu0
          %3550 = vmatprep.mubr.f32.mxu0 0.0
          %3551 = vmatmul.mubr.f32.gmra.mxu0 %v3439
          %v3552 = vpop.f32.mrf.mxu0
          %v3553 = vadd.f32 0.0, %v3552
          %v3554 = vpop.f32.mrf.mxu0
          %3555 = vmatprep.mubr.f32.mxu0 0.0
          %3556 = vmatmul.mubr.f32.gmra.mxu0 %v3441
          %v3557 = vpop.f32.mrf.mxu0
          %v3558 = vadd.f32 0.0, %v3557
          %v3559 = vpop.f32.mrf.mxu0
          %3560 = vmatprep.mubr.f32.mxu0 0.0
          %3561 = vmatmul.mubr.f32.gmra.mxu0 %v3443
          %v3562 = vpop.f32.mrf.mxu0
          %v3563 = vadd.f32 0.0, %v3562
          %v3564 = vpop.f32.mrf.mxu0
          %3565 = vdwg.mxu0
          %3566 = vmatprep.subr.mxu0 0.0
          %3567 = vmatpush1.msra.mxu0 %v3460
          %3568 = vmatprep.subr.mxu0 0.0
          %3569 = vmatpush1.msra.mxu0 %v3459
          %3570 = vmatprep.subr.mxu0 0.0
          %3571 = vmatpush1.msra.mxu0 %v3458
          %3572 = vmatprep.subr.mxu0 0.0
          %3573 = vmatpush1.msra.mxu0 %v3457
          %3574 = vmatprep.subr.mxu0 0.0
          %3575 = vmatpush1.msra.mxu0 %v3456
          %3576 = vmatprep.subr.mxu0 0.0
          %3577 = vmatpush1.msra.mxu0 %v3455
          %3578 = vmatprep.subr.mxu0 0.0
          %3579 = vmatpush1.msra.mxu0 %v3454
          %3580 = vmatprep.subr.mxu0 0.0
          %3581 = vmatpush1.msra.mxu0 %v3453
          %3582 = vmatprep.subr.mxu0 0.0
          %3583 = vmatpush1.msra.mxu0 %v3452
          %3584 = vmatprep.subr.mxu0 0.0
          %3585 = vmatpush1.msra.mxu0 %v3451
          %3586 = vmatprep.subr.mxu0 0.0
          %3587 = vmatpush1.msra.mxu0 %v3450
          %3588 = vmatprep.subr.mxu0 0.0
          %3589 = vmatpush1.msra.mxu0 %v3449
          %3590 = vmatprep.subr.mxu0 0.0
          %3591 = vmatpush1.msra.mxu0 %v3448
          %3592 = vmatprep.subr.mxu0 0.0
          %3593 = vmatpush1.msra.mxu0 %v3447
          %3594 = vmatprep.subr.mxu0 0.0
          %3595 = vmatpush1.msra.mxu0 %v3446
          %3596 = vmatprep.subr.mxu0 0.0
          %3597 = vmatpush1.msra.mxu0 %v3445
          %3598 = vmatprep.subr.mxu0 0.0
          %3599 = vmatpush2.msra.mxu0 0.0
          %3600 = vmatprep.subr.mxu0 0.0
          %3601 = vmatpush2.msra.mxu0 0.0
          %3602 = vmatprep.subr.mxu0 0.0
          %3603 = vmatpush2.msra.mxu0 0.0
          %3604 = vmatprep.subr.mxu0 0.0
          %3605 = vmatpush2.msra.mxu0 0.0
          %3606 = vmatprep.subr.mxu0 0.0
          %3607 = vmatpush2.msra.mxu0 0.0
          %3608 = vmatprep.subr.mxu0 0.0
          %3609 = vmatpush2.msra.mxu0 0.0
          %3610 = vmatprep.subr.mxu0 0.0
          %3611 = vmatpush2.msra.mxu0 0.0
          %3612 = vmatprep.subr.mxu0 0.0
          %3613 = vmatpush2.msra.mxu0 0.0
          %3614 = vmatprep.subr.mxu0 0.0
          %3615 = vmatpush2.msra.mxu0 0.0
          %3616 = vmatprep.subr.mxu0 0.0
          %3617 = vmatpush2.msra.mxu0 0.0
          %3618 = vmatprep.subr.mxu0 0.0
          %3619 = vmatpush2.msra.mxu0 0.0
          %3620 = vmatprep.subr.mxu0 0.0
          %3621 = vmatpush2.msra.mxu0 0.0
          %3622 = vmatprep.subr.mxu0 0.0
          %3623 = vmatpush2.msra.mxu0 0.0
          %3624 = vmatprep.subr.mxu0 0.0
          %3625 = vmatpush2.msra.mxu0 0.0
          %3626 = vmatprep.subr.mxu0 0.0
          %3627 = vmatpush2.msra.mxu0 0.0
          %3628 = vmatprep.subr.mxu0 0.0
          %3629 = vmatpush2.msra.mxu0 0.0
          %3630 = vmatprep.mubr.f32.mxu0 0.0
          %3631 = vmatmul.mubr.f32.gmra.mxu0 %v3430
          %v3632 = vpop.f32.mrf.mxu0
          %v3633 = vadd.f32 0.0, %v3632
          %v3634 = vpop.f32.mrf.mxu0
          %3635 = vmatprep.mubr.f32.mxu0 0.0
          %3636 = vmatmul.mubr.f32.gmra.mxu0 %v3432
          %v3637 = vpop.f32.mrf.mxu0
          %v3638 = vadd.f32 0.0, %v3637
          %v3639 = vpop.f32.mrf.mxu0
          %3640 = vmatprep.mubr.f32.mxu0 0.0
          %3641 = vmatmul.mubr.f32.gmra.mxu0 %v3434
          %v3642 = vpop.f32.mrf.mxu0
          %v3643 = vadd.f32 0.0, %v3642
          %v3644 = vpop.f32.mrf.mxu0
          %3645 = vmatprep.mubr.f32.mxu0 0.0
          %3646 = vmatmul.mubr.f32.gmra.mxu0 %v3436
          %v3647 = vpop.f32.mrf.mxu0
          %v3648 = vadd.f32 0.0, %v3647
          %v3649 = vpop.f32.mrf.mxu0
          %3650 = vmatprep.mubr.f32.mxu0 0.0
          %3651 = vmatmul.mubr.f32.gmra.mxu0 %v3438
          %v3652 = vpop.f32.mrf.mxu0
          %v3653 = vadd.f32 0.0, %v3652
          %v3654 = vpop.f32.mrf.mxu0
          %3655 = vmatprep.mubr.f32.mxu0 0.0
          %3656 = vmatmul.mubr.f32.gmra.mxu0 %v3440
          %v3657 = vpop.f32.mrf.mxu0
          %v3658 = vadd.f32 0.0, %v3657
          %v3659 = vpop.f32.mrf.mxu0
          %3660 = vmatprep.mubr.f32.mxu0 0.0
          %3661 = vmatmul.mubr.f32.gmra.mxu0 %v3442
          %v3662 = vpop.f32.mrf.mxu0
          %v3663 = vadd.f32 0.0, %v3662
          %v3664 = vpop.f32.mrf.mxu0
          %3665 = vmatprep.mubr.f32.mxu0 0.0
          %3666 = vmatmul.mubr.f32.gmra.mxu0 %v3444
          %v3667 = vpop.f32.mrf.mxu0
          %v3668 = vadd.f32 0.0, %v3667
          %v3669 = vpop.f32.mrf.mxu0
          %3670 = vdwg.mxu0
          %v3671 = vstv %s584
          %v3672 = vadd.f32 %v3671, 0.0
          %v3673 = vstv %s585
          %v3674 = vadd.f32 %v3673, 0.0
          %v3675 = vstv %s586
          %v3676 = vadd.f32 %v3675, 0.0
          %v3677 = vstv %s587
          %v3678 = vadd.f32 %v3677, 0.0
          %v3679 = vrot.slane %v3528, 7
          %v3680 = vrot.slane %v3533, 7
          %v3681 = vrot.slane %v3538, 7
          %v3682 = vrot.slane %v3543, 7
          %v3683 = vrot.slane %v3548, 7
          %v3684 = vrot.slane %v3553, 7
          %v3685 = vrot.slane %v3558, 7
          %v3686 = vrot.slane %v3563, 7
          %v3687 = vsel %vm971, %v3685, %v3686
          %v3688 = vsel %vm971, %v3684, %v3685
          %v3689 = vsel %vm971, %v3683, %v3684
          %v3690 = vsel %vm971, %v3682, %v3683
          %v3691 = vsel %vm971, %v3681, %v3682
          %v3692 = vsel %vm971, %v3680, %v3681
          %v3693 = vsel %vm971, %v3679, %v3680
          %v3694 = vsel %vm971, %v3686, %v3679
          %v3695 = vmul.f32 %v3694, %v685
          %v3696 = vmul.f32 %v3693, %v686
          %v3697 = vmul.f32 %v3692, %v687
          %v3698 = vmul.f32 %v3691, %v688
          %v3699 = vmul.f32 %v3690, %v689
          %v3700 = vmul.f32 %v3689, %v690
          %v3701 = vmul.f32 %v3688, %v691
          %v3702 = vmul.f32 %v3687, %v692
          %3703 = vrot.lane.b32.xlu0 %v3695, 1
          %v3704 = vpop.permute.xlu0 %3703
          %3705 = vrot.lane.b32.xlu0 %v3696, 1
          %v3706 = vpop.permute.xlu0 %3705
          %3707 = vrot.lane.b32.xlu0 %v3697, 1
          %v3708 = vpop.permute.xlu0 %3707
          %3709 = vrot.lane.b32.xlu0 %v3698, 1
          %v3710 = vpop.permute.xlu0 %3709
          %3711 = vrot.lane.b32.xlu0 %v3699, 1
          %v3712 = vpop.permute.xlu0 %3711
          %3713 = vrot.lane.b32.xlu0 %v3700, 1
          %v3714 = vpop.permute.xlu0 %3713
          %3715 = vrot.lane.b32.xlu0 %v3701, 1
          %v3716 = vpop.permute.xlu0 %3715
          %3717 = vrot.lane.b32.xlu0 %v3702, 1
          %v3718 = vpop.permute.xlu0 %3717
          %v3719 = vstv %s512
          %v3720 = vmul.f32 %v3719, %v3704
          %v3721 = vmul.f32 %v3719, %v3706
          %v3722 = vmul.f32 %v3719, %v3708
          %v3723 = vmul.f32 %v3719, %v3710
          %v3724 = vmul.f32 %v3719, %v3712
          %v3725 = vmul.f32 %v3719, %v3714
          %v3726 = vmul.f32 %v3719, %v3716
          %v3727 = vmul.f32 %v3719, %v3718
          %v3728 = vadd.f32 %v3672, %v3720
          %v3729 = vadd.f32 %v3672, %v3721
          %v3730 = vadd.f32 %v3672, %v3722
          %v3731 = vadd.f32 %v3672, %v3723
          %v3732 = vadd.f32 %v3672, %v3724
          %v3733 = vadd.f32 %v3672, %v3725
          %v3734 = vadd.f32 %v3672, %v3726
          %v3735 = vadd.f32 %v3672, %v3727
          %v3736 = vstv %s530
          %v3737 = vmul.f32 %v3736, %v3704
          %v3738 = vmul.f32 %v3736, %v3706
          %v3739 = vmul.f32 %v3736, %v3708
          %v3740 = vmul.f32 %v3736, %v3710
          %v3741 = vmul.f32 %v3736, %v3712
          %v3742 = vmul.f32 %v3736, %v3714
          %v3743 = vmul.f32 %v3736, %v3716
          %v3744 = vmul.f32 %v3736, %v3718
          %v3745 = vadd.f32 %v3674, %v3737
          %v3746 = vadd.f32 %v3674, %v3738
          %v3747 = vadd.f32 %v3674, %v3739
          %v3748 = vadd.f32 %v3674, %v3740
          %v3749 = vadd.f32 %v3674, %v3741
          %v3750 = vadd.f32 %v3674, %v3742
          %v3751 = vadd.f32 %v3674, %v3743
          %v3752 = vadd.f32 %v3674, %v3744
          %v3753 = vstv %s548
          %v3754 = vmul.f32 %v3753, %v3704
          %v3755 = vmul.f32 %v3753, %v3706
          %v3756 = vmul.f32 %v3753, %v3708
          %v3757 = vmul.f32 %v3753, %v3710
          %v3758 = vmul.f32 %v3753, %v3712
          %v3759 = vmul.f32 %v3753, %v3714
          %v3760 = vmul.f32 %v3753, %v3716
          %v3761 = vmul.f32 %v3753, %v3718
          %v3762 = vadd.f32 %v3676, %v3754
          %v3763 = vadd.f32 %v3676, %v3755
          %v3764 = vadd.f32 %v3676, %v3756
          %v3765 = vadd.f32 %v3676, %v3757
          %v3766 = vadd.f32 %v3676, %v3758
          %v3767 = vadd.f32 %v3676, %v3759
          %v3768 = vadd.f32 %v3676, %v3760
          %v3769 = vadd.f32 %v3676, %v3761
          %v3770 = vstv %s566
          %v3771 = vmul.f32 %v3770, %v3704
          %v3772 = vmul.f32 %v3770, %v3706
          %v3773 = vmul.f32 %v3770, %v3708
          %v3774 = vmul.f32 %v3770, %v3710
          %v3775 = vmul.f32 %v3770, %v3712
          %v3776 = vmul.f32 %v3770, %v3714
          %v3777 = vmul.f32 %v3770, %v3716
          %v3778 = vmul.f32 %v3770, %v3718
          %v3779 = vadd.f32 %v3678, %v3771
          %v3780 = vadd.f32 %v3678, %v3772
          %v3781 = vadd.f32 %v3678, %v3773
          %v3782 = vadd.f32 %v3678, %v3774
          %v3783 = vadd.f32 %v3678, %v3775
          %v3784 = vadd.f32 %v3678, %v3776
          %v3785 = vadd.f32 %v3678, %v3777
          %v3786 = vadd.f32 %v3678, %v3778
          %v3787 = vstv %s513
          %v3788 = vmul.f32 %v3787, %v3695
          %v3789 = vmul.f32 %v3787, %v3696
          %v3790 = vmul.f32 %v3787, %v3697
          %v3791 = vmul.f32 %v3787, %v3698
          %v3792 = vmul.f32 %v3787, %v3699
          %v3793 = vmul.f32 %v3787, %v3700
          %v3794 = vmul.f32 %v3787, %v3701
          %v3795 = vmul.f32 %v3787, %v3702
          %v3796 = vadd.f32 %v3728, %v3788
          %v3797 = vadd.f32 %v3729, %v3789
          %v3798 = vadd.f32 %v3730, %v3790
          %v3799 = vadd.f32 %v3731, %v3791
          %v3800 = vadd.f32 %v3732, %v3792
          %v3801 = vadd.f32 %v3733, %v3793
          %v3802 = vadd.f32 %v3734, %v3794
          %v3803 = vadd.f32 %v3735, %v3795
          %v3804 = vstv %s531
          %v3805 = vmul.f32 %v3804, %v3695
          %v3806 = vmul.f32 %v3804, %v3696
          %v3807 = vmul.f32 %v3804, %v3697
          %v3808 = vmul.f32 %v3804, %v3698
          %v3809 = vmul.f32 %v3804, %v3699
          %v3810 = vmul.f32 %v3804, %v3700
          %v3811 = vmul.f32 %v3804, %v3701
          %v3812 = vmul.f32 %v3804, %v3702
          %v3813 = vadd.f32 %v3745, %v3805
          %v3814 = vadd.f32 %v3746, %v3806
          %v3815 = vadd.f32 %v3747, %v3807
          %v3816 = vadd.f32 %v3748, %v3808
          %v3817 = vadd.f32 %v3749, %v3809
          %v3818 = vadd.f32 %v3750, %v3810
          %v3819 = vadd.f32 %v3751, %v3811
          %v3820 = vadd.f32 %v3752, %v3812
          %v3821 = vstv %s549
          %v3822 = vmul.f32 %v3821, %v3695
          %v3823 = vmul.f32 %v3821, %v3696
          %v3824 = vmul.f32 %v3821, %v3697
          %v3825 = vmul.f32 %v3821, %v3698
          %v3826 = vmul.f32 %v3821, %v3699
          %v3827 = vmul.f32 %v3821, %v3700
          %v3828 = vmul.f32 %v3821, %v3701
          %v3829 = vmul.f32 %v3821, %v3702
          %v3830 = vadd.f32 %v3762, %v3822
          %v3831 = vadd.f32 %v3763, %v3823
          %v3832 = vadd.f32 %v3764, %v3824
          %v3833 = vadd.f32 %v3765, %v3825
          %v3834 = vadd.f32 %v3766, %v3826
          %v3835 = vadd.f32 %v3767, %v3827
          %v3836 = vadd.f32 %v3768, %v3828
          %v3837 = vadd.f32 %v3769, %v3829
          %v3838 = vstv %s567
          %v3839 = vmul.f32 %v3838, %v3695
          %v3840 = vmul.f32 %v3838, %v3696
          %v3841 = vmul.f32 %v3838, %v3697
          %v3842 = vmul.f32 %v3838, %v3698
          %v3843 = vmul.f32 %v3838, %v3699
          %v3844 = vmul.f32 %v3838, %v3700
          %v3845 = vmul.f32 %v3838, %v3701
          %v3846 = vmul.f32 %v3838, %v3702
          %v3847 = vadd.f32 %v3779, %v3839
          %v3848 = vadd.f32 %v3780, %v3840
          %v3849 = vadd.f32 %v3781, %v3841
          %v3850 = vadd.f32 %v3782, %v3842
          %v3851 = vadd.f32 %v3783, %v3843
          %v3852 = vadd.f32 %v3784, %v3844
          %v3853 = vadd.f32 %v3785, %v3845
          %v3854 = vadd.f32 %v3786, %v3846
          %3855 = vrot.lane.b32.xlu0 %v3695, 127
          %v3856 = vpop.permute.xlu0 %3855
          %3857 = vrot.lane.b32.xlu0 %v3696, 127
          %v3858 = vpop.permute.xlu0 %3857
          %3859 = vrot.lane.b32.xlu0 %v3697, 127
          %v3860 = vpop.permute.xlu0 %3859
          %3861 = vrot.lane.b32.xlu0 %v3698, 127
          %v3862 = vpop.permute.xlu0 %3861
          %3863 = vrot.lane.b32.xlu0 %v3699, 127
          %v3864 = vpop.permute.xlu0 %3863
          %3865 = vrot.lane.b32.xlu0 %v3700, 127
          %v3866 = vpop.permute.xlu0 %3865
          %3867 = vrot.lane.b32.xlu0 %v3701, 127
          %v3868 = vpop.permute.xlu0 %3867
          %3869 = vrot.lane.b32.xlu0 %v3702, 127
          %v3870 = vpop.permute.xlu0 %3869
          %v3871 = vstv %s514
          %v3872 = vmul.f32 %v3871, %v3856
          %v3873 = vmul.f32 %v3871, %v3858
          %v3874 = vmul.f32 %v3871, %v3860
          %v3875 = vmul.f32 %v3871, %v3862
          %v3876 = vmul.f32 %v3871, %v3864
          %v3877 = vmul.f32 %v3871, %v3866
          %v3878 = vmul.f32 %v3871, %v3868
          %v3879 = vmul.f32 %v3871, %v3870
          %v3880 = vadd.f32 %v3796, %v3872
          %v3881 = vadd.f32 %v3797, %v3873
          %v3882 = vadd.f32 %v3798, %v3874
          %v3883 = vadd.f32 %v3799, %v3875
          %v3884 = vadd.f32 %v3800, %v3876
          %v3885 = vadd.f32 %v3801, %v3877
          %v3886 = vadd.f32 %v3802, %v3878
          %v3887 = vadd.f32 %v3803, %v3879
          %v3888 = vstv %s532
          %v3889 = vmul.f32 %v3888, %v3856
          %v3890 = vmul.f32 %v3888, %v3858
          %v3891 = vmul.f32 %v3888, %v3860
          %v3892 = vmul.f32 %v3888, %v3862
          %v3893 = vmul.f32 %v3888, %v3864
          %v3894 = vmul.f32 %v3888, %v3866
          %v3895 = vmul.f32 %v3888, %v3868
          %v3896 = vmul.f32 %v3888, %v3870
          %v3897 = vadd.f32 %v3813, %v3889
          %v3898 = vadd.f32 %v3814, %v3890
          %v3899 = vadd.f32 %v3815, %v3891
          %v3900 = vadd.f32 %v3816, %v3892
          %v3901 = vadd.f32 %v3817, %v3893
          %v3902 = vadd.f32 %v3818, %v3894
          %v3903 = vadd.f32 %v3819, %v3895
          %v3904 = vadd.f32 %v3820, %v3896
          %v3905 = vstv %s550
          %v3906 = vmul.f32 %v3905, %v3856
          %v3907 = vmul.f32 %v3905, %v3858
          %v3908 = vmul.f32 %v3905, %v3860
          %v3909 = vmul.f32 %v3905, %v3862
          %v3910 = vmul.f32 %v3905, %v3864
          %v3911 = vmul.f32 %v3905, %v3866
          %v3912 = vmul.f32 %v3905, %v3868
          %v3913 = vmul.f32 %v3905, %v3870
          %v3914 = vadd.f32 %v3830, %v3906
          %v3915 = vadd.f32 %v3831, %v3907
          %v3916 = vadd.f32 %v3832, %v3908
          %v3917 = vadd.f32 %v3833, %v3909
          %v3918 = vadd.f32 %v3834, %v3910
          %v3919 = vadd.f32 %v3835, %v3911
          %v3920 = vadd.f32 %v3836, %v3912
          %v3921 = vadd.f32 %v3837, %v3913
          %v3922 = vstv %s568
          %v3923 = vmul.f32 %v3922, %v3856
          %v3924 = vmul.f32 %v3922, %v3858
          %v3925 = vmul.f32 %v3922, %v3860
          %v3926 = vmul.f32 %v3922, %v3862
          %v3927 = vmul.f32 %v3922, %v3864
          %v3928 = vmul.f32 %v3922, %v3866
          %v3929 = vmul.f32 %v3922, %v3868
          %v3930 = vmul.f32 %v3922, %v3870
          %v3931 = vadd.f32 %v3847, %v3923
          %v3932 = vadd.f32 %v3848, %v3924
          %v3933 = vadd.f32 %v3849, %v3925
          %v3934 = vadd.f32 %v3850, %v3926
          %v3935 = vadd.f32 %v3851, %v3927
          %v3936 = vadd.f32 %v3852, %v3928
          %v3937 = vadd.f32 %v3853, %v3929
          %v3938 = vadd.f32 %v3854, %v3930
          %3939 = vrot.lane.b32.xlu0 %v3528, 1
          %v3940 = vpop.permute.xlu0 %3939
          %3941 = vrot.lane.b32.xlu0 %v3533, 1
          %v3942 = vpop.permute.xlu0 %3941
          %3943 = vrot.lane.b32.xlu0 %v3538, 1
          %v3944 = vpop.permute.xlu0 %3943
          %3945 = vrot.lane.b32.xlu0 %v3543, 1
          %v3946 = vpop.permute.xlu0 %3945
          %3947 = vrot.lane.b32.xlu0 %v3548, 1
          %v3948 = vpop.permute.xlu0 %3947
          %3949 = vrot.lane.b32.xlu0 %v3553, 1
          %v3950 = vpop.permute.xlu0 %3949
          %3951 = vrot.lane.b32.xlu0 %v3558, 1
          %v3952 = vpop.permute.xlu0 %3951
          %3953 = vrot.lane.b32.xlu0 %v3563, 1
          %v3954 = vpop.permute.xlu0 %3953
          %v3955 = vstv %s515
          %v3956 = vmul.f32 %v3955, %v3940
          %v3957 = vmul.f32 %v3955, %v3942
          %v3958 = vmul.f32 %v3955, %v3944
          %v3959 = vmul.f32 %v3955, %v3946
          %v3960 = vmul.f32 %v3955, %v3948
          %v3961 = vmul.f32 %v3955, %v3950
          %v3962 = vmul.f32 %v3955, %v3952
          %v3963 = vmul.f32 %v3955, %v3954
          %v3964 = vadd.f32 %v3880, %v3956
          %v3965 = vadd.f32 %v3881, %v3957
          %v3966 = vadd.f32 %v3882, %v3958
          %v3967 = vadd.f32 %v3883, %v3959
          %v3968 = vadd.f32 %v3884, %v3960
          %v3969 = vadd.f32 %v3885, %v3961
          %v3970 = vadd.f32 %v3886, %v3962
          %v3971 = vadd.f32 %v3887, %v3963
          %v3972 = vstv %s533
          %v3973 = vmul.f32 %v3972, %v3940
          %v3974 = vmul.f32 %v3972, %v3942
          %v3975 = vmul.f32 %v3972, %v3944
          %v3976 = vmul.f32 %v3972, %v3946
          %v3977 = vmul.f32 %v3972, %v3948
          %v3978 = vmul.f32 %v3972, %v3950
          %v3979 = vmul.f32 %v3972, %v3952
          %v3980 = vmul.f32 %v3972, %v3954
          %v3981 = vadd.f32 %v3897, %v3973
          %v3982 = vadd.f32 %v3898, %v3974
          %v3983 = vadd.f32 %v3899, %v3975
          %v3984 = vadd.f32 %v3900, %v3976
          %v3985 = vadd.f32 %v3901, %v3977
          %v3986 = vadd.f32 %v3902, %v3978
          %v3987 = vadd.f32 %v3903, %v3979
          %v3988 = vadd.f32 %v3904, %v3980
          %v3989 = vstv %s551
          %v3990 = vmul.f32 %v3989, %v3940
          %v3991 = vmul.f32 %v3989, %v3942
          %v3992 = vmul.f32 %v3989, %v3944
          %v3993 = vmul.f32 %v3989, %v3946
          %v3994 = vmul.f32 %v3989, %v3948
          %v3995 = vmul.f32 %v3989, %v3950
          %v3996 = vmul.f32 %v3989, %v3952
          %v3997 = vmul.f32 %v3989, %v3954
          %v3998 = vadd.f32 %v3914, %v3990
          %v3999 = vadd.f32 %v3915, %v3991
          %v4000 = vadd.f32 %v3916, %v3992
          %v4001 = vadd.f32 %v3917, %v3993
          %v4002 = vadd.f32 %v3918, %v3994
          %v4003 = vadd.f32 %v3919, %v3995
          %v4004 = vadd.f32 %v3920, %v3996
          %v4005 = vadd.f32 %v3921, %v3997
          %v4006 = vstv %s569
          %v4007 = vmul.f32 %v4006, %v3940
          %v4008 = vmul.f32 %v4006, %v3942
          %v4009 = vmul.f32 %v4006, %v3944
          %v4010 = vmul.f32 %v4006, %v3946
          %v4011 = vmul.f32 %v4006, %v3948
          %v4012 = vmul.f32 %v4006, %v3950
          %v4013 = vmul.f32 %v4006, %v3952
          %v4014 = vmul.f32 %v4006, %v3954
          %v4015 = vadd.f32 %v3931, %v4007
          %v4016 = vadd.f32 %v3932, %v4008
          %v4017 = vadd.f32 %v3933, %v4009
          %v4018 = vadd.f32 %v3934, %v4010
          %v4019 = vadd.f32 %v3935, %v4011
          %v4020 = vadd.f32 %v3936, %v4012
          %v4021 = vadd.f32 %v3937, %v4013
          %v4022 = vadd.f32 %v3938, %v4014
          %v4023 = vstv %s516
          %v4024 = vmul.f32 %v4023, %v3528
          %v4025 = vmul.f32 %v4023, %v3533
          %v4026 = vmul.f32 %v4023, %v3538
          %v4027 = vmul.f32 %v4023, %v3543
          %v4028 = vmul.f32 %v4023, %v3548
          %v4029 = vmul.f32 %v4023, %v3553
          %v4030 = vmul.f32 %v4023, %v3558
          %v4031 = vmul.f32 %v4023, %v3563
          %v4032 = vadd.f32 %v3964, %v4024
          %v4033 = vadd.f32 %v3965, %v4025
          %v4034 = vadd.f32 %v3966, %v4026
          %v4035 = vadd.f32 %v3967, %v4027
          %v4036 = vadd.f32 %v3968, %v4028
          %v4037 = vadd.f32 %v3969, %v4029
          %v4038 = vadd.f32 %v3970, %v4030
          %v4039 = vadd.f32 %v3971, %v4031
          %v4040 = vstv %s534
          %v4041 = vmul.f32 %v4040, %v3528
          %v4042 = vmul.f32 %v4040, %v3533
          %v4043 = vmul.f32 %v4040, %v3538
          %v4044 = vmul.f32 %v4040, %v3543
          %v4045 = vmul.f32 %v4040, %v3548
          %v4046 = vmul.f32 %v4040, %v3553
          %v4047 = vmul.f32 %v4040, %v3558
          %v4048 = vmul.f32 %v4040, %v3563
          %v4049 = vadd.f32 %v3981, %v4041
          %v4050 = vadd.f32 %v3982, %v4042
          %v4051 = vadd.f32 %v3983, %v4043
          %v4052 = vadd.f32 %v3984, %v4044
          %v4053 = vadd.f32 %v3985, %v4045
          %v4054 = vadd.f32 %v3986, %v4046
          %v4055 = vadd.f32 %v3987, %v4047
          %v4056 = vadd.f32 %v3988, %v4048
          %v4057 = vstv %s552
          %v4058 = vmul.f32 %v4057, %v3528
          %v4059 = vmul.f32 %v4057, %v3533
          %v4060 = vmul.f32 %v4057, %v3538
          %v4061 = vmul.f32 %v4057, %v3543
          %v4062 = vmul.f32 %v4057, %v3548
          %v4063 = vmul.f32 %v4057, %v3553
          %v4064 = vmul.f32 %v4057, %v3558
          %v4065 = vmul.f32 %v4057, %v3563
          %v4066 = vadd.f32 %v3998, %v4058
          %v4067 = vadd.f32 %v3999, %v4059
          %v4068 = vadd.f32 %v4000, %v4060
          %v4069 = vadd.f32 %v4001, %v4061
          %v4070 = vadd.f32 %v4002, %v4062
          %v4071 = vadd.f32 %v4003, %v4063
          %v4072 = vadd.f32 %v4004, %v4064
          %v4073 = vadd.f32 %v4005, %v4065
          %v4074 = vstv %s570
          %v4075 = vmul.f32 %v4074, %v3528
          %v4076 = vmul.f32 %v4074, %v3533
          %v4077 = vmul.f32 %v4074, %v3538
          %v4078 = vmul.f32 %v4074, %v3543
          %v4079 = vmul.f32 %v4074, %v3548
          %v4080 = vmul.f32 %v4074, %v3553
          %v4081 = vmul.f32 %v4074, %v3558
          %v4082 = vmul.f32 %v4074, %v3563
          %v4083 = vadd.f32 %v4015, %v4075
          %v4084 = vadd.f32 %v4016, %v4076
          %v4085 = vadd.f32 %v4017, %v4077
          %v4086 = vadd.f32 %v4018, %v4078
          %v4087 = vadd.f32 %v4019, %v4079
          %v4088 = vadd.f32 %v4020, %v4080
          %v4089 = vadd.f32 %v4021, %v4081
          %v4090 = vadd.f32 %v4022, %v4082
          %4091 = vrot.lane.b32.xlu0 %v3528, 127
          %v4092 = vpop.permute.xlu0 %4091
          %4093 = vrot.lane.b32.xlu0 %v3533, 127
          %v4094 = vpop.permute.xlu0 %4093
          %4095 = vrot.lane.b32.xlu0 %v3538, 127
          %v4096 = vpop.permute.xlu0 %4095
          %4097 = vrot.lane.b32.xlu0 %v3543, 127
          %v4098 = vpop.permute.xlu0 %4097
          %4099 = vrot.lane.b32.xlu0 %v3548, 127
          %v4100 = vpop.permute.xlu0 %4099
          %4101 = vrot.lane.b32.xlu0 %v3553, 127
          %v4102 = vpop.permute.xlu0 %4101
          %4103 = vrot.lane.b32.xlu0 %v3558, 127
          %v4104 = vpop.permute.xlu0 %4103
          %4105 = vrot.lane.b32.xlu0 %v3563, 127
          %v4106 = vpop.permute.xlu0 %4105
          %v4107 = vstv %s517
          %v4108 = vmul.f32 %v4107, %v4092
          %v4109 = vmul.f32 %v4107, %v4094
          %v4110 = vmul.f32 %v4107, %v4096
          %v4111 = vmul.f32 %v4107, %v4098
          %v4112 = vmul.f32 %v4107, %v4100
          %v4113 = vmul.f32 %v4107, %v4102
          %v4114 = vmul.f32 %v4107, %v4104
          %v4115 = vmul.f32 %v4107, %v4106
          %v4116 = vadd.f32 %v4032, %v4108
          %v4117 = vadd.f32 %v4033, %v4109
          %v4118 = vadd.f32 %v4034, %v4110
          %v4119 = vadd.f32 %v4035, %v4111
          %v4120 = vadd.f32 %v4036, %v4112
          %v4121 = vadd.f32 %v4037, %v4113
          %v4122 = vadd.f32 %v4038, %v4114
          %v4123 = vadd.f32 %v4039, %v4115
          %v4124 = vstv %s535
          %v4125 = vmul.f32 %v4124, %v4092
          %v4126 = vmul.f32 %v4124, %v4094
          %v4127 = vmul.f32 %v4124, %v4096
          %v4128 = vmul.f32 %v4124, %v4098
          %v4129 = vmul.f32 %v4124, %v4100
          %v4130 = vmul.f32 %v4124, %v4102
          %v4131 = vmul.f32 %v4124, %v4104
          %v4132 = vmul.f32 %v4124, %v4106
          %v4133 = vadd.f32 %v4049, %v4125
          %v4134 = vadd.f32 %v4050, %v4126
          %v4135 = vadd.f32 %v4051, %v4127
          %v4136 = vadd.f32 %v4052, %v4128
          %v4137 = vadd.f32 %v4053, %v4129
          %v4138 = vadd.f32 %v4054, %v4130
          %v4139 = vadd.f32 %v4055, %v4131
          %v4140 = vadd.f32 %v4056, %v4132
          %v4141 = vstv %s553
          %v4142 = vmul.f32 %v4141, %v4092
          %v4143 = vmul.f32 %v4141, %v4094
          %v4144 = vmul.f32 %v4141, %v4096
          %v4145 = vmul.f32 %v4141, %v4098
          %v4146 = vmul.f32 %v4141, %v4100
          %v4147 = vmul.f32 %v4141, %v4102
          %v4148 = vmul.f32 %v4141, %v4104
          %v4149 = vmul.f32 %v4141, %v4106
          %v4150 = vadd.f32 %v4066, %v4142
          %v4151 = vadd.f32 %v4067, %v4143
          %v4152 = vadd.f32 %v4068, %v4144
          %v4153 = vadd.f32 %v4069, %v4145
          %v4154 = vadd.f32 %v4070, %v4146
          %v4155 = vadd.f32 %v4071, %v4147
          %v4156 = vadd.f32 %v4072, %v4148
          %v4157 = vadd.f32 %v4073, %v4149
          %v4158 = vstv %s571
          %v4159 = vmul.f32 %v4158, %v4092
          %v4160 = vmul.f32 %v4158, %v4094
          %v4161 = vmul.f32 %v4158, %v4096
          %v4162 = vmul.f32 %v4158, %v4098
          %v4163 = vmul.f32 %v4158, %v4100
          %v4164 = vmul.f32 %v4158, %v4102
          %v4165 = vmul.f32 %v4158, %v4104
          %v4166 = vmul.f32 %v4158, %v4106
          %v4167 = vadd.f32 %v4083, %v4159
          %v4168 = vadd.f32 %v4084, %v4160
          %v4169 = vadd.f32 %v4085, %v4161
          %v4170 = vadd.f32 %v4086, %v4162
          %v4171 = vadd.f32 %v4087, %v4163
          %v4172 = vadd.f32 %v4088, %v4164
          %v4173 = vadd.f32 %v4089, %v4165
          %v4174 = vadd.f32 %v4090, %v4166
          %v4175 = vrot.slane %v3528, 1
          %v4176 = vrot.slane %v3533, 1
          %v4177 = vrot.slane %v3538, 1
          %v4178 = vrot.slane %v3543, 1
          %v4179 = vrot.slane %v3548, 1
          %v4180 = vrot.slane %v3553, 1
          %v4181 = vrot.slane %v3558, 1
          %v4182 = vrot.slane %v3563, 1
          %v4183 = vsel %vm1608, %v4181, %v4182
          %v4184 = vsel %vm1608, %v4180, %v4181
          %v4185 = vsel %vm1608, %v4179, %v4180
          %v4186 = vsel %vm1608, %v4178, %v4179
          %v4187 = vsel %vm1608, %v4177, %v4178
          %v4188 = vsel %vm1608, %v4176, %v4177
          %v4189 = vsel %vm1608, %v4175, %v4176
          %v4190 = vsel %vm1608, %v4182, %v4175
          %v4191 = vmul.f32 %v4189, %v725
          %v4192 = vmul.f32 %v4188, %v726
          %v4193 = vmul.f32 %v4187, %v727
          %v4194 = vmul.f32 %v4186, %v728
          %v4195 = vmul.f32 %v4185, %v729
          %v4196 = vmul.f32 %v4184, %v730
          %v4197 = vmul.f32 %v4183, %v731
          %v4198 = vmul.f32 %v4190, %v732
          %4199 = vrot.lane.b32.xlu0 %v4191, 1
          %v4200 = vpop.permute.xlu0 %4199
          %4201 = vrot.lane.b32.xlu0 %v4192, 1
          %v4202 = vpop.permute.xlu0 %4201
          %4203 = vrot.lane.b32.xlu0 %v4193, 1
          %v4204 = vpop.permute.xlu0 %4203
          %4205 = vrot.lane.b32.xlu0 %v4194, 1
          %v4206 = vpop.permute.xlu0 %4205
          %4207 = vrot.lane.b32.xlu0 %v4195, 1
          %v4208 = vpop.permute.xlu0 %4207
          %4209 = vrot.lane.b32.xlu0 %v4196, 1
          %v4210 = vpop.permute.xlu0 %4209
          %4211 = vrot.lane.b32.xlu0 %v4197, 1
          %v4212 = vpop.permute.xlu0 %4211
          %4213 = vrot.lane.b32.xlu0 %v4198, 1
          %v4214 = vpop.permute.xlu0 %4213
          %v4215 = vstv %s518
          %v4216 = vmul.f32 %v4215, %v4200
          %v4217 = vmul.f32 %v4215, %v4202
          %v4218 = vmul.f32 %v4215, %v4204
          %v4219 = vmul.f32 %v4215, %v4206
          %v4220 = vmul.f32 %v4215, %v4208
          %v4221 = vmul.f32 %v4215, %v4210
          %v4222 = vmul.f32 %v4215, %v4212
          %v4223 = vmul.f32 %v4215, %v4214
          %v4224 = vadd.f32 %v4116, %v4216
          %v4225 = vadd.f32 %v4117, %v4217
          %v4226 = vadd.f32 %v4118, %v4218
          %v4227 = vadd.f32 %v4119, %v4219
          %v4228 = vadd.f32 %v4120, %v4220
          %v4229 = vadd.f32 %v4121, %v4221
          %v4230 = vadd.f32 %v4122, %v4222
          %v4231 = vadd.f32 %v4123, %v4223
          %v4232 = vstv %s536
          %v4233 = vmul.f32 %v4232, %v4200
          %v4234 = vmul.f32 %v4232, %v4202
          %v4235 = vmul.f32 %v4232, %v4204
          %v4236 = vmul.f32 %v4232, %v4206
          %v4237 = vmul.f32 %v4232, %v4208
          %v4238 = vmul.f32 %v4232, %v4210
          %v4239 = vmul.f32 %v4232, %v4212
          %v4240 = vmul.f32 %v4232, %v4214
          %v4241 = vadd.f32 %v4133, %v4233
          %v4242 = vadd.f32 %v4134, %v4234
          %v4243 = vadd.f32 %v4135, %v4235
          %v4244 = vadd.f32 %v4136, %v4236
          %v4245 = vadd.f32 %v4137, %v4237
          %v4246 = vadd.f32 %v4138, %v4238
          %v4247 = vadd.f32 %v4139, %v4239
          %v4248 = vadd.f32 %v4140, %v4240
          %v4249 = vstv %s554
          %v4250 = vmul.f32 %v4249, %v4200
          %v4251 = vmul.f32 %v4249, %v4202
          %v4252 = vmul.f32 %v4249, %v4204
          %v4253 = vmul.f32 %v4249, %v4206
          %v4254 = vmul.f32 %v4249, %v4208
          %v4255 = vmul.f32 %v4249, %v4210
          %v4256 = vmul.f32 %v4249, %v4212
          %v4257 = vmul.f32 %v4249, %v4214
          %v4258 = vadd.f32 %v4150, %v4250
          %v4259 = vadd.f32 %v4151, %v4251
          %v4260 = vadd.f32 %v4152, %v4252
          %v4261 = vadd.f32 %v4153, %v4253
          %v4262 = vadd.f32 %v4154, %v4254
          %v4263 = vadd.f32 %v4155, %v4255
          %v4264 = vadd.f32 %v4156, %v4256
          %v4265 = vadd.f32 %v4157, %v4257
          %v4266 = vstv %s572
          %v4267 = vmul.f32 %v4266, %v4200
          %v4268 = vmul.f32 %v4266, %v4202
          %v4269 = vmul.f32 %v4266, %v4204
          %v4270 = vmul.f32 %v4266, %v4206
          %v4271 = vmul.f32 %v4266, %v4208
          %v4272 = vmul.f32 %v4266, %v4210
          %v4273 = vmul.f32 %v4266, %v4212
          %v4274 = vmul.f32 %v4266, %v4214
          %v4275 = vadd.f32 %v4167, %v4267
          %v4276 = vadd.f32 %v4168, %v4268
          %v4277 = vadd.f32 %v4169, %v4269
          %v4278 = vadd.f32 %v4170, %v4270
          %v4279 = vadd.f32 %v4171, %v4271
          %v4280 = vadd.f32 %v4172, %v4272
          %v4281 = vadd.f32 %v4173, %v4273
          %v4282 = vadd.f32 %v4174, %v4274
          %v4283 = vstv %s519
          %v4284 = vmul.f32 %v4283, %v4191
          %v4285 = vmul.f32 %v4283, %v4192
          %v4286 = vmul.f32 %v4283, %v4193
          %v4287 = vmul.f32 %v4283, %v4194
          %v4288 = vmul.f32 %v4283, %v4195
          %v4289 = vmul.f32 %v4283, %v4196
          %v4290 = vmul.f32 %v4283, %v4197
          %v4291 = vmul.f32 %v4283, %v4198
          %v4292 = vadd.f32 %v4224, %v4284
          %v4293 = vadd.f32 %v4225, %v4285
          %v4294 = vadd.f32 %v4226, %v4286
          %v4295 = vadd.f32 %v4227, %v4287
          %v4296 = vadd.f32 %v4228, %v4288
          %v4297 = vadd.f32 %v4229, %v4289
          %v4298 = vadd.f32 %v4230, %v4290
          %v4299 = vadd.f32 %v4231, %v4291
          %v4300 = vstv %s537
          %v4301 = vmul.f32 %v4300, %v4191
          %v4302 = vmul.f32 %v4300, %v4192
          %v4303 = vmul.f32 %v4300, %v4193
          %v4304 = vmul.f32 %v4300, %v4194
          %v4305 = vmul.f32 %v4300, %v4195
          %v4306 = vmul.f32 %v4300, %v4196
          %v4307 = vmul.f32 %v4300, %v4197
          %v4308 = vmul.f32 %v4300, %v4198
          %v4309 = vadd.f32 %v4241, %v4301
          %v4310 = vadd.f32 %v4242, %v4302
          %v4311 = vadd.f32 %v4243, %v4303
          %v4312 = vadd.f32 %v4244, %v4304
          %v4313 = vadd.f32 %v4245, %v4305
          %v4314 = vadd.f32 %v4246, %v4306
          %v4315 = vadd.f32 %v4247, %v4307
          %v4316 = vadd.f32 %v4248, %v4308
          %v4317 = vstv %s555
          %v4318 = vmul.f32 %v4317, %v4191
          %v4319 = vmul.f32 %v4317, %v4192
          %v4320 = vmul.f32 %v4317, %v4193
          %v4321 = vmul.f32 %v4317, %v4194
          %v4322 = vmul.f32 %v4317, %v4195
          %v4323 = vmul.f32 %v4317, %v4196
          %v4324 = vmul.f32 %v4317, %v4197
          %v4325 = vmul.f32 %v4317, %v4198
          %v4326 = vadd.f32 %v4258, %v4318
          %v4327 = vadd.f32 %v4259, %v4319
          %v4328 = vadd.f32 %v4260, %v4320
          %v4329 = vadd.f32 %v4261, %v4321
          %v4330 = vadd.f32 %v4262, %v4322
          %v4331 = vadd.f32 %v4263, %v4323
          %v4332 = vadd.f32 %v4264, %v4324
          %v4333 = vadd.f32 %v4265, %v4325
          %v4334 = vstv %s573
          %v4335 = vmul.f32 %v4334, %v4191
          %v4336 = vmul.f32 %v4334, %v4192
          %v4337 = vmul.f32 %v4334, %v4193
          %v4338 = vmul.f32 %v4334, %v4194
          %v4339 = vmul.f32 %v4334, %v4195
          %v4340 = vmul.f32 %v4334, %v4196
          %v4341 = vmul.f32 %v4334, %v4197
          %v4342 = vmul.f32 %v4334, %v4198
          %v4343 = vadd.f32 %v4275, %v4335
          %v4344 = vadd.f32 %v4276, %v4336
          %v4345 = vadd.f32 %v4277, %v4337
          %v4346 = vadd.f32 %v4278, %v4338
          %v4347 = vadd.f32 %v4279, %v4339
          %v4348 = vadd.f32 %v4280, %v4340
          %v4349 = vadd.f32 %v4281, %v4341
          %v4350 = vadd.f32 %v4282, %v4342
          %4351 = vrot.lane.b32.xlu0 %v4191, 127
          %v4352 = vpop.permute.xlu0 %4351
          %4353 = vrot.lane.b32.xlu0 %v4192, 127
          %v4354 = vpop.permute.xlu0 %4353
          %4355 = vrot.lane.b32.xlu0 %v4193, 127
          %v4356 = vpop.permute.xlu0 %4355
          %4357 = vrot.lane.b32.xlu0 %v4194, 127
          %v4358 = vpop.permute.xlu0 %4357
          %4359 = vrot.lane.b32.xlu0 %v4195, 127
          %v4360 = vpop.permute.xlu0 %4359
          %4361 = vrot.lane.b32.xlu0 %v4196, 127
          %v4362 = vpop.permute.xlu0 %4361
          %4363 = vrot.lane.b32.xlu0 %v4197, 127
          %v4364 = vpop.permute.xlu0 %4363
          %4365 = vrot.lane.b32.xlu0 %v4198, 127
          %v4366 = vpop.permute.xlu0 %4365
          %v4367 = vstv %s520
          %v4368 = vmul.f32 %v4367, %v4352
          %v4369 = vmul.f32 %v4367, %v4354
          %v4370 = vmul.f32 %v4367, %v4356
          %v4371 = vmul.f32 %v4367, %v4358
          %v4372 = vmul.f32 %v4367, %v4360
          %v4373 = vmul.f32 %v4367, %v4362
          %v4374 = vmul.f32 %v4367, %v4364
          %v4375 = vmul.f32 %v4367, %v4366
          %v4376 = vadd.f32 %v4292, %v4368
          %v4377 = vadd.f32 %v4293, %v4369
          %v4378 = vadd.f32 %v4294, %v4370
          %v4379 = vadd.f32 %v4295, %v4371
          %v4380 = vadd.f32 %v4296, %v4372
          %v4381 = vadd.f32 %v4297, %v4373
          %v4382 = vadd.f32 %v4298, %v4374
          %v4383 = vadd.f32 %v4299, %v4375
          %v4384 = vstv %s538
          %v4385 = vmul.f32 %v4384, %v4352
          %v4386 = vmul.f32 %v4384, %v4354
          %v4387 = vmul.f32 %v4384, %v4356
          %v4388 = vmul.f32 %v4384, %v4358
          %v4389 = vmul.f32 %v4384, %v4360
          %v4390 = vmul.f32 %v4384, %v4362
          %v4391 = vmul.f32 %v4384, %v4364
          %v4392 = vmul.f32 %v4384, %v4366
          %v4393 = vadd.f32 %v4309, %v4385
          %v4394 = vadd.f32 %v4310, %v4386
          %v4395 = vadd.f32 %v4311, %v4387
          %v4396 = vadd.f32 %v4312, %v4388
          %v4397 = vadd.f32 %v4313, %v4389
          %v4398 = vadd.f32 %v4314, %v4390
          %v4399 = vadd.f32 %v4315, %v4391
          %v4400 = vadd.f32 %v4316, %v4392
          %v4401 = vstv %s556
          %v4402 = vmul.f32 %v4401, %v4352
          %v4403 = vmul.f32 %v4401, %v4354
          %v4404 = vmul.f32 %v4401, %v4356
          %v4405 = vmul.f32 %v4401, %v4358
          %v4406 = vmul.f32 %v4401, %v4360
          %v4407 = vmul.f32 %v4401, %v4362
          %v4408 = vmul.f32 %v4401, %v4364
          %v4409 = vmul.f32 %v4401, %v4366
          %v4410 = vadd.f32 %v4326, %v4402
          %v4411 = vadd.f32 %v4327, %v4403
          %v4412 = vadd.f32 %v4328, %v4404
          %v4413 = vadd.f32 %v4329, %v4405
          %v4414 = vadd.f32 %v4330, %v4406
          %v4415 = vadd.f32 %v4331, %v4407
          %v4416 = vadd.f32 %v4332, %v4408
          %v4417 = vadd.f32 %v4333, %v4409
          %v4418 = vstv %s574
          %v4419 = vmul.f32 %v4418, %v4352
          %v4420 = vmul.f32 %v4418, %v4354
          %v4421 = vmul.f32 %v4418, %v4356
          %v4422 = vmul.f32 %v4418, %v4358
          %v4423 = vmul.f32 %v4418, %v4360
          %v4424 = vmul.f32 %v4418, %v4362
          %v4425 = vmul.f32 %v4418, %v4364
          %v4426 = vmul.f32 %v4418, %v4366
          %v4427 = vadd.f32 %v4343, %v4419
          %v4428 = vadd.f32 %v4344, %v4420
          %v4429 = vadd.f32 %v4345, %v4421
          %v4430 = vadd.f32 %v4346, %v4422
          %v4431 = vadd.f32 %v4347, %v4423
          %v4432 = vadd.f32 %v4348, %v4424
          %v4433 = vadd.f32 %v4349, %v4425
          %v4434 = vadd.f32 %v4350, %v4426
          %v4435 = vrot.slane %v3633, 7
          %v4436 = vrot.slane %v3638, 7
          %v4437 = vrot.slane %v3643, 7
          %v4438 = vrot.slane %v3648, 7
          %v4439 = vrot.slane %v3653, 7
          %v4440 = vrot.slane %v3658, 7
          %v4441 = vrot.slane %v3663, 7
          %v4442 = vrot.slane %v3668, 7
          %v4443 = vsel %vm971, %v4441, %v4442
          %v4444 = vsel %vm971, %v4440, %v4441
          %v4445 = vsel %vm971, %v4439, %v4440
          %v4446 = vsel %vm971, %v4438, %v4439
          %v4447 = vsel %vm971, %v4437, %v4438
          %v4448 = vsel %vm971, %v4436, %v4437
          %v4449 = vsel %vm971, %v4435, %v4436
          %v4450 = vsel %vm971, %v4442, %v4435
          %v4451 = vmul.f32 %v4450, %v685
          %v4452 = vmul.f32 %v4449, %v686
          %v4453 = vmul.f32 %v4448, %v687
          %v4454 = vmul.f32 %v4447, %v688
          %v4455 = vmul.f32 %v4446, %v689
          %v4456 = vmul.f32 %v4445, %v690
          %v4457 = vmul.f32 %v4444, %v691
          %v4458 = vmul.f32 %v4443, %v692
          %4459 = vrot.lane.b32.xlu0 %v4451, 1
          %v4460 = vpop.permute.xlu0 %4459
          %4461 = vrot.lane.b32.xlu0 %v4452, 1
          %v4462 = vpop.permute.xlu0 %4461
          %4463 = vrot.lane.b32.xlu0 %v4453, 1
          %v4464 = vpop.permute.xlu0 %4463
          %4465 = vrot.lane.b32.xlu0 %v4454, 1
          %v4466 = vpop.permute.xlu0 %4465
          %4467 = vrot.lane.b32.xlu0 %v4455, 1
          %v4468 = vpop.permute.xlu0 %4467
          %4469 = vrot.lane.b32.xlu0 %v4456, 1
          %v4470 = vpop.permute.xlu0 %4469
          %4471 = vrot.lane.b32.xlu0 %v4457, 1
          %v4472 = vpop.permute.xlu0 %4471
          %4473 = vrot.lane.b32.xlu0 %v4458, 1
          %v4474 = vpop.permute.xlu0 %4473
          %v4475 = vstv %s521
          %v4476 = vmul.f32 %v4475, %v4460
          %v4477 = vmul.f32 %v4475, %v4462
          %v4478 = vmul.f32 %v4475, %v4464
          %v4479 = vmul.f32 %v4475, %v4466
          %v4480 = vmul.f32 %v4475, %v4468
          %v4481 = vmul.f32 %v4475, %v4470
          %v4482 = vmul.f32 %v4475, %v4472
          %v4483 = vmul.f32 %v4475, %v4474
          %v4484 = vadd.f32 %v4376, %v4476
          %v4485 = vadd.f32 %v4377, %v4477
          %v4486 = vadd.f32 %v4378, %v4478
          %v4487 = vadd.f32 %v4379, %v4479
          %v4488 = vadd.f32 %v4380, %v4480
          %v4489 = vadd.f32 %v4381, %v4481
          %v4490 = vadd.f32 %v4382, %v4482
          %v4491 = vadd.f32 %v4383, %v4483
          %v4492 = vstv %s539
          %v4493 = vmul.f32 %v4492, %v4460
          %v4494 = vmul.f32 %v4492, %v4462
          %v4495 = vmul.f32 %v4492, %v4464
          %v4496 = vmul.f32 %v4492, %v4466
          %v4497 = vmul.f32 %v4492, %v4468
          %v4498 = vmul.f32 %v4492, %v4470
          %v4499 = vmul.f32 %v4492, %v4472
          %v4500 = vmul.f32 %v4492, %v4474
          %v4501 = vadd.f32 %v4393, %v4493
          %v4502 = vadd.f32 %v4394, %v4494
          %v4503 = vadd.f32 %v4395, %v4495
          %v4504 = vadd.f32 %v4396, %v4496
          %v4505 = vadd.f32 %v4397, %v4497
          %v4506 = vadd.f32 %v4398, %v4498
          %v4507 = vadd.f32 %v4399, %v4499
          %v4508 = vadd.f32 %v4400, %v4500
          %v4509 = vstv %s557
          %v4510 = vmul.f32 %v4509, %v4460
          %v4511 = vmul.f32 %v4509, %v4462
          %v4512 = vmul.f32 %v4509, %v4464
          %v4513 = vmul.f32 %v4509, %v4466
          %v4514 = vmul.f32 %v4509, %v4468
          %v4515 = vmul.f32 %v4509, %v4470
          %v4516 = vmul.f32 %v4509, %v4472
          %v4517 = vmul.f32 %v4509, %v4474
          %v4518 = vadd.f32 %v4410, %v4510
          %v4519 = vadd.f32 %v4411, %v4511
          %v4520 = vadd.f32 %v4412, %v4512
          %v4521 = vadd.f32 %v4413, %v4513
          %v4522 = vadd.f32 %v4414, %v4514
          %v4523 = vadd.f32 %v4415, %v4515
          %v4524 = vadd.f32 %v4416, %v4516
          %v4525 = vadd.f32 %v4417, %v4517
          %v4526 = vstv %s575
          %v4527 = vmul.f32 %v4526, %v4460
          %v4528 = vmul.f32 %v4526, %v4462
          %v4529 = vmul.f32 %v4526, %v4464
          %v4530 = vmul.f32 %v4526, %v4466
          %v4531 = vmul.f32 %v4526, %v4468
          %v4532 = vmul.f32 %v4526, %v4470
          %v4533 = vmul.f32 %v4526, %v4472
          %v4534 = vmul.f32 %v4526, %v4474
          %v4535 = vadd.f32 %v4427, %v4527
          %v4536 = vadd.f32 %v4428, %v4528
          %v4537 = vadd.f32 %v4429, %v4529
          %v4538 = vadd.f32 %v4430, %v4530
          %v4539 = vadd.f32 %v4431, %v4531
          %v4540 = vadd.f32 %v4432, %v4532
          %v4541 = vadd.f32 %v4433, %v4533
          %v4542 = vadd.f32 %v4434, %v4534
          %v4543 = vstv %s522
          %v4544 = vmul.f32 %v4543, %v4451
          %v4545 = vmul.f32 %v4543, %v4452
          %v4546 = vmul.f32 %v4543, %v4453
          %v4547 = vmul.f32 %v4543, %v4454
          %v4548 = vmul.f32 %v4543, %v4455
          %v4549 = vmul.f32 %v4543, %v4456
          %v4550 = vmul.f32 %v4543, %v4457
          %v4551 = vmul.f32 %v4543, %v4458
          %v4552 = vadd.f32 %v4484, %v4544
          %v4553 = vadd.f32 %v4485, %v4545
          %v4554 = vadd.f32 %v4486, %v4546
          %v4555 = vadd.f32 %v4487, %v4547
          %v4556 = vadd.f32 %v4488, %v4548
          %v4557 = vadd.f32 %v4489, %v4549
          %v4558 = vadd.f32 %v4490, %v4550
          %v4559 = vadd.f32 %v4491, %v4551
          %v4560 = vstv %s540
          %v4561 = vmul.f32 %v4560, %v4451
          %v4562 = vmul.f32 %v4560, %v4452
          %v4563 = vmul.f32 %v4560, %v4453
          %v4564 = vmul.f32 %v4560, %v4454
          %v4565 = vmul.f32 %v4560, %v4455
          %v4566 = vmul.f32 %v4560, %v4456
          %v4567 = vmul.f32 %v4560, %v4457
          %v4568 = vmul.f32 %v4560, %v4458
          %v4569 = vadd.f32 %v4501, %v4561
          %v4570 = vadd.f32 %v4502, %v4562
          %v4571 = vadd.f32 %v4503, %v4563
          %v4572 = vadd.f32 %v4504, %v4564
          %v4573 = vadd.f32 %v4505, %v4565
          %v4574 = vadd.f32 %v4506, %v4566
          %v4575 = vadd.f32 %v4507, %v4567
          %v4576 = vadd.f32 %v4508, %v4568
          %v4577 = vstv %s558
          %v4578 = vmul.f32 %v4577, %v4451
          %v4579 = vmul.f32 %v4577, %v4452
          %v4580 = vmul.f32 %v4577, %v4453
          %v4581 = vmul.f32 %v4577, %v4454
          %v4582 = vmul.f32 %v4577, %v4455
          %v4583 = vmul.f32 %v4577, %v4456
          %v4584 = vmul.f32 %v4577, %v4457
          %v4585 = vmul.f32 %v4577, %v4458
          %v4586 = vadd.f32 %v4518, %v4578
          %v4587 = vadd.f32 %v4519, %v4579
          %v4588 = vadd.f32 %v4520, %v4580
          %v4589 = vadd.f32 %v4521, %v4581
          %v4590 = vadd.f32 %v4522, %v4582
          %v4591 = vadd.f32 %v4523, %v4583
          %v4592 = vadd.f32 %v4524, %v4584
          %v4593 = vadd.f32 %v4525, %v4585
          %v4594 = vstv %s576
          %v4595 = vmul.f32 %v4594, %v4451
          %v4596 = vmul.f32 %v4594, %v4452
          %v4597 = vmul.f32 %v4594, %v4453
          %v4598 = vmul.f32 %v4594, %v4454
          %v4599 = vmul.f32 %v4594, %v4455
          %v4600 = vmul.f32 %v4594, %v4456
          %v4601 = vmul.f32 %v4594, %v4457
          %v4602 = vmul.f32 %v4594, %v4458
          %v4603 = vadd.f32 %v4535, %v4595
          %v4604 = vadd.f32 %v4536, %v4596
          %v4605 = vadd.f32 %v4537, %v4597
          %v4606 = vadd.f32 %v4538, %v4598
          %v4607 = vadd.f32 %v4539, %v4599
          %v4608 = vadd.f32 %v4540, %v4600
          %v4609 = vadd.f32 %v4541, %v4601
          %v4610 = vadd.f32 %v4542, %v4602
          %4611 = vrot.lane.b32.xlu0 %v4451, 127
          %v4612 = vpop.permute.xlu0 %4611
          %4613 = vrot.lane.b32.xlu0 %v4452, 127
          %v4614 = vpop.permute.xlu0 %4613
          %4615 = vrot.lane.b32.xlu0 %v4453, 127
          %v4616 = vpop.permute.xlu0 %4615
          %4617 = vrot.lane.b32.xlu0 %v4454, 127
          %v4618 = vpop.permute.xlu0 %4617
          %4619 = vrot.lane.b32.xlu0 %v4455, 127
          %v4620 = vpop.permute.xlu0 %4619
          %4621 = vrot.lane.b32.xlu0 %v4456, 127
          %v4622 = vpop.permute.xlu0 %4621
          %4623 = vrot.lane.b32.xlu0 %v4457, 127
          %v4624 = vpop.permute.xlu0 %4623
          %4625 = vrot.lane.b32.xlu0 %v4458, 127
          %v4626 = vpop.permute.xlu0 %4625
          %v4627 = vstv %s523
          %v4628 = vmul.f32 %v4627, %v4612
          %v4629 = vmul.f32 %v4627, %v4614
          %v4630 = vmul.f32 %v4627, %v4616
          %v4631 = vmul.f32 %v4627, %v4618
          %v4632 = vmul.f32 %v4627, %v4620
          %v4633 = vmul.f32 %v4627, %v4622
          %v4634 = vmul.f32 %v4627, %v4624
          %v4635 = vmul.f32 %v4627, %v4626
          %v4636 = vadd.f32 %v4552, %v4628
          %v4637 = vadd.f32 %v4553, %v4629
          %v4638 = vadd.f32 %v4554, %v4630
          %v4639 = vadd.f32 %v4555, %v4631
          %v4640 = vadd.f32 %v4556, %v4632
          %v4641 = vadd.f32 %v4557, %v4633
          %v4642 = vadd.f32 %v4558, %v4634
          %v4643 = vadd.f32 %v4559, %v4635
          %v4644 = vstv %s541
          %v4645 = vmul.f32 %v4644, %v4612
          %v4646 = vmul.f32 %v4644, %v4614
          %v4647 = vmul.f32 %v4644, %v4616
          %v4648 = vmul.f32 %v4644, %v4618
          %v4649 = vmul.f32 %v4644, %v4620
          %v4650 = vmul.f32 %v4644, %v4622
          %v4651 = vmul.f32 %v4644, %v4624
          %v4652 = vmul.f32 %v4644, %v4626
          %v4653 = vadd.f32 %v4569, %v4645
          %v4654 = vadd.f32 %v4570, %v4646
          %v4655 = vadd.f32 %v4571, %v4647
          %v4656 = vadd.f32 %v4572, %v4648
          %v4657 = vadd.f32 %v4573, %v4649
          %v4658 = vadd.f32 %v4574, %v4650
          %v4659 = vadd.f32 %v4575, %v4651
          %v4660 = vadd.f32 %v4576, %v4652
          %v4661 = vstv %s559
          %v4662 = vmul.f32 %v4661, %v4612
          %v4663 = vmul.f32 %v4661, %v4614
          %v4664 = vmul.f32 %v4661, %v4616
          %v4665 = vmul.f32 %v4661, %v4618
          %v4666 = vmul.f32 %v4661, %v4620
          %v4667 = vmul.f32 %v4661, %v4622
          %v4668 = vmul.f32 %v4661, %v4624
          %v4669 = vmul.f32 %v4661, %v4626
          %v4670 = vadd.f32 %v4586, %v4662
          %v4671 = vadd.f32 %v4587, %v4663
          %v4672 = vadd.f32 %v4588, %v4664
          %v4673 = vadd.f32 %v4589, %v4665
          %v4674 = vadd.f32 %v4590, %v4666
          %v4675 = vadd.f32 %v4591, %v4667
          %v4676 = vadd.f32 %v4592, %v4668
          %v4677 = vadd.f32 %v4593, %v4669
          %v4678 = vstv %s577
          %v4679 = vmul.f32 %v4678, %v4612
          %v4680 = vmul.f32 %v4678, %v4614
          %v4681 = vmul.f32 %v4678, %v4616
          %v4682 = vmul.f32 %v4678, %v4618
          %v4683 = vmul.f32 %v4678, %v4620
          %v4684 = vmul.f32 %v4678, %v4622
          %v4685 = vmul.f32 %v4678, %v4624
          %v4686 = vmul.f32 %v4678, %v4626
          %v4687 = vadd.f32 %v4603, %v4679
          %v4688 = vadd.f32 %v4604, %v4680
          %v4689 = vadd.f32 %v4605, %v4681
          %v4690 = vadd.f32 %v4606, %v4682
          %v4691 = vadd.f32 %v4607, %v4683
          %v4692 = vadd.f32 %v4608, %v4684
          %v4693 = vadd.f32 %v4609, %v4685
          %v4694 = vadd.f32 %v4610, %v4686
          %4695 = vrot.lane.b32.xlu0 %v3633, 1
          %v4696 = vpop.permute.xlu0 %4695
          %4697 = vrot.lane.b32.xlu0 %v3638, 1
          %v4698 = vpop.permute.xlu0 %4697
          %4699 = vrot.lane.b32.xlu0 %v3643, 1
          %v4700 = vpop.permute.xlu0 %4699
          %4701 = vrot.lane.b32.xlu0 %v3648, 1
          %v4702 = vpop.permute.xlu0 %4701
          %4703 = vrot.lane.b32.xlu0 %v3653, 1
          %v4704 = vpop.permute.xlu0 %4703
          %4705 = vrot.lane.b32.xlu0 %v3658, 1
          %v4706 = vpop.permute.xlu0 %4705
          %4707 = vrot.lane.b32.xlu0 %v3663, 1
          %v4708 = vpop.permute.xlu0 %4707
          %4709 = vrot.lane.b32.xlu0 %v3668, 1
          %v4710 = vpop.permute.xlu0 %4709
          %v4711 = vstv %s524
          %v4712 = vmul.f32 %v4711, %v4696
          %v4713 = vmul.f32 %v4711, %v4698
          %v4714 = vmul.f32 %v4711, %v4700
          %v4715 = vmul.f32 %v4711, %v4702
          %v4716 = vmul.f32 %v4711, %v4704
          %v4717 = vmul.f32 %v4711, %v4706
          %v4718 = vmul.f32 %v4711, %v4708
          %v4719 = vmul.f32 %v4711, %v4710
          %v4720 = vadd.f32 %v4636, %v4712
          %v4721 = vadd.f32 %v4637, %v4713
          %v4722 = vadd.f32 %v4638, %v4714
          %v4723 = vadd.f32 %v4639, %v4715
          %v4724 = vadd.f32 %v4640, %v4716
          %v4725 = vadd.f32 %v4641, %v4717
          %v4726 = vadd.f32 %v4642, %v4718
          %v4727 = vadd.f32 %v4643, %v4719
          %v4728 = vstv %s542
          %v4729 = vmul.f32 %v4728, %v4696
          %v4730 = vmul.f32 %v4728, %v4698
          %v4731 = vmul.f32 %v4728, %v4700
          %v4732 = vmul.f32 %v4728, %v4702
          %v4733 = vmul.f32 %v4728, %v4704
          %v4734 = vmul.f32 %v4728, %v4706
          %v4735 = vmul.f32 %v4728, %v4708
          %v4736 = vmul.f32 %v4728, %v4710
          %v4737 = vadd.f32 %v4653, %v4729
          %v4738 = vadd.f32 %v4654, %v4730
          %v4739 = vadd.f32 %v4655, %v4731
          %v4740 = vadd.f32 %v4656, %v4732
          %v4741 = vadd.f32 %v4657, %v4733
          %v4742 = vadd.f32 %v4658, %v4734
          %v4743 = vadd.f32 %v4659, %v4735
          %v4744 = vadd.f32 %v4660, %v4736
          %v4745 = vstv %s560
          %v4746 = vmul.f32 %v4745, %v4696
          %v4747 = vmul.f32 %v4745, %v4698
          %v4748 = vmul.f32 %v4745, %v4700
          %v4749 = vmul.f32 %v4745, %v4702
          %v4750 = vmul.f32 %v4745, %v4704
          %v4751 = vmul.f32 %v4745, %v4706
          %v4752 = vmul.f32 %v4745, %v4708
          %v4753 = vmul.f32 %v4745, %v4710
          %v4754 = vadd.f32 %v4670, %v4746
          %v4755 = vadd.f32 %v4671, %v4747
          %v4756 = vadd.f32 %v4672, %v4748
          %v4757 = vadd.f32 %v4673, %v4749
          %v4758 = vadd.f32 %v4674, %v4750
          %v4759 = vadd.f32 %v4675, %v4751
          %v4760 = vadd.f32 %v4676, %v4752
          %v4761 = vadd.f32 %v4677, %v4753
          %v4762 = vstv %s578
          %v4763 = vmul.f32 %v4762, %v4696
          %v4764 = vmul.f32 %v4762, %v4698
          %v4765 = vmul.f32 %v4762, %v4700
          %v4766 = vmul.f32 %v4762, %v4702
          %v4767 = vmul.f32 %v4762, %v4704
          %v4768 = vmul.f32 %v4762, %v4706
          %v4769 = vmul.f32 %v4762, %v4708
          %v4770 = vmul.f32 %v4762, %v4710
          %v4771 = vadd.f32 %v4687, %v4763
          %v4772 = vadd.f32 %v4688, %v4764
          %v4773 = vadd.f32 %v4689, %v4765
          %v4774 = vadd.f32 %v4690, %v4766
          %v4775 = vadd.f32 %v4691, %v4767
          %v4776 = vadd.f32 %v4692, %v4768
          %v4777 = vadd.f32 %v4693, %v4769
          %v4778 = vadd.f32 %v4694, %v4770
          %v4779 = vstv %s525
          %v4780 = vmul.f32 %v4779, %v3633
          %v4781 = vmul.f32 %v4779, %v3638
          %v4782 = vmul.f32 %v4779, %v3643
          %v4783 = vmul.f32 %v4779, %v3648
          %v4784 = vmul.f32 %v4779, %v3653
          %v4785 = vmul.f32 %v4779, %v3658
          %v4786 = vmul.f32 %v4779, %v3663
          %v4787 = vmul.f32 %v4779, %v3668
          %v4788 = vadd.f32 %v4720, %v4780
          %v4789 = vadd.f32 %v4721, %v4781
          %v4790 = vadd.f32 %v4722, %v4782
          %v4791 = vadd.f32 %v4723, %v4783
          %v4792 = vadd.f32 %v4724, %v4784
          %v4793 = vadd.f32 %v4725, %v4785
          %v4794 = vadd.f32 %v4726, %v4786
          %v4795 = vadd.f32 %v4727, %v4787
          %v4796 = vstv %s543
          %v4797 = vmul.f32 %v4796, %v3633
          %v4798 = vmul.f32 %v4796, %v3638
          %v4799 = vmul.f32 %v4796, %v3643
          %v4800 = vmul.f32 %v4796, %v3648
          %v4801 = vmul.f32 %v4796, %v3653
          %v4802 = vmul.f32 %v4796, %v3658
          %v4803 = vmul.f32 %v4796, %v3663
          %v4804 = vmul.f32 %v4796, %v3668
          %v4805 = vadd.f32 %v4737, %v4797
          %v4806 = vadd.f32 %v4738, %v4798
          %v4807 = vadd.f32 %v4739, %v4799
          %v4808 = vadd.f32 %v4740, %v4800
          %v4809 = vadd.f32 %v4741, %v4801
          %v4810 = vadd.f32 %v4742, %v4802
          %v4811 = vadd.f32 %v4743, %v4803
          %v4812 = vadd.f32 %v4744, %v4804
          %v4813 = vstv %s561
          %v4814 = vmul.f32 %v4813, %v3633
          %v4815 = vmul.f32 %v4813, %v3638
          %v4816 = vmul.f32 %v4813, %v3643
          %v4817 = vmul.f32 %v4813, %v3648
          %v4818 = vmul.f32 %v4813, %v3653
          %v4819 = vmul.f32 %v4813, %v3658
          %v4820 = vmul.f32 %v4813, %v3663
          %v4821 = vmul.f32 %v4813, %v3668
          %v4822 = vadd.f32 %v4754, %v4814
          %v4823 = vadd.f32 %v4755, %v4815
          %v4824 = vadd.f32 %v4756, %v4816
          %v4825 = vadd.f32 %v4757, %v4817
          %v4826 = vadd.f32 %v4758, %v4818
          %v4827 = vadd.f32 %v4759, %v4819
          %v4828 = vadd.f32 %v4760, %v4820
          %v4829 = vadd.f32 %v4761, %v4821
          %v4830 = vstv %s579
          %v4831 = vmul.f32 %v4830, %v3633
          %v4832 = vmul.f32 %v4830, %v3638
          %v4833 = vmul.f32 %v4830, %v3643
          %v4834 = vmul.f32 %v4830, %v3648
          %v4835 = vmul.f32 %v4830, %v3653
          %v4836 = vmul.f32 %v4830, %v3658
          %v4837 = vmul.f32 %v4830, %v3663
          %v4838 = vmul.f32 %v4830, %v3668
          %v4839 = vadd.f32 %v4771, %v4831
          %v4840 = vadd.f32 %v4772, %v4832
          %v4841 = vadd.f32 %v4773, %v4833
          %v4842 = vadd.f32 %v4774, %v4834
          %v4843 = vadd.f32 %v4775, %v4835
          %v4844 = vadd.f32 %v4776, %v4836
          %v4845 = vadd.f32 %v4777, %v4837
          %v4846 = vadd.f32 %v4778, %v4838
          %4847 = vrot.lane.b32.xlu0 %v3633, 127
          %v4848 = vpop.permute.xlu0 %4847
          %4849 = vrot.lane.b32.xlu0 %v3638, 127
          %v4850 = vpop.permute.xlu0 %4849
          %4851 = vrot.lane.b32.xlu0 %v3643, 127
          %v4852 = vpop.permute.xlu0 %4851
          %4853 = vrot.lane.b32.xlu0 %v3648, 127
          %v4854 = vpop.permute.xlu0 %4853
          %4855 = vrot.lane.b32.xlu0 %v3653, 127
          %v4856 = vpop.permute.xlu0 %4855
          %4857 = vrot.lane.b32.xlu0 %v3658, 127
          %v4858 = vpop.permute.xlu0 %4857
          %4859 = vrot.lane.b32.xlu0 %v3663, 127
          %v4860 = vpop.permute.xlu0 %4859
          %4861 = vrot.lane.b32.xlu0 %v3668, 127
          %v4862 = vpop.permute.xlu0 %4861
          %v4863 = vstv %s526
          %v4864 = vmul.f32 %v4863, %v4848
          %v4865 = vmul.f32 %v4863, %v4850
          %v4866 = vmul.f32 %v4863, %v4852
          %v4867 = vmul.f32 %v4863, %v4854
          %v4868 = vmul.f32 %v4863, %v4856
          %v4869 = vmul.f32 %v4863, %v4858
          %v4870 = vmul.f32 %v4863, %v4860
          %v4871 = vmul.f32 %v4863, %v4862
          %v4872 = vadd.f32 %v4788, %v4864
          %v4873 = vadd.f32 %v4789, %v4865
          %v4874 = vadd.f32 %v4790, %v4866
          %v4875 = vadd.f32 %v4791, %v4867
          %v4876 = vadd.f32 %v4792, %v4868
          %v4877 = vadd.f32 %v4793, %v4869
          %v4878 = vadd.f32 %v4794, %v4870
          %v4879 = vadd.f32 %v4795, %v4871
          %v4880 = vstv %s544
          %v4881 = vmul.f32 %v4880, %v4848
          %v4882 = vmul.f32 %v4880, %v4850
          %v4883 = vmul.f32 %v4880, %v4852
          %v4884 = vmul.f32 %v4880, %v4854
          %v4885 = vmul.f32 %v4880, %v4856
          %v4886 = vmul.f32 %v4880, %v4858
          %v4887 = vmul.f32 %v4880, %v4860
          %v4888 = vmul.f32 %v4880, %v4862
          %v4889 = vadd.f32 %v4805, %v4881
          %v4890 = vadd.f32 %v4806, %v4882
          %v4891 = vadd.f32 %v4807, %v4883
          %v4892 = vadd.f32 %v4808, %v4884
          %v4893 = vadd.f32 %v4809, %v4885
          %v4894 = vadd.f32 %v4810, %v4886
          %v4895 = vadd.f32 %v4811, %v4887
          %v4896 = vadd.f32 %v4812, %v4888
          %v4897 = vstv %s562
          %v4898 = vmul.f32 %v4897, %v4848
          %v4899 = vmul.f32 %v4897, %v4850
          %v4900 = vmul.f32 %v4897, %v4852
          %v4901 = vmul.f32 %v4897, %v4854
          %v4902 = vmul.f32 %v4897, %v4856
          %v4903 = vmul.f32 %v4897, %v4858
          %v4904 = vmul.f32 %v4897, %v4860
          %v4905 = vmul.f32 %v4897, %v4862
          %v4906 = vadd.f32 %v4822, %v4898
          %v4907 = vadd.f32 %v4823, %v4899
          %v4908 = vadd.f32 %v4824, %v4900
          %v4909 = vadd.f32 %v4825, %v4901
          %v4910 = vadd.f32 %v4826, %v4902
          %v4911 = vadd.f32 %v4827, %v4903
          %v4912 = vadd.f32 %v4828, %v4904
          %v4913 = vadd.f32 %v4829, %v4905
          %v4914 = vstv %s580
          %v4915 = vmul.f32 %v4914, %v4848
          %v4916 = vmul.f32 %v4914, %v4850
          %v4917 = vmul.f32 %v4914, %v4852
          %v4918 = vmul.f32 %v4914, %v4854
          %v4919 = vmul.f32 %v4914, %v4856
          %v4920 = vmul.f32 %v4914, %v4858
          %v4921 = vmul.f32 %v4914, %v4860
          %v4922 = vmul.f32 %v4914, %v4862
          %v4923 = vadd.f32 %v4839, %v4915
          %v4924 = vadd.f32 %v4840, %v4916
          %v4925 = vadd.f32 %v4841, %v4917
          %v4926 = vadd.f32 %v4842, %v4918
          %v4927 = vadd.f32 %v4843, %v4919
          %v4928 = vadd.f32 %v4844, %v4920
          %v4929 = vadd.f32 %v4845, %v4921
          %v4930 = vadd.f32 %v4846, %v4922
          %v4931 = vrot.slane %v3633, 1
          %v4932 = vrot.slane %v3638, 1
          %v4933 = vrot.slane %v3643, 1
          %v4934 = vrot.slane %v3648, 1
          %v4935 = vrot.slane %v3653, 1
          %v4936 = vrot.slane %v3658, 1
          %v4937 = vrot.slane %v3663, 1
          %v4938 = vrot.slane %v3668, 1
          %v4939 = vsel %vm1608, %v4937, %v4938
          %v4940 = vsel %vm1608, %v4936, %v4937
          %v4941 = vsel %vm1608, %v4935, %v4936
          %v4942 = vsel %vm1608, %v4934, %v4935
          %v4943 = vsel %vm1608, %v4933, %v4934
          %v4944 = vsel %vm1608, %v4932, %v4933
          %v4945 = vsel %vm1608, %v4931, %v4932
          %v4946 = vsel %vm1608, %v4938, %v4931
          %v4947 = vmul.f32 %v4945, %v725
          %v4948 = vmul.f32 %v4944, %v726
          %v4949 = vmul.f32 %v4943, %v727
          %v4950 = vmul.f32 %v4942, %v728
          %v4951 = vmul.f32 %v4941, %v729
          %v4952 = vmul.f32 %v4940, %v730
          %v4953 = vmul.f32 %v4939, %v731
          %v4954 = vmul.f32 %v4946, %v732
          %4955 = vrot.lane.b32.xlu0 %v4947, 1
          %v4956 = vpop.permute.xlu0 %4955
          %4957 = vrot.lane.b32.xlu0 %v4948, 1
          %v4958 = vpop.permute.xlu0 %4957
          %4959 = vrot.lane.b32.xlu0 %v4949, 1
          %v4960 = vpop.permute.xlu0 %4959
          %4961 = vrot.lane.b32.xlu0 %v4950, 1
          %v4962 = vpop.permute.xlu0 %4961
          %4963 = vrot.lane.b32.xlu0 %v4951, 1
          %v4964 = vpop.permute.xlu0 %4963
          %4965 = vrot.lane.b32.xlu0 %v4952, 1
          %v4966 = vpop.permute.xlu0 %4965
          %4967 = vrot.lane.b32.xlu0 %v4953, 1
          %v4968 = vpop.permute.xlu0 %4967
          %4969 = vrot.lane.b32.xlu0 %v4954, 1
          %v4970 = vpop.permute.xlu0 %4969
          %v4971 = vstv %s527
          %v4972 = vmul.f32 %v4971, %v4956
          %v4973 = vmul.f32 %v4971, %v4958
          %v4974 = vmul.f32 %v4971, %v4960
          %v4975 = vmul.f32 %v4971, %v4962
          %v4976 = vmul.f32 %v4971, %v4964
          %v4977 = vmul.f32 %v4971, %v4966
          %v4978 = vmul.f32 %v4971, %v4968
          %v4979 = vmul.f32 %v4971, %v4970
          %v4980 = vadd.f32 %v4872, %v4972
          %v4981 = vadd.f32 %v4873, %v4973
          %v4982 = vadd.f32 %v4874, %v4974
          %v4983 = vadd.f32 %v4875, %v4975
          %v4984 = vadd.f32 %v4876, %v4976
          %v4985 = vadd.f32 %v4877, %v4977
          %v4986 = vadd.f32 %v4878, %v4978
          %v4987 = vadd.f32 %v4879, %v4979
          %v4988 = vstv %s545
          %v4989 = vmul.f32 %v4988, %v4956
          %v4990 = vmul.f32 %v4988, %v4958
          %v4991 = vmul.f32 %v4988, %v4960
          %v4992 = vmul.f32 %v4988, %v4962
          %v4993 = vmul.f32 %v4988, %v4964
          %v4994 = vmul.f32 %v4988, %v4966
          %v4995 = vmul.f32 %v4988, %v4968
          %v4996 = vmul.f32 %v4988, %v4970
          %v4997 = vadd.f32 %v4889, %v4989
          %v4998 = vadd.f32 %v4890, %v4990
          %v4999 = vadd.f32 %v4891, %v4991
          %v5000 = vadd.f32 %v4892, %v4992
          %v5001 = vadd.f32 %v4893, %v4993
          %v5002 = vadd.f32 %v4894, %v4994
          %v5003 = vadd.f32 %v4895, %v4995
          %v5004 = vadd.f32 %v4896, %v4996
          %v5005 = vstv %s563
          %v5006 = vmul.f32 %v5005, %v4956
          %v5007 = vmul.f32 %v5005, %v4958
          %v5008 = vmul.f32 %v5005, %v4960
          %v5009 = vmul.f32 %v5005, %v4962
          %v5010 = vmul.f32 %v5005, %v4964
          %v5011 = vmul.f32 %v5005, %v4966
          %v5012 = vmul.f32 %v5005, %v4968
          %v5013 = vmul.f32 %v5005, %v4970
          %v5014 = vadd.f32 %v4906, %v5006
          %v5015 = vadd.f32 %v4907, %v5007
          %v5016 = vadd.f32 %v4908, %v5008
          %v5017 = vadd.f32 %v4909, %v5009
          %v5018 = vadd.f32 %v4910, %v5010
          %v5019 = vadd.f32 %v4911, %v5011
          %v5020 = vadd.f32 %v4912, %v5012
          %v5021 = vadd.f32 %v4913, %v5013
          %v5022 = vstv %s581
          %v5023 = vmul.f32 %v5022, %v4956
          %v5024 = vmul.f32 %v5022, %v4958
          %v5025 = vmul.f32 %v5022, %v4960
          %v5026 = vmul.f32 %v5022, %v4962
          %v5027 = vmul.f32 %v5022, %v4964
          %v5028 = vmul.f32 %v5022, %v4966
          %v5029 = vmul.f32 %v5022, %v4968
          %v5030 = vmul.f32 %v5022, %v4970
          %v5031 = vadd.f32 %v4923, %v5023
          %v5032 = vadd.f32 %v4924, %v5024
          %v5033 = vadd.f32 %v4925, %v5025
          %v5034 = vadd.f32 %v4926, %v5026
          %v5035 = vadd.f32 %v4927, %v5027
          %v5036 = vadd.f32 %v4928, %v5028
          %v5037 = vadd.f32 %v4929, %v5029
          %v5038 = vadd.f32 %v4930, %v5030
          %v5039 = vstv %s528
          %v5040 = vmul.f32 %v5039, %v4947
          %v5041 = vmul.f32 %v5039, %v4948
          %v5042 = vmul.f32 %v5039, %v4949
          %v5043 = vmul.f32 %v5039, %v4950
          %v5044 = vmul.f32 %v5039, %v4951
          %v5045 = vmul.f32 %v5039, %v4952
          %v5046 = vmul.f32 %v5039, %v4953
          %v5047 = vmul.f32 %v5039, %v4954
          %v5048 = vadd.f32 %v4980, %v5040
          %v5049 = vadd.f32 %v4981, %v5041
          %v5050 = vadd.f32 %v4982, %v5042
          %v5051 = vadd.f32 %v4983, %v5043
          %v5052 = vadd.f32 %v4984, %v5044
          %v5053 = vadd.f32 %v4985, %v5045
          %v5054 = vadd.f32 %v4986, %v5046
          %v5055 = vadd.f32 %v4987, %v5047
          %v5056 = vstv %s546
          %v5057 = vmul.f32 %v5056, %v4947
          %v5058 = vmul.f32 %v5056, %v4948
          %v5059 = vmul.f32 %v5056, %v4949
          %v5060 = vmul.f32 %v5056, %v4950
          %v5061 = vmul.f32 %v5056, %v4951
          %v5062 = vmul.f32 %v5056, %v4952
          %v5063 = vmul.f32 %v5056, %v4953
          %v5064 = vmul.f32 %v5056, %v4954
          %v5065 = vadd.f32 %v4997, %v5057
          %v5066 = vadd.f32 %v4998, %v5058
          %v5067 = vadd.f32 %v4999, %v5059
          %v5068 = vadd.f32 %v5000, %v5060
          %v5069 = vadd.f32 %v5001, %v5061
          %v5070 = vadd.f32 %v5002, %v5062
          %v5071 = vadd.f32 %v5003, %v5063
          %v5072 = vadd.f32 %v5004, %v5064
          %v5073 = vstv %s564
          %v5074 = vmul.f32 %v5073, %v4947
          %v5075 = vmul.f32 %v5073, %v4948
          %v5076 = vmul.f32 %v5073, %v4949
          %v5077 = vmul.f32 %v5073, %v4950
          %v5078 = vmul.f32 %v5073, %v4951
          %v5079 = vmul.f32 %v5073, %v4952
          %v5080 = vmul.f32 %v5073, %v4953
          %v5081 = vmul.f32 %v5073, %v4954
          %v5082 = vadd.f32 %v5014, %v5074
          %v5083 = vadd.f32 %v5015, %v5075
          %v5084 = vadd.f32 %v5016, %v5076
          %v5085 = vadd.f32 %v5017, %v5077
          %v5086 = vadd.f32 %v5018, %v5078
          %v5087 = vadd.f32 %v5019, %v5079
          %v5088 = vadd.f32 %v5020, %v5080
          %v5089 = vadd.f32 %v5021, %v5081
          %v5090 = vstv %s582
          %v5091 = vmul.f32 %v5090, %v4947
          %v5092 = vmul.f32 %v5090, %v4948
          %v5093 = vmul.f32 %v5090, %v4949
          %v5094 = vmul.f32 %v5090, %v4950
          %v5095 = vmul.f32 %v5090, %v4951
          %v5096 = vmul.f32 %v5090, %v4952
          %v5097 = vmul.f32 %v5090, %v4953
          %v5098 = vmul.f32 %v5090, %v4954
          %v5099 = vadd.f32 %v5031, %v5091
          %v5100 = vadd.f32 %v5032, %v5092
          %v5101 = vadd.f32 %v5033, %v5093
          %v5102 = vadd.f32 %v5034, %v5094
          %v5103 = vadd.f32 %v5035, %v5095
          %v5104 = vadd.f32 %v5036, %v5096
          %v5105 = vadd.f32 %v5037, %v5097
          %v5106 = vadd.f32 %v5038, %v5098
          %5107 = vrot.lane.b32.xlu0 %v4947, 127
          %v5108 = vpop.permute.xlu0 %5107
          %5109 = vrot.lane.b32.xlu0 %v4948, 127
          %v5110 = vpop.permute.xlu0 %5109
          %5111 = vrot.lane.b32.xlu0 %v4949, 127
          %v5112 = vpop.permute.xlu0 %5111
          %5113 = vrot.lane.b32.xlu0 %v4950, 127
          %v5114 = vpop.permute.xlu0 %5113
          %5115 = vrot.lane.b32.xlu0 %v4951, 127
          %v5116 = vpop.permute.xlu0 %5115
          %5117 = vrot.lane.b32.xlu0 %v4952, 127
          %v5118 = vpop.permute.xlu0 %5117
          %5119 = vrot.lane.b32.xlu0 %v4953, 127
          %v5120 = vpop.permute.xlu0 %5119
          %5121 = vrot.lane.b32.xlu0 %v4954, 127
          %v5122 = vpop.permute.xlu0 %5121
          %v5123 = vstv %s529
          %v5124 = vmul.f32 %v5123, %v5108
          %v5125 = vmul.f32 %v5123, %v5110
          %v5126 = vmul.f32 %v5123, %v5112
          %v5127 = vmul.f32 %v5123, %v5114
          %v5128 = vmul.f32 %v5123, %v5116
          %v5129 = vmul.f32 %v5123, %v5118
          %v5130 = vmul.f32 %v5123, %v5120
          %v5131 = vmul.f32 %v5123, %v5122
          %v5132 = vadd.f32 %v5048, %v5124
          %v5133 = vadd.f32 %v5049, %v5125
          %v5134 = vadd.f32 %v5050, %v5126
          %v5135 = vadd.f32 %v5051, %v5127
          %v5136 = vadd.f32 %v5052, %v5128
          %v5137 = vadd.f32 %v5053, %v5129
          %v5138 = vadd.f32 %v5054, %v5130
          %v5139 = vadd.f32 %v5055, %v5131
          %v5140 = vstv %s547
          %v5141 = vmul.f32 %v5140, %v5108
          %v5142 = vmul.f32 %v5140, %v5110
          %v5143 = vmul.f32 %v5140, %v5112
          %v5144 = vmul.f32 %v5140, %v5114
          %v5145 = vmul.f32 %v5140, %v5116
          %v5146 = vmul.f32 %v5140, %v5118
          %v5147 = vmul.f32 %v5140, %v5120
          %v5148 = vmul.f32 %v5140, %v5122
          %v5149 = vadd.f32 %v5065, %v5141
          %v5150 = vadd.f32 %v5066, %v5142
          %v5151 = vadd.f32 %v5067, %v5143
          %v5152 = vadd.f32 %v5068, %v5144
          %v5153 = vadd.f32 %v5069, %v5145
          %v5154 = vadd.f32 %v5070, %v5146
          %v5155 = vadd.f32 %v5071, %v5147
          %v5156 = vadd.f32 %v5072, %v5148
          %v5157 = vstv %s565
          %v5158 = vmul.f32 %v5157, %v5108
          %v5159 = vmul.f32 %v5157, %v5110
          %v5160 = vmul.f32 %v5157, %v5112
          %v5161 = vmul.f32 %v5157, %v5114
          %v5162 = vmul.f32 %v5157, %v5116
          %v5163 = vmul.f32 %v5157, %v5118
          %v5164 = vmul.f32 %v5157, %v5120
          %v5165 = vmul.f32 %v5157, %v5122
          %v5166 = vadd.f32 %v5082, %v5158
          %v5167 = vadd.f32 %v5083, %v5159
          %v5168 = vadd.f32 %v5084, %v5160
          %v5169 = vadd.f32 %v5085, %v5161
          %v5170 = vadd.f32 %v5086, %v5162
          %v5171 = vadd.f32 %v5087, %v5163
          %v5172 = vadd.f32 %v5088, %v5164
          %v5173 = vadd.f32 %v5089, %v5165
          %v5174 = vstv %s583
          %v5175 = vmul.f32 %v5174, %v5108
          %v5176 = vmul.f32 %v5174, %v5110
          %v5177 = vmul.f32 %v5174, %v5112
          %v5178 = vmul.f32 %v5174, %v5114
          %v5179 = vmul.f32 %v5174, %v5116
          %v5180 = vmul.f32 %v5174, %v5118
          %v5181 = vmul.f32 %v5174, %v5120
          %v5182 = vmul.f32 %v5174, %v5122
          %v5183 = vadd.f32 %v5099, %v5175
          %v5184 = vadd.f32 %v5100, %v5176
          %v5185 = vadd.f32 %v5101, %v5177
          %v5186 = vadd.f32 %v5102, %v5178
          %v5187 = vadd.f32 %v5103, %v5179
          %v5188 = vadd.f32 %v5104, %v5180
          %v5189 = vadd.f32 %v5105, %v5181
          %v5190 = vadd.f32 %v5106, %v5182
          %5191 = vrot.lane.b32.xlu0 %v5132, 127
          %v5192 = vpop.permute.xlu0 %5191
          %5193 = vrot.lane.b32.xlu0 %v5133, 127
          %v5194 = vpop.permute.xlu0 %5193
          %5195 = vrot.lane.b32.xlu0 %v5134, 127
          %v5196 = vpop.permute.xlu0 %5195
          %5197 = vrot.lane.b32.xlu0 %v5135, 127
          %v5198 = vpop.permute.xlu0 %5197
          %5199 = vrot.lane.b32.xlu0 %v5136, 127
          %v5200 = vpop.permute.xlu0 %5199
          %5201 = vrot.lane.b32.xlu0 %v5137, 127
          %v5202 = vpop.permute.xlu0 %5201
          %5203 = vrot.lane.b32.xlu0 %v5138, 127
          %v5204 = vpop.permute.xlu0 %5203
          %5205 = vrot.lane.b32.xlu0 %v5139, 127
          %v5206 = vpop.permute.xlu0 %5205
          %v5207 = vmax.f32 %v5132, %v5192
          %v5208 = vmax.f32 %v5133, %v5194
          %v5209 = vmax.f32 %v5134, %v5196
          %v5210 = vmax.f32 %v5135, %v5198
          %v5211 = vmax.f32 %v5136, %v5200
          %v5212 = vmax.f32 %v5137, %v5202
          %v5213 = vmax.f32 %v5138, %v5204
          %v5214 = vmax.f32 %v5139, %v5206
          %5215 = vrot.lane.b32.xlu0 %v5149, 127
          %v5216 = vpop.permute.xlu0 %5215
          %5217 = vrot.lane.b32.xlu0 %v5150, 127
          %v5218 = vpop.permute.xlu0 %5217
          %5219 = vrot.lane.b32.xlu0 %v5151, 127
          %v5220 = vpop.permute.xlu0 %5219
          %5221 = vrot.lane.b32.xlu0 %v5152, 127
          %v5222 = vpop.permute.xlu0 %5221
          %5223 = vrot.lane.b32.xlu0 %v5153, 127
          %v5224 = vpop.permute.xlu0 %5223
          %5225 = vrot.lane.b32.xlu0 %v5154, 127
          %v5226 = vpop.permute.xlu0 %5225
          %5227 = vrot.lane.b32.xlu0 %v5155, 127
          %v5228 = vpop.permute.xlu0 %5227
          %5229 = vrot.lane.b32.xlu0 %v5156, 127
          %v5230 = vpop.permute.xlu0 %5229
          %v5231 = vmax.f32 %v5149, %v5216
          %v5232 = vmax.f32 %v5150, %v5218
          %v5233 = vmax.f32 %v5151, %v5220
          %v5234 = vmax.f32 %v5152, %v5222
          %v5235 = vmax.f32 %v5153, %v5224
          %v5236 = vmax.f32 %v5154, %v5226
          %v5237 = vmax.f32 %v5155, %v5228
          %v5238 = vmax.f32 %v5156, %v5230
          %5239 = vrot.lane.b32.xlu0 %v5166, 127
          %v5240 = vpop.permute.xlu0 %5239
          %5241 = vrot.lane.b32.xlu0 %v5167, 127
          %v5242 = vpop.permute.xlu0 %5241
          %5243 = vrot.lane.b32.xlu0 %v5168, 127
          %v5244 = vpop.permute.xlu0 %5243
          %5245 = vrot.lane.b32.xlu0 %v5169, 127
          %v5246 = vpop.permute.xlu0 %5245
          %5247 = vrot.lane.b32.xlu0 %v5170, 127
          %v5248 = vpop.permute.xlu0 %5247
          %5249 = vrot.lane.b32.xlu0 %v5171, 127
          %v5250 = vpop.permute.xlu0 %5249
          %5251 = vrot.lane.b32.xlu0 %v5172, 127
          %v5252 = vpop.permute.xlu0 %5251
          %5253 = vrot.lane.b32.xlu0 %v5173, 127
          %v5254 = vpop.permute.xlu0 %5253
          %v5255 = vmax.f32 %v5166, %v5240
          %v5256 = vmax.f32 %v5167, %v5242
          %v5257 = vmax.f32 %v5168, %v5244
          %v5258 = vmax.f32 %v5169, %v5246
          %v5259 = vmax.f32 %v5170, %v5248
          %v5260 = vmax.f32 %v5171, %v5250
          %v5261 = vmax.f32 %v5172, %v5252
          %v5262 = vmax.f32 %v5173, %v5254
          %5263 = vrot.lane.b32.xlu0 %v5183, 127
          %v5264 = vpop.permute.xlu0 %5263
          %5265 = vrot.lane.b32.xlu0 %v5184, 127
          %v5266 = vpop.permute.xlu0 %5265
          %5267 = vrot.lane.b32.xlu0 %v5185, 127
          %v5268 = vpop.permute.xlu0 %5267
          %5269 = vrot.lane.b32.xlu0 %v5186, 127
          %v5270 = vpop.permute.xlu0 %5269
          %5271 = vrot.lane.b32.xlu0 %v5187, 127
          %v5272 = vpop.permute.xlu0 %5271
          %5273 = vrot.lane.b32.xlu0 %v5188, 127
          %v5274 = vpop.permute.xlu0 %5273
          %5275 = vrot.lane.b32.xlu0 %v5189, 127
          %v5276 = vpop.permute.xlu0 %5275
          %5277 = vrot.lane.b32.xlu0 %v5190, 127
          %v5278 = vpop.permute.xlu0 %5277
          %v5279 = vmax.f32 %v5183, %v5264
          %v5280 = vmax.f32 %v5184, %v5266
          %v5281 = vmax.f32 %v5185, %v5268
          %v5282 = vmax.f32 %v5186, %v5270
          %v5283 = vmax.f32 %v5187, %v5272
          %v5284 = vmax.f32 %v5188, %v5274
          %v5285 = vmax.f32 %v5189, %v5276
          %v5286 = vmax.f32 %v5190, %v5278
          %v5287 = vld [vmem:[%s5] sm:$0xff]
          %v5288 = vld [vmem:[%s5 + $0x8] sm:$0xff]
          %v5289 = vld [vmem:[%s5 + $0x10] sm:$0xff]
          %v5290 = vld [vmem:[%s5 + $0x18] sm:$0xff]
          %vm5291 = vcmask 523264
          %v5293 = vsel %vm5291, %v5287, 0
          %v5296 = vsel %vm5291, %v5288, 0
          %v5299 = vsel %vm5291, %v5289, 0
          %v5302 = vsel %vm5291, %v5290, 0
          %5304 = vmatprep.subr.mxu0 0.0
          %5305 = vmatpush1.msra.mxu0 0.0
          %5306 = vmatprep.subr.mxu0 0.0
          %5307 = vmatpush1.msra.mxu0 0.0
          %5308 = vmatprep.subr.mxu0 0.0
          %5309 = vmatpush1.msra.mxu0 0.0
          %5310 = vmatprep.subr.mxu0 0.0
          %5311 = vmatpush1.msra.mxu0 0.0
          %5312 = vmatprep.subr.mxu0 0.0
          %5313 = vmatpush1.msra.mxu0 0.0
          %5314 = vmatprep.subr.mxu0 0.0
          %5315 = vmatpush1.msra.mxu0 0.0
          %5316 = vmatprep.subr.mxu0 0.0
          %5317 = vmatpush1.msra.mxu0 0.0
          %5318 = vmatprep.subr.mxu0 0.0
          %5319 = vmatpush1.msra.mxu0 0.0
          %5320 = vmatprep.subr.mxu0 %v5238
          %5321 = vmatpush1.msra.mxu0 %v5214
          %5322 = vmatprep.subr.mxu0 %v5237
          %5323 = vmatpush1.msra.mxu0 %v5213
          %5324 = vmatprep.subr.mxu0 %v5236
          %5325 = vmatpush1.msra.mxu0 %v5212
          %5326 = vmatprep.subr.mxu0 %v5235
          %5327 = vmatpush1.msra.mxu0 %v5211
          %5328 = vmatprep.subr.mxu0 %v5234
          %5329 = vmatpush1.msra.mxu0 %v5210
          %5330 = vmatprep.subr.mxu0 %v5233
          %5331 = vmatpush1.msra.mxu0 %v5209
          %5332 = vmatprep.subr.mxu0 %v5232
          %5333 = vmatpush1.msra.mxu0 %v5208
          %5334 = vmatprep.subr.mxu0 %v5231
          %5335 = vmatpush1.msra.mxu0 %v5207
          %5336 = vmatprep.subr.mxu0 0.0
          %5337 = vmatpush2.msra.mxu0 0.0
          %5338 = vmatprep.subr.mxu0 0.0
          %5339 = vmatpush2.msra.mxu0 0.0
          %5340 = vmatprep.subr.mxu0 0.0
          %5341 = vmatpush2.msra.mxu0 0.0
          %5342 = vmatprep.subr.mxu0 0.0
          %5343 = vmatpush2.msra.mxu0 0.0
          %5344 = vmatprep.subr.mxu0 0.0
          %5345 = vmatpush2.msra.mxu0 0.0
          %5346 = vmatprep.subr.mxu0 0.0
          %5347 = vmatpush2.msra.mxu0 0.0
          %5348 = vmatprep.subr.mxu0 0.0
          %5349 = vmatpush2.msra.mxu0 0.0
          %5350 = vmatprep.subr.mxu0 0.0
          %5351 = vmatpush2.msra.mxu0 0.0
          %5352 = vmatprep.subr.mxu0 0.0
          %5353 = vmatpush2.msra.mxu0 0.0
          %5354 = vmatprep.subr.mxu0 0.0
          %5355 = vmatpush2.msra.mxu0 0.0
          %5356 = vmatprep.subr.mxu0 0.0
          %5357 = vmatpush2.msra.mxu0 0.0
          %5358 = vmatprep.subr.mxu0 0.0
          %5359 = vmatpush2.msra.mxu0 0.0
          %5360 = vmatprep.subr.mxu0 0.0
          %5361 = vmatpush2.msra.mxu0 0.0
          %5362 = vmatprep.subr.mxu0 0.0
          %5363 = vmatpush2.msra.mxu0 0.0
          %5364 = vmatprep.subr.mxu0 0.0
          %5365 = vmatpush2.msra.mxu0 0.0
          %5366 = vmatprep.subr.mxu0 0.0
          %5367 = vmatpush2.msra.mxu0 0.0
          %5368 = vmatprep.mubr.f32.mxu0 0.0
          %5369 = vmatmul.mubr.f32.gmra.mxu0 %v5293
          %v5370 = vpop.f32.mrf.mxu0
          %v5371 = vadd.f32 0.0, %v5370
          %v5372 = vpop.f32.mrf.mxu0
          %v5373 = vadd.f32 0.0, %v5372
          %5374 = vmatprep.mubr.f32.mxu0 0.0
          %5375 = vmatmul.mubr.f32.gmra.mxu0 %v5296
          %v5376 = vpop.f32.mrf.mxu0
          %v5377 = vadd.f32 0.0, %v5376
          %v5378 = vpop.f32.mrf.mxu0
          %v5379 = vadd.f32 0.0, %v5378
          %5380 = vmatprep.mubr.f32.mxu0 0.0
          %5381 = vmatmul.mubr.f32.gmra.mxu0 %v5299
          %v5382 = vpop.f32.mrf.mxu0
          %v5383 = vadd.f32 0.0, %v5382
          %v5384 = vpop.f32.mrf.mxu0
          %v5385 = vadd.f32 0.0, %v5384
          %5386 = vmatprep.mubr.f32.mxu0 0.0
          %5387 = vmatmul.mubr.f32.gmra.mxu0 %v5302
          %v5388 = vpop.f32.mrf.mxu0
          %v5389 = vadd.f32 0.0, %v5388
          %v5390 = vpop.f32.mrf.mxu0
          %v5391 = vadd.f32 0.0, %v5390
          %5392 = vdwg.mxu0
          %5393 = vmatprep.subr.mxu0 0.0
          %5394 = vmatpush1.msra.mxu0 0.0
          %5395 = vmatprep.subr.mxu0 0.0
          %5396 = vmatpush1.msra.mxu0 0.0
          %5397 = vmatprep.subr.mxu0 0.0
          %5398 = vmatpush1.msra.mxu0 0.0
          %5399 = vmatprep.subr.mxu0 0.0
          %5400 = vmatpush1.msra.mxu0 0.0
          %5401 = vmatprep.subr.mxu0 0.0
          %5402 = vmatpush1.msra.mxu0 0.0
          %5403 = vmatprep.subr.mxu0 0.0
          %5404 = vmatpush1.msra.mxu0 0.0
          %5405 = vmatprep.subr.mxu0 0.0
          %5406 = vmatpush1.msra.mxu0 0.0
          %5407 = vmatprep.subr.mxu0 0.0
          %5408 = vmatpush1.msra.mxu0 0.0
          %5409 = vmatprep.subr.mxu0 %v5286
          %5410 = vmatpush1.msra.mxu0 %v5262
          %5411 = vmatprep.subr.mxu0 %v5285
          %5412 = vmatpush1.msra.mxu0 %v5261
          %5413 = vmatprep.subr.mxu0 %v5284
          %5414 = vmatpush1.msra.mxu0 %v5260
          %5415 = vmatprep.subr.mxu0 %v5283
          %5416 = vmatpush1.msra.mxu0 %v5259
          %5417 = vmatprep.subr.mxu0 %v5282
          %5418 = vmatpush1.msra.mxu0 %v5258
          %5419 = vmatprep.subr.mxu0 %v5281
          %5420 = vmatpush1.msra.mxu0 %v5257
          %5421 = vmatprep.subr.mxu0 %v5280
          %5422 = vmatpush1.msra.mxu0 %v5256
          %5423 = vmatprep.subr.mxu0 %v5279
          %5424 = vmatpush1.msra.mxu0 %v5255
          %5425 = vmatprep.subr.mxu0 0.0
          %5426 = vmatpush2.msra.mxu0 0.0
          %5427 = vmatprep.subr.mxu0 0.0
          %5428 = vmatpush2.msra.mxu0 0.0
          %5429 = vmatprep.subr.mxu0 0.0
          %5430 = vmatpush2.msra.mxu0 0.0
          %5431 = vmatprep.subr.mxu0 0.0
          %5432 = vmatpush2.msra.mxu0 0.0
          %5433 = vmatprep.subr.mxu0 0.0
          %5434 = vmatpush2.msra.mxu0 0.0
          %5435 = vmatprep.subr.mxu0 0.0
          %5436 = vmatpush2.msra.mxu0 0.0
          %5437 = vmatprep.subr.mxu0 0.0
          %5438 = vmatpush2.msra.mxu0 0.0
          %5439 = vmatprep.subr.mxu0 0.0
          %5440 = vmatpush2.msra.mxu0 0.0
          %5441 = vmatprep.subr.mxu0 0.0
          %5442 = vmatpush2.msra.mxu0 0.0
          %5443 = vmatprep.subr.mxu0 0.0
          %5444 = vmatpush2.msra.mxu0 0.0
          %5445 = vmatprep.subr.mxu0 0.0
          %5446 = vmatpush2.msra.mxu0 0.0
          %5447 = vmatprep.subr.mxu0 0.0
          %5448 = vmatpush2.msra.mxu0 0.0
          %5449 = vmatprep.subr.mxu0 0.0
          %5450 = vmatpush2.msra.mxu0 0.0
          %5451 = vmatprep.subr.mxu0 0.0
          %5452 = vmatpush2.msra.mxu0 0.0
          %5453 = vmatprep.subr.mxu0 0.0
          %5454 = vmatpush2.msra.mxu0 0.0
          %5455 = vmatprep.subr.mxu0 0.0
          %5456 = vmatpush2.msra.mxu0 0.0
          %5457 = vmatprep.mubr.f32.mxu0 0.0
          %5458 = vmatmul.mubr.f32.gmra.mxu0 %v5293
          %v5459 = vpop.f32.mrf.mxu0
          %v5460 = vadd.f32 0.0, %v5459
          %v5461 = vpop.f32.mrf.mxu0
          %v5462 = vadd.f32 0.0, %v5461
          %5463 = vmatprep.mubr.f32.mxu0 0.0
          %5464 = vmatmul.mubr.f32.gmra.mxu0 %v5296
          %v5465 = vpop.f32.mrf.mxu0
          %v5466 = vadd.f32 0.0, %v5465
          %v5467 = vpop.f32.mrf.mxu0
          %v5468 = vadd.f32 0.0, %v5467
          %5469 = vmatprep.mubr.f32.mxu0 0.0
          %5470 = vmatmul.mubr.f32.gmra.mxu0 %v5299
          %v5471 = vpop.f32.mrf.mxu0
          %v5472 = vadd.f32 0.0, %v5471
          %v5473 = vpop.f32.mrf.mxu0
          %v5474 = vadd.f32 0.0, %v5473
          %5475 = vmatprep.mubr.f32.mxu0 0.0
          %5476 = vmatmul.mubr.f32.gmra.mxu0 %v5302
          %v5477 = vpop.f32.mrf.mxu0
          %v5478 = vadd.f32 0.0, %v5477
          %v5479 = vpop.f32.mrf.mxu0
          %v5480 = vadd.f32 0.0, %v5479
          %5481 = vdwg.mxu0
          %v5482 = vld [vmem:[%s6] sm:$0xff]
          %v5483 = vld [vmem:[%s6 + $0x8] sm:$0xff]
          %v5484 = vld [vmem:[%s6 + $0x10] sm:$0xff]
          %v5485 = vld [vmem:[%s6 + $0x18] sm:$0xff]
          %v5487 = vsel %vm5291, %v5482, 0
          %v5490 = vsel %vm5291, %v5483, 0
          %v5493 = vsel %vm5291, %v5484, 0
          %v5496 = vsel %vm5291, %v5485, 0
          %5498 = vmatprep.subr.mxu0 0.0
          %5499 = vmatpush1.msra.mxu0 0.0
          %5500 = vmatprep.subr.mxu0 0.0
          %5501 = vmatpush1.msra.mxu0 0.0
          %5502 = vmatprep.subr.mxu0 0.0
          %5503 = vmatpush1.msra.mxu0 0.0
          %5504 = vmatprep.subr.mxu0 0.0
          %5505 = vmatpush1.msra.mxu0 0.0
          %5506 = vmatprep.subr.mxu0 0.0
          %5507 = vmatpush1.msra.mxu0 0.0
          %5508 = vmatprep.subr.mxu0 0.0
          %5509 = vmatpush1.msra.mxu0 0.0
          %5510 = vmatprep.subr.mxu0 0.0
          %5511 = vmatpush1.msra.mxu0 0.0
          %5512 = vmatprep.subr.mxu0 0.0
          %5513 = vmatpush1.msra.mxu0 0.0
          %5514 = vmatprep.subr.mxu0 %v5238
          %5515 = vmatpush1.msra.mxu0 %v5214
          %5516 = vmatprep.subr.mxu0 %v5237
          %5517 = vmatpush1.msra.mxu0 %v5213
          %5518 = vmatprep.subr.mxu0 %v5236
          %5519 = vmatpush1.msra.mxu0 %v5212
          %5520 = vmatprep.subr.mxu0 %v5235
          %5521 = vmatpush1.msra.mxu0 %v5211
          %5522 = vmatprep.subr.mxu0 %v5234
          %5523 = vmatpush1.msra.mxu0 %v5210
          %5524 = vmatprep.subr.mxu0 %v5233
          %5525 = vmatpush1.msra.mxu0 %v5209
          %5526 = vmatprep.subr.mxu0 %v5232
          %5527 = vmatpush1.msra.mxu0 %v5208
          %5528 = vmatprep.subr.mxu0 %v5231
          %5529 = vmatpush1.msra.mxu0 %v5207
          %5530 = vmatprep.subr.mxu0 0.0
          %5531 = vmatpush2.msra.mxu0 0.0
          %5532 = vmatprep.subr.mxu0 0.0
          %5533 = vmatpush2.msra.mxu0 0.0
          %5534 = vmatprep.subr.mxu0 0.0
          %5535 = vmatpush2.msra.mxu0 0.0
          %5536 = vmatprep.subr.mxu0 0.0
          %5537 = vmatpush2.msra.mxu0 0.0
          %5538 = vmatprep.subr.mxu0 0.0
          %5539 = vmatpush2.msra.mxu0 0.0
          %5540 = vmatprep.subr.mxu0 0.0
          %5541 = vmatpush2.msra.mxu0 0.0
          %5542 = vmatprep.subr.mxu0 0.0
          %5543 = vmatpush2.msra.mxu0 0.0
          %5544 = vmatprep.subr.mxu0 0.0
          %5545 = vmatpush2.msra.mxu0 0.0
          %5546 = vmatprep.subr.mxu0 0.0
          %5547 = vmatpush2.msra.mxu0 0.0
          %5548 = vmatprep.subr.mxu0 0.0
          %5549 = vmatpush2.msra.mxu0 0.0
          %5550 = vmatprep.subr.mxu0 0.0
          %5551 = vmatpush2.msra.mxu0 0.0
          %5552 = vmatprep.subr.mxu0 0.0
          %5553 = vmatpush2.msra.mxu0 0.0
          %5554 = vmatprep.subr.mxu0 0.0
          %5555 = vmatpush2.msra.mxu0 0.0
          %5556 = vmatprep.subr.mxu0 0.0
          %5557 = vmatpush2.msra.mxu0 0.0
          %5558 = vmatprep.subr.mxu0 0.0
          %5559 = vmatpush2.msra.mxu0 0.0
          %5560 = vmatprep.subr.mxu0 0.0
          %5561 = vmatpush2.msra.mxu0 0.0
          %5562 = vmatprep.mubr.f32.mxu0 0.0
          %5563 = vmatmul.mubr.f32.gmra.mxu0 %v5487
          %v5564 = vpop.f32.mrf.mxu0
          %v5565 = vadd.f32 0.0, %v5564
          %v5566 = vpop.f32.mrf.mxu0
          %v5567 = vadd.f32 0.0, %v5566
          %5568 = vmatprep.mubr.f32.mxu0 0.0
          %5569 = vmatmul.mubr.f32.gmra.mxu0 %v5490
          %v5570 = vpop.f32.mrf.mxu0
          %v5571 = vadd.f32 0.0, %v5570
          %v5572 = vpop.f32.mrf.mxu0
          %v5573 = vadd.f32 0.0, %v5572
          %5574 = vmatprep.mubr.f32.mxu0 0.0
          %5575 = vmatmul.mubr.f32.gmra.mxu0 %v5493
          %v5576 = vpop.f32.mrf.mxu0
          %v5577 = vadd.f32 0.0, %v5576
          %v5578 = vpop.f32.mrf.mxu0
          %v5579 = vadd.f32 0.0, %v5578
          %5580 = vmatprep.mubr.f32.mxu0 0.0
          %5581 = vmatmul.mubr.f32.gmra.mxu0 %v5496
          %v5582 = vpop.f32.mrf.mxu0
          %v5583 = vadd.f32 0.0, %v5582
          %v5584 = vpop.f32.mrf.mxu0
          %v5585 = vadd.f32 0.0, %v5584
          %5586 = vdwg.mxu0
          %5587 = vmatprep.subr.mxu0 0.0
          %5588 = vmatpush1.msra.mxu0 0.0
          %5589 = vmatprep.subr.mxu0 0.0
          %5590 = vmatpush1.msra.mxu0 0.0
          %5591 = vmatprep.subr.mxu0 0.0
          %5592 = vmatpush1.msra.mxu0 0.0
          %5593 = vmatprep.subr.mxu0 0.0
          %5594 = vmatpush1.msra.mxu0 0.0
          %5595 = vmatprep.subr.mxu0 0.0
          %5596 = vmatpush1.msra.mxu0 0.0
          %5597 = vmatprep.subr.mxu0 0.0
          %5598 = vmatpush1.msra.mxu0 0.0
          %5599 = vmatprep.subr.mxu0 0.0
          %5600 = vmatpush1.msra.mxu0 0.0
          %5601 = vmatprep.subr.mxu0 0.0
          %5602 = vmatpush1.msra.mxu0 0.0
          %5603 = vmatprep.subr.mxu0 %v5286
          %5604 = vmatpush1.msra.mxu0 %v5262
          %5605 = vmatprep.subr.mxu0 %v5285
          %5606 = vmatpush1.msra.mxu0 %v5261
          %5607 = vmatprep.subr.mxu0 %v5284
          %5608 = vmatpush1.msra.mxu0 %v5260
          %5609 = vmatprep.subr.mxu0 %v5283
          %5610 = vmatpush1.msra.mxu0 %v5259
          %5611 = vmatprep.subr.mxu0 %v5282
          %5612 = vmatpush1.msra.mxu0 %v5258
          %5613 = vmatprep.subr.mxu0 %v5281
          %5614 = vmatpush1.msra.mxu0 %v5257
          %5615 = vmatprep.subr.mxu0 %v5280
          %5616 = vmatpush1.msra.mxu0 %v5256
          %5617 = vmatprep.subr.mxu0 %v5279
          %5618 = vmatpush1.msra.mxu0 %v5255
          %5619 = vmatprep.subr.mxu0 0.0
          %5620 = vmatpush2.msra.mxu0 0.0
          %5621 = vmatprep.subr.mxu0 0.0
          %5622 = vmatpush2.msra.mxu0 0.0
          %5623 = vmatprep.subr.mxu0 0.0
          %5624 = vmatpush2.msra.mxu0 0.0
          %5625 = vmatprep.subr.mxu0 0.0
          %5626 = vmatpush2.msra.mxu0 0.0
          %5627 = vmatprep.subr.mxu0 0.0
          %5628 = vmatpush2.msra.mxu0 0.0
          %5629 = vmatprep.subr.mxu0 0.0
          %5630 = vmatpush2.msra.mxu0 0.0
          %5631 = vmatprep.subr.mxu0 0.0
          %5632 = vmatpush2.msra.mxu0 0.0
          %5633 = vmatprep.subr.mxu0 0.0
          %5634 = vmatpush2.msra.mxu0 0.0
          %5635 = vmatprep.subr.mxu0 0.0
          %5636 = vmatpush2.msra.mxu0 0.0
          %5637 = vmatprep.subr.mxu0 0.0
          %5638 = vmatpush2.msra.mxu0 0.0
          %5639 = vmatprep.subr.mxu0 0.0
          %5640 = vmatpush2.msra.mxu0 0.0
          %5641 = vmatprep.subr.mxu0 0.0
          %5642 = vmatpush2.msra.mxu0 0.0
          %5643 = vmatprep.subr.mxu0 0.0
          %5644 = vmatpush2.msra.mxu0 0.0
          %5645 = vmatprep.subr.mxu0 0.0
          %5646 = vmatpush2.msra.mxu0 0.0
          %5647 = vmatprep.subr.mxu0 0.0
          %5648 = vmatpush2.msra.mxu0 0.0
          %5649 = vmatprep.subr.mxu0 0.0
          %5650 = vmatpush2.msra.mxu0 0.0
          %5651 = vmatprep.mubr.f32.mxu0 0.0
          %5652 = vmatmul.mubr.f32.gmra.mxu0 %v5487
          %v5653 = vpop.f32.mrf.mxu0
          %v5654 = vadd.f32 0.0, %v5653
          %v5655 = vpop.f32.mrf.mxu0
          %v5656 = vadd.f32 0.0, %v5655
          %5657 = vmatprep.mubr.f32.mxu0 0.0
          %5658 = vmatmul.mubr.f32.gmra.mxu0 %v5490
          %v5659 = vpop.f32.mrf.mxu0
          %v5660 = vadd.f32 0.0, %v5659
          %v5661 = vpop.f32.mrf.mxu0
          %v5662 = vadd.f32 0.0, %v5661
          %5663 = vmatprep.mubr.f32.mxu0 0.0
          %5664 = vmatmul.mubr.f32.gmra.mxu0 %v5493
          %v5665 = vpop.f32.mrf.mxu0
          %v5666 = vadd.f32 0.0, %v5665
          %v5667 = vpop.f32.mrf.mxu0
          %v5668 = vadd.f32 0.0, %v5667
          %5669 = vmatprep.mubr.f32.mxu0 0.0
          %5670 = vmatmul.mubr.f32.gmra.mxu0 %v5496
          %v5671 = vpop.f32.mrf.mxu0
          %v5672 = vadd.f32 0.0, %v5671
          %v5673 = vpop.f32.mrf.mxu0
          %v5674 = vadd.f32 0.0, %v5673
          %5675 = vdwg.mxu0
          %v5676 = vmax.f32 %v5371, %v5565
          %v5677 = vmax.f32 %v5373, %v5567
          %v5678 = vmax.f32 %v5460, %v5654
          %v5679 = vmax.f32 %v5462, %v5656
          %v5680 = vmax.f32 %v5377, %v5571
          %v5681 = vmax.f32 %v5379, %v5573
          %v5682 = vmax.f32 %v5466, %v5660
          %v5683 = vmax.f32 %v5468, %v5662
          %v5684 = vmax.f32 %v5383, %v5577
          %v5685 = vmax.f32 %v5385, %v5579
          %v5686 = vmax.f32 %v5472, %v5666
          %v5687 = vmax.f32 %v5474, %v5668
          %v5688 = vmax.f32 %v5389, %v5583
          %v5689 = vmax.f32 %v5391, %v5585
          %v5690 = vmax.f32 %v5478, %v5672
          %v5691 = vmax.f32 %v5480, %v5674
          %v5692 = vld [vmem:[%s7] sm:$0xff]
          %v5693 = vld [vmem:[%s7 + $0x8] sm:$0xff]
          %v5694 = vld [vmem:[%s7 + $0x10] sm:$0xff]
          %v5695 = vld [vmem:[%s7 + $0x18] sm:$0xff]
          %v5696 = vld [vmem:[%s7 + $0x20] sm:$0xff]
          %v5697 = vld [vmem:[%s7 + $0x28] sm:$0xff]
          %v5698 = vld [vmem:[%s7 + $0x30] sm:$0xff]
          %v5699 = vld [vmem:[%s7 + $0x38] sm:$0xff]
          %v5700 = vld [vmem:[%s7 + $0x40] sm:$0xff]
          %v5701 = vld [vmem:[%s7 + $0x48] sm:$0xff]
          %v5702 = vld [vmem:[%s7 + $0x50] sm:$0xff]
          %v5703 = vld [vmem:[%s7 + $0x58] sm:$0xff]
          %v5704 = vld [vmem:[%s7 + $0x60] sm:$0xff]
          %v5705 = vld [vmem:[%s7 + $0x68] sm:$0xff]
          %v5706 = vld [vmem:[%s7 + $0x70] sm:$0xff]
          %v5707 = vld [vmem:[%s7 + $0x78] sm:$0xff]
          %v5708 = vld [vmem:[%s7 + $0x80] sm:$0xff]
          %v5709 = vld [vmem:[%s7 + $0x88] sm:$0xff]
          %v5710 = vld [vmem:[%s7 + $0x90] sm:$0xff]
          %v5711 = vld [vmem:[%s7 + $0x98] sm:$0xff]
          %v5712 = vld [vmem:[%s7 + $0xa0] sm:$0xff]
          %v5713 = vld [vmem:[%s7 + $0xa8] sm:$0xff]
          %v5714 = vld [vmem:[%s7 + $0xb0] sm:$0xff]
          %v5715 = vld [vmem:[%s7 + $0xb8] sm:$0xff]
          %v5716 = vld [vmem:[%s7 + $0xc0] sm:$0xff]
          %v5717 = vld [vmem:[%s7 + $0xc8] sm:$0xff]
          %v5718 = vld [vmem:[%s7 + $0xd0] sm:$0xff]
          %v5719 = vld [vmem:[%s7 + $0xd8] sm:$0xff]
          %v5720 = vld [vmem:[%s7 + $0xe0] sm:$0xff]
          %v5721 = vld [vmem:[%s7 + $0xe8] sm:$0xff]
          %v5722 = vld [vmem:[%s7 + $0xf0] sm:$0xff]
          %v5723 = vld [vmem:[%s7 + $0xf8] sm:$0xff]
          %v5724 = vld [vmem:[%s7 + $0x100] sm:$0xff]
          %v5725 = vld [vmem:[%s7 + $0x108] sm:$0xff]
          %v5726 = vld [vmem:[%s7 + $0x110] sm:$0xff]
          %v5727 = vld [vmem:[%s7 + $0x118] sm:$0xff]
          %v5728 = vld [vmem:[%s7 + $0x120] sm:$0xff]
          %v5729 = vld [vmem:[%s7 + $0x128] sm:$0xff]
          %v5730 = vld [vmem:[%s7 + $0x130] sm:$0xff]
          %v5731 = vld [vmem:[%s7 + $0x138] sm:$0xff]
          %v5732 = vld [vmem:[%s7 + $0x140] sm:$0xff]
          %v5733 = vld [vmem:[%s7 + $0x148] sm:$0xff]
          %v5734 = vld [vmem:[%s7 + $0x150] sm:$0xff]
          %v5735 = vld [vmem:[%s7 + $0x158] sm:$0xff]
          %v5736 = vld [vmem:[%s7 + $0x160] sm:$0xff]
          %v5737 = vld [vmem:[%s7 + $0x168] sm:$0xff]
          %v5738 = vld [vmem:[%s7 + $0x170] sm:$0xff]
          %v5739 = vld [vmem:[%s7 + $0x178] sm:$0xff]
          %v5740 = vld [vmem:[%s7 + $0x180] sm:$0xff]
          %v5741 = vld [vmem:[%s7 + $0x188] sm:$0xff]
          %v5742 = vld [vmem:[%s7 + $0x190] sm:$0xff]
          %v5743 = vld [vmem:[%s7 + $0x198] sm:$0xff]
          %v5744 = vld [vmem:[%s7 + $0x1a0] sm:$0xff]
          %v5745 = vld [vmem:[%s7 + $0x1a8] sm:$0xff]
          %v5746 = vld [vmem:[%s7 + $0x1b0] sm:$0xff]
          %v5747 = vld [vmem:[%s7 + $0x1b8] sm:$0xff]
          %v5748 = vld [vmem:[%s7 + $0x1c0] sm:$0xff]
          %v5749 = vld [vmem:[%s7 + $0x1c8] sm:$0xff]
          %v5750 = vld [vmem:[%s7 + $0x1d0] sm:$0xff]
          %v5751 = vld [vmem:[%s7 + $0x1d8] sm:$0xff]
          %v5752 = vld [vmem:[%s7 + $0x1e0] sm:$0xff]
          %v5753 = vld [vmem:[%s7 + $0x1e8] sm:$0xff]
          %v5754 = vld [vmem:[%s7 + $0x1f0] sm:$0xff]
          %v5755 = vld [vmem:[%s7 + $0x1f8] sm:$0xff]
          %5756 = vmatprep.subr.mxu0 0.0
          %5757 = vmatpush1.msra.mxu0 %v5707
          %5758 = vmatprep.subr.mxu0 0.0
          %5759 = vmatpush1.msra.mxu0 %v5706
          %5760 = vmatprep.subr.mxu0 0.0
          %5761 = vmatpush1.msra.mxu0 %v5705
          %5762 = vmatprep.subr.mxu0 0.0
          %5763 = vmatpush1.msra.mxu0 %v5704
          %5764 = vmatprep.subr.mxu0 0.0
          %5765 = vmatpush1.msra.mxu0 %v5703
          %5766 = vmatprep.subr.mxu0 0.0
          %5767 = vmatpush1.msra.mxu0 %v5702
          %5768 = vmatprep.subr.mxu0 0.0
          %5769 = vmatpush1.msra.mxu0 %v5701
          %5770 = vmatprep.subr.mxu0 0.0
          %5771 = vmatpush1.msra.mxu0 %v5700
          %5772 = vmatprep.subr.mxu0 0.0
          %5773 = vmatpush1.msra.mxu0 %v5699
          %5774 = vmatprep.subr.mxu0 0.0
          %5775 = vmatpush1.msra.mxu0 %v5698
          %5776 = vmatprep.subr.mxu0 0.0
          %5777 = vmatpush1.msra.mxu0 %v5697
          %5778 = vmatprep.subr.mxu0 0.0
          %5779 = vmatpush1.msra.mxu0 %v5696
          %5780 = vmatprep.subr.mxu0 0.0
          %5781 = vmatpush1.msra.mxu0 %v5695
          %5782 = vmatprep.subr.mxu0 0.0
          %5783 = vmatpush1.msra.mxu0 %v5694
          %5784 = vmatprep.subr.mxu0 0.0
          %5785 = vmatpush1.msra.mxu0 %v5693
          %5786 = vmatprep.subr.mxu0 0.0
          %5787 = vmatpush1.msra.mxu0 %v5692
          %5788 = vmatprep.subr.mxu0 0.0
          %5789 = vmatpush2.msra.mxu0 %v5723
          %5790 = vmatprep.subr.mxu0 0.0
          %5791 = vmatpush2.msra.mxu0 %v5722
          %5792 = vmatprep.subr.mxu0 0.0
          %5793 = vmatpush2.msra.mxu0 %v5721
          %5794 = vmatprep.subr.mxu0 0.0
          %5795 = vmatpush2.msra.mxu0 %v5720
          %5796 = vmatprep.subr.mxu0 0.0
          %5797 = vmatpush2.msra.mxu0 %v5719
          %5798 = vmatprep.subr.mxu0 0.0
          %5799 = vmatpush2.msra.mxu0 %v5718
          %5800 = vmatprep.subr.mxu0 0.0
          %5801 = vmatpush2.msra.mxu0 %v5717
          %5802 = vmatprep.subr.mxu0 0.0
          %5803 = vmatpush2.msra.mxu0 %v5716
          %5804 = vmatprep.subr.mxu0 0.0
          %5805 = vmatpush2.msra.mxu0 %v5715
          %5806 = vmatprep.subr.mxu0 0.0
          %5807 = vmatpush2.msra.mxu0 %v5714
          %5808 = vmatprep.subr.mxu0 0.0
          %5809 = vmatpush2.msra.mxu0 %v5713
          %5810 = vmatprep.subr.mxu0 0.0
          %5811 = vmatpush2.msra.mxu0 %v5712
          %5812 = vmatprep.subr.mxu0 0.0
          %5813 = vmatpush2.msra.mxu0 %v5711
          %5814 = vmatprep.subr.mxu0 0.0
          %5815 = vmatpush2.msra.mxu0 %v5710
          %5816 = vmatprep.subr.mxu0 0.0
          %5817 = vmatpush2.msra.mxu0 %v5709
          %5818 = vmatprep.subr.mxu0 0.0
          %5819 = vmatpush2.msra.mxu0 %v5708
          %5820 = vmatprep.mubr.f32.mxu0 %v5677
          %5821 = vmatmul.mubr.f32.gmra.mxu0 %v5676
          %v5822 = vpop.f32.mrf.mxu0
          %v5823 = vadd.f32 0.0, %v5822
          %v5824 = vpop.f32.mrf.mxu0
          %5825 = vmatprep.mubr.f32.mxu0 %v5681
          %5826 = vmatmul.mubr.f32.gmra.mxu0 %v5680
          %v5827 = vpop.f32.mrf.mxu0
          %v5828 = vadd.f32 0.0, %v5827
          %v5829 = vpop.f32.mrf.mxu0
          %5830 = vmatprep.mubr.f32.mxu0 %v5685
          %5831 = vmatmul.mubr.f32.gmra.mxu0 %v5684
          %v5832 = vpop.f32.mrf.mxu0
          %v5833 = vadd.f32 0.0, %v5832
          %v5834 = vpop.f32.mrf.mxu0
          %5835 = vmatprep.mubr.f32.mxu0 %v5689
          %5836 = vmatmul.mubr.f32.gmra.mxu0 %v5688
          %v5837 = vpop.f32.mrf.mxu0
          %v5838 = vadd.f32 0.0, %v5837
          %v5839 = vpop.f32.mrf.mxu0
          %5840 = vdwg.mxu0
          %5841 = vmatprep.subr.mxu0 0.0
          %5842 = vmatpush1.msra.mxu0 %v5739
          %5843 = vmatprep.subr.mxu0 0.0
          %5844 = vmatpush1.msra.mxu0 %v5738
          %5845 = vmatprep.subr.mxu0 0.0
          %5846 = vmatpush1.msra.mxu0 %v5737
          %5847 = vmatprep.subr.mxu0 0.0
          %5848 = vmatpush1.msra.mxu0 %v5736
          %5849 = vmatprep.subr.mxu0 0.0
          %5850 = vmatpush1.msra.mxu0 %v5735
          %5851 = vmatprep.subr.mxu0 0.0
          %5852 = vmatpush1.msra.mxu0 %v5734
          %5853 = vmatprep.subr.mxu0 0.0
          %5854 = vmatpush1.msra.mxu0 %v5733
          %5855 = vmatprep.subr.mxu0 0.0
          %5856 = vmatpush1.msra.mxu0 %v5732
          %5857 = vmatprep.subr.mxu0 0.0
          %5858 = vmatpush1.msra.mxu0 %v5731
          %5859 = vmatprep.subr.mxu0 0.0
          %5860 = vmatpush1.msra.mxu0 %v5730
          %5861 = vmatprep.subr.mxu0 0.0
          %5862 = vmatpush1.msra.mxu0 %v5729
          %5863 = vmatprep.subr.mxu0 0.0
          %5864 = vmatpush1.msra.mxu0 %v5728
          %5865 = vmatprep.subr.mxu0 0.0
          %5866 = vmatpush1.msra.mxu0 %v5727
          %5867 = vmatprep.subr.mxu0 0.0
          %5868 = vmatpush1.msra.mxu0 %v5726
          %5869 = vmatprep.subr.mxu0 0.0
          %5870 = vmatpush1.msra.mxu0 %v5725
          %5871 = vmatprep.subr.mxu0 0.0
          %5872 = vmatpush1.msra.mxu0 %v5724
          %5873 = vmatprep.subr.mxu0 0.0
          %5874 = vmatpush2.msra.mxu0 %v5755
          %5875 = vmatprep.subr.mxu0 0.0
          %5876 = vmatpush2.msra.mxu0 %v5754
          %5877 = vmatprep.subr.mxu0 0.0
          %5878 = vmatpush2.msra.mxu0 %v5753
          %5879 = vmatprep.subr.mxu0 0.0
          %5880 = vmatpush2.msra.mxu0 %v5752
          %5881 = vmatprep.subr.mxu0 0.0
          %5882 = vmatpush2.msra.mxu0 %v5751
          %5883 = vmatprep.subr.mxu0 0.0
          %5884 = vmatpush2.msra.mxu0 %v5750
          %5885 = vmatprep.subr.mxu0 0.0
          %5886 = vmatpush2.msra.mxu0 %v5749
          %5887 = vmatprep.subr.mxu0 0.0
          %5888 = vmatpush2.msra.mxu0 %v5748
          %5889 = vmatprep.subr.mxu0 0.0
          %5890 = vmatpush2.msra.mxu0 %v5747
          %5891 = vmatprep.subr.mxu0 0.0
          %5892 = vmatpush2.msra.mxu0 %v5746
          %5893 = vmatprep.subr.mxu0 0.0
          %5894 = vmatpush2.msra.mxu0 %v5745
          %5895 = vmatprep.subr.mxu0 0.0
          %5896 = vmatpush2.msra.mxu0 %v5744
          %5897 = vmatprep.subr.mxu0 0.0
          %5898 = vmatpush2.msra.mxu0 %v5743
          %5899 = vmatprep.subr.mxu0 0.0
          %5900 = vmatpush2.msra.mxu0 %v5742
          %5901 = vmatprep.subr.mxu0 0.0
          %5902 = vmatpush2.msra.mxu0 %v5741
          %5903 = vmatprep.subr.mxu0 0.0
          %5904 = vmatpush2.msra.mxu0 %v5740
          %5905 = vmatprep.mubr.f32.mxu0 %v5679
          %5906 = vmatmul.mubr.f32.gmra.mxu0 %v5678
          %v5907 = vpop.f32.mrf.mxu0
          %v5908 = vadd.f32 %v5823, %v5907
          %v5909 = vpop.f32.mrf.mxu0
          %5910 = vmatprep.mubr.f32.mxu0 %v5683
          %5911 = vmatmul.mubr.f32.gmra.mxu0 %v5682
          %v5912 = vpop.f32.mrf.mxu0
          %v5913 = vadd.f32 %v5828, %v5912
          %v5914 = vpop.f32.mrf.mxu0
          %5915 = vmatprep.mubr.f32.mxu0 %v5687
          %5916 = vmatmul.mubr.f32.gmra.mxu0 %v5686
          %v5917 = vpop.f32.mrf.mxu0
          %v5918 = vadd.f32 %v5833, %v5917
          %v5919 = vpop.f32.mrf.mxu0
          %5920 = vmatprep.mubr.f32.mxu0 %v5691
          %5921 = vmatmul.mubr.f32.gmra.mxu0 %v5690
          %v5922 = vpop.f32.mrf.mxu0
          %v5923 = vadd.f32 %v5838, %v5922
          %v5924 = vpop.f32.mrf.mxu0
          %5925 = vdwg.mxu0
          %s5926 = scalar_lea.vmem %s472, %s743
          %5927 = vst [vmem:[%s5926] sm:$0xff] %v5908
          %5928 = vst [vmem:[%s5926 + $0x8] sm:$0xff] %v5913
          %5929 = vst [vmem:[%s5926 + $0x10] sm:$0xff] %v5918
          %5930 = vst [vmem:[%s5926 + $0x18] sm:$0xff] %v5923
        $region89: #{snn_forward.2} parent=67 // loop_footer
          %s738 = sadd.s32 1, %s734
        $region90: #{snn_forward.2} parent=67 // loop_footer_branch
          %733 = sbr.rel target = $region86
        $region91: #{snn_forward.2} parent=67 // loop_exit
          _
        %s5931 = smul.u32 4, %s26
        %p5932 = scmp.lt.s32.totalorder %s5931, 7
        %s5933 = scalar_select %p5932, %s5931, 7
        %s5934 = smul.addr %s5933, 4
        %s5935 = smul.addr %s5934, 8
        %s5936 = scalar_lea.vmem %s12, %s5935
        // Predicated region
        $region92: #{snn_forward.2} parent=67 // pred_check
          %p5937 = pneg %p301
        $region93: #{snn_forward.2} parent=67 // pred_check_branch
          %5939 = sbr.rel (%p5937) target = $region95
        $region94: #{snn_forward.2} parent=67 // pred_region
          %s5940 = smul.u32 4, %s26
        $region95: #{snn_forward.2} parent=67 // pred_fallthru
          _
      $region68: #{snn_forward.2} parent=5 // pred_fallthru
        _
      %p5941 = scmp.le.s32.totalorder 2, %s21
      // Predicated region
      $region96: #{snn_forward.2} parent=5 // pred_check
        %p5942 = pneg %p5941
      $region97: #{snn_forward.2} parent=5 // pred_check_branch
        %5944 = sbr.rel (%p5942) target = $region99
      $region98: #{snn_forward.2} parent=5 // pred_region
        %s5945 = ssub.s32 %s21, 2
        // Predicated region
        $region100: #{snn_forward.2} parent=98 // pred_check
          %p5946 = pneg %p307
        $region101: #{snn_forward.2} parent=98 // pred_check_branch
          %5948 = sbr.rel (%p5946) target = $region103
        $region102: #{snn_forward.2} parent=98 // pred_region
          %s5949 = smul.u32 4, %s27
          %p5950 = scmp.lt.s32.totalorder %s5949, 7
          %s5951 = scalar_select %p5950, %s5949, 7
          %s5952 = smul.addr %s5951, 4
          %s5953 = smul.addr %s5952, 8
          %s5954 = scalar_lea.vmem %s12, %s5953
        $region103: #{snn_forward.2} parent=98 // pred_fallthru
          _
      $region99: #{snn_forward.2} parent=5 // pred_fallthru
        _
    $region6: #{snn_forward.2} parent=1 // loop_footer
      %s25 = sadd.s32 1, %s21
    $region7: #{snn_forward.2} parent=1 // loop_footer_branch
      %20 = sbr.rel target = $region3
    $region8: #{snn_forward.2} parent=1 // loop_exit
      _
    %5955 = vsyncpa [#allocation3], 1
    %s5956 = scalar_lea.sflag [#allocation3], 1
    %5957 = vsyncpa %s5956, 1
    %5958 = vsyncpa [#allocation5], 1
    %5959 = vsyncpa [#allocation8], 1

</llo_original>
